<compile_context>
chip_gen: v7x
topology: tpu7x:2x2x1
jax: 0.10.0
libtpu: 0.0.40
codegen_flags: <defaults>
</compile_context>

<pallas_src>
import functools

import jax
import jax.numpy as jnp
from jax.experimental import pallas as pl
from jax.experimental.pallas import tpu as pltpu

_EPS = 1e-5


# ------------------------------------------------------------------ kernels ---

def _conv_stage_kernel(x_ref, w1_ref, wr_ref, y1_ref, yr_ref, stats_ref, *, H, W):
    """Per image: y1 = conv1_3x3(x), yr = conv_res_1x1(x) (both bias-free — the bias
    is cancelled exactly by the following training-mode BN).  Accumulates per-channel
    sum / sum-of-squares for BN1 and BN_res across the batch grid axis."""
    n = pl.program_id(0)

    @pl.when(n == 0)
    def _init():
        stats_ref[...] = jnp.zeros_like(stats_ref)

    cin = x_ref.shape[-1]
    cpad = w1_ref.shape[-1]

    # conv1: in-kernel im2col -> 9 shifted matmuls accumulated in f32 (MXU).
    acc = jnp.zeros((H * W, cpad), jnp.float32)
    k = 0
    for dy in range(3):
        for dx in range(3):
            xs = x_ref[dy:dy + H, dx:dx + W, :].reshape(H * W, cin)
            acc = acc + jnp.dot(xs, w1_ref[k], preferred_element_type=jnp.float32)
            k += 1
    y1_ref[...] = acc

    # residual path: 1x1 conv on the un-padded centre of the tile.
    xc = x_ref[1:1 + H, 1:1 + W, :].reshape(H * W, cin)
    yr = jnp.dot(xc, wr_ref[...], preferred_element_type=jnp.float32)
    yr_ref[...] = yr

    # BN statistics (rows: sum(y1), sum(y1^2), sum(yr), sum(yr^2)).
    stats_ref[0:1, :] += jnp.sum(acc, axis=0, keepdims=True)
    stats_ref[1:2, :] += jnp.sum(acc * acc, axis=0, keepdims=True)
    stats_ref[2:3, :] += jnp.sum(yr, axis=0, keepdims=True)
    stats_ref[3:4, :] += jnp.sum(yr * yr, axis=0, keepdims=True)


def _bn_relu_conv2_kernel(y1_ref, stats1_ref, g1_ref, b1_ref, w2_ref,
                          y2_ref, stats2_ref, pad_ref, *, H, W, m_total):
    """Per image: h1 = relu(BN1(y1)); y2 = conv2_3x3(h1) (bias-free).
    Accumulates per-channel sum / sum-of-squares of y2 for BN2."""
    n = pl.program_id(0)

    @pl.when(n == 0)
    def _init():
        stats2_ref[...] = jnp.zeros_like(stats2_ref)

    cpad = y1_ref.shape[-1]
    inv_m = 1.0 / m_total
    mean1 = stats1_ref[0:1, :] * inv_m
    var1 = stats1_ref[1:2, :] * inv_m - mean1 * mean1
    h1 = (y1_ref[...] - mean1) * jax.lax.rsqrt(var1 + _EPS)
    h1 = jnp.maximum(h1 * g1_ref[...] + b1_ref[...], 0.0)          # (H*W, cpad)

    # Zero-padded spatial tile for the 3x3 window; the halo never touches HBM.
    pad_ref[...] = jnp.zeros_like(pad_ref)
    pad_ref[1:H + 1, 1:W + 1, :] = h1.reshape(H, W, cpad)

    acc = jnp.zeros((H * W, cpad), jnp.float32)
    k = 0
    for dy in range(3):
        for dx in range(3):
            xs = pad_ref[dy:dy + H, dx:dx + W, :].reshape(H * W, cpad)
            acc = acc + jnp.dot(xs, w2_ref[k], preferred_element_type=jnp.float32)
            k += 1
    y2_ref[...] = acc

    stats2_ref[0:1, :] += jnp.sum(acc, axis=0, keepdims=True)
    stats2_ref[1:2, :] += jnp.sum(acc * acc, axis=0, keepdims=True)


def _bn_add_relu_kernel(y2_ref, yr_ref, stats1_ref, stats2_ref,
                        g2_ref, b2_ref, gr_ref, br_ref, o_ref, *, m_total, c_out):
    """out = relu(BN2(y2) + BN_res(yr)); written directly as NCHW-ordered,
    lane-dense (Cout, H*W) tiles (no post-hoc XLA transpose)."""
    inv_m = 1.0 / m_total

    m2 = stats2_ref[0:1, :] * inv_m
    v2 = stats2_ref[1:2, :] * inv_m - m2 * m2
    a = (y2_ref[...] - m2) * jax.lax.rsqrt(v2 + _EPS) * g2_ref[...] + b2_ref[...]

    mr = stats1_ref[2:3, :] * inv_m
    vr = stats1_ref[3:4, :] * inv_m - mr * mr
    r = (yr_ref[...] - mr) * jax.lax.rsqrt(vr + _EPS) * gr_ref[...] + br_ref[...]

    out = jnp.maximum(a + r, 0.0)                     # (H*W, cpad)
    out_t = jnp.transpose(out)                        # (cpad, H*W), lane-dense
    o_ref[...] = out_t[:c_out, :]


# ------------------------------------------------------------------ wrapper ---

def _pad_channels(a, c_pad, value=0.0):
    extra = c_pad - a.shape[-1]
    cfg = [(0, 0)] * (a.ndim - 1) + [(0, extra)]
    return jnp.pad(a, cfg, constant_values=value)


def residual_block_forward(x_nchw, params):
    """Matches ResidualBlock.forward (training-mode BN). Returns (N, Cout, H, W)."""
    N, Cin, H, W = x_nchw.shape
    Cout = params["conv1_w"].shape[0]
    HW = H * W
    M = N * HW
    C_PAD = ((Cout + 127) // 128) * 128
    f32 = jnp.float32

    x_nhwc = jnp.transpose(x_nchw, (0, 2, 3, 1)).astype(f32)
    x_pad = jnp.pad(x_nhwc, ((0, 0), (1, 1), (1, 1), (0, 0)))

    # Weight prep (trace-time, tiny). Conv biases are dropped: training-mode BN
    # mean-centering cancels a per-channel additive bias exactly.
    w1p = _pad_channels(
        jnp.transpose(params["conv1_w"], (2, 3, 1, 0)).reshape(9, Cin, Cout), C_PAD)
    w2p = jnp.transpose(params["conv2_w"], (2, 3, 1, 0)).reshape(9, Cout, Cout)
    w2p = jnp.pad(w2p, ((0, 0), (0, C_PAD - Cout), (0, C_PAD - Cout)))
    wrp = _pad_channels(
        jnp.transpose(params["res_w"].reshape(Cout, Cin), (1, 0)), C_PAD)

    def affine(g, b):
        return (_pad_channels(g.reshape(1, Cout), C_PAD, 1.0),
                _pad_channels(b.reshape(1, Cout), C_PAD, 0.0))
    g1p, b1p = affine(params["bn1_g"], params["bn1_b"])
    g2p, b2p = affine(params["bn2_g"], params["bn2_b"])
    grp, brp = affine(params["bnr_g"], params["bnr_b"])

    # ---- stage 1: conv1 + residual conv + BN1/BNres statistics ---------------
    y1, yr, stats1 = pl.pallas_call(
        functools.partial(_conv_stage_kernel, H=H, W=W),
        out_shape=(jax.ShapeDtypeStruct((N, HW, C_PAD), f32),
                   jax.ShapeDtypeStruct((N, HW, C_PAD), f32),
                   jax.ShapeDtypeStruct((8, C_PAD), f32)),
        grid=(N,),
        in_specs=[
            pl.BlockSpec((None, H + 2, W + 2, Cin), lambda n: (n, 0, 0, 0)),
            pl.BlockSpec((9, Cin, C_PAD), lambda n: (0, 0, 0)),
            pl.BlockSpec((Cin, C_PAD), lambda n: (0, 0)),
        ],
        out_specs=(
            pl.BlockSpec((None, HW, C_PAD), lambda n: (n, 0, 0)),
            pl.BlockSpec((None, HW, C_PAD), lambda n: (n, 0, 0)),
            pl.BlockSpec((8, C_PAD), lambda n: (0, 0)),
        ),
        compiler_params=pltpu.CompilerParams(dimension_semantics=("arbitrary",)),
    )(x_pad, w1p, wrp)

    # ---- stage 2: BN1 + ReLU + conv2 + BN2 statistics ------------------------
    y2, stats2 = pl.pallas_call(
        functools.partial(_bn_relu_conv2_kernel, H=H, W=W, m_total=float(M)),
        out_shape=(jax.ShapeDtypeStruct((N, HW, C_PAD), f32),
                   jax.ShapeDtypeStruct((8, C_PAD), f32)),
        grid=(N,),
        in_specs=[
            pl.BlockSpec((None, HW, C_PAD), lambda n: (n, 0, 0)),
            pl.BlockSpec((8, C_PAD), lambda n: (0, 0)),
            pl.BlockSpec((1, C_PAD), lambda n: (0, 0)),
            pl.BlockSpec((1, C_PAD), lambda n: (0, 0)),
            pl.BlockSpec((9, C_PAD, C_PAD), lambda n: (0, 0, 0)),
        ],
        out_specs=(
            pl.BlockSpec((None, HW, C_PAD), lambda n: (n, 0, 0)),
            pl.BlockSpec((8, C_PAD), lambda n: (0, 0)),
        ),
        scratch_shapes=[pltpu.VMEM((H + 2, W + 2, C_PAD), f32)],
        compiler_params=pltpu.CompilerParams(dimension_semantics=("arbitrary",)),
    )(y1, stats1, g1p, b1p, w2p)

    # ---- stage 3: BN2 + BNres + add + ReLU, NCHW lane-dense output -----------
    out = pl.pallas_call(
        functools.partial(_bn_add_relu_kernel, m_total=float(M), c_out=Cout),
        out_shape=jax.ShapeDtypeStruct((N, Cout, HW), f32),
        grid=(N,),
        in_specs=[
            pl.BlockSpec((None, HW, C_PAD), lambda n: (n, 0, 0)),
            pl.BlockSpec((None, HW, C_PAD), lambda n: (n, 0, 0)),
            pl.BlockSpec((8, C_PAD), lambda n: (0, 0)),
            pl.BlockSpec((8, C_PAD), lambda n: (0, 0)),
            pl.BlockSpec((1, C_PAD), lambda n: (0, 0)),
            pl.BlockSpec((1, C_PAD), lambda n: (0, 0)),
            pl.BlockSpec((1, C_PAD), lambda n: (0, 0)),
            pl.BlockSpec((1, C_PAD), lambda n: (0, 0)),
        ],
        out_specs=pl.BlockSpec((None, Cout, HW), lambda n: (n, 0, 0)),
        compiler_params=pltpu.CompilerParams(dimension_semantics=("parallel",)),
    )(y2, yr, stats1, stats2, g2p, b2p, grp, brp)

    return out.reshape(N, Cout, H, W)


# ------------------------------------------------------------------- params ---

def init_params(key, in_channels, out_channels):
    ks = jax.random.split(key, 6)

    def conv_init(k, shape):
        fan_in = shape[1] * shape[2] * shape[3]
        bound = 1.0 / jnp.sqrt(fan_in)
        return jax.random.uniform(k, shape, jnp.float32, -bound, bound)

    def bias_init(k, fan_in, n):
        bound = 1.0 / jnp.sqrt(fan_in)
        return jax.random.uniform(k, (n,), jnp.float32, -bound, bound)

    # NOTE: conv biases are kept to mirror the PyTorch module, but the Pallas
    # kernels do not consume them — training-mode BN cancels them exactly.
    params = {
        "conv1_w": conv_init(ks[0], (out_channels, in_channels, 3, 3)),
        "conv1_b": bias_init(ks[1], in_channels * 9, out_channels),
        "conv2_w": conv_init(ks[2], (out_channels, out_channels, 3, 3)),
        "conv2_b": bias_init(ks[3], out_channels * 9, out_channels),
        "res_w": conv_init(ks[4], (out_channels, in_channels, 1, 1)),
        "res_b": bias_init(ks[5], in_channels, out_channels),
        # PyTorch BatchNorm2d default init: weight=1, bias=0
        "bn1_g": jnp.ones((out_channels,), jnp.float32),
        "bn1_b": jnp.zeros((out_channels,), jnp.float32),
        "bn2_g": jnp.ones((out_channels,), jnp.float32),
        "bn2_b": jnp.zeros((out_channels,), jnp.float32),
        "bnr_g": jnp.ones((out_channels,), jnp.float32),
        "bnr_b": jnp.zeros((out_channels,), jnp.float32),
    }
    return params


# -------------------------------------------------------- pure-JAX reference ---

def _reference_forward(x_nchw, params):
    x = jnp.transpose(x_nchw, (0, 2, 3, 1)).astype(jnp.float32)   # NHWC

    def conv(inp, w, b, pad):
        w_hwio = jnp.transpose(w, (2, 3, 1, 0))
        y = jax.lax.conv_general_dilated(
            inp, w_hwio, window_strides=(1, 1), padding=pad,
            dimension_numbers=("NHWC", "HWIO", "NHWC"),
            precision=jax.lax.Precision.HIGHEST)
        return y + b

    def bn(y, g, b):
        mean = jnp.mean(y, axis=(0, 1, 2), keepdims=True)
        var = jnp.mean((y - mean) ** 2, axis=(0, 1, 2), keepdims=True)
        return (y - mean) * jax.lax.rsqrt(var + _EPS) * g + b

    r = bn(conv(x, params["res_w"], params["res_b"], "VALID"),
           params["bnr_g"], params["bnr_b"])
    o = jax.nn.relu(bn(conv(x, params["conv1_w"], params["conv1_b"], "SAME"),
                       params["bn1_g"], params["bn1_b"]))
    o = bn(conv(o, params["conv2_w"], params["conv2_b"], "SAME"),
           params["bn2_g"], params["bn2_b"])
    out = jax.nn.relu(o + r)
    return jnp.transpose(out, (0, 3, 1, 2))


# ---------------------------------------------------------------------- main ---

if __name__ == "__main__":
    key = jax.random.PRNGKey(0)
    k_x, k_p = jax.random.split(key)

    N, Cin, Cout, H, W = 2, 4, 8, 16, 16
    x = jax.random.normal(k_x, (N, Cin, H, W), jnp.float32)
    params = init_params(k_p, Cin, Cout)

    out = jax.jit(residual_block_forward)(x, params)
    jax.block_until_ready(out)

    assert out.shape == (N, Cout, H, W), out.shape

    ref = _reference_forward(x, params)
    max_err = float(jnp.max(jnp.abs(out - ref)))
    assert max_err < 2e-2, f"max abs error vs reference: {max_err}"

    print("KERNEL_OK")
</pallas_src>

<mosaic_0001>
module attributes {stable_mosaic.version = 11 : i64} {
  func.func @_conv_stage_kernel(%arg0: i32, %arg1: memref<1x18x18x4xf32, #tpu.memory_space<vmem>>, %arg2: memref<9x4x128xf32, #tpu.memory_space<vmem>>, %arg3: memref<4x128xf32, #tpu.memory_space<vmem>>, %arg4: memref<1x256x128xf32, #tpu.memory_space<vmem>>, %arg5: memref<1x256x128xf32, #tpu.memory_space<vmem>>, %arg6: memref<8x128xf32, #tpu.memory_space<vmem>>) attributes {dimension_semantics = [#tpu.dimension_semantics<arbitrary>], iteration_bounds = array<i64: 2>, scalar_prefetch = 0 : i64, scratch_operands = 0 : i64, tpu.core_type = #tpu.core_type<tc>, window_params = [{transform_indices = @transform_0, window_bounds = array<i64: 1, 18, 18, 4>}, {pipeline_mode = #tpu.pipeline_mode<synchronous>, transform_indices = @transform_1, window_bounds = array<i64: 9, 4, 128>}, {pipeline_mode = #tpu.pipeline_mode<synchronous>, transform_indices = @transform_2, window_bounds = array<i64: 4, 128>}, {transform_indices = @transform_3, window_bounds = array<i64: 1, 256, 128>}, {transform_indices = @transform_4, window_bounds = array<i64: 1, 256, 128>}, {pipeline_mode = #tpu.pipeline_mode<synchronous>, transform_indices = @transform_5, window_bounds = array<i64: 8, 128>}]} {
    %c0_i32 = arith.constant 0 : i32
    %0 = arith.cmpi eq, %arg0, %c0_i32 : i32
    %1 = arith.extui %0 : i1 to i32
    %c0_i32_0 = arith.constant 0 : i32
    %2 = arith.cmpi ne, %1, %c0_i32_0 : i32
    scf.if %2 {
      %cst_97 = arith.constant 0.000000e+00 : f32
      %100 = vector.broadcast %cst_97 : f32 to vector<8x128xf32>
      %c0_98 = arith.constant 0 : index
      %c0_99 = arith.constant 0 : index
      %101 = vector.load %arg6[%c0_98, %c0_99] : memref<8x128xf32, #tpu.memory_space<vmem>>, vector<8x128xf32>
      tpu.vector_store %arg6[%c0_98, %c0_99], %100 {strides = array<i32>} : memref<8x128xf32, #tpu.memory_space<vmem>>, vector<8x128xf32>,
    } else {
    }
    %cst = arith.constant 0.000000e+00 : f32
    %3 = vector.broadcast %cst : f32 to vector<256x128xf32>
    %c0 = arith.constant 0 : index
    %c0_1 = arith.constant 0 : index
    %c0_2 = arith.constant 0 : index
    %c0_3 = arith.constant 0 : index
    %4 = vector.load %arg1[%c0, %c0_1, %c0_2, %c0_3] : memref<1x18x18x4xf32, #tpu.memory_space<vmem>>, vector<1x16x16x4xf32>
    %5 = vector.shape_cast %4 : vector<1x16x16x4xf32> to vector<16x16x4xf32>
    %6 = vector.shape_cast %5 : vector<16x16x4xf32> to vector<256x4xf32>
    %c0_4 = arith.constant 0 : index
    %c0_5 = arith.constant 0 : index
    %c0_6 = arith.constant 0 : index
    %7 = vector.load %arg2[%c0_4, %c0_5, %c0_6] : memref<9x4x128xf32, #tpu.memory_space<vmem>>, vector<1x4x128xf32>
    %8 = vector.shape_cast %7 : vector<1x4x128xf32> to vector<4x128xf32>
    %cst_7 = arith.constant dense<0.000000e+00> : vector<256x128xf32>
    %9 = tpu.matmul %6, %8, %cst_7 {dimension_numbers = #tpu.dot_dimension_numbers<[1], [0], [0], [1], [0, 0, 1, 1], [], []>} : vector<256x4xf32>, vector<4x128xf32>, vector<256x128xf32> -> vector<256x128xf32>
    %10 = arith.addf %3, %9 : vector<256x128xf32>
    %c0_8 = arith.constant 0 : index
    %c0_9 = arith.constant 0 : index
    %c1 = arith.constant 1 : index
    %c0_10 = arith.constant 0 : index
    %11 = vector.load %arg1[%c0_8, %c0_9, %c1, %c0_10] : memref<1x18x18x4xf32, #tpu.memory_space<vmem>>, vector<1x16x16x4xf32>
    %12 = vector.shape_cast %11 : vector<1x16x16x4xf32> to vector<16x16x4xf32>
    %13 = vector.shape_cast %12 : vector<16x16x4xf32> to vector<256x4xf32>
    %c1_11 = arith.constant 1 : index
    %c0_12 = arith.constant 0 : index
    %c0_13 = arith.constant 0 : index
    %14 = vector.load %arg2[%c1_11, %c0_12, %c0_13] : memref<9x4x128xf32, #tpu.memory_space<vmem>>, vector<1x4x128xf32>
    %15 = vector.shape_cast %14 : vector<1x4x128xf32> to vector<4x128xf32>
    %cst_14 = arith.constant dense<0.000000e+00> : vector<256x128xf32>
    %16 = tpu.matmul %13, %15, %cst_14 {dimension_numbers = #tpu.dot_dimension_numbers<[1], [0], [0], [1], [0, 0, 1, 1], [], []>} : vector<256x4xf32>, vector<4x128xf32>, vector<256x128xf32> -> vector<256x128xf32>
    %17 = arith.addf %10, %16 : vector<256x128xf32>
    %c0_15 = arith.constant 0 : index
    %c0_16 = arith.constant 0 : index
    %c2 = arith.constant 2 : index
    %c0_17 = arith.constant 0 : index
    %18 = vector.load %arg1[%c0_15, %c0_16, %c2, %c0_17] : memref<1x18x18x4xf32, #tpu.memory_space<vmem>>, vector<1x16x16x4xf32>
    %19 = vector.shape_cast %18 : vector<1x16x16x4xf32> to vector<16x16x4xf32>
    %20 = vector.shape_cast %19 : vector<16x16x4xf32> to vector<256x4xf32>
    %c2_18 = arith.constant 2 : index
    %c0_19 = arith.constant 0 : index
    %c0_20 = arith.constant 0 : index
    %21 = vector.load %arg2[%c2_18, %c0_19, %c0_20] : memref<9x4x128xf32, #tpu.memory_space<vmem>>, vector<1x4x128xf32>
    %22 = vector.shape_cast %21 : vector<1x4x128xf32> to vector<4x128xf32>
    %cst_21 = arith.constant dense<0.000000e+00> : vector<256x128xf32>
    %23 = tpu.matmul %20, %22, %cst_21 {dimension_numbers = #tpu.dot_dimension_numbers<[1], [0], [0], [1], [0, 0, 1, 1], [], []>} : vector<256x4xf32>, vector<4x128xf32>, vector<256x128xf32> -> vector<256x128xf32>
    %24 = arith.addf %17, %23 : vector<256x128xf32>
    %c0_22 = arith.constant 0 : index
    %c1_23 = arith.constant 1 : index
    %c0_24 = arith.constant 0 : index
    %c0_25 = arith.constant 0 : index
    %25 = vector.load %arg1[%c0_22, %c1_23, %c0_24, %c0_25] : memref<1x18x18x4xf32, #tpu.memory_space<vmem>>, vector<1x16x16x4xf32>
    %26 = vector.shape_cast %25 : vector<1x16x16x4xf32> to vector<16x16x4xf32>
    %27 = vector.shape_cast %26 : vector<16x16x4xf32> to vector<256x4xf32>
    %c3 = arith.constant 3 : index
    %c0_26 = arith.constant 0 : index
    %c0_27 = arith.constant 0 : index
    %28 = vector.load %arg2[%c3, %c0_26, %c0_27] : memref<9x4x128xf32, #tpu.memory_space<vmem>>, vector<1x4x128xf32>
    %29 = vector.shape_cast %28 : vector<1x4x128xf32> to vector<4x128xf32>
    %cst_28 = arith.constant dense<0.000000e+00> : vector<256x128xf32>
    %30 = tpu.matmul %27, %29, %cst_28 {dimension_numbers = #tpu.dot_dimension_numbers<[1], [0], [0], [1], [0, 0, 1, 1], [], []>} : vector<256x4xf32>, vector<4x128xf32>, vector<256x128xf32> -> vector<256x128xf32>
    %31 = arith.addf %24, %30 : vector<256x128xf32>
    %c0_29 = arith.constant 0 : index
    %c1_30 = arith.constant 1 : index
    %c1_31 = arith.constant 1 : index
    %c0_32 = arith.constant 0 : index
    %32 = vector.load %arg1[%c0_29, %c1_30, %c1_31, %c0_32] : memref<1x18x18x4xf32, #tpu.memory_space<vmem>>, vector<1x16x16x4xf32>
    %33 = vector.shape_cast %32 : vector<1x16x16x4xf32> to vector<16x16x4xf32>
    %34 = vector.shape_cast %33 : vector<16x16x4xf32> to vector<256x4xf32>
    %c4 = arith.constant 4 : index
    %c0_33 = arith.constant 0 : index
    %c0_34 = arith.constant 0 : index
    %35 = vector.load %arg2[%c4, %c0_33, %c0_34] : memref<9x4x128xf32, #tpu.memory_space<vmem>>, vector<1x4x128xf32>
    %36 = vector.shape_cast %35 : vector<1x4x128xf32> to vector<4x128xf32>
    %cst_35 = arith.constant dense<0.000000e+00> : vector<256x128xf32>
    %37 = tpu.matmul %34, %36, %cst_35 {dimension_numbers = #tpu.dot_dimension_numbers<[1], [0], [0], [1], [0, 0, 1, 1], [], []>} : vector<256x4xf32>, vector<4x128xf32>, vector<256x128xf32> -> vector<256x128xf32>
    %38 = arith.addf %31, %37 : vector<256x128xf32>
    %c0_36 = arith.constant 0 : index
    %c1_37 = arith.constant 1 : index
    %c2_38 = arith.constant 2 : index
    %c0_39 = arith.constant 0 : index
    %39 = vector.load %arg1[%c0_36, %c1_37, %c2_38, %c0_39] : memref<1x18x18x4xf32, #tpu.memory_space<vmem>>, vector<1x16x16x4xf32>
    %40 = vector.shape_cast %39 : vector<1x16x16x4xf32> to vector<16x16x4xf32>
    %41 = vector.shape_cast %40 : vector<16x16x4xf32> to vector<256x4xf32>
    %c5 = arith.constant 5 : index
    %c0_40 = arith.constant 0 : index
    %c0_41 = arith.constant 0 : index
    %42 = vector.load %arg2[%c5, %c0_40, %c0_41] : memref<9x4x128xf32, #tpu.memory_space<vmem>>, vector<1x4x128xf32>
    %43 = vector.shape_cast %42 : vector<1x4x128xf32> to vector<4x128xf32>
    %cst_42 = arith.constant dense<0.000000e+00> : vector<256x128xf32>
    %44 = tpu.matmul %41, %43, %cst_42 {dimension_numbers = #tpu.dot_dimension_numbers<[1], [0], [0], [1], [0, 0, 1, 1], [], []>} : vector<256x4xf32>, vector<4x128xf32>, vector<256x128xf32> -> vector<256x128xf32>
    %45 = arith.addf %38, %44 : vector<256x128xf32>
    %c0_43 = arith.constant 0 : index
    %c2_44 = arith.constant 2 : index
    %c0_45 = arith.constant 0 : index
    %c0_46 = arith.constant 0 : index
    %46 = vector.load %arg1[%c0_43, %c2_44, %c0_45, %c0_46] : memref<1x18x18x4xf32, #tpu.memory_space<vmem>>, vector<1x16x16x4xf32>
    %47 = vector.shape_cast %46 : vector<1x16x16x4xf32> to vector<16x16x4xf32>
    %48 = vector.shape_cast %47 : vector<16x16x4xf32> to vector<256x4xf32>
    %c6 = arith.constant 6 : index
    %c0_47 = arith.constant 0 : index
    %c0_48 = arith.constant 0 : index
    %49 = vector.load %arg2[%c6, %c0_47, %c0_48] : memref<9x4x128xf32, #tpu.memory_space<vmem>>, vector<1x4x128xf32>
    %50 = vector.shape_cast %49 : vector<1x4x128xf32> to vector<4x128xf32>
    %cst_49 = arith.constant dense<0.000000e+00> : vector<256x128xf32>
    %51 = tpu.matmul %48, %50, %cst_49 {dimension_numbers = #tpu.dot_dimension_numbers<[1], [0], [0], [1], [0, 0, 1, 1], [], []>} : vector<256x4xf32>, vector<4x128xf32>, vector<256x128xf32> -> vector<256x128xf32>
    %52 = arith.addf %45, %51 : vector<256x128xf32>
    %c0_50 = arith.constant 0 : index
    %c2_51 = arith.constant 2 : index
    %c1_52 = arith.constant 1 : index
    %c0_53 = arith.constant 0 : index
    %53 = vector.load %arg1[%c0_50, %c2_51, %c1_52, %c0_53] : memref<1x18x18x4xf32, #tpu.memory_space<vmem>>, vector<1x16x16x4xf32>
    %54 = vector.shape_cast %53 : vector<1x16x16x4xf32> to vector<16x16x4xf32>
    %55 = vector.shape_cast %54 : vector<16x16x4xf32> to vector<256x4xf32>
    %c7 = arith.constant 7 : index
    %c0_54 = arith.constant 0 : index
    %c0_55 = arith.constant 0 : index
    %56 = vector.load %arg2[%c7, %c0_54, %c0_55] : memref<9x4x128xf32, #tpu.memory_space<vmem>>, vector<1x4x128xf32>
    %57 = vector.shape_cast %56 : vector<1x4x128xf32> to vector<4x128xf32>
    %cst_56 = arith.constant dense<0.000000e+00> : vector<256x128xf32>
    %58 = tpu.matmul %55, %57, %cst_56 {dimension_numbers = #tpu.dot_dimension_numbers<[1], [0], [0], [1], [0, 0, 1, 1], [], []>} : vector<256x4xf32>, vector<4x128xf32>, vector<256x128xf32> -> vector<256x128xf32>
    %59 = arith.addf %52, %58 : vector<256x128xf32>
    %c0_57 = arith.constant 0 : index
    %c2_58 = arith.constant 2 : index
    %c2_59 = arith.constant 2 : index
    %c0_60 = arith.constant 0 : index
    %60 = vector.load %arg1[%c0_57, %c2_58, %c2_59, %c0_60] : memref<1x18x18x4xf32, #tpu.memory_space<vmem>>, vector<1x16x16x4xf32>
    %61 = vector.shape_cast %60 : vector<1x16x16x4xf32> to vector<16x16x4xf32>
    %62 = vector.shape_cast %61 : vector<16x16x4xf32> to vector<256x4xf32>
    %c8 = arith.constant 8 : index
    %c0_61 = arith.constant 0 : index
    %c0_62 = arith.constant 0 : index
    %63 = vector.load %arg2[%c8, %c0_61, %c0_62] : memref<9x4x128xf32, #tpu.memory_space<vmem>>, vector<1x4x128xf32>
    %64 = vector.shape_cast %63 : vector<1x4x128xf32> to vector<4x128xf32>
    %cst_63 = arith.constant dense<0.000000e+00> : vector<256x128xf32>
    %65 = tpu.matmul %62, %64, %cst_63 {dimension_numbers = #tpu.dot_dimension_numbers<[1], [0], [0], [1], [0, 0, 1, 1], [], []>} : vector<256x4xf32>, vector<4x128xf32>, vector<256x128xf32> -> vector<256x128xf32>
    %66 = arith.addf %59, %65 : vector<256x128xf32>
    %c0_64 = arith.constant 0 : index
    %c0_65 = arith.constant 0 : index
    %c0_66 = arith.constant 0 : index
    %67 = vector.load %arg4[%c0_64, %c0_65, %c0_66] : memref<1x256x128xf32, #tpu.memory_space<vmem>>, vector<1x256x128xf32>
    %68 = vector.shape_cast %67 : vector<1x256x128xf32> to vector<256x128xf32>
    %69 = vector.shape_cast %66 : vector<256x128xf32> to vector<1x256x128xf32>
    tpu.vector_store %arg4[%c0_64, %c0_65, %c0_66], %69 {strides = array<i32>} : memref<1x256x128xf32, #tpu.memory_space<vmem>>, vector<1x256x128xf32>,
    %c0_67 = arith.constant 0 : index
    %c1_68 = arith.constant 1 : index
    %c1_69 = arith.constant 1 : index
    %c0_70 = arith.constant 0 : index
    %70 = vector.load %arg1[%c0_67, %c1_68, %c1_69, %c0_70] : memref<1x18x18x4xf32, #tpu.memory_space<vmem>>, vector<1x16x16x4xf32>
    %71 = vector.shape_cast %70 : vector<1x16x16x4xf32> to vector<16x16x4xf32>
    %72 = vector.shape_cast %71 : vector<16x16x4xf32> to vector<256x4xf32>
    %c0_71 = arith.constant 0 : index
    %c0_72 = arith.constant 0 : index
    %73 = vector.load %arg3[%c0_71, %c0_72] : memref<4x128xf32, #tpu.memory_space<vmem>>, vector<4x128xf32>
    %cst_73 = arith.constant dense<0.000000e+00> : vector<256x128xf32>
    %74 = tpu.matmul %72, %73, %cst_73 {dimension_numbers = #tpu.dot_dimension_numbers<[1], [0], [0], [1], [0, 0, 1, 1], [], []>} : vector<256x4xf32>, vector<4x128xf32>, vector<256x128xf32> -> vector<256x128xf32>
    %c0_74 = arith.constant 0 : index
    %c0_75 = arith.constant 0 : index
    %c0_76 = arith.constant 0 : index
    %75 = vector.load %arg5[%c0_74, %c0_75, %c0_76] : memref<1x256x128xf32, #tpu.memory_space<vmem>>, vector<1x256x128xf32>
    %76 = vector.shape_cast %75 : vector<1x256x128xf32> to vector<256x128xf32>
    %77 = vector.shape_cast %74 : vector<256x128xf32> to vector<1x256x128xf32>
    tpu.vector_store %arg5[%c0_74, %c0_75, %c0_76], %77 {strides = array<i32>} : memref<1x256x128xf32, #tpu.memory_space<vmem>>, vector<1x256x128xf32>,
    %c0_77 = arith.constant 0 : index
    %c0_78 = arith.constant 0 : index
    %78 = vector.load %arg6[%c0_77, %c0_78] : memref<8x128xf32, #tpu.memory_space<vmem>>, vector<1x128xf32>
    %cst_79 = arith.constant dense<0.000000e+00> : vector<128xf32>
    %79 = vector.multi_reduction <add>, %66, %cst_79 [0] : vector<256x128xf32> to vector<128xf32>
    %80 = vector.shape_cast %79 : vector<128xf32> to vector<1x128xf32>
    %81 = arith.addf %78, %80 : vector<1x128xf32>
    %c0_80 = arith.constant 0 : index
    %c0_81 = arith.constant 0 : index
    %82 = vector.load %arg6[%c0_80, %c0_81] : memref<8x128xf32, #tpu.memory_space<vmem>>, vector<1x128xf32>
    tpu.vector_store %arg6[%c0_80, %c0_81], %81 {strides = array<i32>} : memref<8x128xf32, #tpu.memory_space<vmem>>, vector<1x128xf32>,
    %c1_82 = arith.constant 1 : index
    %c0_83 = arith.constant 0 : index
    %83 = vector.load %arg6[%c1_82, %c0_83] : memref<8x128xf32, #tpu.memory_space<vmem>>, vector<1x128xf32>
    %84 = arith.mulf %66, %66 : vector<256x128xf32>
    %cst_84 = arith.constant dense<0.000000e+00> : vector<128xf32>
    %85 = vector.multi_reduction <add>, %84, %cst_84 [0] : vector<256x128xf32> to vector<128xf32>
    %86 = vector.shape_cast %85 : vector<128xf32> to vector<1x128xf32>
    %87 = arith.addf %83, %86 : vector<1x128xf32>
    %c1_85 = arith.constant 1 : index
    %c0_86 = arith.constant 0 : index
    %88 = vector.load %arg6[%c1_85, %c0_86] : memref<8x128xf32, #tpu.memory_space<vmem>>, vector<1x128xf32>
    tpu.vector_store %arg6[%c1_85, %c0_86], %87 {strides = array<i32>} : memref<8x128xf32, #tpu.memory_space<vmem>>, vector<1x128xf32>,
    %c2_87 = arith.constant 2 : index
    %c0_88 = arith.constant 0 : index
    %89 = vector.load %arg6[%c2_87, %c0_88] : memref<8x128xf32, #tpu.memory_space<vmem>>, vector<1x128xf32>
    %cst_89 = arith.constant dense<0.000000e+00> : vector<128xf32>
    %90 = vector.multi_reduction <add>, %74, %cst_89 [0] : vector<256x128xf32> to vector<128xf32>
    %91 = vector.shape_cast %90 : vector<128xf32> to vector<1x128xf32>
    %92 = arith.addf %89, %91 : vector<1x128xf32>
    %c2_90 = arith.constant 2 : index
    %c0_91 = arith.constant 0 : index
    %93 = vector.load %arg6[%c2_90, %c0_91] : memref<8x128xf32, #tpu.memory_space<vmem>>, vector<1x128xf32>
    tpu.vector_store %arg6[%c2_90, %c0_91], %92 {strides = array<i32>} : memref<8x128xf32, #tpu.memory_space<vmem>>, vector<1x128xf32>,
    %c3_92 = arith.constant 3 : index
    %c0_93 = arith.constant 0 : index
    %94 = vector.load %arg6[%c3_92, %c0_93] : memref<8x128xf32, #tpu.memory_space<vmem>>, vector<1x128xf32>
    %95 = arith.mulf %74, %74 : vector<256x128xf32>
    %cst_94 = arith.constant dense<0.000000e+00> : vector<128xf32>
    %96 = vector.multi_reduction <add>, %95, %cst_94 [0] : vector<256x128xf32> to vector<128xf32>
    %97 = vector.shape_cast %96 : vector<128xf32> to vector<1x128xf32>
    %98 = arith.addf %94, %97 : vector<1x128xf32>
    %c3_95 = arith.constant 3 : index
    %c0_96 = arith.constant 0 : index
    %99 = vector.load %arg6[%c3_95, %c0_96] : memref<8x128xf32, #tpu.memory_space<vmem>>, vector<1x128xf32>
    tpu.vector_store %arg6[%c3_95, %c0_96], %98 {strides = array<i32>} : memref<8x128xf32, #tpu.memory_space<vmem>>, vector<1x128xf32>,
    return
  }
  func.func @transform_0(%arg0: i32) -> (i32, i32, i32, i32) {
    %c0_i32 = arith.constant 0 : i32
    %c0_i32_0 = arith.constant 0 : i32
    %c0_i32_1 = arith.constant 0 : i32
    %c0_i32_2 = arith.constant 0 : i32
    return %arg0, %c0_i32, %c0_i32_0, %c0_i32_1 : i32, i32, i32, i32
  }
  func.func @transform_1(%arg0: i32) -> (i32, i32, i32) {
    %c0_i32 = arith.constant 0 : i32
    %c0_i32_0 = arith.constant 0 : i32
    %c0_i32_1 = arith.constant 0 : i32
    %c0_i32_2 = arith.constant 0 : i32
    return %c0_i32, %c0_i32_0, %c0_i32_1 : i32, i32, i32
  }
  func.func @transform_2(%arg0: i32) -> (i32, i32) {
    %c0_i32 = arith.constant 0 : i32
    %c0_i32_0 = arith.constant 0 : i32
    %c0_i32_1 = arith.constant 0 : i32
    return %c0_i32, %c0_i32_0 : i32, i32
  }
  func.func @transform_3(%arg0: i32) -> (i32, i32, i32) {
    %c0_i32 = arith.constant 0 : i32
    %c0_i32_0 = arith.constant 0 : i32
    %c0_i32_1 = arith.constant 0 : i32
    return %arg0, %c0_i32, %c0_i32_0 : i32, i32, i32
  }
  func.func @transform_4(%arg0: i32) -> (i32, i32, i32) {
    %c0_i32 = arith.constant 0 : i32
    %c0_i32_0 = arith.constant 0 : i32
    %c0_i32_1 = arith.constant 0 : i32
    return %arg0, %c0_i32, %c0_i32_0 : i32, i32, i32
  }
  func.func @transform_5(%arg0: i32) -> (i32, i32) {
    %c0_i32 = arith.constant 0 : i32
    %c0_i32_0 = arith.constant 0 : i32
    %c0_i32_1 = arith.constant 0 : i32
    return %c0_i32, %c0_i32_0 : i32, i32
  }
}

module attributes {stable_mosaic.version = 11 : i64} {
  func.func @_bn_relu_conv2_kernel(%arg0: i32, %arg1: memref<1x256x128xf32, #tpu.memory_space<vmem>>, %arg2: memref<8x128xf32, #tpu.memory_space<vmem>>, %arg3: memref<1x128xf32, #tpu.memory_space<vmem>>, %arg4: memref<1x128xf32, #tpu.memory_space<vmem>>, %arg5: memref<9x128x128xf32, #tpu.memory_space<vmem>>, %arg6: memref<1x256x128xf32, #tpu.memory_space<vmem>>, %arg7: memref<8x128xf32, #tpu.memory_space<vmem>>, %arg8: memref<18x18x128xf32, #tpu.memory_space<vmem>>) attributes {dimension_semantics = [#tpu.dimension_semantics<arbitrary>], iteration_bounds = array<i64: 2>, scalar_prefetch = 0 : i64, scratch_operands = 1 : i64, tpu.core_type = #tpu.core_type<tc>, window_params = [{transform_indices = @transform_0, window_bounds = array<i64: 1, 256, 128>}, {pipeline_mode = #tpu.pipeline_mode<synchronous>, transform_indices = @transform_1, window_bounds = array<i64: 8, 128>}, {pipeline_mode = #tpu.pipeline_mode<synchronous>, transform_indices = @transform_2, window_bounds = array<i64: 1, 128>}, {pipeline_mode = #tpu.pipeline_mode<synchronous>, transform_indices = @transform_3, window_bounds = array<i64: 1, 128>}, {pipeline_mode = #tpu.pipeline_mode<synchronous>, transform_indices = @transform_4, window_bounds = array<i64: 9, 128, 128>}, {transform_indices = @transform_5, window_bounds = array<i64: 1, 256, 128>}, {pipeline_mode = #tpu.pipeline_mode<synchronous>, transform_indices = @transform_6, window_bounds = array<i64: 8, 128>}]} {
    %c0_i32 = arith.constant 0 : i32
    %0 = arith.cmpi eq, %arg0, %c0_i32 : i32
    %1 = arith.extui %0 : i1 to i32
    %c0_i32_0 = arith.constant 0 : i32
    %2 = arith.cmpi ne, %1, %c0_i32_0 : i32
    scf.if %2 {
      %cst_90 = arith.constant 0.000000e+00 : f32
      %101 = vector.broadcast %cst_90 : f32 to vector<8x128xf32>
      %c0_91 = arith.constant 0 : index
      %c0_92 = arith.constant 0 : index
      %102 = vector.load %arg7[%c0_91, %c0_92] : memref<8x128xf32, #tpu.memory_space<vmem>>, vector<8x128xf32>
      tpu.vector_store %arg7[%c0_91, %c0_92], %101 {strides = array<i32>} : memref<8x128xf32, #tpu.memory_space<vmem>>, vector<8x128xf32>,
    } else {
    }
    %c0 = arith.constant 0 : index
    %c0_1 = arith.constant 0 : index
    %3 = vector.load %arg2[%c0, %c0_1] : memref<8x128xf32, #tpu.memory_space<vmem>>, vector<1x128xf32>
    %cst = arith.constant 0.001953125 : f32
    %4 = vector.broadcast %cst : f32 to vector<1x128xf32>
    %5 = arith.mulf %3, %4 : vector<1x128xf32>
    %c1 = arith.constant 1 : index
    %c0_2 = arith.constant 0 : index
    %6 = vector.load %arg2[%c1, %c0_2] : memref<8x128xf32, #tpu.memory_space<vmem>>, vector<1x128xf32>
    %cst_3 = arith.constant 0.001953125 : f32
    %7 = vector.broadcast %cst_3 : f32 to vector<1x128xf32>
    %8 = arith.mulf %6, %7 : vector<1x128xf32>
    %9 = arith.mulf %5, %5 : vector<1x128xf32>
    %10 = arith.subf %8, %9 : vector<1x128xf32>
    %c0_4 = arith.constant 0 : index
    %c0_5 = arith.constant 0 : index
    %c0_6 = arith.constant 0 : index
    %11 = vector.load %arg1[%c0_4, %c0_5, %c0_6] : memref<1x256x128xf32, #tpu.memory_space<vmem>>, vector<1x256x128xf32>
    %12 = vector.shape_cast %11 : vector<1x256x128xf32> to vector<256x128xf32>
    %13 = vector.broadcast %5 : vector<1x128xf32> to vector<256x128xf32>
    %14 = arith.subf %12, %13 : vector<256x128xf32>
    %cst_7 = arith.constant 9.99999974E-6 : f32
    %15 = vector.broadcast %cst_7 : f32 to vector<1x128xf32>
    %16 = arith.addf %10, %15 : vector<1x128xf32>
    %17 = math.rsqrt %16 : vector<1x128xf32>
    %18 = vector.broadcast %17 : vector<1x128xf32> to vector<256x128xf32>
    %19 = arith.mulf %14, %18 : vector<256x128xf32>
    %c0_8 = arith.constant 0 : index
    %c0_9 = arith.constant 0 : index
    %20 = vector.load %arg3[%c0_8, %c0_9] : memref<1x128xf32, #tpu.memory_space<vmem>>, vector<1x128xf32>
    %21 = vector.broadcast %20 : vector<1x128xf32> to vector<256x128xf32>
    %22 = arith.mulf %19, %21 : vector<256x128xf32>
    %c0_10 = arith.constant 0 : index
    %c0_11 = arith.constant 0 : index
    %23 = vector.load %arg4[%c0_10, %c0_11] : memref<1x128xf32, #tpu.memory_space<vmem>>, vector<1x128xf32>
    %24 = vector.broadcast %23 : vector<1x128xf32> to vector<256x128xf32>
    %25 = arith.addf %22, %24 : vector<256x128xf32>
    %cst_12 = arith.constant 0.000000e+00 : f32
    %26 = vector.broadcast %cst_12 : f32 to vector<256x128xf32>
    %27 = arith.maximumf %25, %26 : vector<256x128xf32>
    %cst_13 = arith.constant 0.000000e+00 : f32
    %28 = vector.broadcast %cst_13 : f32 to vector<18x18x128xf32>
    %c0_14 = arith.constant 0 : index
    %c0_15 = arith.constant 0 : index
    %c0_16 = arith.constant 0 : index
    %29 = vector.load %arg8[%c0_14, %c0_15, %c0_16] : memref<18x18x128xf32, #tpu.memory_space<vmem>>, vector<18x18x128xf32>
    tpu.vector_store %arg8[%c0_14, %c0_15, %c0_16], %28 {strides = array<i32>} : memref<18x18x128xf32, #tpu.memory_space<vmem>>, vector<18x18x128xf32>,
    %30 = vector.shape_cast %27 : vector<256x128xf32> to vector<16x16x128xf32>
    %c1_17 = arith.constant 1 : index
    %c1_18 = arith.constant 1 : index
    %c0_19 = arith.constant 0 : index
    %31 = vector.load %arg8[%c1_17, %c1_18, %c0_19] : memref<18x18x128xf32, #tpu.memory_space<vmem>>, vector<16x16x128xf32>
    tpu.vector_store %arg8[%c1_17, %c1_18, %c0_19], %30 {strides = array<i32>} : memref<18x18x128xf32, #tpu.memory_space<vmem>>, vector<16x16x128xf32>,
    %cst_20 = arith.constant 0.000000e+00 : f32
    %32 = vector.broadcast %cst_20 : f32 to vector<256x128xf32>
    %c0_21 = arith.constant 0 : index
    %c0_22 = arith.constant 0 : index
    %c0_23 = arith.constant 0 : index
    %33 = vector.load %arg8[%c0_21, %c0_22, %c0_23] : memref<18x18x128xf32, #tpu.memory_space<vmem>>, vector<16x16x128xf32>
    %34 = vector.shape_cast %33 : vector<16x16x128xf32> to vector<256x128xf32>
    %c0_24 = arith.constant 0 : index
    %c0_25 = arith.constant 0 : index
    %c0_26 = arith.constant 0 : index
    %35 = vector.load %arg5[%c0_24, %c0_25, %c0_26] : memref<9x128x128xf32, #tpu.memory_space<vmem>>, vector<1x128x128xf32>
    %36 = vector.shape_cast %35 : vector<1x128x128xf32> to vector<128x128xf32>
    %cst_27 = arith.constant dense<0.000000e+00> : vector<256x128xf32>
    %37 = tpu.matmul %34, %36, %cst_27 {dimension_numbers = #tpu.dot_dimension_numbers<[1], [0], [0], [1], [0, 0, 1, 1], [], []>} : vector<256x128xf32>, vector<128x128xf32>, vector<256x128xf32> -> vector<256x128xf32>
    %38 = arith.addf %32, %37 : vector<256x128xf32>
    %c0_28 = arith.constant 0 : index
    %c1_29 = arith.constant 1 : index
    %c0_30 = arith.constant 0 : index
    %39 = vector.load %arg8[%c0_28, %c1_29, %c0_30] : memref<18x18x128xf32, #tpu.memory_space<vmem>>, vector<16x16x128xf32>
    %40 = vector.shape_cast %39 : vector<16x16x128xf32> to vector<256x128xf32>
    %c1_31 = arith.constant 1 : index
    %c0_32 = arith.constant 0 : index
    %c0_33 = arith.constant 0 : index
    %41 = vector.load %arg5[%c1_31, %c0_32, %c0_33] : memref<9x128x128xf32, #tpu.memory_space<vmem>>, vector<1x128x128xf32>
    %42 = vector.shape_cast %41 : vector<1x128x128xf32> to vector<128x128xf32>
    %cst_34 = arith.constant dense<0.000000e+00> : vector<256x128xf32>
    %43 = tpu.matmul %40, %42, %cst_34 {dimension_numbers = #tpu.dot_dimension_numbers<[1], [0], [0], [1], [0, 0, 1, 1], [], []>} : vector<256x128xf32>, vector<128x128xf32>, vector<256x128xf32> -> vector<256x128xf32>
    %44 = arith.addf %38, %43 : vector<256x128xf32>
    %c0_35 = arith.constant 0 : index
    %c2 = arith.constant 2 : index
    %c0_36 = arith.constant 0 : index
    %45 = vector.load %arg8[%c0_35, %c2, %c0_36] : memref<18x18x128xf32, #tpu.memory_space<vmem>>, vector<16x16x128xf32>
    %46 = vector.shape_cast %45 : vector<16x16x128xf32> to vector<256x128xf32>
    %c2_37 = arith.constant 2 : index
    %c0_38 = arith.constant 0 : index
    %c0_39 = arith.constant 0 : index
    %47 = vector.load %arg5[%c2_37, %c0_38, %c0_39] : memref<9x128x128xf32, #tpu.memory_space<vmem>>, vector<1x128x128xf32>
    %48 = vector.shape_cast %47 : vector<1x128x128xf32> to vector<128x128xf32>
    %cst_40 = arith.constant dense<0.000000e+00> : vector<256x128xf32>
    %49 = tpu.matmul %46, %48, %cst_40 {dimension_numbers = #tpu.dot_dimension_numbers<[1], [0], [0], [1], [0, 0, 1, 1], [], []>} : vector<256x128xf32>, vector<128x128xf32>, vector<256x128xf32> -> vector<256x128xf32>
    %50 = arith.addf %44, %49 : vector<256x128xf32>
    %c1_41 = arith.constant 1 : index
    %c0_42 = arith.constant 0 : index
    %c0_43 = arith.constant 0 : index
    %51 = vector.load %arg8[%c1_41, %c0_42, %c0_43] : memref<18x18x128xf32, #tpu.memory_space<vmem>>, vector<16x16x128xf32>
    %52 = vector.shape_cast %51 : vector<16x16x128xf32> to vector<256x128xf32>
    %c3 = arith.constant 3 : index
    %c0_44 = arith.constant 0 : index
    %c0_45 = arith.constant 0 : index
    %53 = vector.load %arg5[%c3, %c0_44, %c0_45] : memref<9x128x128xf32, #tpu.memory_space<vmem>>, vector<1x128x128xf32>
    %54 = vector.shape_cast %53 : vector<1x128x128xf32> to vector<128x128xf32>
    %cst_46 = arith.constant dense<0.000000e+00> : vector<256x128xf32>
    %55 = tpu.matmul %52, %54, %cst_46 {dimension_numbers = #tpu.dot_dimension_numbers<[1], [0], [0], [1], [0, 0, 1, 1], [], []>} : vector<256x128xf32>, vector<128x128xf32>, vector<256x128xf32> -> vector<256x128xf32>
    %56 = arith.addf %50, %55 : vector<256x128xf32>
    %c1_47 = arith.constant 1 : index
    %c1_48 = arith.constant 1 : index
    %c0_49 = arith.constant 0 : index
    %57 = vector.load %arg8[%c1_47, %c1_48, %c0_49] : memref<18x18x128xf32, #tpu.memory_space<vmem>>, vector<16x16x128xf32>
    %58 = vector.shape_cast %57 : vector<16x16x128xf32> to vector<256x128xf32>
    %c4 = arith.constant 4 : index
    %c0_50 = arith.constant 0 : index
    %c0_51 = arith.constant 0 : index
    %59 = vector.load %arg5[%c4, %c0_50, %c0_51] : memref<9x128x128xf32, #tpu.memory_space<vmem>>, vector<1x128x128xf32>
    %60 = vector.shape_cast %59 : vector<1x128x128xf32> to vector<128x128xf32>
    %cst_52 = arith.constant dense<0.000000e+00> : vector<256x128xf32>
    %61 = tpu.matmul %58, %60, %cst_52 {dimension_numbers = #tpu.dot_dimension_numbers<[1], [0], [0], [1], [0, 0, 1, 1], [], []>} : vector<256x128xf32>, vector<128x128xf32>, vector<256x128xf32> -> vector<256x128xf32>
    %62 = arith.addf %56, %61 : vector<256x128xf32>
    %c1_53 = arith.constant 1 : index
    %c2_54 = arith.constant 2 : index
    %c0_55 = arith.constant 0 : index
    %63 = vector.load %arg8[%c1_53, %c2_54, %c0_55] : memref<18x18x128xf32, #tpu.memory_space<vmem>>, vector<16x16x128xf32>
    %64 = vector.shape_cast %63 : vector<16x16x128xf32> to vector<256x128xf32>
    %c5 = arith.constant 5 : index
    %c0_56 = arith.constant 0 : index
    %c0_57 = arith.constant 0 : index
    %65 = vector.load %arg5[%c5, %c0_56, %c0_57] : memref<9x128x128xf32, #tpu.memory_space<vmem>>, vector<1x128x128xf32>
    %66 = vector.shape_cast %65 : vector<1x128x128xf32> to vector<128x128xf32>
    %cst_58 = arith.constant dense<0.000000e+00> : vector<256x128xf32>
    %67 = tpu.matmul %64, %66, %cst_58 {dimension_numbers = #tpu.dot_dimension_numbers<[1], [0], [0], [1], [0, 0, 1, 1], [], []>} : vector<256x128xf32>, vector<128x128xf32>, vector<256x128xf32> -> vector<256x128xf32>
    %68 = arith.addf %62, %67 : vector<256x128xf32>
    %c2_59 = arith.constant 2 : index
    %c0_60 = arith.constant 0 : index
    %c0_61 = arith.constant 0 : index
    %69 = vector.load %arg8[%c2_59, %c0_60, %c0_61] : memref<18x18x128xf32, #tpu.memory_space<vmem>>, vector<16x16x128xf32>
    %70 = vector.shape_cast %69 : vector<16x16x128xf32> to vector<256x128xf32>
    %c6 = arith.constant 6 : index
    %c0_62 = arith.constant 0 : index
    %c0_63 = arith.constant 0 : index
    %71 = vector.load %arg5[%c6, %c0_62, %c0_63] : memref<9x128x128xf32, #tpu.memory_space<vmem>>, vector<1x128x128xf32>
    %72 = vector.shape_cast %71 : vector<1x128x128xf32> to vector<128x128xf32>
    %cst_64 = arith.constant dense<0.000000e+00> : vector<256x128xf32>
    %73 = tpu.matmul %70, %72, %cst_64 {dimension_numbers = #tpu.dot_dimension_numbers<[1], [0], [0], [1], [0, 0, 1, 1], [], []>} : vector<256x128xf32>, vector<128x128xf32>, vector<256x128xf32> -> vector<256x128xf32>
    %74 = arith.addf %68, %73 : vector<256x128xf32>
    %c2_65 = arith.constant 2 : index
    %c1_66 = arith.constant 1 : index
    %c0_67 = arith.constant 0 : index
    %75 = vector.load %arg8[%c2_65, %c1_66, %c0_67] : memref<18x18x128xf32, #tpu.memory_space<vmem>>, vector<16x16x128xf32>
    %76 = vector.shape_cast %75 : vector<16x16x128xf32> to vector<256x128xf32>
    %c7 = arith.constant 7 : index
    %c0_68 = arith.constant 0 : index
    %c0_69 = arith.constant 0 : index
    %77 = vector.load %arg5[%c7, %c0_68, %c0_69] : memref<9x128x128xf32, #tpu.memory_space<vmem>>, vector<1x128x128xf32>
    %78 = vector.shape_cast %77 : vector<1x128x128xf32> to vector<128x128xf32>
    %cst_70 = arith.constant dense<0.000000e+00> : vector<256x128xf32>
    %79 = tpu.matmul %76, %78, %cst_70 {dimension_numbers = #tpu.dot_dimension_numbers<[1], [0], [0], [1], [0, 0, 1, 1], [], []>} : vector<256x128xf32>, vector<128x128xf32>, vector<256x128xf32> -> vector<256x128xf32>
    %80 = arith.addf %74, %79 : vector<256x128xf32>
    %c2_71 = arith.constant 2 : index
    %c2_72 = arith.constant 2 : index
    %c0_73 = arith.constant 0 : index
    %81 = vector.load %arg8[%c2_71, %c2_72, %c0_73] : memref<18x18x128xf32, #tpu.memory_space<vmem>>, vector<16x16x128xf32>
    %82 = vector.shape_cast %81 : vector<16x16x128xf32> to vector<256x128xf32>
    %c8 = arith.constant 8 : index
    %c0_74 = arith.constant 0 : index
    %c0_75 = arith.constant 0 : index
    %83 = vector.load %arg5[%c8, %c0_74, %c0_75] : memref<9x128x128xf32, #tpu.memory_space<vmem>>, vector<1x128x128xf32>
    %84 = vector.shape_cast %83 : vector<1x128x128xf32> to vector<128x128xf32>
    %cst_76 = arith.constant dense<0.000000e+00> : vector<256x128xf32>
    %85 = tpu.matmul %82, %84, %cst_76 {dimension_numbers = #tpu.dot_dimension_numbers<[1], [0], [0], [1], [0, 0, 1, 1], [], []>} : vector<256x128xf32>, vector<128x128xf32>, vector<256x128xf32> -> vector<256x128xf32>
    %86 = arith.addf %80, %85 : vector<256x128xf32>
    %c0_77 = arith.constant 0 : index
    %c0_78 = arith.constant 0 : index
    %c0_79 = arith.constant 0 : index
    %87 = vector.load %arg6[%c0_77, %c0_78, %c0_79] : memref<1x256x128xf32, #tpu.memory_space<vmem>>, vector<1x256x128xf32>
    %88 = vector.shape_cast %87 : vector<1x256x128xf32> to vector<256x128xf32>
    %89 = vector.shape_cast %86 : vector<256x128xf32> to vector<1x256x128xf32>
    tpu.vector_store %arg6[%c0_77, %c0_78, %c0_79], %89 {strides = array<i32>} : memref<1x256x128xf32, #tpu.memory_space<vmem>>, vector<1x256x128xf32>,
    %c0_80 = arith.constant 0 : index
    %c0_81 = arith.constant 0 : index
    %90 = vector.load %arg7[%c0_80, %c0_81] : memref<8x128xf32, #tpu.memory_space<vmem>>, vector<1x128xf32>
    %cst_82 = arith.constant dense<0.000000e+00> : vector<128xf32>
    %91 = vector.multi_reduction <add>, %86, %cst_82 [0] : vector<256x128xf32> to vector<128xf32>
    %92 = vector.shape_cast %91 : vector<128xf32> to vector<1x128xf32>
    %93 = arith.addf %90, %92 : vector<1x128xf32>
    %c0_83 = arith.constant 0 : index
    %c0_84 = arith.constant 0 : index
    %94 = vector.load %arg7[%c0_83, %c0_84] : memref<8x128xf32, #tpu.memory_space<vmem>>, vector<1x128xf32>
    tpu.vector_store %arg7[%c0_83, %c0_84], %93 {strides = array<i32>} : memref<8x128xf32, #tpu.memory_space<vmem>>, vector<1x128xf32>,
    %c1_85 = arith.constant 1 : index
    %c0_86 = arith.constant 0 : index
    %95 = vector.load %arg7[%c1_85, %c0_86] : memref<8x128xf32, #tpu.memory_space<vmem>>, vector<1x128xf32>
    %96 = arith.mulf %86, %86 : vector<256x128xf32>
    %cst_87 = arith.constant dense<0.000000e+00> : vector<128xf32>
    %97 = vector.multi_reduction <add>, %96, %cst_87 [0] : vector<256x128xf32> to vector<128xf32>
    %98 = vector.shape_cast %97 : vector<128xf32> to vector<1x128xf32>
    %99 = arith.addf %95, %98 : vector<1x128xf32>
    %c1_88 = arith.constant 1 : index
    %c0_89 = arith.constant 0 : index
    %100 = vector.load %arg7[%c1_88, %c0_89] : memref<8x128xf32, #tpu.memory_space<vmem>>, vector<1x128xf32>
    tpu.vector_store %arg7[%c1_88, %c0_89], %99 {strides = array<i32>} : memref<8x128xf32, #tpu.memory_space<vmem>>, vector<1x128xf32>,
    return
  }
  func.func @transform_0(%arg0: i32) -> (i32, i32, i32) {
    %c0_i32 = arith.constant 0 : i32
    %c0_i32_0 = arith.constant 0 : i32
    %c0_i32_1 = arith.constant 0 : i32
    return %arg0, %c0_i32, %c0_i32_0 : i32, i32, i32
  }
  func.func @transform_1(%arg0: i32) -> (i32, i32) {
    %c0_i32 = arith.constant 0 : i32
    %c0_i32_0 = arith.constant 0 : i32
    %c0_i32_1 = arith.constant 0 : i32
    return %c0_i32, %c0_i32_0 : i32, i32
  }
  func.func @transform_2(%arg0: i32) -> (i32, i32) {
    %c0_i32 = arith.constant 0 : i32
    %c0_i32_0 = arith.constant 0 : i32
    %c0_i32_1 = arith.constant 0 : i32
    return %c0_i32, %c0_i32_0 : i32, i32
  }
  func.func @transform_3(%arg0: i32) -> (i32, i32) {
    %c0_i32 = arith.constant 0 : i32
    %c0_i32_0 = arith.constant 0 : i32
    %c0_i32_1 = arith.constant 0 : i32
    return %c0_i32, %c0_i32_0 : i32, i32
  }
  func.func @transform_4(%arg0: i32) -> (i32, i32, i32) {
    %c0_i32 = arith.constant 0 : i32
    %c0_i32_0 = arith.constant 0 : i32
    %c0_i32_1 = arith.constant 0 : i32
    %c0_i32_2 = arith.constant 0 : i32
    return %c0_i32, %c0_i32_0, %c0_i32_1 : i32, i32, i32
  }
  func.func @transform_5(%arg0: i32) -> (i32, i32, i32) {
    %c0_i32 = arith.constant 0 : i32
    %c0_i32_0 = arith.constant 0 : i32
    %c0_i32_1 = arith.constant 0 : i32
    return %arg0, %c0_i32, %c0_i32_0 : i32, i32, i32
  }
  func.func @transform_6(%arg0: i32) -> (i32, i32) {
    %c0_i32 = arith.constant 0 : i32
    %c0_i32_0 = arith.constant 0 : i32
    %c0_i32_1 = arith.constant 0 : i32
    return %c0_i32, %c0_i32_0 : i32, i32
  }
}

module attributes {stable_mosaic.version = 11 : i64} {
  func.func @_bn_add_relu_kernel(%arg0: i32, %arg1: memref<1x256x128xf32, #tpu.memory_space<vmem>>, %arg2: memref<1x256x128xf32, #tpu.memory_space<vmem>>, %arg3: memref<8x128xf32, #tpu.memory_space<vmem>>, %arg4: memref<8x128xf32, #tpu.memory_space<vmem>>, %arg5: memref<1x128xf32, #tpu.memory_space<vmem>>, %arg6: memref<1x128xf32, #tpu.memory_space<vmem>>, %arg7: memref<1x128xf32, #tpu.memory_space<vmem>>, %arg8: memref<1x128xf32, #tpu.memory_space<vmem>>, %arg9: memref<1x8x256xf32, #tpu.memory_space<vmem>>) attributes {dimension_semantics = [#tpu.dimension_semantics<parallel>], iteration_bounds = array<i64: 2>, scalar_prefetch = 0 : i64, scratch_operands = 0 : i64, tpu.core_type = #tpu.core_type<tc>, window_params = [{transform_indices = @transform_0, window_bounds = array<i64: 1, 256, 128>}, {transform_indices = @transform_1, window_bounds = array<i64: 1, 256, 128>}, {pipeline_mode = #tpu.pipeline_mode<synchronous>, transform_indices = @transform_2, window_bounds = array<i64: 8, 128>}, {pipeline_mode = #tpu.pipeline_mode<synchronous>, transform_indices = @transform_3, window_bounds = array<i64: 8, 128>}, {pipeline_mode = #tpu.pipeline_mode<synchronous>, transform_indices = @transform_4, window_bounds = array<i64: 1, 128>}, {pipeline_mode = #tpu.pipeline_mode<synchronous>, transform_indices = @transform_5, window_bounds = array<i64: 1, 128>}, {pipeline_mode = #tpu.pipeline_mode<synchronous>, transform_indices = @transform_6, window_bounds = array<i64: 1, 128>}, {pipeline_mode = #tpu.pipeline_mode<synchronous>, transform_indices = @transform_7, window_bounds = array<i64: 1, 128>}, {transform_indices = @transform_8, window_bounds = array<i64: 1, 8, 256>}]} {
    %c0 = arith.constant 0 : index
    %c0_0 = arith.constant 0 : index
    %0 = vector.load %arg4[%c0, %c0_0] : memref<8x128xf32, #tpu.memory_space<vmem>>, vector<1x128xf32>
    %cst = arith.constant 0.001953125 : f32
    %1 = vector.broadcast %cst : f32 to vector<1x128xf32>
    %2 = arith.mulf %0, %1 : vector<1x128xf32>
    %c1 = arith.constant 1 : index
    %c0_1 = arith.constant 0 : index
    %3 = vector.load %arg4[%c1, %c0_1] : memref<8x128xf32, #tpu.memory_space<vmem>>, vector<1x128xf32>
    %cst_2 = arith.constant 0.001953125 : f32
    %4 = vector.broadcast %cst_2 : f32 to vector<1x128xf32>
    %5 = arith.mulf %3, %4 : vector<1x128xf32>
    %6 = arith.mulf %2, %2 : vector<1x128xf32>
    %7 = arith.subf %5, %6 : vector<1x128xf32>
    %c0_3 = arith.constant 0 : index
    %c0_4 = arith.constant 0 : index
    %c0_5 = arith.constant 0 : index
    %8 = vector.load %arg1[%c0_3, %c0_4, %c0_5] : memref<1x256x128xf32, #tpu.memory_space<vmem>>, vector<1x256x128xf32>
    %9 = vector.shape_cast %8 : vector<1x256x128xf32> to vector<256x128xf32>
    %10 = vector.broadcast %2 : vector<1x128xf32> to vector<256x128xf32>
    %11 = arith.subf %9, %10 : vector<256x128xf32>
    %cst_6 = arith.constant 9.99999974E-6 : f32
    %12 = vector.broadcast %cst_6 : f32 to vector<1x128xf32>
    %13 = arith.addf %7, %12 : vector<1x128xf32>
    %14 = math.rsqrt %13 : vector<1x128xf32>
    %15 = vector.broadcast %14 : vector<1x128xf32> to vector<256x128xf32>
    %16 = arith.mulf %11, %15 : vector<256x128xf32>
    %c0_7 = arith.constant 0 : index
    %c0_8 = arith.constant 0 : index
    %17 = vector.load %arg5[%c0_7, %c0_8] : memref<1x128xf32, #tpu.memory_space<vmem>>, vector<1x128xf32>
    %18 = vector.broadcast %17 : vector<1x128xf32> to vector<256x128xf32>
    %19 = arith.mulf %16, %18 : vector<256x128xf32>
    %c0_9 = arith.constant 0 : index
    %c0_10 = arith.constant 0 : index
    %20 = vector.load %arg6[%c0_9, %c0_10] : memref<1x128xf32, #tpu.memory_space<vmem>>, vector<1x128xf32>
    %21 = vector.broadcast %20 : vector<1x128xf32> to vector<256x128xf32>
    %22 = arith.addf %19, %21 : vector<256x128xf32>
    %c2 = arith.constant 2 : index
    %c0_11 = arith.constant 0 : index
    %23 = vector.load %arg3[%c2, %c0_11] : memref<8x128xf32, #tpu.memory_space<vmem>>, vector<1x128xf32>
    %cst_12 = arith.constant 0.001953125 : f32
    %24 = vector.broadcast %cst_12 : f32 to vector<1x128xf32>
    %25 = arith.mulf %23, %24 : vector<1x128xf32>
    %c3 = arith.constant 3 : index
    %c0_13 = arith.constant 0 : index
    %26 = vector.load %arg3[%c3, %c0_13] : memref<8x128xf32, #tpu.memory_space<vmem>>, vector<1x128xf32>
    %cst_14 = arith.constant 0.001953125 : f32
    %27 = vector.broadcast %cst_14 : f32 to vector<1x128xf32>
    %28 = arith.mulf %26, %27 : vector<1x128xf32>
    %29 = arith.mulf %25, %25 : vector<1x128xf32>
    %30 = arith.subf %28, %29 : vector<1x128xf32>
    %c0_15 = arith.constant 0 : index
    %c0_16 = arith.constant 0 : index
    %c0_17 = arith.constant 0 : index
    %31 = vector.load %arg2[%c0_15, %c0_16, %c0_17] : memref<1x256x128xf32, #tpu.memory_space<vmem>>, vector<1x256x128xf32>
    %32 = vector.shape_cast %31 : vector<1x256x128xf32> to vector<256x128xf32>
    %33 = vector.broadcast %25 : vector<1x128xf32> to vector<256x128xf32>
    %34 = arith.subf %32, %33 : vector<256x128xf32>
    %cst_18 = arith.constant 9.99999974E-6 : f32
    %35 = vector.broadcast %cst_18 : f32 to vector<1x128xf32>
    %36 = arith.addf %30, %35 : vector<1x128xf32>
    %37 = math.rsqrt %36 : vector<1x128xf32>
    %38 = vector.broadcast %37 : vector<1x128xf32> to vector<256x128xf32>
    %39 = arith.mulf %34, %38 : vector<256x128xf32>
    %c0_19 = arith.constant 0 : index
    %c0_20 = arith.constant 0 : index
    %40 = vector.load %arg7[%c0_19, %c0_20] : memref<1x128xf32, #tpu.memory_space<vmem>>, vector<1x128xf32>
    %41 = vector.broadcast %40 : vector<1x128xf32> to vector<256x128xf32>
    %42 = arith.mulf %39, %41 : vector<256x128xf32>
    %c0_21 = arith.constant 0 : index
    %c0_22 = arith.constant 0 : index
    %43 = vector.load %arg8[%c0_21, %c0_22] : memref<1x128xf32, #tpu.memory_space<vmem>>, vector<1x128xf32>
    %44 = vector.broadcast %43 : vector<1x128xf32> to vector<256x128xf32>
    %45 = arith.addf %42, %44 : vector<256x128xf32>
    %46 = arith.addf %22, %45 : vector<256x128xf32>
    %cst_23 = arith.constant 0.000000e+00 : f32
    %47 = vector.broadcast %cst_23 : f32 to vector<256x128xf32>
    %48 = arith.maximumf %46, %47 : vector<256x128xf32>
    %49 = tpu.transpose %48, [1, 0] : vector<256x128xf32> -> vector<128x256xf32>
    %50 = vector.extract_strided_slice %49 {offsets = [0, 0], sizes = [8, 256], strides = [1, 1]} : vector<128x256xf32> to vector<8x256xf32>
    %c0_24 = arith.constant 0 : index
    %c0_25 = arith.constant 0 : index
    %c0_26 = arith.constant 0 : index
    %51 = vector.load %arg9[%c0_24, %c0_25, %c0_26] : memref<1x8x256xf32, #tpu.memory_space<vmem>>, vector<1x8x256xf32>
    %52 = vector.shape_cast %51 : vector<1x8x256xf32> to vector<8x256xf32>
    %53 = vector.shape_cast %50 : vector<8x256xf32> to vector<1x8x256xf32>
    tpu.vector_store %arg9[%c0_24, %c0_25, %c0_26], %53 {strides = array<i32>} : memref<1x8x256xf32, #tpu.memory_space<vmem>>, vector<1x8x256xf32>,
    return
  }
  func.func @transform_0(%arg0: i32) -> (i32, i32, i32) {
    %c0_i32 = arith.constant 0 : i32
    %c0_i32_0 = arith.constant 0 : i32
    %c0_i32_1 = arith.constant 0 : i32
    return %arg0, %c0_i32, %c0_i32_0 : i32, i32, i32
  }
  func.func @transform_1(%arg0: i32) -> (i32, i32, i32) {
    %c0_i32 = arith.constant 0 : i32
    %c0_i32_0 = arith.constant 0 : i32
    %c0_i32_1 = arith.constant 0 : i32
    return %arg0, %c0_i32, %c0_i32_0 : i32, i32, i32
  }
  func.func @transform_2(%arg0: i32) -> (i32, i32) {
    %c0_i32 = arith.constant 0 : i32
    %c0_i32_0 = arith.constant 0 : i32
    %c0_i32_1 = arith.constant 0 : i32
    return %c0_i32, %c0_i32_0 : i32, i32
  }
  func.func @transform_3(%arg0: i32) -> (i32, i32) {
    %c0_i32 = arith.constant 0 : i32
    %c0_i32_0 = arith.constant 0 : i32
    %c0_i32_1 = arith.constant 0 : i32
    return %c0_i32, %c0_i32_0 : i32, i32
  }
  func.func @transform_4(%arg0: i32) -> (i32, i32) {
    %c0_i32 = arith.constant 0 : i32
    %c0_i32_0 = arith.constant 0 : i32
    %c0_i32_1 = arith.constant 0 : i32
    return %c0_i32, %c0_i32_0 : i32, i32
  }
  func.func @transform_5(%arg0: i32) -> (i32, i32) {
    %c0_i32 = arith.constant 0 : i32
    %c0_i32_0 = arith.constant 0 : i32
    %c0_i32_1 = arith.constant 0 : i32
    return %c0_i32, %c0_i32_0 : i32, i32
  }
  func.func @transform_6(%arg0: i32) -> (i32, i32) {
    %c0_i32 = arith.constant 0 : i32
    %c0_i32_0 = arith.constant 0 : i32
    %c0_i32_1 = arith.constant 0 : i32
    return %c0_i32, %c0_i32_0 : i32, i32
  }
  func.func @transform_7(%arg0: i32) -> (i32, i32) {
    %c0_i32 = arith.constant 0 : i32
    %c0_i32_0 = arith.constant 0 : i32
    %c0_i32_1 = arith.constant 0 : i32
    return %c0_i32, %c0_i32_0 : i32, i32
  }
  func.func @transform_8(%arg0: i32) -> (i32, i32, i32) {
    %c0_i32 = arith.constant 0 : i32
    %c0_i32_0 = arith.constant 0 : i32
    %c0_i32_1 = arith.constant 0 : i32
    return %arg0, %c0_i32, %c0_i32_0 : i32, i32, i32
  }
}

</mosaic_0001>

<llo_original>
// kernel: residual_block_forward.5
$region0: #{residual_block_forward.5}
  #allocation0 [shape = 'u32[]', space=smem, size = 0x4, offset = 0x4, fixed_abs, tag = 'smem constant byte address 0x4 - core index']
  #allocation1 [shape = 'u32[144,128]{1,0:T(1,128)}', space=vmem, size = 0x12000, scoped, tag = 'internal scratch']
  %s0 = inlined_call_operand.vmem [shape: f32[2,256,128], index: 0, kind: input, shape index: {}]
  %s1 = inlined_call_operand.vmem [shape: f32[2,256,128], index: 1, kind: input, shape index: {}]
  %s2 = inlined_call_operand.vmem [shape: f32[8,128], index: 2, kind: input, shape index: {}]
  %s3 = inlined_call_operand.vmem [shape: f32[8,128], index: 3, kind: input, shape index: {}]
  %s4 = inlined_call_operand.vmem [shape: f32[1,128], index: 4, kind: input, shape index: {}]
  %s5 = inlined_call_operand.vmem [shape: f32[1,128], index: 5, kind: input, shape index: {}]
  %s6 = inlined_call_operand.vmem [shape: f32[1,128], index: 6, kind: input, shape index: {}]
  %s7 = inlined_call_operand.vmem [shape: f32[1,128], index: 7, kind: input, shape index: {}]
  %s8 = inlined_call_operand.vmem [shape: f32[2,8,256], index: 8, kind: output, shape index: {}]
  %s9 = sld [smem:[#allocation0]]
  $region65: #{residual_block_forward.5} parent=0
    _
  %s11 = ssub.s32 1, %s9
  %s12 = scalar_select 0, %s11, %s9
  loop: start=0, step=1, limit=4
  $region2: #{residual_block_forward.5} parent=0 // loop_pre_header
    _
  $region3: #{residual_block_forward.5} parent=0 // loop_header
    %s14 = sphi 0, %s18
    %p15 = scmp.ge.s32.totalorder %s14, 4
    %s24 = sphi 0, %s26
    %s27 = sphi 0, %s24
    %s28 = sphi 0, %s27
    %s44 = sphi 0, %s28
    %s50 = sphi 0, %s52
    %s53 = sphi 0, %s50
    %s54 = sphi 0, %s53
    %s70 = sphi 0, %s54
    %s74 = sphi 0, %s74
    %s76 = sphi 0, %s74
    %s77 = sphi 0, %s76
    %s91 = sphi 0, %s77
    %s95 = sphi 0, %s95
    %s97 = sphi 0, %s95
    %s98 = sphi 0, %s97
    %s112 = sphi 0, %s98
    %s116 = sphi 0, %s116
    %s118 = sphi 0, %s116
    %s119 = sphi 0, %s118
    %s133 = sphi 0, %s119
    %s137 = sphi 0, %s137
    %s139 = sphi 0, %s137
    %s140 = sphi 0, %s139
    %s154 = sphi 0, %s140
    %s158 = sphi 0, %s158
    %s160 = sphi 0, %s158
    %s161 = sphi 0, %s160
    %s175 = sphi 0, %s161
    %s179 = sphi 0, %s179
    %s181 = sphi 0, %s179
    %s182 = sphi 0, %s181
    %s196 = sphi 0, %s182
    %s202 = sphi 0, %s204
    %s205 = sphi 0, %s202
    %s206 = sphi 0, %s205
    %s222 = sphi 0, %s206
  $region4: #{residual_block_forward.5} parent=0 // loop_header_branch
    %17 = sbr.rel (%p15) target = $region8
  $region5: #{residual_block_forward.5} parent=0 // loop_body
    %s19 = ssub.s32 %s14, 1
    %s20 = ssub.s32 %s14, 2
    %s21 = sadd.s32 %s14, 1
    %s22 = ssub.s32 %s14, %s21
    %p23 = scmp.eq.s32.totalorder %s22, 0
    %s25 = sadd.s32 %s24, 1
    %s26 = scalar_select %p23, %s24, %s25
    %p29 = pneg %p23
    %p30 = scmp.eq.s32.totalorder %s14, 1
    %p31 = por %p29, %p30
    %p32 = scmp.ne.s32.totalorder %s24, %s27
    %p33 = scmp.eq.s32.totalorder %s14, 0
    %p34 = por %p32, %p33
    %p35 = scmp.ne.s32.totalorder %s24, %s27
    %p36 = scmp.eq.s32.totalorder %s19, 1
    %p37 = por %p35, %p36
    %p38 = scmp.ne.s32.totalorder %s27, %s28
    %p39 = scmp.eq.s32.totalorder %s19, 0
    %p40 = por %p38, %p39
    %p41 = scmp.ne.s32.totalorder %s27, %s28
    %p42 = scmp.eq.s32.totalorder %s20, 1
    %p43 = por %p41, %p42
    %p45 = scmp.ne.s32.totalorder %s28, %s44
    %p46 = scmp.eq.s32.totalorder %s20, 0
    %p47 = por %p45, %p46
    %s48 = ssub.s32 %s14, %s21
    %p49 = scmp.eq.s32.totalorder %s48, 0
    %s51 = sadd.s32 %s50, 1
    %s52 = scalar_select %p49, %s50, %s51
    %p55 = pneg %p49
    %p56 = scmp.eq.s32.totalorder %s14, 1
    %p57 = por %p55, %p56
    %p58 = scmp.ne.s32.totalorder %s50, %s53
    %p59 = scmp.eq.s32.totalorder %s14, 0
    %p60 = por %p58, %p59
    %p61 = scmp.ne.s32.totalorder %s50, %s53
    %p62 = scmp.eq.s32.totalorder %s19, 1
    %p63 = por %p61, %p62
    %p64 = scmp.ne.s32.totalorder %s53, %s54
    %p65 = scmp.eq.s32.totalorder %s19, 0
    %p66 = por %p64, %p65
    %p67 = scmp.ne.s32.totalorder %s53, %s54
    %p68 = scmp.eq.s32.totalorder %s20, 1
    %p69 = por %p67, %p68
    %p71 = scmp.ne.s32.totalorder %s54, %s70
    %p72 = scmp.eq.s32.totalorder %s20, 0
    %p73 = por %p71, %p72
    %s75 = sadd.s32 %s74, 1
    %p78 = scmp.eq.s32.totalorder %s14, 1
    %p79 = scmp.ne.s32.totalorder %s74, %s76
    %p80 = scmp.eq.s32.totalorder %s14, 0
    %p81 = por %p79, %p80
    %p82 = scmp.ne.s32.totalorder %s74, %s76
    %p83 = scmp.eq.s32.totalorder %s19, 1
    %p84 = por %p82, %p83
    %p85 = scmp.ne.s32.totalorder %s76, %s77
    %p86 = scmp.eq.s32.totalorder %s19, 0
    %p87 = por %p85, %p86
    %p88 = scmp.ne.s32.totalorder %s76, %s77
    %p89 = scmp.eq.s32.totalorder %s20, 1
    %p90 = por %p88, %p89
    %p92 = scmp.ne.s32.totalorder %s77, %s91
    %p93 = scmp.eq.s32.totalorder %s20, 0
    %p94 = por %p92, %p93
    %s96 = sadd.s32 %s95, 1
    %p99 = scmp.eq.s32.totalorder %s14, 1
    %p100 = scmp.ne.s32.totalorder %s95, %s97
    %p101 = scmp.eq.s32.totalorder %s14, 0
    %p102 = por %p100, %p101
    %p103 = scmp.ne.s32.totalorder %s95, %s97
    %p104 = scmp.eq.s32.totalorder %s19, 1
    %p105 = por %p103, %p104
    %p106 = scmp.ne.s32.totalorder %s97, %s98
    %p107 = scmp.eq.s32.totalorder %s19, 0
    %p108 = por %p106, %p107
    %p109 = scmp.ne.s32.totalorder %s97, %s98
    %p110 = scmp.eq.s32.totalorder %s20, 1
    %p111 = por %p109, %p110
    %p113 = scmp.ne.s32.totalorder %s98, %s112
    %p114 = scmp.eq.s32.totalorder %s20, 0
    %p115 = por %p113, %p114
    %s117 = sadd.s32 %s116, 1
    %p120 = scmp.eq.s32.totalorder %s14, 1
    %p121 = scmp.ne.s32.totalorder %s116, %s118
    %p122 = scmp.eq.s32.totalorder %s14, 0
    %p123 = por %p121, %p122
    %p124 = scmp.ne.s32.totalorder %s116, %s118
    %p125 = scmp.eq.s32.totalorder %s19, 1
    %p126 = por %p124, %p125
    %p127 = scmp.ne.s32.totalorder %s118, %s119
    %p128 = scmp.eq.s32.totalorder %s19, 0
    %p129 = por %p127, %p128
    %p130 = scmp.ne.s32.totalorder %s118, %s119
    %p131 = scmp.eq.s32.totalorder %s20, 1
    %p132 = por %p130, %p131
    %p134 = scmp.ne.s32.totalorder %s119, %s133
    %p135 = scmp.eq.s32.totalorder %s20, 0
    %p136 = por %p134, %p135
    %s138 = sadd.s32 %s137, 1
    %p141 = scmp.eq.s32.totalorder %s14, 1
    %p142 = scmp.ne.s32.totalorder %s137, %s139
    %p143 = scmp.eq.s32.totalorder %s14, 0
    %p144 = por %p142, %p143
    %p145 = scmp.ne.s32.totalorder %s137, %s139
    %p146 = scmp.eq.s32.totalorder %s19, 1
    %p147 = por %p145, %p146
    %p148 = scmp.ne.s32.totalorder %s139, %s140
    %p149 = scmp.eq.s32.totalorder %s19, 0
    %p150 = por %p148, %p149
    %p151 = scmp.ne.s32.totalorder %s139, %s140
    %p152 = scmp.eq.s32.totalorder %s20, 1
    %p153 = por %p151, %p152
    %p155 = scmp.ne.s32.totalorder %s140, %s154
    %p156 = scmp.eq.s32.totalorder %s20, 0
    %p157 = por %p155, %p156
    %s159 = sadd.s32 %s158, 1
    %p162 = scmp.eq.s32.totalorder %s14, 1
    %p163 = scmp.ne.s32.totalorder %s158, %s160
    %p164 = scmp.eq.s32.totalorder %s14, 0
    %p165 = por %p163, %p164
    %p166 = scmp.ne.s32.totalorder %s158, %s160
    %p167 = scmp.eq.s32.totalorder %s19, 1
    %p168 = por %p166, %p167
    %p169 = scmp.ne.s32.totalorder %s160, %s161
    %p170 = scmp.eq.s32.totalorder %s19, 0
    %p171 = por %p169, %p170
    %p172 = scmp.ne.s32.totalorder %s160, %s161
    %p173 = scmp.eq.s32.totalorder %s20, 1
    %p174 = por %p172, %p173
    %p176 = scmp.ne.s32.totalorder %s161, %s175
    %p177 = scmp.eq.s32.totalorder %s20, 0
    %p178 = por %p176, %p177
    %s180 = sadd.s32 %s179, 1
    %p183 = scmp.eq.s32.totalorder %s14, 1
    %p184 = scmp.ne.s32.totalorder %s179, %s181
    %p185 = scmp.eq.s32.totalorder %s14, 0
    %p186 = por %p184, %p185
    %p187 = scmp.ne.s32.totalorder %s179, %s181
    %p188 = scmp.eq.s32.totalorder %s19, 1
    %p189 = por %p187, %p188
    %p190 = scmp.ne.s32.totalorder %s181, %s182
    %p191 = scmp.eq.s32.totalorder %s19, 0
    %p192 = por %p190, %p191
    %p193 = scmp.ne.s32.totalorder %s181, %s182
    %p194 = scmp.eq.s32.totalorder %s20, 1
    %p195 = por %p193, %p194
    %p197 = scmp.ne.s32.totalorder %s182, %s196
    %p198 = scmp.eq.s32.totalorder %s20, 0
    %p199 = por %p197, %p198
    %s200 = ssub.s32 %s14, %s21
    %p201 = scmp.eq.s32.totalorder %s200, 0
    %s203 = sadd.s32 %s202, 1
    %s204 = scalar_select %p201, %s202, %s203
    %p207 = pneg %p201
    %p208 = scmp.eq.s32.totalorder %s14, 1
    %p209 = por %p207, %p208
    %p210 = scmp.ne.s32.totalorder %s202, %s205
    %p211 = scmp.eq.s32.totalorder %s14, 0
    %p212 = por %p210, %p211
    %p213 = scmp.ne.s32.totalorder %s202, %s205
    %p214 = scmp.eq.s32.totalorder %s19, 1
    %p215 = por %p213, %p214
    %p216 = scmp.ne.s32.totalorder %s205, %s206
    %p217 = scmp.eq.s32.totalorder %s19, 0
    %p218 = por %p216, %p217
    %p219 = scmp.ne.s32.totalorder %s205, %s206
    %p220 = scmp.eq.s32.totalorder %s20, 1
    %p221 = por %p219, %p220
    %p223 = scmp.ne.s32.totalorder %s206, %s222
    %p224 = scmp.eq.s32.totalorder %s20, 0
    %p225 = por %p223, %p224
    %p226 = scmp.le.s32.totalorder 1, %s14
    %p227 = scmp.lt.s32.totalorder %s14, 3
    %p228 = pnand %p226, %p227
    %p229 = pneg %p228
    // Predicated region
    $region9: #{residual_block_forward.5} parent=5 // pred_check
      _
    $region10: #{residual_block_forward.5} parent=5 // pred_check_branch
      %231 = sbr.rel (%p228) target = $region12
    $region11: #{residual_block_forward.5} parent=5 // pred_region
      %s232 = ssub.s32 %s14, 1
      // Predicated region
      $region13: #{residual_block_forward.5} parent=11 // pred_check
        %p233 = pneg %p87
      $region14: #{residual_block_forward.5} parent=11 // pred_check_branch
        %235 = sbr.rel (%p233) target = $region16
      $region15: #{residual_block_forward.5} parent=11 // pred_region
        _
      $region16: #{residual_block_forward.5} parent=11 // pred_fallthru
        _
      // Predicated region
      $region17: #{residual_block_forward.5} parent=11 // pred_check
        %p236 = pneg %p108
      $region18: #{residual_block_forward.5} parent=11 // pred_check_branch
        %238 = sbr.rel (%p236) target = $region20
      $region19: #{residual_block_forward.5} parent=11 // pred_region
        _
      $region20: #{residual_block_forward.5} parent=11 // pred_fallthru
        _
      // Predicated region
      $region21: #{residual_block_forward.5} parent=11 // pred_check
        %p239 = pneg %p129
      $region22: #{residual_block_forward.5} parent=11 // pred_check_branch
        %241 = sbr.rel (%p239) target = $region24
      $region23: #{residual_block_forward.5} parent=11 // pred_region
        _
      $region24: #{residual_block_forward.5} parent=11 // pred_fallthru
        _
      // Predicated region
      $region25: #{residual_block_forward.5} parent=11 // pred_check
        %p242 = pneg %p150
      $region26: #{residual_block_forward.5} parent=11 // pred_check_branch
        %244 = sbr.rel (%p242) target = $region28
      $region27: #{residual_block_forward.5} parent=11 // pred_region
        _
      $region28: #{residual_block_forward.5} parent=11 // pred_fallthru
        _
      // Predicated region
      $region29: #{residual_block_forward.5} parent=11 // pred_check
        %p245 = pneg %p171
      $region30: #{residual_block_forward.5} parent=11 // pred_check_branch
        %247 = sbr.rel (%p245) target = $region32
      $region31: #{residual_block_forward.5} parent=11 // pred_region
        _
      $region32: #{residual_block_forward.5} parent=11 // pred_fallthru
        _
      // Predicated region
      $region33: #{residual_block_forward.5} parent=11 // pred_check
        %p248 = pneg %p192
      $region34: #{residual_block_forward.5} parent=11 // pred_check_branch
        %250 = sbr.rel (%p248) target = $region36
      $region35: #{residual_block_forward.5} parent=11 // pred_region
        _
      $region36: #{residual_block_forward.5} parent=11 // pred_fallthru
        _
    $region12: #{residual_block_forward.5} parent=5 // pred_fallthru
      _
    %p251 = scmp.lt.s32.totalorder %s14, 2
    // Predicated region
    $region37: #{residual_block_forward.5} parent=5 // pred_check
      %p252 = pneg %p251
    $region38: #{residual_block_forward.5} parent=5 // pred_check_branch
      %254 = sbr.rel (%p252) target = $region40
    $region39: #{residual_block_forward.5} parent=5 // pred_region
      // Predicated region
      $region41: #{residual_block_forward.5} parent=39 // pred_check
        %p255 = pneg %p34
      $region42: #{residual_block_forward.5} parent=39 // pred_check_branch
        %257 = sbr.rel (%p255) target = $region44
      $region43: #{residual_block_forward.5} parent=39 // pred_region
        %p258 = scmp.lt.s32.totalorder %s14, 1
        %s259 = scalar_select %p258, %s14, 1
        %s260 = smul.addr %s259, 32
        %s261 = smul.addr %s260, 8
        %s262 = scalar_lea.vmem %s0, %s261
      $region44: #{residual_block_forward.5} parent=39 // pred_fallthru
        _
      // Predicated region
      $region45: #{residual_block_forward.5} parent=39 // pred_check
        %p263 = pneg %p60
      $region46: #{residual_block_forward.5} parent=39 // pred_check_branch
        %265 = sbr.rel (%p263) target = $region48
      $region47: #{residual_block_forward.5} parent=39 // pred_region
        %p266 = scmp.lt.s32.totalorder %s14, 1
        %s267 = scalar_select %p266, %s14, 1
        %s268 = smul.addr %s267, 32
        %s269 = smul.addr %s268, 8
        %s270 = scalar_lea.vmem %s1, %s269
      $region48: #{residual_block_forward.5} parent=39 // pred_fallthru
        _
    $region40: #{residual_block_forward.5} parent=5 // pred_fallthru
      _
    %p271 = scmp.le.s32.totalorder 1, %s14
    %p272 = scmp.lt.s32.totalorder %s14, 3
    %p273 = pnand %p271, %p272
    %p274 = pneg %p273
    // Predicated region
    $region49: #{residual_block_forward.5} parent=5 // pred_check
      _
    $region50: #{residual_block_forward.5} parent=5 // pred_check_branch
      %276 = sbr.rel (%p273) target = $region52
    $region51: #{residual_block_forward.5} parent=5 // pred_region
      %s277 = ssub.s32 %s14, 1
      %p278 = scmp.lt.s32.totalorder %s19, 1
      %s279 = scalar_select %p278, %s19, 1
      %s280 = smul.addr %s279, 32
      %s281 = smul.addr %s280, 8
      %s282 = scalar_lea.vmem %s0, %s281
      %p283 = pneg %p40
      %p284 = pneg %p37
      %p285 = scmp.lt.s32.totalorder %s19, 1
      %s286 = scalar_select %p285, %s19, 1
      %s287 = smul.addr %s286, 32
      %s288 = smul.addr %s287, 8
      %s289 = scalar_lea.vmem %s1, %s288
      %p290 = pneg %p66
      %p291 = pneg %p63
      %p292 = pneg %p87
      %p293 = pneg %p84
      %p294 = pneg %p108
      %p295 = pneg %p105
      %p296 = pneg %p129
      %p297 = pneg %p126
      %p298 = pneg %p150
      %p299 = pneg %p147
      %p300 = pneg %p171
      %p301 = pneg %p168
      %p302 = pneg %p192
      %p303 = pneg %p189
      %p304 = pneg %p218
      %p305 = pneg %p215
      %p306 = scmp.lt.s32.totalorder %s19, 1
      %s307 = scalar_select %p306, %s19, 1
      %s308 = smul.addr %s307, 2
      %s309 = smul.addr %s308, 8
      %s310 = scalar_lea.vmem %s8, %s309
      %p311 = scmp.lt.s32.totalorder %s19, 1
      %s312 = scalar_select %p311, %s19, 1
      %s313 = smul.addr %s312, 32
      %s314 = smul.addr %s313, 8
      %s315 = scalar_lea.vmem %s0, %s314
      %p316 = scmp.lt.s32.totalorder %s19, 1
      %s317 = scalar_select %p316, %s19, 1
      %s318 = smul.addr %s317, 32
      %s319 = smul.addr %s318, 8
      %s320 = scalar_lea.vmem %s1, %s319
      %p321 = scmp.lt.s32.totalorder %s19, 1
      %s322 = scalar_select %p321, %s19, 1
      %s323 = smul.addr %s322, 2
      %s324 = smul.addr %s323, 8
      %s325 = scalar_lea.vmem %s8, %s324
      %v326 = vld [vmem:[%s3] sm:$0x1]
      %v327 = vmul.f32 %v326, 0.001953125
      %v328 = vld [vmem:[%s3 + $0x1] sm:$0x1]
      %v329 = vmul.f32 %v328, 0.001953125
      %v330 = vmul.f32 %v327, %v327
      %v331 = vsub.f32 %v329, %v330
      %v332 = vld [vmem:[%s315] sm:$0xff]
      %v333 = vld [vmem:[%s315 + $0x8] sm:$0xff]
      %v334 = vld [vmem:[%s315 + $0x10] sm:$0xff]
      %v335 = vld [vmem:[%s315 + $0x18] sm:$0xff]
      %v336 = vld [vmem:[%s315 + $0x20] sm:$0xff]
      %v337 = vld [vmem:[%s315 + $0x28] sm:$0xff]
      %v338 = vld [vmem:[%s315 + $0x30] sm:$0xff]
      %v339 = vld [vmem:[%s315 + $0x38] sm:$0xff]
      %v340 = vld [vmem:[%s315 + $0x40] sm:$0xff]
      %v341 = vld [vmem:[%s315 + $0x48] sm:$0xff]
      %v342 = vld [vmem:[%s315 + $0x50] sm:$0xff]
      %v343 = vld [vmem:[%s315 + $0x58] sm:$0xff]
      %v344 = vld [vmem:[%s315 + $0x60] sm:$0xff]
      %v345 = vld [vmem:[%s315 + $0x68] sm:$0xff]
      %v346 = vld [vmem:[%s315 + $0x70] sm:$0xff]
      %v347 = vld [vmem:[%s315 + $0x78] sm:$0xff]
      %v348 = vld [vmem:[%s315 + $0x80] sm:$0xff]
      %v349 = vld [vmem:[%s315 + $0x88] sm:$0xff]
      %v350 = vld [vmem:[%s315 + $0x90] sm:$0xff]
      %v351 = vld [vmem:[%s315 + $0x98] sm:$0xff]
      %v352 = vld [vmem:[%s315 + $0xa0] sm:$0xff]
      %v353 = vld [vmem:[%s315 + $0xa8] sm:$0xff]
      %v354 = vld [vmem:[%s315 + $0xb0] sm:$0xff]
      %v355 = vld [vmem:[%s315 + $0xb8] sm:$0xff]
      %v356 = vld [vmem:[%s315 + $0xc0] sm:$0xff]
      %v357 = vld [vmem:[%s315 + $0xc8] sm:$0xff]
      %v358 = vld [vmem:[%s315 + $0xd0] sm:$0xff]
      %v359 = vld [vmem:[%s315 + $0xd8] sm:$0xff]
      %v360 = vld [vmem:[%s315 + $0xe0] sm:$0xff]
      %v361 = vld [vmem:[%s315 + $0xe8] sm:$0xff]
      %v362 = vld [vmem:[%s315 + $0xf0] sm:$0xff]
      %v363 = vld [vmem:[%s315 + $0xf8] sm:$0xff]
      %v364 = vlaneseq
      %v365 = vshrl.u32 %v364, 7
      %v366 = vsub.s32 0, %v365
      %v367 = vrot.slane %v327, %v366
      %v368 = vsub.f32 %v332, %v367
      %v369 = vsub.f32 %v333, %v367
      %v370 = vsub.f32 %v334, %v367
      %v371 = vsub.f32 %v335, %v367
      %v372 = vsub.f32 %v336, %v367
      %v373 = vsub.f32 %v337, %v367
      %v374 = vsub.f32 %v338, %v367
      %v375 = vsub.f32 %v339, %v367
      %v376 = vsub.f32 %v340, %v367
      %v377 = vsub.f32 %v341, %v367
      %v378 = vsub.f32 %v342, %v367
      %v379 = vsub.f32 %v343, %v367
      %v380 = vsub.f32 %v344, %v367
      %v381 = vsub.f32 %v345, %v367
      %v382 = vsub.f32 %v346, %v367
      %v383 = vsub.f32 %v347, %v367
      %v384 = vsub.f32 %v348, %v367
      %v385 = vsub.f32 %v349, %v367
      %v386 = vsub.f32 %v350, %v367
      %v387 = vsub.f32 %v351, %v367
      %v388 = vsub.f32 %v352, %v367
      %v389 = vsub.f32 %v353, %v367
      %v390 = vsub.f32 %v354, %v367
      %v391 = vsub.f32 %v355, %v367
      %v392 = vsub.f32 %v356, %v367
      %v393 = vsub.f32 %v357, %v367
      %v394 = vsub.f32 %v358, %v367
      %v395 = vsub.f32 %v359, %v367
      %v396 = vsub.f32 %v360, %v367
      %v397 = vsub.f32 %v361, %v367
      %v398 = vsub.f32 %v362, %v367
      %v399 = vsub.f32 %v363, %v367
      %v400 = vadd.f32 %v331, 1e-05
      %v401 = vrsqrt.pop %v400
      %v402 = vlaneseq
      %v403 = vshrl.u32 %v402, 7
      %v404 = vsub.s32 0, %v403
      %v405 = vrot.slane %v401, %v404
      %v406 = vmul.f32 %v368, %v405
      %v407 = vmul.f32 %v369, %v405
      %v408 = vmul.f32 %v370, %v405
      %v409 = vmul.f32 %v371, %v405
      %v410 = vmul.f32 %v372, %v405
      %v411 = vmul.f32 %v373, %v405
      %v412 = vmul.f32 %v374, %v405
      %v413 = vmul.f32 %v375, %v405
      %v414 = vmul.f32 %v376, %v405
      %v415 = vmul.f32 %v377, %v405
      %v416 = vmul.f32 %v378, %v405
      %v417 = vmul.f32 %v379, %v405
      %v418 = vmul.f32 %v380, %v405
      %v419 = vmul.f32 %v381, %v405
      %v420 = vmul.f32 %v382, %v405
      %v421 = vmul.f32 %v383, %v405
      %v422 = vmul.f32 %v384, %v405
      %v423 = vmul.f32 %v385, %v405
      %v424 = vmul.f32 %v386, %v405
      %v425 = vmul.f32 %v387, %v405
      %v426 = vmul.f32 %v388, %v405
      %v427 = vmul.f32 %v389, %v405
      %v428 = vmul.f32 %v390, %v405
      %v429 = vmul.f32 %v391, %v405
      %v430 = vmul.f32 %v392, %v405
      %v431 = vmul.f32 %v393, %v405
      %v432 = vmul.f32 %v394, %v405
      %v433 = vmul.f32 %v395, %v405
      %v434 = vmul.f32 %v396, %v405
      %v435 = vmul.f32 %v397, %v405
      %v436 = vmul.f32 %v398, %v405
      %v437 = vmul.f32 %v399, %v405
      %v438 = vld [vmem:[%s4] sm:$0x1]
      %v440 = vlaneseq
      %v441 = vshrl.u32 %v440, 7
      %v442 = vsub.s32 0, %v441
      %v443 = vrot.slane %v438, %v442
      %v445 = vmul.f32 %v406, %v443
      %v446 = vmul.f32 %v407, %v443
      %v447 = vmul.f32 %v408, %v443
      %v448 = vmul.f32 %v409, %v443
      %v449 = vmul.f32 %v410, %v443
      %v450 = vmul.f32 %v411, %v443
      %v451 = vmul.f32 %v412, %v443
      %v452 = vmul.f32 %v413, %v443
      %v453 = vmul.f32 %v414, %v443
      %v454 = vmul.f32 %v415, %v443
      %v455 = vmul.f32 %v416, %v443
      %v456 = vmul.f32 %v417, %v443
      %v457 = vmul.f32 %v418, %v443
      %v458 = vmul.f32 %v419, %v443
      %v459 = vmul.f32 %v420, %v443
      %v460 = vmul.f32 %v421, %v443
      %v461 = vmul.f32 %v422, %v443
      %v462 = vmul.f32 %v423, %v443
      %v463 = vmul.f32 %v424, %v443
      %v464 = vmul.f32 %v425, %v443
      %v465 = vmul.f32 %v426, %v443
      %v466 = vmul.f32 %v427, %v443
      %v467 = vmul.f32 %v428, %v443
      %v468 = vmul.f32 %v429, %v443
      %v469 = vmul.f32 %v430, %v443
      %v470 = vmul.f32 %v431, %v443
      %v471 = vmul.f32 %v432, %v443
      %v472 = vmul.f32 %v433, %v443
      %v473 = vmul.f32 %v434, %v443
      %v474 = vmul.f32 %v435, %v443
      %v475 = vmul.f32 %v436, %v443
      %v476 = vmul.f32 %v437, %v443
      %v477 = vld [vmem:[%s5] sm:$0x1]
      %v479 = vlaneseq
      %v480 = vshrl.u32 %v479, 7
      %v481 = vsub.s32 0, %v480
      %v482 = vrot.slane %v477, %v481
      %v484 = vadd.f32 %v445, %v482
      %v485 = vadd.f32 %v446, %v482
      %v486 = vadd.f32 %v447, %v482
      %v487 = vadd.f32 %v448, %v482
      %v488 = vadd.f32 %v449, %v482
      %v489 = vadd.f32 %v450, %v482
      %v490 = vadd.f32 %v451, %v482
      %v491 = vadd.f32 %v452, %v482
      %v492 = vadd.f32 %v453, %v482
      %v493 = vadd.f32 %v454, %v482
      %v494 = vadd.f32 %v455, %v482
      %v495 = vadd.f32 %v456, %v482
      %v496 = vadd.f32 %v457, %v482
      %v497 = vadd.f32 %v458, %v482
      %v498 = vadd.f32 %v459, %v482
      %v499 = vadd.f32 %v460, %v482
      %v500 = vadd.f32 %v461, %v482
      %v501 = vadd.f32 %v462, %v482
      %v502 = vadd.f32 %v463, %v482
      %v503 = vadd.f32 %v464, %v482
      %v504 = vadd.f32 %v465, %v482
      %v505 = vadd.f32 %v466, %v482
      %v506 = vadd.f32 %v467, %v482
      %v507 = vadd.f32 %v468, %v482
      %v508 = vadd.f32 %v469, %v482
      %v509 = vadd.f32 %v470, %v482
      %v510 = vadd.f32 %v471, %v482
      %v511 = vadd.f32 %v472, %v482
      %v512 = vadd.f32 %v473, %v482
      %v513 = vadd.f32 %v474, %v482
      %v514 = vadd.f32 %v475, %v482
      %v515 = vadd.f32 %v476, %v482
      %v516 = vld [vmem:[%s2 + $0x2] sm:$0x1]
      %v517 = vmul.f32 %v516, 0.001953125
      %v518 = vld [vmem:[%s2 + $0x3] sm:$0x1]
      %v519 = vmul.f32 %v518, 0.001953125
      %v520 = vmul.f32 %v517, %v517
      %v521 = vsub.f32 %v519, %v520
      %v522 = vld [vmem:[%s320] sm:$0xff]
      %v523 = vld [vmem:[%s320 + $0x8] sm:$0xff]
      %v524 = vld [vmem:[%s320 + $0x10] sm:$0xff]
      %v525 = vld [vmem:[%s320 + $0x18] sm:$0xff]
      %v526 = vld [vmem:[%s320 + $0x20] sm:$0xff]
      %v527 = vld [vmem:[%s320 + $0x28] sm:$0xff]
      %v528 = vld [vmem:[%s320 + $0x30] sm:$0xff]
      %v529 = vld [vmem:[%s320 + $0x38] sm:$0xff]
      %v530 = vld [vmem:[%s320 + $0x40] sm:$0xff]
      %v531 = vld [vmem:[%s320 + $0x48] sm:$0xff]
      %v532 = vld [vmem:[%s320 + $0x50] sm:$0xff]
      %v533 = vld [vmem:[%s320 + $0x58] sm:$0xff]
      %v534 = vld [vmem:[%s320 + $0x60] sm:$0xff]
      %v535 = vld [vmem:[%s320 + $0x68] sm:$0xff]
      %v536 = vld [vmem:[%s320 + $0x70] sm:$0xff]
      %v537 = vld [vmem:[%s320 + $0x78] sm:$0xff]
      %v538 = vld [vmem:[%s320 + $0x80] sm:$0xff]
      %v539 = vld [vmem:[%s320 + $0x88] sm:$0xff]
      %v540 = vld [vmem:[%s320 + $0x90] sm:$0xff]
      %v541 = vld [vmem:[%s320 + $0x98] sm:$0xff]
      %v542 = vld [vmem:[%s320 + $0xa0] sm:$0xff]
      %v543 = vld [vmem:[%s320 + $0xa8] sm:$0xff]
      %v544 = vld [vmem:[%s320 + $0xb0] sm:$0xff]
      %v545 = vld [vmem:[%s320 + $0xb8] sm:$0xff]
      %v546 = vld [vmem:[%s320 + $0xc0] sm:$0xff]
      %v547 = vld [vmem:[%s320 + $0xc8] sm:$0xff]
      %v548 = vld [vmem:[%s320 + $0xd0] sm:$0xff]
      %v549 = vld [vmem:[%s320 + $0xd8] sm:$0xff]
      %v550 = vld [vmem:[%s320 + $0xe0] sm:$0xff]
      %v551 = vld [vmem:[%s320 + $0xe8] sm:$0xff]
      %v552 = vld [vmem:[%s320 + $0xf0] sm:$0xff]
      %v553 = vld [vmem:[%s320 + $0xf8] sm:$0xff]
      %v554 = vlaneseq
      %v555 = vshrl.u32 %v554, 7
      %v556 = vsub.s32 0, %v555
      %v557 = vrot.slane %v517, %v556
      %v558 = vsub.f32 %v522, %v557
      %v559 = vsub.f32 %v523, %v557
      %v560 = vsub.f32 %v524, %v557
      %v561 = vsub.f32 %v525, %v557
      %v562 = vsub.f32 %v526, %v557
      %v563 = vsub.f32 %v527, %v557
      %v564 = vsub.f32 %v528, %v557
      %v565 = vsub.f32 %v529, %v557
      %v566 = vsub.f32 %v530, %v557
      %v567 = vsub.f32 %v531, %v557
      %v568 = vsub.f32 %v532, %v557
      %v569 = vsub.f32 %v533, %v557
      %v570 = vsub.f32 %v534, %v557
      %v571 = vsub.f32 %v535, %v557
      %v572 = vsub.f32 %v536, %v557
      %v573 = vsub.f32 %v537, %v557
      %v574 = vsub.f32 %v538, %v557
      %v575 = vsub.f32 %v539, %v557
      %v576 = vsub.f32 %v540, %v557
      %v577 = vsub.f32 %v541, %v557
      %v578 = vsub.f32 %v542, %v557
      %v579 = vsub.f32 %v543, %v557
      %v580 = vsub.f32 %v544, %v557
      %v581 = vsub.f32 %v545, %v557
      %v582 = vsub.f32 %v546, %v557
      %v583 = vsub.f32 %v547, %v557
      %v584 = vsub.f32 %v548, %v557
      %v585 = vsub.f32 %v549, %v557
      %v586 = vsub.f32 %v550, %v557
      %v587 = vsub.f32 %v551, %v557
      %v588 = vsub.f32 %v552, %v557
      %v589 = vsub.f32 %v553, %v557
      %v590 = vadd.f32 %v521, 1e-05
      %v591 = vrsqrt.pop %v590
      %v592 = vlaneseq
      %v593 = vshrl.u32 %v592, 7
      %v594 = vsub.s32 0, %v593
      %v595 = vrot.slane %v591, %v594
      %v596 = vmul.f32 %v558, %v595
      %v597 = vmul.f32 %v559, %v595
      %v598 = vmul.f32 %v560, %v595
      %v599 = vmul.f32 %v561, %v595
      %v600 = vmul.f32 %v562, %v595
      %v601 = vmul.f32 %v563, %v595
      %v602 = vmul.f32 %v564, %v595
      %v603 = vmul.f32 %v565, %v595
      %v604 = vmul.f32 %v566, %v595
      %v605 = vmul.f32 %v567, %v595
      %v606 = vmul.f32 %v568, %v595
      %v607 = vmul.f32 %v569, %v595
      %v608 = vmul.f32 %v570, %v595
      %v609 = vmul.f32 %v571, %v595
      %v610 = vmul.f32 %v572, %v595
      %v611 = vmul.f32 %v573, %v595
      %v612 = vmul.f32 %v574, %v595
      %v613 = vmul.f32 %v575, %v595
      %v614 = vmul.f32 %v576, %v595
      %v615 = vmul.f32 %v577, %v595
      %v616 = vmul.f32 %v578, %v595
      %v617 = vmul.f32 %v579, %v595
      %v618 = vmul.f32 %v580, %v595
      %v619 = vmul.f32 %v581, %v595
      %v620 = vmul.f32 %v582, %v595
      %v621 = vmul.f32 %v583, %v595
      %v622 = vmul.f32 %v584, %v595
      %v623 = vmul.f32 %v585, %v595
      %v624 = vmul.f32 %v586, %v595
      %v625 = vmul.f32 %v587, %v595
      %v626 = vmul.f32 %v588, %v595
      %v627 = vmul.f32 %v589, %v595
      %v628 = vld [vmem:[%s6] sm:$0x1]
      %v630 = vlaneseq
      %v631 = vshrl.u32 %v630, 7
      %v632 = vsub.s32 0, %v631
      %v633 = vrot.slane %v628, %v632
      %v635 = vmul.f32 %v596, %v633
      %v636 = vmul.f32 %v597, %v633
      %v637 = vmul.f32 %v598, %v633
      %v638 = vmul.f32 %v599, %v633
      %v639 = vmul.f32 %v600, %v633
      %v640 = vmul.f32 %v601, %v633
      %v641 = vmul.f32 %v602, %v633
      %v642 = vmul.f32 %v603, %v633
      %v643 = vmul.f32 %v604, %v633
      %v644 = vmul.f32 %v605, %v633
      %v645 = vmul.f32 %v606, %v633
      %v646 = vmul.f32 %v607, %v633
      %v647 = vmul.f32 %v608, %v633
      %v648 = vmul.f32 %v609, %v633
      %v649 = vmul.f32 %v610, %v633
      %v650 = vmul.f32 %v611, %v633
      %v651 = vmul.f32 %v612, %v633
      %v652 = vmul.f32 %v613, %v633
      %v653 = vmul.f32 %v614, %v633
      %v654 = vmul.f32 %v615, %v633
      %v655 = vmul.f32 %v616, %v633
      %v656 = vmul.f32 %v617, %v633
      %v657 = vmul.f32 %v618, %v633
      %v658 = vmul.f32 %v619, %v633
      %v659 = vmul.f32 %v620, %v633
      %v660 = vmul.f32 %v621, %v633
      %v661 = vmul.f32 %v622, %v633
      %v662 = vmul.f32 %v623, %v633
      %v663 = vmul.f32 %v624, %v633
      %v664 = vmul.f32 %v625, %v633
      %v665 = vmul.f32 %v626, %v633
      %v666 = vmul.f32 %v627, %v633
      %v667 = vld [vmem:[%s7] sm:$0x1]
      %v669 = vlaneseq
      %v670 = vshrl.u32 %v669, 7
      %v671 = vsub.s32 0, %v670
      %v672 = vrot.slane %v667, %v671
      %v674 = vadd.f32 %v635, %v672
      %v675 = vadd.f32 %v636, %v672
      %v676 = vadd.f32 %v637, %v672
      %v677 = vadd.f32 %v638, %v672
      %v678 = vadd.f32 %v639, %v672
      %v679 = vadd.f32 %v640, %v672
      %v680 = vadd.f32 %v641, %v672
      %v681 = vadd.f32 %v642, %v672
      %v682 = vadd.f32 %v643, %v672
      %v683 = vadd.f32 %v644, %v672
      %v684 = vadd.f32 %v645, %v672
      %v685 = vadd.f32 %v646, %v672
      %v686 = vadd.f32 %v647, %v672
      %v687 = vadd.f32 %v648, %v672
      %v688 = vadd.f32 %v649, %v672
      %v689 = vadd.f32 %v650, %v672
      %v690 = vadd.f32 %v651, %v672
      %v691 = vadd.f32 %v652, %v672
      %v692 = vadd.f32 %v653, %v672
      %v693 = vadd.f32 %v654, %v672
      %v694 = vadd.f32 %v655, %v672
      %v695 = vadd.f32 %v656, %v672
      %v696 = vadd.f32 %v657, %v672
      %v697 = vadd.f32 %v658, %v672
      %v698 = vadd.f32 %v659, %v672
      %v699 = vadd.f32 %v660, %v672
      %v700 = vadd.f32 %v661, %v672
      %v701 = vadd.f32 %v662, %v672
      %v702 = vadd.f32 %v663, %v672
      %v703 = vadd.f32 %v664, %v672
      %v704 = vadd.f32 %v665, %v672
      %v705 = vadd.f32 %v666, %v672
      %v706 = vadd.f32 %v484, %v674
      %v707 = vadd.f32 %v485, %v675
      %v708 = vadd.f32 %v486, %v676
      %v709 = vadd.f32 %v487, %v677
      %v710 = vadd.f32 %v488, %v678
      %v711 = vadd.f32 %v489, %v679
      %v712 = vadd.f32 %v490, %v680
      %v713 = vadd.f32 %v491, %v681
      %v714 = vadd.f32 %v492, %v682
      %v715 = vadd.f32 %v493, %v683
      %v716 = vadd.f32 %v494, %v684
      %v717 = vadd.f32 %v495, %v685
      %v718 = vadd.f32 %v496, %v686
      %v719 = vadd.f32 %v497, %v687
      %v720 = vadd.f32 %v498, %v688
      %v721 = vadd.f32 %v499, %v689
      %v722 = vadd.f32 %v500, %v690
      %v723 = vadd.f32 %v501, %v691
      %v724 = vadd.f32 %v502, %v692
      %v725 = vadd.f32 %v503, %v693
      %v726 = vadd.f32 %v504, %v694
      %v727 = vadd.f32 %v505, %v695
      %v728 = vadd.f32 %v506, %v696
      %v729 = vadd.f32 %v507, %v697
      %v730 = vadd.f32 %v508, %v698
      %v731 = vadd.f32 %v509, %v699
      %v732 = vadd.f32 %v510, %v700
      %v733 = vadd.f32 %v511, %v701
      %v734 = vadd.f32 %v512, %v702
      %v735 = vadd.f32 %v513, %v703
      %v736 = vadd.f32 %v514, %v704
      %v737 = vadd.f32 %v515, %v705
      %v738 = vmax.f32 %v706, 0.0
      %v739 = vmax.f32 %v707, 0.0
      %v740 = vmax.f32 %v708, 0.0
      %v741 = vmax.f32 %v709, 0.0
      %v742 = vmax.f32 %v710, 0.0
      %v743 = vmax.f32 %v711, 0.0
      %v744 = vmax.f32 %v712, 0.0
      %v745 = vmax.f32 %v713, 0.0
      %v746 = vmax.f32 %v714, 0.0
      %v747 = vmax.f32 %v715, 0.0
      %v748 = vmax.f32 %v716, 0.0
      %v749 = vmax.f32 %v717, 0.0
      %v750 = vmax.f32 %v718, 0.0
      %v751 = vmax.f32 %v719, 0.0
      %v752 = vmax.f32 %v720, 0.0
      %v753 = vmax.f32 %v721, 0.0
      %v754 = vmax.f32 %v722, 0.0
      %v755 = vmax.f32 %v723, 0.0
      %v756 = vmax.f32 %v724, 0.0
      %v757 = vmax.f32 %v725, 0.0
      %v758 = vmax.f32 %v726, 0.0
      %v759 = vmax.f32 %v727, 0.0
      %v760 = vmax.f32 %v728, 0.0
      %v761 = vmax.f32 %v729, 0.0
      %v762 = vmax.f32 %v730, 0.0
      %v763 = vmax.f32 %v731, 0.0
      %v764 = vmax.f32 %v732, 0.0
      %v765 = vmax.f32 %v733, 0.0
      %v766 = vmax.f32 %v734, 0.0
      %v767 = vmax.f32 %v735, 0.0
      %v768 = vmax.f32 %v736, 0.0
      %v769 = vmax.f32 %v737, 0.0
      %770 = vxpose.xlu0.b32.start [1/16] %v738, 128
      %771 = vxpose.xlu0.b32.cont [2/16] %v739, 128
      %772 = vxpose.xlu0.b32.cont [3/16] %v740, 128
      %773 = vxpose.xlu0.b32.cont [4/16] %v741, 128
      %774 = vxpose.xlu0.b32.cont [5/16] %v742, 128
      %775 = vxpose.xlu0.b32.cont [6/16] %v743, 128
      %776 = vxpose.xlu0.b32.cont [7/16] %v744, 128
      %777 = vxpose.xlu0.b32.cont [8/16] %v745, 128
      %778 = vxpose.xlu0.b32.cont [9/16] %v746, 128
      %779 = vxpose.xlu0.b32.cont [10/16] %v747, 128
      %780 = vxpose.xlu0.b32.cont [11/16] %v748, 128
      %781 = vxpose.xlu0.b32.cont [12/16] %v749, 128
      %782 = vxpose.xlu0.b32.cont [13/16] %v750, 128
      %783 = vxpose.xlu0.b32.cont [14/16] %v751, 128
      %784 = vxpose.xlu0.b32.cont [15/16] %v752, 128
      %785 = vxpose.xlu0.b32.end [16/16] %v753, 128
      %v786 = vpop.trf.xlu0
      %v787 = vpop.trf.xlu0
      %v788 = vpop.trf.xlu0
      %v789 = vpop.trf.xlu0
      %v790 = vpop.trf.xlu0
      %v791 = vpop.trf.xlu0
      %v792 = vpop.trf.xlu0
      %v793 = vpop.trf.xlu0
      %v794 = vpop.trf.xlu0
      %v795 = vpop.trf.xlu0
      %v796 = vpop.trf.xlu0
      %v797 = vpop.trf.xlu0
      %v798 = vpop.trf.xlu0
      %v799 = vpop.trf.xlu0
      %v800 = vpop.trf.xlu0
      %v801 = vpop.trf.xlu0
      %802 = vxpose.xlu0.b32.start [1/16] %v754, 128
      %803 = vxpose.xlu0.b32.cont [2/16] %v755, 128
      %804 = vxpose.xlu0.b32.cont [3/16] %v756, 128
      %805 = vxpose.xlu0.b32.cont [4/16] %v757, 128
      %806 = vxpose.xlu0.b32.cont [5/16] %v758, 128
      %807 = vxpose.xlu0.b32.cont [6/16] %v759, 128
      %808 = vxpose.xlu0.b32.cont [7/16] %v760, 128
      %809 = vxpose.xlu0.b32.cont [8/16] %v761, 128
      %810 = vxpose.xlu0.b32.cont [9/16] %v762, 128
      %811 = vxpose.xlu0.b32.cont [10/16] %v763, 128
      %812 = vxpose.xlu0.b32.cont [11/16] %v764, 128
      %813 = vxpose.xlu0.b32.cont [12/16] %v765, 128
      %814 = vxpose.xlu0.b32.cont [13/16] %v766, 128
      %815 = vxpose.xlu0.b32.cont [14/16] %v767, 128
      %816 = vxpose.xlu0.b32.cont [15/16] %v768, 128
      %817 = vxpose.xlu0.b32.end [16/16] %v769, 128
      %v818 = vpop.trf.xlu0
      %v819 = vpop.trf.xlu0
      %v820 = vpop.trf.xlu0
      %v821 = vpop.trf.xlu0
      %v822 = vpop.trf.xlu0
      %v823 = vpop.trf.xlu0
      %v824 = vpop.trf.xlu0
      %v825 = vpop.trf.xlu0
      %v826 = vpop.trf.xlu0
      %v827 = vpop.trf.xlu0
      %v828 = vpop.trf.xlu0
      %v829 = vpop.trf.xlu0
      %v830 = vpop.trf.xlu0
      %v831 = vpop.trf.xlu0
      %v832 = vpop.trf.xlu0
      %v833 = vpop.trf.xlu0
      %834 = vst [vmem:[%s325] sm:$0xff] %v786
      %835 = vst [vmem:[%s325 + $0x8] sm:$0xff] %v818
      %p836 = scmp.lt.s32.totalorder %s19, 1
      %s837 = scalar_select %p836, %s19, 1
      %s838 = smul.addr %s837, 2
      %s839 = smul.addr %s838, 8
      %s840 = scalar_lea.vmem %s8, %s839
      // Predicated region
      $region53: #{residual_block_forward.5} parent=51 // pred_check
        %p841 = pneg %p215
      $region54: #{residual_block_forward.5} parent=51 // pred_check_branch
        %843 = sbr.rel (%p841) target = $region56
      $region55: #{residual_block_forward.5} parent=51 // pred_region
        _
      $region56: #{residual_block_forward.5} parent=51 // pred_fallthru
        _
    $region52: #{residual_block_forward.5} parent=5 // pred_fallthru
      _
    %p844 = scmp.le.s32.totalorder 2, %s14
    // Predicated region
    $region57: #{residual_block_forward.5} parent=5 // pred_check
      %p845 = pneg %p844
    $region58: #{residual_block_forward.5} parent=5 // pred_check_branch
      %847 = sbr.rel (%p845) target = $region60
    $region59: #{residual_block_forward.5} parent=5 // pred_region
      %s848 = ssub.s32 %s14, 2
      // Predicated region
      $region61: #{residual_block_forward.5} parent=59 // pred_check
        %p849 = pneg %p221
      $region62: #{residual_block_forward.5} parent=59 // pred_check_branch
        %851 = sbr.rel (%p849) target = $region64
      $region63: #{residual_block_forward.5} parent=59 // pred_region
        %p852 = scmp.lt.s32.totalorder %s20, 1
        %s853 = scalar_select %p852, %s20, 1
        %s854 = smul.addr %s853, 2
        %s855 = smul.addr %s854, 8
        %s856 = scalar_lea.vmem %s8, %s855
      $region64: #{residual_block_forward.5} parent=59 // pred_fallthru
        _
    $region60: #{residual_block_forward.5} parent=5 // pred_fallthru
      _
  $region6: #{residual_block_forward.5} parent=0 // loop_footer
    %s18 = sadd.s32 1, %s14
  $region7: #{residual_block_forward.5} parent=0 // loop_footer_branch
    %13 = sbr.rel target = $region3
  $region8: #{residual_block_forward.5} parent=0 // loop_exit
    _

// kernel: residual_block_forward.4
$region0: #{residual_block_forward.4}
  #allocation0 [shape = 'u32[]', space=smem, size = 0x4, offset = 0x4, fixed_abs, tag = 'smem constant byte address 0x4 - core index']
  #allocation1 [shape = 'u32[144,128]{1,0:T(1,128)}', space=vmem, size = 0x12000, scoped, tag = 'internal scratch']
  #allocation2 [shape = 'f32[18,18,128]{2,1,0:T(8,128)}', space=vmem, size = 0x36000, scoped, tag = 'scratch operand']
  %s0 = inlined_call_operand.vmem [shape: f32[2,256,128], index: 0, kind: input, shape index: {}]
  %s1 = inlined_call_operand.vmem [shape: f32[8,128], index: 1, kind: input, shape index: {}]
  %s2 = inlined_call_operand.vmem [shape: f32[1,128], index: 2, kind: input, shape index: {}]
  %s3 = inlined_call_operand.vmem [shape: f32[1,128], index: 3, kind: input, shape index: {}]
  %s4 = inlined_call_operand.vmem [shape: f32[9,128,128], index: 4, kind: input, shape index: {}]
  %s5 = inlined_call_operand.vmem [shape: f32[2,256,128], index: 5, kind: output, shape index: {0}]
  %s6 = inlined_call_operand.vmem [shape: f32[8,128], index: 6, kind: output, shape index: {1}]
  %7 = xla_tuple %s5, %s6
  %s8 = sld [smem:[#allocation0]]
  $region65: #{residual_block_forward.4} parent=0
    _
  %s10 = ssub.s32 1, %s8
  %s11 = scalar_select 0, %s10, %s8
  loop: start=0, step=1, limit=4
  $region2: #{residual_block_forward.4} parent=0 // loop_pre_header
    _
  $region3: #{residual_block_forward.4} parent=0 // loop_header
    %s13 = sphi 0, %s17
    %p14 = scmp.ge.s32.totalorder %s13, 4
    %s23 = sphi 0, %s25
    %s26 = sphi 0, %s23
    %s27 = sphi 0, %s26
    %s43 = sphi 0, %s27
    %s47 = sphi 0, %s47
    %s49 = sphi 0, %s47
    %s50 = sphi 0, %s49
    %s64 = sphi 0, %s50
    %s68 = sphi 0, %s68
    %s70 = sphi 0, %s68
    %s71 = sphi 0, %s70
    %s85 = sphi 0, %s71
    %s89 = sphi 0, %s89
    %s91 = sphi 0, %s89
    %s92 = sphi 0, %s91
    %s106 = sphi 0, %s92
    %s110 = sphi 0, %s110
    %s112 = sphi 0, %s110
    %s113 = sphi 0, %s112
    %s127 = sphi 0, %s113
    %s133 = sphi 0, %s135
    %s136 = sphi 0, %s133
    %s137 = sphi 0, %s136
    %s153 = sphi 0, %s137
    %s157 = sphi 0, %s157
    %s159 = sphi 0, %s157
    %s160 = sphi 0, %s159
    %s174 = sphi 0, %s160
  $region4: #{residual_block_forward.4} parent=0 // loop_header_branch
    %16 = sbr.rel (%p14) target = $region8
  $region5: #{residual_block_forward.4} parent=0 // loop_body
    %s18 = ssub.s32 %s13, 1
    %s19 = ssub.s32 %s13, 2
    %s20 = sadd.s32 %s13, 1
    %s21 = ssub.s32 %s13, %s20
    %p22 = scmp.eq.s32.totalorder %s21, 0
    %s24 = sadd.s32 %s23, 1
    %s25 = scalar_select %p22, %s23, %s24
    %p28 = pneg %p22
    %p29 = scmp.eq.s32.totalorder %s13, 1
    %p30 = por %p28, %p29
    %p31 = scmp.ne.s32.totalorder %s23, %s26
    %p32 = scmp.eq.s32.totalorder %s13, 0
    %p33 = por %p31, %p32
    %p34 = scmp.ne.s32.totalorder %s23, %s26
    %p35 = scmp.eq.s32.totalorder %s18, 1
    %p36 = por %p34, %p35
    %p37 = scmp.ne.s32.totalorder %s26, %s27
    %p38 = scmp.eq.s32.totalorder %s18, 0
    %p39 = por %p37, %p38
    %p40 = scmp.ne.s32.totalorder %s26, %s27
    %p41 = scmp.eq.s32.totalorder %s19, 1
    %p42 = por %p40, %p41
    %p44 = scmp.ne.s32.totalorder %s27, %s43
    %p45 = scmp.eq.s32.totalorder %s19, 0
    %p46 = por %p44, %p45
    %s48 = sadd.s32 %s47, 1
    %p51 = scmp.eq.s32.totalorder %s13, 1
    %p52 = scmp.ne.s32.totalorder %s47, %s49
    %p53 = scmp.eq.s32.totalorder %s13, 0
    %p54 = por %p52, %p53
    %p55 = scmp.ne.s32.totalorder %s47, %s49
    %p56 = scmp.eq.s32.totalorder %s18, 1
    %p57 = por %p55, %p56
    %p58 = scmp.ne.s32.totalorder %s49, %s50
    %p59 = scmp.eq.s32.totalorder %s18, 0
    %p60 = por %p58, %p59
    %p61 = scmp.ne.s32.totalorder %s49, %s50
    %p62 = scmp.eq.s32.totalorder %s19, 1
    %p63 = por %p61, %p62
    %p65 = scmp.ne.s32.totalorder %s50, %s64
    %p66 = scmp.eq.s32.totalorder %s19, 0
    %p67 = por %p65, %p66
    %s69 = sadd.s32 %s68, 1
    %p72 = scmp.eq.s32.totalorder %s13, 1
    %p73 = scmp.ne.s32.totalorder %s68, %s70
    %p74 = scmp.eq.s32.totalorder %s13, 0
    %p75 = por %p73, %p74
    %p76 = scmp.ne.s32.totalorder %s68, %s70
    %p77 = scmp.eq.s32.totalorder %s18, 1
    %p78 = por %p76, %p77
    %p79 = scmp.ne.s32.totalorder %s70, %s71
    %p80 = scmp.eq.s32.totalorder %s18, 0
    %p81 = por %p79, %p80
    %p82 = scmp.ne.s32.totalorder %s70, %s71
    %p83 = scmp.eq.s32.totalorder %s19, 1
    %p84 = por %p82, %p83
    %p86 = scmp.ne.s32.totalorder %s71, %s85
    %p87 = scmp.eq.s32.totalorder %s19, 0
    %p88 = por %p86, %p87
    %s90 = sadd.s32 %s89, 1
    %p93 = scmp.eq.s32.totalorder %s13, 1
    %p94 = scmp.ne.s32.totalorder %s89, %s91
    %p95 = scmp.eq.s32.totalorder %s13, 0
    %p96 = por %p94, %p95
    %p97 = scmp.ne.s32.totalorder %s89, %s91
    %p98 = scmp.eq.s32.totalorder %s18, 1
    %p99 = por %p97, %p98
    %p100 = scmp.ne.s32.totalorder %s91, %s92
    %p101 = scmp.eq.s32.totalorder %s18, 0
    %p102 = por %p100, %p101
    %p103 = scmp.ne.s32.totalorder %s91, %s92
    %p104 = scmp.eq.s32.totalorder %s19, 1
    %p105 = por %p103, %p104
    %p107 = scmp.ne.s32.totalorder %s92, %s106
    %p108 = scmp.eq.s32.totalorder %s19, 0
    %p109 = por %p107, %p108
    %s111 = sadd.s32 %s110, 1
    %p114 = scmp.eq.s32.totalorder %s13, 1
    %p115 = scmp.ne.s32.totalorder %s110, %s112
    %p116 = scmp.eq.s32.totalorder %s13, 0
    %p117 = por %p115, %p116
    %p118 = scmp.ne.s32.totalorder %s110, %s112
    %p119 = scmp.eq.s32.totalorder %s18, 1
    %p120 = por %p118, %p119
    %p121 = scmp.ne.s32.totalorder %s112, %s113
    %p122 = scmp.eq.s32.totalorder %s18, 0
    %p123 = por %p121, %p122
    %p124 = scmp.ne.s32.totalorder %s112, %s113
    %p125 = scmp.eq.s32.totalorder %s19, 1
    %p126 = por %p124, %p125
    %p128 = scmp.ne.s32.totalorder %s113, %s127
    %p129 = scmp.eq.s32.totalorder %s19, 0
    %p130 = por %p128, %p129
    %s131 = ssub.s32 %s13, %s20
    %p132 = scmp.eq.s32.totalorder %s131, 0
    %s134 = sadd.s32 %s133, 1
    %s135 = scalar_select %p132, %s133, %s134
    %p138 = pneg %p132
    %p139 = scmp.eq.s32.totalorder %s13, 1
    %p140 = por %p138, %p139
    %p141 = scmp.ne.s32.totalorder %s133, %s136
    %p142 = scmp.eq.s32.totalorder %s13, 0
    %p143 = por %p141, %p142
    %p144 = scmp.ne.s32.totalorder %s133, %s136
    %p145 = scmp.eq.s32.totalorder %s18, 1
    %p146 = por %p144, %p145
    %p147 = scmp.ne.s32.totalorder %s136, %s137
    %p148 = scmp.eq.s32.totalorder %s18, 0
    %p149 = por %p147, %p148
    %p150 = scmp.ne.s32.totalorder %s136, %s137
    %p151 = scmp.eq.s32.totalorder %s19, 1
    %p152 = por %p150, %p151
    %p154 = scmp.ne.s32.totalorder %s137, %s153
    %p155 = scmp.eq.s32.totalorder %s19, 0
    %p156 = por %p154, %p155
    %s158 = sadd.s32 %s157, 1
    %p161 = scmp.eq.s32.totalorder %s13, 1
    %p162 = scmp.ne.s32.totalorder %s157, %s159
    %p163 = scmp.eq.s32.totalorder %s13, 0
    %p164 = por %p162, %p163
    %p165 = scmp.ne.s32.totalorder %s157, %s159
    %p166 = scmp.eq.s32.totalorder %s18, 1
    %p167 = por %p165, %p166
    %p168 = scmp.ne.s32.totalorder %s159, %s160
    %p169 = scmp.eq.s32.totalorder %s18, 0
    %p170 = por %p168, %p169
    %p171 = scmp.ne.s32.totalorder %s159, %s160
    %p172 = scmp.eq.s32.totalorder %s19, 1
    %p173 = por %p171, %p172
    %p175 = scmp.ne.s32.totalorder %s160, %s174
    %p176 = scmp.eq.s32.totalorder %s19, 0
    %p177 = por %p175, %p176
    %p178 = scmp.le.s32.totalorder 1, %s13
    %p179 = scmp.lt.s32.totalorder %s13, 3
    %p180 = pnand %p178, %p179
    %p181 = pneg %p180
    // Predicated region
    $region9: #{residual_block_forward.4} parent=5 // pred_check
      _
    $region10: #{residual_block_forward.4} parent=5 // pred_check_branch
      %183 = sbr.rel (%p180) target = $region12
    $region11: #{residual_block_forward.4} parent=5 // pred_region
      %s184 = ssub.s32 %s13, 1
      // Predicated region
      $region13: #{residual_block_forward.4} parent=11 // pred_check
        %p185 = pneg %p60
      $region14: #{residual_block_forward.4} parent=11 // pred_check_branch
        %187 = sbr.rel (%p185) target = $region16
      $region15: #{residual_block_forward.4} parent=11 // pred_region
        _
      $region16: #{residual_block_forward.4} parent=11 // pred_fallthru
        _
      // Predicated region
      $region17: #{residual_block_forward.4} parent=11 // pred_check
        %p188 = pneg %p81
      $region18: #{residual_block_forward.4} parent=11 // pred_check_branch
        %190 = sbr.rel (%p188) target = $region20
      $region19: #{residual_block_forward.4} parent=11 // pred_region
        _
      $region20: #{residual_block_forward.4} parent=11 // pred_fallthru
        _
      // Predicated region
      $region21: #{residual_block_forward.4} parent=11 // pred_check
        %p191 = pneg %p102
      $region22: #{residual_block_forward.4} parent=11 // pred_check_branch
        %193 = sbr.rel (%p191) target = $region24
      $region23: #{residual_block_forward.4} parent=11 // pred_region
        _
      $region24: #{residual_block_forward.4} parent=11 // pred_fallthru
        _
      // Predicated region
      $region25: #{residual_block_forward.4} parent=11 // pred_check
        %p194 = pneg %p123
      $region26: #{residual_block_forward.4} parent=11 // pred_check_branch
        %196 = sbr.rel (%p194) target = $region28
      $region27: #{residual_block_forward.4} parent=11 // pred_region
        _
      $region28: #{residual_block_forward.4} parent=11 // pred_fallthru
        _
    $region12: #{residual_block_forward.4} parent=5 // pred_fallthru
      _
    %p197 = scmp.lt.s32.totalorder %s13, 2
    // Predicated region
    $region29: #{residual_block_forward.4} parent=5 // pred_check
      %p198 = pneg %p197
    $region30: #{residual_block_forward.4} parent=5 // pred_check_branch
      %200 = sbr.rel (%p198) target = $region32
    $region31: #{residual_block_forward.4} parent=5 // pred_region
      // Predicated region
      $region33: #{residual_block_forward.4} parent=31 // pred_check
        %p201 = pneg %p33
      $region34: #{residual_block_forward.4} parent=31 // pred_check_branch
        %203 = sbr.rel (%p201) target = $region36
      $region35: #{residual_block_forward.4} parent=31 // pred_region
        %p204 = scmp.lt.s32.totalorder %s13, 1
        %s205 = scalar_select %p204, %s13, 1
        %s206 = smul.addr %s205, 32
        %s207 = smul.addr %s206, 8
        %s208 = scalar_lea.vmem %s0, %s207
      $region36: #{residual_block_forward.4} parent=31 // pred_fallthru
        _
    $region32: #{residual_block_forward.4} parent=5 // pred_fallthru
      _
    %p209 = scmp.le.s32.totalorder 1, %s13
    %p210 = scmp.lt.s32.totalorder %s13, 3
    %p211 = pnand %p209, %p210
    %p212 = pneg %p211
    // Predicated region
    $region37: #{residual_block_forward.4} parent=5 // pred_check
      _
    $region38: #{residual_block_forward.4} parent=5 // pred_check_branch
      %214 = sbr.rel (%p211) target = $region40
    $region39: #{residual_block_forward.4} parent=5 // pred_region
      %s215 = ssub.s32 %s13, 1
      %p216 = scmp.lt.s32.totalorder %s18, 1
      %s217 = scalar_select %p216, %s18, 1
      %s218 = smul.addr %s217, 32
      %s219 = smul.addr %s218, 8
      %s220 = scalar_lea.vmem %s0, %s219
      %p221 = pneg %p39
      %p222 = pneg %p36
      %p223 = pneg %p60
      %p224 = pneg %p57
      %p225 = pneg %p81
      %p226 = pneg %p78
      %p227 = pneg %p102
      %p228 = pneg %p99
      %p229 = pneg %p123
      %p230 = pneg %p120
      %p231 = pneg %p149
      %p232 = pneg %p146
      %p233 = scmp.lt.s32.totalorder %s18, 1
      %s234 = scalar_select %p233, %s18, 1
      %s235 = smul.addr %s234, 32
      %s236 = smul.addr %s235, 8
      %s237 = scalar_lea.vmem %s5, %s236
      %p238 = pneg %p170
      %p239 = pneg %p167
      %p240 = scmp.lt.s32.totalorder %s18, 1
      %s241 = scalar_select %p240, %s18, 1
      %s242 = smul.addr %s241, 32
      %s243 = smul.addr %s242, 8
      %s244 = scalar_lea.vmem %s0, %s243
      %p245 = scmp.lt.s32.totalorder %s18, 1
      %s246 = scalar_select %p245, %s18, 1
      %s247 = smul.addr %s246, 32
      %s248 = smul.addr %s247, 8
      %s249 = scalar_lea.vmem %s5, %s248
      %p250 = scmp.eq.s32.totalorder %s18, 0
      // Predicated region
      $region41: #{residual_block_forward.4} parent=39 // pred_check
        %p251 = pneg %p250
      $region42: #{residual_block_forward.4} parent=39 // pred_check_branch
        %253 = sbr.rel (%p251) target = $region44
      $region43: #{residual_block_forward.4} parent=39 // pred_region
        %254 = vst [vmem:[%s6] sm:$0xff] 0.0
      $region44: #{residual_block_forward.4} parent=39 // pred_fallthru
        _
      %v255 = vld [vmem:[%s1] sm:$0x1]
      %v256 = vmul.f32 %v255, 0.001953125
      %v257 = vld [vmem:[%s1 + $0x1] sm:$0x1]
      %v258 = vmul.f32 %v257, 0.001953125
      %v259 = vmul.f32 %v256, %v256
      %v260 = vsub.f32 %v258, %v259
      %v261 = vld [vmem:[%s244] sm:$0xff]
      %v262 = vld [vmem:[%s244 + $0x8] sm:$0xff]
      %v263 = vld [vmem:[%s244 + $0x10] sm:$0xff]
      %v264 = vld [vmem:[%s244 + $0x18] sm:$0xff]
      %v265 = vld [vmem:[%s244 + $0x20] sm:$0xff]
      %v266 = vld [vmem:[%s244 + $0x28] sm:$0xff]
      %v267 = vld [vmem:[%s244 + $0x30] sm:$0xff]
      %v268 = vld [vmem:[%s244 + $0x38] sm:$0xff]
      %v269 = vld [vmem:[%s244 + $0x40] sm:$0xff]
      %v270 = vld [vmem:[%s244 + $0x48] sm:$0xff]
      %v271 = vld [vmem:[%s244 + $0x50] sm:$0xff]
      %v272 = vld [vmem:[%s244 + $0x58] sm:$0xff]
      %v273 = vld [vmem:[%s244 + $0x60] sm:$0xff]
      %v274 = vld [vmem:[%s244 + $0x68] sm:$0xff]
      %v275 = vld [vmem:[%s244 + $0x70] sm:$0xff]
      %v276 = vld [vmem:[%s244 + $0x78] sm:$0xff]
      %v277 = vld [vmem:[%s244 + $0x80] sm:$0xff]
      %v278 = vld [vmem:[%s244 + $0x88] sm:$0xff]
      %v279 = vld [vmem:[%s244 + $0x90] sm:$0xff]
      %v280 = vld [vmem:[%s244 + $0x98] sm:$0xff]
      %v281 = vld [vmem:[%s244 + $0xa0] sm:$0xff]
      %v282 = vld [vmem:[%s244 + $0xa8] sm:$0xff]
      %v283 = vld [vmem:[%s244 + $0xb0] sm:$0xff]
      %v284 = vld [vmem:[%s244 + $0xb8] sm:$0xff]
      %v285 = vld [vmem:[%s244 + $0xc0] sm:$0xff]
      %v286 = vld [vmem:[%s244 + $0xc8] sm:$0xff]
      %v287 = vld [vmem:[%s244 + $0xd0] sm:$0xff]
      %v288 = vld [vmem:[%s244 + $0xd8] sm:$0xff]
      %v289 = vld [vmem:[%s244 + $0xe0] sm:$0xff]
      %v290 = vld [vmem:[%s244 + $0xe8] sm:$0xff]
      %v291 = vld [vmem:[%s244 + $0xf0] sm:$0xff]
      %v292 = vld [vmem:[%s244 + $0xf8] sm:$0xff]
      %v293 = vlaneseq
      %v294 = vshrl.u32 %v293, 7
      %v295 = vsub.s32 0, %v294
      %v296 = vrot.slane %v256, %v295
      %v297 = vsub.f32 %v261, %v296
      %v298 = vsub.f32 %v262, %v296
      %v299 = vsub.f32 %v263, %v296
      %v300 = vsub.f32 %v264, %v296
      %v301 = vsub.f32 %v265, %v296
      %v302 = vsub.f32 %v266, %v296
      %v303 = vsub.f32 %v267, %v296
      %v304 = vsub.f32 %v268, %v296
      %v305 = vsub.f32 %v269, %v296
      %v306 = vsub.f32 %v270, %v296
      %v307 = vsub.f32 %v271, %v296
      %v308 = vsub.f32 %v272, %v296
      %v309 = vsub.f32 %v273, %v296
      %v310 = vsub.f32 %v274, %v296
      %v311 = vsub.f32 %v275, %v296
      %v312 = vsub.f32 %v276, %v296
      %v313 = vsub.f32 %v277, %v296
      %v314 = vsub.f32 %v278, %v296
      %v315 = vsub.f32 %v279, %v296
      %v316 = vsub.f32 %v280, %v296
      %v317 = vsub.f32 %v281, %v296
      %v318 = vsub.f32 %v282, %v296
      %v319 = vsub.f32 %v283, %v296
      %v320 = vsub.f32 %v284, %v296
      %v321 = vsub.f32 %v285, %v296
      %v322 = vsub.f32 %v286, %v296
      %v323 = vsub.f32 %v287, %v296
      %v324 = vsub.f32 %v288, %v296
      %v325 = vsub.f32 %v289, %v296
      %v326 = vsub.f32 %v290, %v296
      %v327 = vsub.f32 %v291, %v296
      %v328 = vsub.f32 %v292, %v296
      %v329 = vadd.f32 %v260, 1e-05
      %v330 = vrsqrt.pop %v329
      %v331 = vlaneseq
      %v332 = vshrl.u32 %v331, 7
      %v333 = vsub.s32 0, %v332
      %v334 = vrot.slane %v330, %v333
      %v335 = vmul.f32 %v297, %v334
      %v336 = vmul.f32 %v298, %v334
      %v337 = vmul.f32 %v299, %v334
      %v338 = vmul.f32 %v300, %v334
      %v339 = vmul.f32 %v301, %v334
      %v340 = vmul.f32 %v302, %v334
      %v341 = vmul.f32 %v303, %v334
      %v342 = vmul.f32 %v304, %v334
      %v343 = vmul.f32 %v305, %v334
      %v344 = vmul.f32 %v306, %v334
      %v345 = vmul.f32 %v307, %v334
      %v346 = vmul.f32 %v308, %v334
      %v347 = vmul.f32 %v309, %v334
      %v348 = vmul.f32 %v310, %v334
      %v349 = vmul.f32 %v311, %v334
      %v350 = vmul.f32 %v312, %v334
      %v351 = vmul.f32 %v313, %v334
      %v352 = vmul.f32 %v314, %v334
      %v353 = vmul.f32 %v315, %v334
      %v354 = vmul.f32 %v316, %v334
      %v355 = vmul.f32 %v317, %v334
      %v356 = vmul.f32 %v318, %v334
      %v357 = vmul.f32 %v319, %v334
      %v358 = vmul.f32 %v320, %v334
      %v359 = vmul.f32 %v321, %v334
      %v360 = vmul.f32 %v322, %v334
      %v361 = vmul.f32 %v323, %v334
      %v362 = vmul.f32 %v324, %v334
      %v363 = vmul.f32 %v325, %v334
      %v364 = vmul.f32 %v326, %v334
      %v365 = vmul.f32 %v327, %v334
      %v366 = vmul.f32 %v328, %v334
      %v367 = vld [vmem:[%s2] sm:$0x1]
      %v369 = vlaneseq
      %v370 = vshrl.u32 %v369, 7
      %v371 = vsub.s32 0, %v370
      %v372 = vrot.slane %v367, %v371
      %v374 = vmul.f32 %v335, %v372
      %v375 = vmul.f32 %v336, %v372
      %v376 = vmul.f32 %v337, %v372
      %v377 = vmul.f32 %v338, %v372
      %v378 = vmul.f32 %v339, %v372
      %v379 = vmul.f32 %v340, %v372
      %v380 = vmul.f32 %v341, %v372
      %v381 = vmul.f32 %v342, %v372
      %v382 = vmul.f32 %v343, %v372
      %v383 = vmul.f32 %v344, %v372
      %v384 = vmul.f32 %v345, %v372
      %v385 = vmul.f32 %v346, %v372
      %v386 = vmul.f32 %v347, %v372
      %v387 = vmul.f32 %v348, %v372
      %v388 = vmul.f32 %v349, %v372
      %v389 = vmul.f32 %v350, %v372
      %v390 = vmul.f32 %v351, %v372
      %v391 = vmul.f32 %v352, %v372
      %v392 = vmul.f32 %v353, %v372
      %v393 = vmul.f32 %v354, %v372
      %v394 = vmul.f32 %v355, %v372
      %v395 = vmul.f32 %v356, %v372
      %v396 = vmul.f32 %v357, %v372
      %v397 = vmul.f32 %v358, %v372
      %v398 = vmul.f32 %v359, %v372
      %v399 = vmul.f32 %v360, %v372
      %v400 = vmul.f32 %v361, %v372
      %v401 = vmul.f32 %v362, %v372
      %v402 = vmul.f32 %v363, %v372
      %v403 = vmul.f32 %v364, %v372
      %v404 = vmul.f32 %v365, %v372
      %v405 = vmul.f32 %v366, %v372
      %v406 = vld [vmem:[%s3] sm:$0x1]
      %v408 = vlaneseq
      %v409 = vshrl.u32 %v408, 7
      %v410 = vsub.s32 0, %v409
      %v411 = vrot.slane %v406, %v410
      %v413 = vadd.f32 %v374, %v411
      %v414 = vadd.f32 %v375, %v411
      %v415 = vadd.f32 %v376, %v411
      %v416 = vadd.f32 %v377, %v411
      %v417 = vadd.f32 %v378, %v411
      %v418 = vadd.f32 %v379, %v411
      %v419 = vadd.f32 %v380, %v411
      %v420 = vadd.f32 %v381, %v411
      %v421 = vadd.f32 %v382, %v411
      %v422 = vadd.f32 %v383, %v411
      %v423 = vadd.f32 %v384, %v411
      %v424 = vadd.f32 %v385, %v411
      %v425 = vadd.f32 %v386, %v411
      %v426 = vadd.f32 %v387, %v411
      %v427 = vadd.f32 %v388, %v411
      %v428 = vadd.f32 %v389, %v411
      %v429 = vadd.f32 %v390, %v411
      %v430 = vadd.f32 %v391, %v411
      %v431 = vadd.f32 %v392, %v411
      %v432 = vadd.f32 %v393, %v411
      %v433 = vadd.f32 %v394, %v411
      %v434 = vadd.f32 %v395, %v411
      %v435 = vadd.f32 %v396, %v411
      %v436 = vadd.f32 %v397, %v411
      %v437 = vadd.f32 %v398, %v411
      %v438 = vadd.f32 %v399, %v411
      %v439 = vadd.f32 %v400, %v411
      %v440 = vadd.f32 %v401, %v411
      %v441 = vadd.f32 %v402, %v411
      %v442 = vadd.f32 %v403, %v411
      %v443 = vadd.f32 %v404, %v411
      %v444 = vadd.f32 %v405, %v411
      %v445 = vmax.f32 %v413, 0.0
      %v446 = vmax.f32 %v414, 0.0
      %v447 = vmax.f32 %v415, 0.0
      %v448 = vmax.f32 %v416, 0.0
      %v449 = vmax.f32 %v417, 0.0
      %v450 = vmax.f32 %v418, 0.0
      %v451 = vmax.f32 %v419, 0.0
      %v452 = vmax.f32 %v420, 0.0
      %v453 = vmax.f32 %v421, 0.0
      %v454 = vmax.f32 %v422, 0.0
      %v455 = vmax.f32 %v423, 0.0
      %v456 = vmax.f32 %v424, 0.0
      %v457 = vmax.f32 %v425, 0.0
      %v458 = vmax.f32 %v426, 0.0
      %v459 = vmax.f32 %v427, 0.0
      %v460 = vmax.f32 %v428, 0.0
      %v461 = vmax.f32 %v429, 0.0
      %v462 = vmax.f32 %v430, 0.0
      %v463 = vmax.f32 %v431, 0.0
      %v464 = vmax.f32 %v432, 0.0
      %v465 = vmax.f32 %v433, 0.0
      %v466 = vmax.f32 %v434, 0.0
      %v467 = vmax.f32 %v435, 0.0
      %v468 = vmax.f32 %v436, 0.0
      %v469 = vmax.f32 %v437, 0.0
      %v470 = vmax.f32 %v438, 0.0
      %v471 = vmax.f32 %v439, 0.0
      %v472 = vmax.f32 %v440, 0.0
      %v473 = vmax.f32 %v441, 0.0
      %v474 = vmax.f32 %v442, 0.0
      %v475 = vmax.f32 %v443, 0.0
      %v476 = vmax.f32 %v444, 0.0
      %477 = vst [vmem:[#allocation2] sm:$0xff] 0.0
      %478 = vst [vmem:[#allocation2 + $0x8] sm:$0xff] 0.0
      %479 = vst [vmem:[#allocation2 + $0x10] sm:$0x3] 0.0
      %480 = vst [vmem:[#allocation2 + $0x18] sm:$0xff] 0.0
      %481 = vst [vmem:[#allocation2 + $0x20] sm:$0xff] 0.0
      %482 = vst [vmem:[#allocation2 + $0x28] sm:$0x3] 0.0
      %483 = vst [vmem:[#allocation2 + $0x30] sm:$0xff] 0.0
      %484 = vst [vmem:[#allocation2 + $0x38] sm:$0xff] 0.0
      %485 = vst [vmem:[#allocation2 + $0x40] sm:$0x3] 0.0
      %486 = vst [vmem:[#allocation2 + $0x48] sm:$0xff] 0.0
      %487 = vst [vmem:[#allocation2 + $0x50] sm:$0xff] 0.0
      %488 = vst [vmem:[#allocation2 + $0x58] sm:$0x3] 0.0
      %489 = vst [vmem:[#allocation2 + $0x60] sm:$0xff] 0.0
      %490 = vst [vmem:[#allocation2 + $0x68] sm:$0xff] 0.0
      %491 = vst [vmem:[#allocation2 + $0x70] sm:$0x3] 0.0
      %492 = vst [vmem:[#allocation2 + $0x78] sm:$0xff] 0.0
      %493 = vst [vmem:[#allocation2 + $0x80] sm:$0xff] 0.0
      %494 = vst [vmem:[#allocation2 + $0x88] sm:$0x3] 0.0
      %495 = vst [vmem:[#allocation2 + $0x90] sm:$0xff] 0.0
      %496 = vst [vmem:[#allocation2 + $0x98] sm:$0xff] 0.0
      %497 = vst [vmem:[#allocation2 + $0xa0] sm:$0x3] 0.0
      %498 = vst [vmem:[#allocation2 + $0xa8] sm:$0xff] 0.0
      %499 = vst [vmem:[#allocation2 + $0xb0] sm:$0xff] 0.0
      %500 = vst [vmem:[#allocation2 + $0xb8] sm:$0x3] 0.0
      %501 = vst [vmem:[#allocation2 + $0xc0] sm:$0xff] 0.0
      %502 = vst [vmem:[#allocation2 + $0xc8] sm:$0xff] 0.0
      %503 = vst [vmem:[#allocation2 + $0xd0] sm:$0x3] 0.0
      %504 = vst [vmem:[#allocation2 + $0xd8] sm:$0xff] 0.0
      %505 = vst [vmem:[#allocation2 + $0xe0] sm:$0xff] 0.0
      %506 = vst [vmem:[#allocation2 + $0xe8] sm:$0x3] 0.0
      %507 = vst [vmem:[#allocation2 + $0xf0] sm:$0xff] 0.0
      %508 = vst [vmem:[#allocation2 + $0xf8] sm:$0xff] 0.0
      %509 = vst [vmem:[#allocation2 + $0x100] sm:$0x3] 0.0
      %510 = vst [vmem:[#allocation2 + $0x108] sm:$0xff] 0.0
      %511 = vst [vmem:[#allocation2 + $0x110] sm:$0xff] 0.0
      %512 = vst [vmem:[#allocation2 + $0x118] sm:$0x3] 0.0
      %513 = vst [vmem:[#allocation2 + $0x120] sm:$0xff] 0.0
      %514 = vst [vmem:[#allocation2 + $0x128] sm:$0xff] 0.0
      %515 = vst [vmem:[#allocation2 + $0x130] sm:$0x3] 0.0
      %516 = vst [vmem:[#allocation2 + $0x138] sm:$0xff] 0.0
      %517 = vst [vmem:[#allocation2 + $0x140] sm:$0xff] 0.0
      %518 = vst [vmem:[#allocation2 + $0x148] sm:$0x3] 0.0
      %519 = vst [vmem:[#allocation2 + $0x150] sm:$0xff] 0.0
      %520 = vst [vmem:[#allocation2 + $0x158] sm:$0xff] 0.0
      %521 = vst [vmem:[#allocation2 + $0x160] sm:$0x3] 0.0
      %522 = vst [vmem:[#allocation2 + $0x168] sm:$0xff] 0.0
      %523 = vst [vmem:[#allocation2 + $0x170] sm:$0xff] 0.0
      %524 = vst [vmem:[#allocation2 + $0x178] sm:$0x3] 0.0
      %525 = vst [vmem:[#allocation2 + $0x180] sm:$0xff] 0.0
      %526 = vst [vmem:[#allocation2 + $0x188] sm:$0xff] 0.0
      %527 = vst [vmem:[#allocation2 + $0x190] sm:$0x3] 0.0
      %528 = vst [vmem:[#allocation2 + $0x198] sm:$0xff] 0.0
      %529 = vst [vmem:[#allocation2 + $0x1a0] sm:$0xff] 0.0
      %530 = vst [vmem:[#allocation2 + $0x1a8] sm:$0x3] 0.0
      %s531 = scalar_lea.vmem [#allocation2], 24
      %532 = vst [vmem:[%s531 + $0x1] sm:$0xff] %v445
      %533 = vst [vmem:[%s531 + $0x9] sm:$0xff] %v446
      %534 = vst [vmem:[%s531 + $0x19] sm:$0xff] %v447
      %535 = vst [vmem:[%s531 + $0x21] sm:$0xff] %v448
      %536 = vst [vmem:[%s531 + $0x31] sm:$0xff] %v449
      %537 = vst [vmem:[%s531 + $0x39] sm:$0xff] %v450
      %538 = vst [vmem:[%s531 + $0x49] sm:$0xff] %v451
      %539 = vst [vmem:[%s531 + $0x51] sm:$0xff] %v452
      %540 = vst [vmem:[%s531 + $0x61] sm:$0xff] %v453
      %541 = vst [vmem:[%s531 + $0x69] sm:$0xff] %v454
      %542 = vst [vmem:[%s531 + $0x79] sm:$0xff] %v455
      %543 = vst [vmem:[%s531 + $0x81] sm:$0xff] %v456
      %544 = vst [vmem:[%s531 + $0x91] sm:$0xff] %v457
      %545 = vst [vmem:[%s531 + $0x99] sm:$0xff] %v458
      %546 = vst [vmem:[%s531 + $0xa9] sm:$0xff] %v459
      %547 = vst [vmem:[%s531 + $0xb1] sm:$0xff] %v460
      %548 = vst [vmem:[%s531 + $0xc1] sm:$0xff] %v461
      %549 = vst [vmem:[%s531 + $0xc9] sm:$0xff] %v462
      %550 = vst [vmem:[%s531 + $0xd9] sm:$0xff] %v463
      %551 = vst [vmem:[%s531 + $0xe1] sm:$0xff] %v464
      %552 = vst [vmem:[%s531 + $0xf1] sm:$0xff] %v465
      %553 = vst [vmem:[%s531 + $0xf9] sm:$0xff] %v466
      %554 = vst [vmem:[%s531 + $0x109] sm:$0xff] %v467
      %555 = vst [vmem:[%s531 + $0x111] sm:$0xff] %v468
      %556 = vst [vmem:[%s531 + $0x121] sm:$0xff] %v469
      %557 = vst [vmem:[%s531 + $0x129] sm:$0xff] %v470
      %558 = vst [vmem:[%s531 + $0x139] sm:$0xff] %v471
      %559 = vst [vmem:[%s531 + $0x141] sm:$0xff] %v472
      %560 = vst [vmem:[%s531 + $0x151] sm:$0xff] %v473
      %561 = vst [vmem:[%s531 + $0x159] sm:$0xff] %v474
      %562 = vst [vmem:[%s531 + $0x169] sm:$0xff] %v475
      %563 = vst [vmem:[%s531 + $0x171] sm:$0xff] %v476
      %v564 = vld [vmem:[#allocation2] sm:$0xff]
      %v565 = vld [vmem:[#allocation2 + $0x8] sm:$0xff]
      %v566 = vld [vmem:[#allocation2 + $0x18] sm:$0xff]
      %v567 = vld [vmem:[#allocation2 + $0x20] sm:$0xff]
      %v568 = vld [vmem:[#allocation2 + $0x30] sm:$0xff]
      %v569 = vld [vmem:[#allocation2 + $0x38] sm:$0xff]
      %v570 = vld [vmem:[#allocation2 + $0x48] sm:$0xff]
      %v571 = vld [vmem:[#allocation2 + $0x50] sm:$0xff]
      %v572 = vld [vmem:[#allocation2 + $0x60] sm:$0xff]
      %v573 = vld [vmem:[#allocation2 + $0x68] sm:$0xff]
      %v574 = vld [vmem:[#allocation2 + $0x78] sm:$0xff]
      %v575 = vld [vmem:[#allocation2 + $0x80] sm:$0xff]
      %v576 = vld [vmem:[#allocation2 + $0x90] sm:$0xff]
      %v577 = vld [vmem:[#allocation2 + $0x98] sm:$0xff]
      %v578 = vld [vmem:[#allocation2 + $0xa8] sm:$0xff]
      %v579 = vld [vmem:[#allocation2 + $0xb0] sm:$0xff]
      %v580 = vld [vmem:[#allocation2 + $0xc0] sm:$0xff]
      %v581 = vld [vmem:[#allocation2 + $0xc8] sm:$0xff]
      %v582 = vld [vmem:[#allocation2 + $0xd8] sm:$0xff]
      %v583 = vld [vmem:[#allocation2 + $0xe0] sm:$0xff]
      %v584 = vld [vmem:[#allocation2 + $0xf0] sm:$0xff]
      %v585 = vld [vmem:[#allocation2 + $0xf8] sm:$0xff]
      %v586 = vld [vmem:[#allocation2 + $0x108] sm:$0xff]
      %v587 = vld [vmem:[#allocation2 + $0x110] sm:$0xff]
      %v588 = vld [vmem:[#allocation2 + $0x120] sm:$0xff]
      %v589 = vld [vmem:[#allocation2 + $0x128] sm:$0xff]
      %v590 = vld [vmem:[#allocation2 + $0x138] sm:$0xff]
      %v591 = vld [vmem:[#allocation2 + $0x140] sm:$0xff]
      %v592 = vld [vmem:[#allocation2 + $0x150] sm:$0xff]
      %v593 = vld [vmem:[#allocation2 + $0x158] sm:$0xff]
      %v594 = vld [vmem:[#allocation2 + $0x168] sm:$0xff]
      %v595 = vld [vmem:[#allocation2 + $0x170] sm:$0xff]
      %v596 = vld [vmem:[%s4] sm:$0xff]
      %v597 = vld [vmem:[%s4 + $0x8] sm:$0xff]
      %v598 = vld [vmem:[%s4 + $0x10] sm:$0xff]
      %v599 = vld [vmem:[%s4 + $0x18] sm:$0xff]
      %v600 = vld [vmem:[%s4 + $0x20] sm:$0xff]
      %v601 = vld [vmem:[%s4 + $0x28] sm:$0xff]
      %v602 = vld [vmem:[%s4 + $0x30] sm:$0xff]
      %v603 = vld [vmem:[%s4 + $0x38] sm:$0xff]
      %v604 = vld [vmem:[%s4 + $0x40] sm:$0xff]
      %v605 = vld [vmem:[%s4 + $0x48] sm:$0xff]
      %v606 = vld [vmem:[%s4 + $0x50] sm:$0xff]
      %v607 = vld [vmem:[%s4 + $0x58] sm:$0xff]
      %v608 = vld [vmem:[%s4 + $0x60] sm:$0xff]
      %v609 = vld [vmem:[%s4 + $0x68] sm:$0xff]
      %v610 = vld [vmem:[%s4 + $0x70] sm:$0xff]
      %v611 = vld [vmem:[%s4 + $0x78] sm:$0xff]
      %v612 = vld [vmem:[#allocation2 + $0x1] sm:$0xff]
      %v613 = vld [vmem:[#allocation2 + $0x9] sm:$0xff]
      %v614 = vld [vmem:[#allocation2 + $0x19] sm:$0xff]
      %v615 = vld [vmem:[#allocation2 + $0x21] sm:$0xff]
      %v616 = vld [vmem:[#allocation2 + $0x31] sm:$0xff]
      %v617 = vld [vmem:[#allocation2 + $0x39] sm:$0xff]
      %v618 = vld [vmem:[#allocation2 + $0x49] sm:$0xff]
      %v619 = vld [vmem:[#allocation2 + $0x51] sm:$0xff]
      %v620 = vld [vmem:[#allocation2 + $0x61] sm:$0xff]
      %v621 = vld [vmem:[#allocation2 + $0x69] sm:$0xff]
      %v622 = vld [vmem:[#allocation2 + $0x79] sm:$0xff]
      %v623 = vld [vmem:[#allocation2 + $0x81] sm:$0xff]
      %v624 = vld [vmem:[#allocation2 + $0x91] sm:$0xff]
      %v625 = vld [vmem:[#allocation2 + $0x99] sm:$0xff]
      %v626 = vld [vmem:[#allocation2 + $0xa9] sm:$0xff]
      %v627 = vld [vmem:[#allocation2 + $0xb1] sm:$0xff]
      %v628 = vld [vmem:[#allocation2 + $0xc1] sm:$0xff]
      %v629 = vld [vmem:[#allocation2 + $0xc9] sm:$0xff]
      %v630 = vld [vmem:[#allocation2 + $0xd9] sm:$0xff]
      %v631 = vld [vmem:[#allocation2 + $0xe1] sm:$0xff]
      %v632 = vld [vmem:[#allocation2 + $0xf1] sm:$0xff]
      %v633 = vld [vmem:[#allocation2 + $0xf9] sm:$0xff]
      %v634 = vld [vmem:[#allocation2 + $0x109] sm:$0xff]
      %v635 = vld [vmem:[#allocation2 + $0x111] sm:$0xff]
      %v636 = vld [vmem:[#allocation2 + $0x121] sm:$0xff]
      %v637 = vld [vmem:[#allocation2 + $0x129] sm:$0xff]
      %v638 = vld [vmem:[#allocation2 + $0x139] sm:$0xff]
      %v639 = vld [vmem:[#allocation2 + $0x141] sm:$0xff]
      %v640 = vld [vmem:[#allocation2 + $0x151] sm:$0xff]
      %v641 = vld [vmem:[#allocation2 + $0x159] sm:$0xff]
      %v642 = vld [vmem:[#allocation2 + $0x169] sm:$0xff]
      %v643 = vld [vmem:[#allocation2 + $0x171] sm:$0xff]
      %s644 = scalar_lea.vmem %s4, 128
      %v645 = vld [vmem:[%s644] sm:$0xff]
      %v646 = vld [vmem:[%s644 + $0x8] sm:$0xff]
      %v647 = vld [vmem:[%s644 + $0x10] sm:$0xff]
      %v648 = vld [vmem:[%s644 + $0x18] sm:$0xff]
      %v649 = vld [vmem:[%s644 + $0x20] sm:$0xff]
      %v650 = vld [vmem:[%s644 + $0x28] sm:$0xff]
      %v651 = vld [vmem:[%s644 + $0x30] sm:$0xff]
      %v652 = vld [vmem:[%s644 + $0x38] sm:$0xff]
      %v653 = vld [vmem:[%s644 + $0x40] sm:$0xff]
      %v654 = vld [vmem:[%s644 + $0x48] sm:$0xff]
      %v655 = vld [vmem:[%s644 + $0x50] sm:$0xff]
      %v656 = vld [vmem:[%s644 + $0x58] sm:$0xff]
      %v657 = vld [vmem:[%s644 + $0x60] sm:$0xff]
      %v658 = vld [vmem:[%s644 + $0x68] sm:$0xff]
      %v659 = vld [vmem:[%s644 + $0x70] sm:$0xff]
      %v660 = vld [vmem:[%s644 + $0x78] sm:$0xff]
      %661 = vmatprep.subr.mxu0 0.0
      %662 = vmatpush1.msra.mxu0 %v645
      %663 = vmatprep.subr.mxu0 0.0
      %664 = vmatpush1.msra.mxu0 %v646
      %665 = vmatprep.subr.mxu0 0.0
      %666 = vmatpush1.msra.mxu0 %v647
      %667 = vmatprep.subr.mxu0 0.0
      %668 = vmatpush1.msra.mxu0 %v648
      %669 = vmatprep.subr.mxu0 0.0
      %670 = vmatpush1.msra.mxu0 %v649
      %671 = vmatprep.subr.mxu0 0.0
      %672 = vmatpush1.msra.mxu0 %v650
      %673 = vmatprep.subr.mxu0 0.0
      %674 = vmatpush1.msra.mxu0 %v651
      %675 = vmatprep.subr.mxu0 0.0
      %676 = vmatpush1.msra.mxu0 %v652
      %677 = vmatprep.subr.mxu0 0.0
      %678 = vmatpush1.msra.mxu0 %v653
      %679 = vmatprep.subr.mxu0 0.0
      %680 = vmatpush1.msra.mxu0 %v654
      %681 = vmatprep.subr.mxu0 0.0
      %682 = vmatpush1.msra.mxu0 %v655
      %683 = vmatprep.subr.mxu0 0.0
      %684 = vmatpush1.msra.mxu0 %v656
      %685 = vmatprep.subr.mxu0 0.0
      %686 = vmatpush1.msra.mxu0 %v657
      %687 = vmatprep.subr.mxu0 0.0
      %688 = vmatpush1.msra.mxu0 %v658
      %689 = vmatprep.subr.mxu0 0.0
      %690 = vmatpush1.msra.mxu0 %v659
      %691 = vmatprep.subr.mxu0 0.0
      %692 = vmatpush1.msra.mxu0 %v660
      %693 = vmatprep.subr.mxu0 0.0
      %694 = vmatpush1.msra.mxu0 0.0
      %695 = vmatprep.subr.mxu0 0.0
      %696 = vmatpush1.msra.mxu0 0.0
      %697 = vmatprep.subr.mxu0 0.0
      %698 = vmatpush1.msra.mxu0 0.0
      %699 = vmatprep.subr.mxu0 0.0
      %700 = vmatpush1.msra.mxu0 0.0
      %701 = vmatprep.subr.mxu0 0.0
      %702 = vmatpush1.msra.mxu0 0.0
      %703 = vmatprep.subr.mxu0 0.0
      %704 = vmatpush1.msra.mxu0 0.0
      %705 = vmatprep.subr.mxu0 0.0
      %706 = vmatpush1.msra.mxu0 0.0
      %707 = vmatprep.subr.mxu0 0.0
      %708 = vmatpush1.msra.mxu0 0.0
      %709 = vmatprep.subr.mxu0 0.0
      %710 = vmatpush1.msra.mxu0 0.0
      %711 = vmatprep.subr.mxu0 0.0
      %712 = vmatpush1.msra.mxu0 0.0
      %713 = vmatprep.subr.mxu0 0.0
      %714 = vmatpush1.msra.mxu0 0.0
      %715 = vmatprep.subr.mxu0 0.0
      %716 = vmatpush1.msra.mxu0 0.0
      %717 = vmatprep.subr.mxu0 0.0
      %718 = vmatpush1.msra.mxu0 0.0
      %719 = vmatprep.subr.mxu0 0.0
      %720 = vmatpush1.msra.mxu0 0.0
      %721 = vmatprep.subr.mxu0 0.0
      %722 = vmatpush1.msra.mxu0 0.0
      %723 = vmatprep.subr.mxu0 0.0
      %724 = vmatpush1.msra.mxu0 0.0
      %725 = vmatprep.mubr.f32.mxu0 0.0
      %726 = vmatmul.mubr.f32.gmra.mrb[0].mxu0 %v612
      %v727 = vpop.f32.mrb[0].mxu0
      %v728 = vadd.f32 0.0, %v727
      %v729 = vpop.f32.mrb[0].mxu0
      %730 = vmatprep.mubr.f32.mxu0 0.0
      %731 = vmatmul.mubr.f32.gmra.mrb[0].mxu0 %v613
      %v732 = vpop.f32.mrb[0].mxu0
      %v733 = vadd.f32 0.0, %v732
      %v734 = vpop.f32.mrb[0].mxu0
      %735 = vmatprep.mubr.f32.mxu0 0.0
      %736 = vmatmul.mubr.f32.gmra.mrb[0].mxu0 %v614
      %v737 = vpop.f32.mrb[0].mxu0
      %v738 = vadd.f32 0.0, %v737
      %v739 = vpop.f32.mrb[0].mxu0
      %740 = vmatprep.mubr.f32.mxu0 0.0
      %741 = vmatmul.mubr.f32.gmra.mrb[0].mxu0 %v615
      %v742 = vpop.f32.mrb[0].mxu0
      %v743 = vadd.f32 0.0, %v742
      %v744 = vpop.f32.mrb[0].mxu0
      %745 = vmatprep.mubr.f32.mxu0 0.0
      %746 = vmatmul.mubr.f32.gmra.mrb[0].mxu0 %v616
      %v747 = vpop.f32.mrb[0].mxu0
      %v748 = vadd.f32 0.0, %v747
      %v749 = vpop.f32.mrb[0].mxu0
      %750 = vmatprep.mubr.f32.mxu0 0.0
      %751 = vmatmul.mubr.f32.gmra.mrb[0].mxu0 %v617
      %v752 = vpop.f32.mrb[0].mxu0
      %v753 = vadd.f32 0.0, %v752
      %v754 = vpop.f32.mrb[0].mxu0
      %755 = vmatprep.mubr.f32.mxu0 0.0
      %756 = vmatmul.mubr.f32.gmra.mrb[0].mxu0 %v618
      %v757 = vpop.f32.mrb[0].mxu0
      %v758 = vadd.f32 0.0, %v757
      %v759 = vpop.f32.mrb[0].mxu0
      %760 = vmatprep.mubr.f32.mxu0 0.0
      %761 = vmatmul.mubr.f32.gmra.mrb[0].mxu0 %v619
      %v762 = vpop.f32.mrb[0].mxu0
      %v763 = vadd.f32 0.0, %v762
      %v764 = vpop.f32.mrb[0].mxu0
      %765 = vmatprep.mubr.f32.mxu0 0.0
      %766 = vmatmul.mubr.f32.gmra.mrb[0].mxu0 %v620
      %v767 = vpop.f32.mrb[0].mxu0
      %v768 = vadd.f32 0.0, %v767
      %v769 = vpop.f32.mrb[0].mxu0
      %770 = vmatprep.mubr.f32.mxu0 0.0
      %771 = vmatmul.mubr.f32.gmra.mrb[0].mxu0 %v621
      %v772 = vpop.f32.mrb[0].mxu0
      %v773 = vadd.f32 0.0, %v772
      %v774 = vpop.f32.mrb[0].mxu0
      %775 = vmatprep.mubr.f32.mxu0 0.0
      %776 = vmatmul.mubr.f32.gmra.mrb[0].mxu0 %v622
      %v777 = vpop.f32.mrb[0].mxu0
      %v778 = vadd.f32 0.0, %v777
      %v779 = vpop.f32.mrb[0].mxu0
      %780 = vmatprep.mubr.f32.mxu0 0.0
      %781 = vmatmul.mubr.f32.gmra.mrb[0].mxu0 %v623
      %v782 = vpop.f32.mrb[0].mxu0
      %v783 = vadd.f32 0.0, %v782
      %v784 = vpop.f32.mrb[0].mxu0
      %785 = vmatprep.mubr.f32.mxu0 0.0
      %786 = vmatmul.mubr.f32.gmra.mrb[0].mxu0 %v624
      %v787 = vpop.f32.mrb[0].mxu0
      %v788 = vadd.f32 0.0, %v787
      %v789 = vpop.f32.mrb[0].mxu0
      %790 = vmatprep.mubr.f32.mxu0 0.0
      %791 = vmatmul.mubr.f32.gmra.mrb[0].mxu0 %v625
      %v792 = vpop.f32.mrb[0].mxu0
      %v793 = vadd.f32 0.0, %v792
      %v794 = vpop.f32.mrb[0].mxu0
      %795 = vmatprep.mubr.f32.mxu0 0.0
      %796 = vmatmul.mubr.f32.gmra.mrb[0].mxu0 %v626
      %v797 = vpop.f32.mrb[0].mxu0
      %v798 = vadd.f32 0.0, %v797
      %v799 = vpop.f32.mrb[0].mxu0
      %800 = vmatprep.mubr.f32.mxu0 0.0
      %801 = vmatmul.mubr.f32.gmra.mrb[0].mxu0 %v627
      %v802 = vpop.f32.mrb[0].mxu0
      %v803 = vadd.f32 0.0, %v802
      %v804 = vpop.f32.mrb[0].mxu0
      %805 = vmatprep.mubr.f32.mxu0 0.0
      %806 = vmatmul.mubr.f32.gmra.mrb[0].mxu0 %v628
      %v807 = vpop.f32.mrb[0].mxu0
      %v808 = vadd.f32 0.0, %v807
      %v809 = vpop.f32.mrb[0].mxu0
      %810 = vmatprep.mubr.f32.mxu0 0.0
      %811 = vmatmul.mubr.f32.gmra.mrb[0].mxu0 %v629
      %v812 = vpop.f32.mrb[0].mxu0
      %v813 = vadd.f32 0.0, %v812
      %v814 = vpop.f32.mrb[0].mxu0
      %815 = vmatprep.mubr.f32.mxu0 0.0
      %816 = vmatmul.mubr.f32.gmra.mrb[0].mxu0 %v630
      %v817 = vpop.f32.mrb[0].mxu0
      %v818 = vadd.f32 0.0, %v817
      %v819 = vpop.f32.mrb[0].mxu0
      %820 = vmatprep.mubr.f32.mxu0 0.0
      %821 = vmatmul.mubr.f32.gmra.mrb[0].mxu0 %v631
      %v822 = vpop.f32.mrb[0].mxu0
      %v823 = vadd.f32 0.0, %v822
      %v824 = vpop.f32.mrb[0].mxu0
      %825 = vmatprep.mubr.f32.mxu0 0.0
      %826 = vmatmul.mubr.f32.gmra.mrb[0].mxu0 %v632
      %v827 = vpop.f32.mrb[0].mxu0
      %v828 = vadd.f32 0.0, %v827
      %v829 = vpop.f32.mrb[0].mxu0
      %830 = vmatprep.mubr.f32.mxu0 0.0
      %831 = vmatmul.mubr.f32.gmra.mrb[0].mxu0 %v633
      %v832 = vpop.f32.mrb[0].mxu0
      %v833 = vadd.f32 0.0, %v832
      %v834 = vpop.f32.mrb[0].mxu0
      %835 = vmatprep.mubr.f32.mxu0 0.0
      %836 = vmatmul.mubr.f32.gmra.mrb[0].mxu0 %v634
      %v837 = vpop.f32.mrb[0].mxu0
      %v838 = vadd.f32 0.0, %v837
      %v839 = vpop.f32.mrb[0].mxu0
      %840 = vmatprep.mubr.f32.mxu0 0.0
      %841 = vmatmul.mubr.f32.gmra.mrb[0].mxu0 %v635
      %v842 = vpop.f32.mrb[0].mxu0
      %v843 = vadd.f32 0.0, %v842
      %v844 = vpop.f32.mrb[0].mxu0
      %845 = vmatprep.mubr.f32.mxu0 0.0
      %846 = vmatmul.mubr.f32.gmra.mrb[0].mxu0 %v636
      %v847 = vpop.f32.mrb[0].mxu0
      %v848 = vadd.f32 0.0, %v847
      %v849 = vpop.f32.mrb[0].mxu0
      %850 = vmatprep.mubr.f32.mxu0 0.0
      %851 = vmatmul.mubr.f32.gmra.mrb[0].mxu0 %v637
      %v852 = vpop.f32.mrb[0].mxu0
      %v853 = vadd.f32 0.0, %v852
      %v854 = vpop.f32.mrb[0].mxu0
      %855 = vmatprep.mubr.f32.mxu0 0.0
      %856 = vmatmul.mubr.f32.gmra.mrb[0].mxu0 %v638
      %v857 = vpop.f32.mrb[0].mxu0
      %v858 = vadd.f32 0.0, %v857
      %v859 = vpop.f32.mrb[0].mxu0
      %860 = vmatprep.mubr.f32.mxu0 0.0
      %861 = vmatmul.mubr.f32.gmra.mrb[0].mxu0 %v639
      %v862 = vpop.f32.mrb[0].mxu0
      %v863 = vadd.f32 0.0, %v862
      %v864 = vpop.f32.mrb[0].mxu0
      %865 = vmatprep.mubr.f32.mxu0 0.0
      %866 = vmatmul.mubr.f32.gmra.mrb[0].mxu0 %v640
      %v867 = vpop.f32.mrb[0].mxu0
      %v868 = vadd.f32 0.0, %v867
      %v869 = vpop.f32.mrb[0].mxu0
      %870 = vmatprep.mubr.f32.mxu0 0.0
      %871 = vmatmul.mubr.f32.gmra.mrb[0].mxu0 %v641
      %v872 = vpop.f32.mrb[0].mxu0
      %v873 = vadd.f32 0.0, %v872
      %v874 = vpop.f32.mrb[0].mxu0
      %875 = vmatprep.mubr.f32.mxu0 0.0
      %876 = vmatmul.mubr.f32.gmra.mrb[0].mxu0 %v642
      %v877 = vpop.f32.mrb[0].mxu0
      %v878 = vadd.f32 0.0, %v877
      %v879 = vpop.f32.mrb[0].mxu0
      %880 = vmatprep.mubr.f32.mxu0 0.0
      %881 = vmatmul.mubr.f32.gmra.mrb[0].mxu0 %v643
      %v882 = vpop.f32.mrb[0].mxu0
      %v883 = vadd.f32 0.0, %v882
      %v884 = vpop.f32.mrb[0].mxu0
      %885 = vdwg.mxu0
      %886 = vmatprep.subr.mxu0 0.0
      %887 = vmatpush1.msra.mxu0 %v596
      %888 = vmatprep.subr.mxu0 0.0
      %889 = vmatpush1.msra.mxu0 %v597
      %890 = vmatprep.subr.mxu0 0.0
      %891 = vmatpush1.msra.mxu0 %v598
      %892 = vmatprep.subr.mxu0 0.0
      %893 = vmatpush1.msra.mxu0 %v599
      %894 = vmatprep.subr.mxu0 0.0
      %895 = vmatpush1.msra.mxu0 %v600
      %896 = vmatprep.subr.mxu0 0.0
      %897 = vmatpush1.msra.mxu0 %v601
      %898 = vmatprep.subr.mxu0 0.0
      %899 = vmatpush1.msra.mxu0 %v602
      %900 = vmatprep.subr.mxu0 0.0
      %901 = vmatpush1.msra.mxu0 %v603
      %902 = vmatprep.subr.mxu0 0.0
      %903 = vmatpush1.msra.mxu0 %v604
      %904 = vmatprep.subr.mxu0 0.0
      %905 = vmatpush1.msra.mxu0 %v605
      %906 = vmatprep.subr.mxu0 0.0
      %907 = vmatpush1.msra.mxu0 %v606
      %908 = vmatprep.subr.mxu0 0.0
      %909 = vmatpush1.msra.mxu0 %v607
      %910 = vmatprep.subr.mxu0 0.0
      %911 = vmatpush1.msra.mxu0 %v608
      %912 = vmatprep.subr.mxu0 0.0
      %913 = vmatpush1.msra.mxu0 %v609
      %914 = vmatprep.subr.mxu0 0.0
      %915 = vmatpush1.msra.mxu0 %v610
      %916 = vmatprep.subr.mxu0 0.0
      %917 = vmatpush1.msra.mxu0 %v611
      %918 = vmatprep.subr.mxu0 0.0
      %919 = vmatpush1.msra.mxu0 0.0
      %920 = vmatprep.subr.mxu0 0.0
      %921 = vmatpush1.msra.mxu0 0.0
      %922 = vmatprep.subr.mxu0 0.0
      %923 = vmatpush1.msra.mxu0 0.0
      %924 = vmatprep.subr.mxu0 0.0
      %925 = vmatpush1.msra.mxu0 0.0
      %926 = vmatprep.subr.mxu0 0.0
      %927 = vmatpush1.msra.mxu0 0.0
      %928 = vmatprep.subr.mxu0 0.0
      %929 = vmatpush1.msra.mxu0 0.0
      %930 = vmatprep.subr.mxu0 0.0
      %931 = vmatpush1.msra.mxu0 0.0
      %932 = vmatprep.subr.mxu0 0.0
      %933 = vmatpush1.msra.mxu0 0.0
      %934 = vmatprep.subr.mxu0 0.0
      %935 = vmatpush1.msra.mxu0 0.0
      %936 = vmatprep.subr.mxu0 0.0
      %937 = vmatpush1.msra.mxu0 0.0
      %938 = vmatprep.subr.mxu0 0.0
      %939 = vmatpush1.msra.mxu0 0.0
      %940 = vmatprep.subr.mxu0 0.0
      %941 = vmatpush1.msra.mxu0 0.0
      %942 = vmatprep.subr.mxu0 0.0
      %943 = vmatpush1.msra.mxu0 0.0
      %944 = vmatprep.subr.mxu0 0.0
      %945 = vmatpush1.msra.mxu0 0.0
      %946 = vmatprep.subr.mxu0 0.0
      %947 = vmatpush1.msra.mxu0 0.0
      %948 = vmatprep.subr.mxu0 0.0
      %949 = vmatpush1.msra.mxu0 0.0
      %950 = vmatprep.mubr.f32.mxu0 0.0
      %951 = vmatmul.mubr.f32.gmra.mrb[0].mxu0 %v564
      %v952 = vpop.f32.mrb[0].mxu0
      %v953 = vadd.f32 %v728, %v952
      %v954 = vpop.f32.mrb[0].mxu0
      %955 = vmatprep.mubr.f32.mxu0 0.0
      %956 = vmatmul.mubr.f32.gmra.mrb[0].mxu0 %v565
      %v957 = vpop.f32.mrb[0].mxu0
      %v958 = vadd.f32 %v733, %v957
      %v959 = vpop.f32.mrb[0].mxu0
      %960 = vmatprep.mubr.f32.mxu0 0.0
      %961 = vmatmul.mubr.f32.gmra.mrb[0].mxu0 %v566
      %v962 = vpop.f32.mrb[0].mxu0
      %v963 = vadd.f32 %v738, %v962
      %v964 = vpop.f32.mrb[0].mxu0
      %965 = vmatprep.mubr.f32.mxu0 0.0
      %966 = vmatmul.mubr.f32.gmra.mrb[0].mxu0 %v567
      %v967 = vpop.f32.mrb[0].mxu0
      %v968 = vadd.f32 %v743, %v967
      %v969 = vpop.f32.mrb[0].mxu0
      %970 = vmatprep.mubr.f32.mxu0 0.0
      %971 = vmatmul.mubr.f32.gmra.mrb[0].mxu0 %v568
      %v972 = vpop.f32.mrb[0].mxu0
      %v973 = vadd.f32 %v748, %v972
      %v974 = vpop.f32.mrb[0].mxu0
      %975 = vmatprep.mubr.f32.mxu0 0.0
      %976 = vmatmul.mubr.f32.gmra.mrb[0].mxu0 %v569
      %v977 = vpop.f32.mrb[0].mxu0
      %v978 = vadd.f32 %v753, %v977
      %v979 = vpop.f32.mrb[0].mxu0
      %980 = vmatprep.mubr.f32.mxu0 0.0
      %981 = vmatmul.mubr.f32.gmra.mrb[0].mxu0 %v570
      %v982 = vpop.f32.mrb[0].mxu0
      %v983 = vadd.f32 %v758, %v982
      %v984 = vpop.f32.mrb[0].mxu0
      %985 = vmatprep.mubr.f32.mxu0 0.0
      %986 = vmatmul.mubr.f32.gmra.mrb[0].mxu0 %v571
      %v987 = vpop.f32.mrb[0].mxu0
      %v988 = vadd.f32 %v763, %v987
      %v989 = vpop.f32.mrb[0].mxu0
      %990 = vmatprep.mubr.f32.mxu0 0.0
      %991 = vmatmul.mubr.f32.gmra.mrb[0].mxu0 %v572
      %v992 = vpop.f32.mrb[0].mxu0
      %v993 = vadd.f32 %v768, %v992
      %v994 = vpop.f32.mrb[0].mxu0
      %995 = vmatprep.mubr.f32.mxu0 0.0
      %996 = vmatmul.mubr.f32.gmra.mrb[0].mxu0 %v573
      %v997 = vpop.f32.mrb[0].mxu0
      %v998 = vadd.f32 %v773, %v997
      %v999 = vpop.f32.mrb[0].mxu0
      %1000 = vmatprep.mubr.f32.mxu0 0.0
      %1001 = vmatmul.mubr.f32.gmra.mrb[0].mxu0 %v574
      %v1002 = vpop.f32.mrb[0].mxu0
      %v1003 = vadd.f32 %v778, %v1002
      %v1004 = vpop.f32.mrb[0].mxu0
      %1005 = vmatprep.mubr.f32.mxu0 0.0
      %1006 = vmatmul.mubr.f32.gmra.mrb[0].mxu0 %v575
      %v1007 = vpop.f32.mrb[0].mxu0
      %v1008 = vadd.f32 %v783, %v1007
      %v1009 = vpop.f32.mrb[0].mxu0
      %1010 = vmatprep.mubr.f32.mxu0 0.0
      %1011 = vmatmul.mubr.f32.gmra.mrb[0].mxu0 %v576
      %v1012 = vpop.f32.mrb[0].mxu0
      %v1013 = vadd.f32 %v788, %v1012
      %v1014 = vpop.f32.mrb[0].mxu0
      %1015 = vmatprep.mubr.f32.mxu0 0.0
      %1016 = vmatmul.mubr.f32.gmra.mrb[0].mxu0 %v577
      %v1017 = vpop.f32.mrb[0].mxu0
      %v1018 = vadd.f32 %v793, %v1017
      %v1019 = vpop.f32.mrb[0].mxu0
      %1020 = vmatprep.mubr.f32.mxu0 0.0
      %1021 = vmatmul.mubr.f32.gmra.mrb[0].mxu0 %v578
      %v1022 = vpop.f32.mrb[0].mxu0
      %v1023 = vadd.f32 %v798, %v1022
      %v1024 = vpop.f32.mrb[0].mxu0
      %1025 = vmatprep.mubr.f32.mxu0 0.0
      %1026 = vmatmul.mubr.f32.gmra.mrb[0].mxu0 %v579
      %v1027 = vpop.f32.mrb[0].mxu0
      %v1028 = vadd.f32 %v803, %v1027
      %v1029 = vpop.f32.mrb[0].mxu0
      %1030 = vmatprep.mubr.f32.mxu0 0.0
      %1031 = vmatmul.mubr.f32.gmra.mrb[0].mxu0 %v580
      %v1032 = vpop.f32.mrb[0].mxu0
      %v1033 = vadd.f32 %v808, %v1032
      %v1034 = vpop.f32.mrb[0].mxu0
      %1035 = vmatprep.mubr.f32.mxu0 0.0
      %1036 = vmatmul.mubr.f32.gmra.mrb[0].mxu0 %v581
      %v1037 = vpop.f32.mrb[0].mxu0
      %v1038 = vadd.f32 %v813, %v1037
      %v1039 = vpop.f32.mrb[0].mxu0
      %1040 = vmatprep.mubr.f32.mxu0 0.0
      %1041 = vmatmul.mubr.f32.gmra.mrb[0].mxu0 %v582
      %v1042 = vpop.f32.mrb[0].mxu0
      %v1043 = vadd.f32 %v818, %v1042
      %v1044 = vpop.f32.mrb[0].mxu0
      %1045 = vmatprep.mubr.f32.mxu0 0.0
      %1046 = vmatmul.mubr.f32.gmra.mrb[0].mxu0 %v583
      %v1047 = vpop.f32.mrb[0].mxu0
      %v1048 = vadd.f32 %v823, %v1047
      %v1049 = vpop.f32.mrb[0].mxu0
      %1050 = vmatprep.mubr.f32.mxu0 0.0
      %1051 = vmatmul.mubr.f32.gmra.mrb[0].mxu0 %v584
      %v1052 = vpop.f32.mrb[0].mxu0
      %v1053 = vadd.f32 %v828, %v1052
      %v1054 = vpop.f32.mrb[0].mxu0
      %1055 = vmatprep.mubr.f32.mxu0 0.0
      %1056 = vmatmul.mubr.f32.gmra.mrb[0].mxu0 %v585
      %v1057 = vpop.f32.mrb[0].mxu0
      %v1058 = vadd.f32 %v833, %v1057
      %v1059 = vpop.f32.mrb[0].mxu0
      %1060 = vmatprep.mubr.f32.mxu0 0.0
      %1061 = vmatmul.mubr.f32.gmra.mrb[0].mxu0 %v586
      %v1062 = vpop.f32.mrb[0].mxu0
      %v1063 = vadd.f32 %v838, %v1062
      %v1064 = vpop.f32.mrb[0].mxu0
      %1065 = vmatprep.mubr.f32.mxu0 0.0
      %1066 = vmatmul.mubr.f32.gmra.mrb[0].mxu0 %v587
      %v1067 = vpop.f32.mrb[0].mxu0
      %v1068 = vadd.f32 %v843, %v1067
      %v1069 = vpop.f32.mrb[0].mxu0
      %1070 = vmatprep.mubr.f32.mxu0 0.0
      %1071 = vmatmul.mubr.f32.gmra.mrb[0].mxu0 %v588
      %v1072 = vpop.f32.mrb[0].mxu0
      %v1073 = vadd.f32 %v848, %v1072
      %v1074 = vpop.f32.mrb[0].mxu0
      %1075 = vmatprep.mubr.f32.mxu0 0.0
      %1076 = vmatmul.mubr.f32.gmra.mrb[0].mxu0 %v589
      %v1077 = vpop.f32.mrb[0].mxu0
      %v1078 = vadd.f32 %v853, %v1077
      %v1079 = vpop.f32.mrb[0].mxu0
      %1080 = vmatprep.mubr.f32.mxu0 0.0
      %1081 = vmatmul.mubr.f32.gmra.mrb[0].mxu0 %v590
      %v1082 = vpop.f32.mrb[0].mxu0
      %v1083 = vadd.f32 %v858, %v1082
      %v1084 = vpop.f32.mrb[0].mxu0
      %1085 = vmatprep.mubr.f32.mxu0 0.0
      %1086 = vmatmul.mubr.f32.gmra.mrb[0].mxu0 %v591
      %v1087 = vpop.f32.mrb[0].mxu0
      %v1088 = vadd.f32 %v863, %v1087
      %v1089 = vpop.f32.mrb[0].mxu0
      %1090 = vmatprep.mubr.f32.mxu0 0.0
      %1091 = vmatmul.mubr.f32.gmra.mrb[0].mxu0 %v592
      %v1092 = vpop.f32.mrb[0].mxu0
      %v1093 = vadd.f32 %v868, %v1092
      %v1094 = vpop.f32.mrb[0].mxu0
      %1095 = vmatprep.mubr.f32.mxu0 0.0
      %1096 = vmatmul.mubr.f32.gmra.mrb[0].mxu0 %v593
      %v1097 = vpop.f32.mrb[0].mxu0
      %v1098 = vadd.f32 %v873, %v1097
      %v1099 = vpop.f32.mrb[0].mxu0
      %1100 = vmatprep.mubr.f32.mxu0 0.0
      %1101 = vmatmul.mubr.f32.gmra.mrb[0].mxu0 %v594
      %v1102 = vpop.f32.mrb[0].mxu0
      %v1103 = vadd.f32 %v878, %v1102
      %v1104 = vpop.f32.mrb[0].mxu0
      %1105 = vmatprep.mubr.f32.mxu0 0.0
      %1106 = vmatmul.mubr.f32.gmra.mrb[0].mxu0 %v595
      %v1107 = vpop.f32.mrb[0].mxu0
      %v1108 = vadd.f32 %v883, %v1107
      %v1109 = vpop.f32.mrb[0].mxu0
      %1110 = vdwg.mxu0
      %v1111 = vld [vmem:[#allocation2 + $0x2] sm:$0xff]
      %v1112 = vld [vmem:[#allocation2 + $0xa] sm:$0xff]
      %v1113 = vld [vmem:[#allocation2 + $0x1a] sm:$0xff]
      %v1114 = vld [vmem:[#allocation2 + $0x22] sm:$0xff]
      %v1115 = vld [vmem:[#allocation2 + $0x32] sm:$0xff]
      %v1116 = vld [vmem:[#allocation2 + $0x3a] sm:$0xff]
      %v1117 = vld [vmem:[#allocation2 + $0x4a] sm:$0xff]
      %v1118 = vld [vmem:[#allocation2 + $0x52] sm:$0xff]
      %v1119 = vld [vmem:[#allocation2 + $0x62] sm:$0xff]
      %v1120 = vld [vmem:[#allocation2 + $0x6a] sm:$0xff]
      %v1121 = vld [vmem:[#allocation2 + $0x7a] sm:$0xff]
      %v1122 = vld [vmem:[#allocation2 + $0x82] sm:$0xff]
      %v1123 = vld [vmem:[#allocation2 + $0x92] sm:$0xff]
      %v1124 = vld [vmem:[#allocation2 + $0x9a] sm:$0xff]
      %v1125 = vld [vmem:[#allocation2 + $0xaa] sm:$0xff]
      %v1126 = vld [vmem:[#allocation2 + $0xb2] sm:$0xff]
      %v1127 = vld [vmem:[#allocation2 + $0xc2] sm:$0xff]
      %v1128 = vld [vmem:[#allocation2 + $0xca] sm:$0xff]
      %v1129 = vld [vmem:[#allocation2 + $0xda] sm:$0xff]
      %v1130 = vld [vmem:[#allocation2 + $0xe2] sm:$0xff]
      %v1131 = vld [vmem:[#allocation2 + $0xf2] sm:$0xff]
      %v1132 = vld [vmem:[#allocation2 + $0xfa] sm:$0xff]
      %v1133 = vld [vmem:[#allocation2 + $0x10a] sm:$0xff]
      %v1134 = vld [vmem:[#allocation2 + $0x112] sm:$0xff]
      %v1135 = vld [vmem:[#allocation2 + $0x122] sm:$0xff]
      %v1136 = vld [vmem:[#allocation2 + $0x12a] sm:$0xff]
      %v1137 = vld [vmem:[#allocation2 + $0x13a] sm:$0xff]
      %v1138 = vld [vmem:[#allocation2 + $0x142] sm:$0xff]
      %v1139 = vld [vmem:[#allocation2 + $0x152] sm:$0xff]
      %v1140 = vld [vmem:[#allocation2 + $0x15a] sm:$0xff]
      %v1141 = vld [vmem:[#allocation2 + $0x16a] sm:$0xff]
      %v1142 = vld [vmem:[#allocation2 + $0x172] sm:$0xff]
      %s1143 = scalar_lea.vmem %s4, 256
      %v1144 = vld [vmem:[%s1143] sm:$0xff]
      %v1145 = vld [vmem:[%s1143 + $0x8] sm:$0xff]
      %v1146 = vld [vmem:[%s1143 + $0x10] sm:$0xff]
      %v1147 = vld [vmem:[%s1143 + $0x18] sm:$0xff]
      %v1148 = vld [vmem:[%s1143 + $0x20] sm:$0xff]
      %v1149 = vld [vmem:[%s1143 + $0x28] sm:$0xff]
      %v1150 = vld [vmem:[%s1143 + $0x30] sm:$0xff]
      %v1151 = vld [vmem:[%s1143 + $0x38] sm:$0xff]
      %v1152 = vld [vmem:[%s1143 + $0x40] sm:$0xff]
      %v1153 = vld [vmem:[%s1143 + $0x48] sm:$0xff]
      %v1154 = vld [vmem:[%s1143 + $0x50] sm:$0xff]
      %v1155 = vld [vmem:[%s1143 + $0x58] sm:$0xff]
      %v1156 = vld [vmem:[%s1143 + $0x60] sm:$0xff]
      %v1157 = vld [vmem:[%s1143 + $0x68] sm:$0xff]
      %v1158 = vld [vmem:[%s1143 + $0x70] sm:$0xff]
      %v1159 = vld [vmem:[%s1143 + $0x78] sm:$0xff]
      %1160 = vmatprep.subr.mxu0 0.0
      %1161 = vmatpush1.msra.mxu0 %v1144
      %1162 = vmatprep.subr.mxu0 0.0
      %1163 = vmatpush1.msra.mxu0 %v1145
      %1164 = vmatprep.subr.mxu0 0.0
      %1165 = vmatpush1.msra.mxu0 %v1146
      %1166 = vmatprep.subr.mxu0 0.0
      %1167 = vmatpush1.msra.mxu0 %v1147
      %1168 = vmatprep.subr.mxu0 0.0
      %1169 = vmatpush1.msra.mxu0 %v1148
      %1170 = vmatprep.subr.mxu0 0.0
      %1171 = vmatpush1.msra.mxu0 %v1149
      %1172 = vmatprep.subr.mxu0 0.0
      %1173 = vmatpush1.msra.mxu0 %v1150
      %1174 = vmatprep.subr.mxu0 0.0
      %1175 = vmatpush1.msra.mxu0 %v1151
      %1176 = vmatprep.subr.mxu0 0.0
      %1177 = vmatpush1.msra.mxu0 %v1152
      %1178 = vmatprep.subr.mxu0 0.0
      %1179 = vmatpush1.msra.mxu0 %v1153
      %1180 = vmatprep.subr.mxu0 0.0
      %1181 = vmatpush1.msra.mxu0 %v1154
      %1182 = vmatprep.subr.mxu0 0.0
      %1183 = vmatpush1.msra.mxu0 %v1155
      %1184 = vmatprep.subr.mxu0 0.0
      %1185 = vmatpush1.msra.mxu0 %v1156
      %1186 = vmatprep.subr.mxu0 0.0
      %1187 = vmatpush1.msra.mxu0 %v1157
      %1188 = vmatprep.subr.mxu0 0.0
      %1189 = vmatpush1.msra.mxu0 %v1158
      %1190 = vmatprep.subr.mxu0 0.0
      %1191 = vmatpush1.msra.mxu0 %v1159
      %1192 = vmatprep.subr.mxu0 0.0
      %1193 = vmatpush1.msra.mxu0 0.0
      %1194 = vmatprep.subr.mxu0 0.0
      %1195 = vmatpush1.msra.mxu0 0.0
      %1196 = vmatprep.subr.mxu0 0.0
      %1197 = vmatpush1.msra.mxu0 0.0
      %1198 = vmatprep.subr.mxu0 0.0
      %1199 = vmatpush1.msra.mxu0 0.0
      %1200 = vmatprep.subr.mxu0 0.0
      %1201 = vmatpush1.msra.mxu0 0.0
      %1202 = vmatprep.subr.mxu0 0.0
      %1203 = vmatpush1.msra.mxu0 0.0
      %1204 = vmatprep.subr.mxu0 0.0
      %1205 = vmatpush1.msra.mxu0 0.0
      %1206 = vmatprep.subr.mxu0 0.0
      %1207 = vmatpush1.msra.mxu0 0.0
      %1208 = vmatprep.subr.mxu0 0.0
      %1209 = vmatpush1.msra.mxu0 0.0
      %1210 = vmatprep.subr.mxu0 0.0
      %1211 = vmatpush1.msra.mxu0 0.0
      %1212 = vmatprep.subr.mxu0 0.0
      %1213 = vmatpush1.msra.mxu0 0.0
      %1214 = vmatprep.subr.mxu0 0.0
      %1215 = vmatpush1.msra.mxu0 0.0
      %1216 = vmatprep.subr.mxu0 0.0
      %1217 = vmatpush1.msra.mxu0 0.0
      %1218 = vmatprep.subr.mxu0 0.0
      %1219 = vmatpush1.msra.mxu0 0.0
      %1220 = vmatprep.subr.mxu0 0.0
      %1221 = vmatpush1.msra.mxu0 0.0
      %1222 = vmatprep.subr.mxu0 0.0
      %1223 = vmatpush1.msra.mxu0 0.0
      %1224 = vmatprep.mubr.f32.mxu0 0.0
      %1225 = vmatmul.mubr.f32.gmra.mrb[0].mxu0 %v1111
      %v1226 = vpop.f32.mrb[0].mxu0
      %v1227 = vadd.f32 0.0, %v1226
      %v1228 = vpop.f32.mrb[0].mxu0
      %1229 = vmatprep.mubr.f32.mxu0 0.0
      %1230 = vmatmul.mubr.f32.gmra.mrb[0].mxu0 %v1112
      %v1231 = vpop.f32.mrb[0].mxu0
      %v1232 = vadd.f32 0.0, %v1231
      %v1233 = vpop.f32.mrb[0].mxu0
      %1234 = vmatprep.mubr.f32.mxu0 0.0
      %1235 = vmatmul.mubr.f32.gmra.mrb[0].mxu0 %v1113
      %v1236 = vpop.f32.mrb[0].mxu0
      %v1237 = vadd.f32 0.0, %v1236
      %v1238 = vpop.f32.mrb[0].mxu0
      %1239 = vmatprep.mubr.f32.mxu0 0.0
      %1240 = vmatmul.mubr.f32.gmra.mrb[0].mxu0 %v1114
      %v1241 = vpop.f32.mrb[0].mxu0
      %v1242 = vadd.f32 0.0, %v1241
      %v1243 = vpop.f32.mrb[0].mxu0
      %1244 = vmatprep.mubr.f32.mxu0 0.0
      %1245 = vmatmul.mubr.f32.gmra.mrb[0].mxu0 %v1115
      %v1246 = vpop.f32.mrb[0].mxu0
      %v1247 = vadd.f32 0.0, %v1246
      %v1248 = vpop.f32.mrb[0].mxu0
      %1249 = vmatprep.mubr.f32.mxu0 0.0
      %1250 = vmatmul.mubr.f32.gmra.mrb[0].mxu0 %v1116
      %v1251 = vpop.f32.mrb[0].mxu0
      %v1252 = vadd.f32 0.0, %v1251
      %v1253 = vpop.f32.mrb[0].mxu0
      %1254 = vmatprep.mubr.f32.mxu0 0.0
      %1255 = vmatmul.mubr.f32.gmra.mrb[0].mxu0 %v1117
      %v1256 = vpop.f32.mrb[0].mxu0
      %v1257 = vadd.f32 0.0, %v1256
      %v1258 = vpop.f32.mrb[0].mxu0
      %1259 = vmatprep.mubr.f32.mxu0 0.0
      %1260 = vmatmul.mubr.f32.gmra.mrb[0].mxu0 %v1118
      %v1261 = vpop.f32.mrb[0].mxu0
      %v1262 = vadd.f32 0.0, %v1261
      %v1263 = vpop.f32.mrb[0].mxu0
      %1264 = vmatprep.mubr.f32.mxu0 0.0
      %1265 = vmatmul.mubr.f32.gmra.mrb[0].mxu0 %v1119
      %v1266 = vpop.f32.mrb[0].mxu0
      %v1267 = vadd.f32 0.0, %v1266
      %v1268 = vpop.f32.mrb[0].mxu0
      %1269 = vmatprep.mubr.f32.mxu0 0.0
      %1270 = vmatmul.mubr.f32.gmra.mrb[0].mxu0 %v1120
      %v1271 = vpop.f32.mrb[0].mxu0
      %v1272 = vadd.f32 0.0, %v1271
      %v1273 = vpop.f32.mrb[0].mxu0
      %1274 = vmatprep.mubr.f32.mxu0 0.0
      %1275 = vmatmul.mubr.f32.gmra.mrb[0].mxu0 %v1121
      %v1276 = vpop.f32.mrb[0].mxu0
      %v1277 = vadd.f32 0.0, %v1276
      %v1278 = vpop.f32.mrb[0].mxu0
      %1279 = vmatprep.mubr.f32.mxu0 0.0
      %1280 = vmatmul.mubr.f32.gmra.mrb[0].mxu0 %v1122
      %v1281 = vpop.f32.mrb[0].mxu0
      %v1282 = vadd.f32 0.0, %v1281
      %v1283 = vpop.f32.mrb[0].mxu0
      %1284 = vmatprep.mubr.f32.mxu0 0.0
      %1285 = vmatmul.mubr.f32.gmra.mrb[0].mxu0 %v1123
      %v1286 = vpop.f32.mrb[0].mxu0
      %v1287 = vadd.f32 0.0, %v1286
      %v1288 = vpop.f32.mrb[0].mxu0
      %1289 = vmatprep.mubr.f32.mxu0 0.0
      %1290 = vmatmul.mubr.f32.gmra.mrb[0].mxu0 %v1124
      %v1291 = vpop.f32.mrb[0].mxu0
      %v1292 = vadd.f32 0.0, %v1291
      %v1293 = vpop.f32.mrb[0].mxu0
      %1294 = vmatprep.mubr.f32.mxu0 0.0
      %1295 = vmatmul.mubr.f32.gmra.mrb[0].mxu0 %v1125
      %v1296 = vpop.f32.mrb[0].mxu0
      %v1297 = vadd.f32 0.0, %v1296
      %v1298 = vpop.f32.mrb[0].mxu0
      %1299 = vmatprep.mubr.f32.mxu0 0.0
      %1300 = vmatmul.mubr.f32.gmra.mrb[0].mxu0 %v1126
      %v1301 = vpop.f32.mrb[0].mxu0
      %v1302 = vadd.f32 0.0, %v1301
      %v1303 = vpop.f32.mrb[0].mxu0
      %1304 = vmatprep.mubr.f32.mxu0 0.0
      %1305 = vmatmul.mubr.f32.gmra.mrb[0].mxu0 %v1127
      %v1306 = vpop.f32.mrb[0].mxu0
      %v1307 = vadd.f32 0.0, %v1306
      %v1308 = vpop.f32.mrb[0].mxu0
      %1309 = vmatprep.mubr.f32.mxu0 0.0
      %1310 = vmatmul.mubr.f32.gmra.mrb[0].mxu0 %v1128
      %v1311 = vpop.f32.mrb[0].mxu0
      %v1312 = vadd.f32 0.0, %v1311
      %v1313 = vpop.f32.mrb[0].mxu0
      %1314 = vmatprep.mubr.f32.mxu0 0.0
      %1315 = vmatmul.mubr.f32.gmra.mrb[0].mxu0 %v1129
      %v1316 = vpop.f32.mrb[0].mxu0
      %v1317 = vadd.f32 0.0, %v1316
      %v1318 = vpop.f32.mrb[0].mxu0
      %1319 = vmatprep.mubr.f32.mxu0 0.0
      %1320 = vmatmul.mubr.f32.gmra.mrb[0].mxu0 %v1130
      %v1321 = vpop.f32.mrb[0].mxu0
      %v1322 = vadd.f32 0.0, %v1321
      %v1323 = vpop.f32.mrb[0].mxu0
      %1324 = vmatprep.mubr.f32.mxu0 0.0
      %1325 = vmatmul.mubr.f32.gmra.mrb[0].mxu0 %v1131
      %v1326 = vpop.f32.mrb[0].mxu0
      %v1327 = vadd.f32 0.0, %v1326
      %v1328 = vpop.f32.mrb[0].mxu0
      %1329 = vmatprep.mubr.f32.mxu0 0.0
      %1330 = vmatmul.mubr.f32.gmra.mrb[0].mxu0 %v1132
      %v1331 = vpop.f32.mrb[0].mxu0
      %v1332 = vadd.f32 0.0, %v1331
      %v1333 = vpop.f32.mrb[0].mxu0
      %1334 = vmatprep.mubr.f32.mxu0 0.0
      %1335 = vmatmul.mubr.f32.gmra.mrb[0].mxu0 %v1133
      %v1336 = vpop.f32.mrb[0].mxu0
      %v1337 = vadd.f32 0.0, %v1336
      %v1338 = vpop.f32.mrb[0].mxu0
      %1339 = vmatprep.mubr.f32.mxu0 0.0
      %1340 = vmatmul.mubr.f32.gmra.mrb[0].mxu0 %v1134
      %v1341 = vpop.f32.mrb[0].mxu0
      %v1342 = vadd.f32 0.0, %v1341
      %v1343 = vpop.f32.mrb[0].mxu0
      %1344 = vmatprep.mubr.f32.mxu0 0.0
      %1345 = vmatmul.mubr.f32.gmra.mrb[0].mxu0 %v1135
      %v1346 = vpop.f32.mrb[0].mxu0
      %v1347 = vadd.f32 0.0, %v1346
      %v1348 = vpop.f32.mrb[0].mxu0
      %1349 = vmatprep.mubr.f32.mxu0 0.0
      %1350 = vmatmul.mubr.f32.gmra.mrb[0].mxu0 %v1136
      %v1351 = vpop.f32.mrb[0].mxu0
      %v1352 = vadd.f32 0.0, %v1351
      %v1353 = vpop.f32.mrb[0].mxu0
      %1354 = vmatprep.mubr.f32.mxu0 0.0
      %1355 = vmatmul.mubr.f32.gmra.mrb[0].mxu0 %v1137
      %v1356 = vpop.f32.mrb[0].mxu0
      %v1357 = vadd.f32 0.0, %v1356
      %v1358 = vpop.f32.mrb[0].mxu0
      %1359 = vmatprep.mubr.f32.mxu0 0.0
      %1360 = vmatmul.mubr.f32.gmra.mrb[0].mxu0 %v1138
      %v1361 = vpop.f32.mrb[0].mxu0
      %v1362 = vadd.f32 0.0, %v1361
      %v1363 = vpop.f32.mrb[0].mxu0
      %1364 = vmatprep.mubr.f32.mxu0 0.0
      %1365 = vmatmul.mubr.f32.gmra.mrb[0].mxu0 %v1139
      %v1366 = vpop.f32.mrb[0].mxu0
      %v1367 = vadd.f32 0.0, %v1366
      %v1368 = vpop.f32.mrb[0].mxu0
      %1369 = vmatprep.mubr.f32.mxu0 0.0
      %1370 = vmatmul.mubr.f32.gmra.mrb[0].mxu0 %v1140
      %v1371 = vpop.f32.mrb[0].mxu0
      %v1372 = vadd.f32 0.0, %v1371
      %v1373 = vpop.f32.mrb[0].mxu0
      %1374 = vmatprep.mubr.f32.mxu0 0.0
      %1375 = vmatmul.mubr.f32.gmra.mrb[0].mxu0 %v1141
      %v1376 = vpop.f32.mrb[0].mxu0
      %v1377 = vadd.f32 0.0, %v1376
      %v1378 = vpop.f32.mrb[0].mxu0
      %1379 = vmatprep.mubr.f32.mxu0 0.0
      %1380 = vmatmul.mubr.f32.gmra.mrb[0].mxu0 %v1142
      %v1381 = vpop.f32.mrb[0].mxu0
      %v1382 = vadd.f32 0.0, %v1381
      %v1383 = vpop.f32.mrb[0].mxu0
      %1384 = vdwg.mxu0
      %v1385 = vadd.f32 %v953, %v1227
      %v1386 = vadd.f32 %v958, %v1232
      %v1387 = vadd.f32 %v963, %v1237
      %v1388 = vadd.f32 %v968, %v1242
      %v1389 = vadd.f32 %v973, %v1247
      %v1390 = vadd.f32 %v978, %v1252
      %v1391 = vadd.f32 %v983, %v1257
      %v1392 = vadd.f32 %v988, %v1262
      %v1393 = vadd.f32 %v993, %v1267
      %v1394 = vadd.f32 %v998, %v1272
      %v1395 = vadd.f32 %v1003, %v1277
      %v1396 = vadd.f32 %v1008, %v1282
      %v1397 = vadd.f32 %v1013, %v1287
      %v1398 = vadd.f32 %v1018, %v1292
      %v1399 = vadd.f32 %v1023, %v1297
      %v1400 = vadd.f32 %v1028, %v1302
      %v1401 = vadd.f32 %v1033, %v1307
      %v1402 = vadd.f32 %v1038, %v1312
      %v1403 = vadd.f32 %v1043, %v1317
      %v1404 = vadd.f32 %v1048, %v1322
      %v1405 = vadd.f32 %v1053, %v1327
      %v1406 = vadd.f32 %v1058, %v1332
      %v1407 = vadd.f32 %v1063, %v1337
      %v1408 = vadd.f32 %v1068, %v1342
      %v1409 = vadd.f32 %v1073, %v1347
      %v1410 = vadd.f32 %v1078, %v1352
      %v1411 = vadd.f32 %v1083, %v1357
      %v1412 = vadd.f32 %v1088, %v1362
      %v1413 = vadd.f32 %v1093, %v1367
      %v1414 = vadd.f32 %v1098, %v1372
      %v1415 = vadd.f32 %v1103, %v1377
      %v1416 = vadd.f32 %v1108, %v1382
      %v1417 = vld [vmem:[%s531] sm:$0xff]
      %v1418 = vld [vmem:[%s531 + $0x8] sm:$0xff]
      %v1419 = vld [vmem:[%s531 + $0x18] sm:$0xff]
      %v1420 = vld [vmem:[%s531 + $0x20] sm:$0xff]
      %v1421 = vld [vmem:[%s531 + $0x30] sm:$0xff]
      %v1422 = vld [vmem:[%s531 + $0x38] sm:$0xff]
      %v1423 = vld [vmem:[%s531 + $0x48] sm:$0xff]
      %v1424 = vld [vmem:[%s531 + $0x50] sm:$0xff]
      %v1425 = vld [vmem:[%s531 + $0x60] sm:$0xff]
      %v1426 = vld [vmem:[%s531 + $0x68] sm:$0xff]
      %v1427 = vld [vmem:[%s531 + $0x78] sm:$0xff]
      %v1428 = vld [vmem:[%s531 + $0x80] sm:$0xff]
      %v1429 = vld [vmem:[%s531 + $0x90] sm:$0xff]
      %v1430 = vld [vmem:[%s531 + $0x98] sm:$0xff]
      %v1431 = vld [vmem:[%s531 + $0xa8] sm:$0xff]
      %v1432 = vld [vmem:[%s531 + $0xb0] sm:$0xff]
      %v1433 = vld [vmem:[%s531 + $0xc0] sm:$0xff]
      %v1434 = vld [vmem:[%s531 + $0xc8] sm:$0xff]
      %v1435 = vld [vmem:[%s531 + $0xd8] sm:$0xff]
      %v1436 = vld [vmem:[%s531 + $0xe0] sm:$0xff]
      %v1437 = vld [vmem:[%s531 + $0xf0] sm:$0xff]
      %v1438 = vld [vmem:[%s531 + $0xf8] sm:$0xff]
      %v1439 = vld [vmem:[%s531 + $0x108] sm:$0xff]
      %v1440 = vld [vmem:[%s531 + $0x110] sm:$0xff]
      %v1441 = vld [vmem:[%s531 + $0x120] sm:$0xff]
      %v1442 = vld [vmem:[%s531 + $0x128] sm:$0xff]
      %v1443 = vld [vmem:[%s531 + $0x138] sm:$0xff]
      %v1444 = vld [vmem:[%s531 + $0x140] sm:$0xff]
      %v1445 = vld [vmem:[%s531 + $0x150] sm:$0xff]
      %v1446 = vld [vmem:[%s531 + $0x158] sm:$0xff]
      %v1447 = vld [vmem:[%s531 + $0x168] sm:$0xff]
      %v1448 = vld [vmem:[%s531 + $0x170] sm:$0xff]
      %s1449 = scalar_lea.vmem %s4, 384
      %v1450 = vld [vmem:[%s1449] sm:$0xff]
      %v1451 = vld [vmem:[%s1449 + $0x8] sm:$0xff]
      %v1452 = vld [vmem:[%s1449 + $0x10] sm:$0xff]
      %v1453 = vld [vmem:[%s1449 + $0x18] sm:$0xff]
      %v1454 = vld [vmem:[%s1449 + $0x20] sm:$0xff]
      %v1455 = vld [vmem:[%s1449 + $0x28] sm:$0xff]
      %v1456 = vld [vmem:[%s1449 + $0x30] sm:$0xff]
      %v1457 = vld [vmem:[%s1449 + $0x38] sm:$0xff]
      %v1458 = vld [vmem:[%s1449 + $0x40] sm:$0xff]
      %v1459 = vld [vmem:[%s1449 + $0x48] sm:$0xff]
      %v1460 = vld [vmem:[%s1449 + $0x50] sm:$0xff]
      %v1461 = vld [vmem:[%s1449 + $0x58] sm:$0xff]
      %v1462 = vld [vmem:[%s1449 + $0x60] sm:$0xff]
      %v1463 = vld [vmem:[%s1449 + $0x68] sm:$0xff]
      %v1464 = vld [vmem:[%s1449 + $0x70] sm:$0xff]
      %v1465 = vld [vmem:[%s1449 + $0x78] sm:$0xff]
      %1466 = vmatprep.subr.mxu0 0.0
      %1467 = vmatpush1.msra.mxu0 %v1450
      %1468 = vmatprep.subr.mxu0 0.0
      %1469 = vmatpush1.msra.mxu0 %v1451
      %1470 = vmatprep.subr.mxu0 0.0
      %1471 = vmatpush1.msra.mxu0 %v1452
      %1472 = vmatprep.subr.mxu0 0.0
      %1473 = vmatpush1.msra.mxu0 %v1453
      %1474 = vmatprep.subr.mxu0 0.0
      %1475 = vmatpush1.msra.mxu0 %v1454
      %1476 = vmatprep.subr.mxu0 0.0
      %1477 = vmatpush1.msra.mxu0 %v1455
      %1478 = vmatprep.subr.mxu0 0.0
      %1479 = vmatpush1.msra.mxu0 %v1456
      %1480 = vmatprep.subr.mxu0 0.0
      %1481 = vmatpush1.msra.mxu0 %v1457
      %1482 = vmatprep.subr.mxu0 0.0
      %1483 = vmatpush1.msra.mxu0 %v1458
      %1484 = vmatprep.subr.mxu0 0.0
      %1485 = vmatpush1.msra.mxu0 %v1459
      %1486 = vmatprep.subr.mxu0 0.0
      %1487 = vmatpush1.msra.mxu0 %v1460
      %1488 = vmatprep.subr.mxu0 0.0
      %1489 = vmatpush1.msra.mxu0 %v1461
      %1490 = vmatprep.subr.mxu0 0.0
      %1491 = vmatpush1.msra.mxu0 %v1462
      %1492 = vmatprep.subr.mxu0 0.0
      %1493 = vmatpush1.msra.mxu0 %v1463
      %1494 = vmatprep.subr.mxu0 0.0
      %1495 = vmatpush1.msra.mxu0 %v1464
      %1496 = vmatprep.subr.mxu0 0.0
      %1497 = vmatpush1.msra.mxu0 %v1465
      %1498 = vmatprep.subr.mxu0 0.0
      %1499 = vmatpush1.msra.mxu0 0.0
      %1500 = vmatprep.subr.mxu0 0.0
      %1501 = vmatpush1.msra.mxu0 0.0
      %1502 = vmatprep.subr.mxu0 0.0
      %1503 = vmatpush1.msra.mxu0 0.0
      %1504 = vmatprep.subr.mxu0 0.0
      %1505 = vmatpush1.msra.mxu0 0.0
      %1506 = vmatprep.subr.mxu0 0.0
      %1507 = vmatpush1.msra.mxu0 0.0
      %1508 = vmatprep.subr.mxu0 0.0
      %1509 = vmatpush1.msra.mxu0 0.0
      %1510 = vmatprep.subr.mxu0 0.0
      %1511 = vmatpush1.msra.mxu0 0.0
      %1512 = vmatprep.subr.mxu0 0.0
      %1513 = vmatpush1.msra.mxu0 0.0
      %1514 = vmatprep.subr.mxu0 0.0
      %1515 = vmatpush1.msra.mxu0 0.0
      %1516 = vmatprep.subr.mxu0 0.0
      %1517 = vmatpush1.msra.mxu0 0.0
      %1518 = vmatprep.subr.mxu0 0.0
      %1519 = vmatpush1.msra.mxu0 0.0
      %1520 = vmatprep.subr.mxu0 0.0
      %1521 = vmatpush1.msra.mxu0 0.0
      %1522 = vmatprep.subr.mxu0 0.0
      %1523 = vmatpush1.msra.mxu0 0.0
      %1524 = vmatprep.subr.mxu0 0.0
      %1525 = vmatpush1.msra.mxu0 0.0
      %1526 = vmatprep.subr.mxu0 0.0
      %1527 = vmatpush1.msra.mxu0 0.0
      %1528 = vmatprep.subr.mxu0 0.0
      %1529 = vmatpush1.msra.mxu0 0.0
      %1530 = vmatprep.mubr.f32.mxu0 0.0
      %1531 = vmatmul.mubr.f32.gmra.mrb[0].mxu0 %v1417
      %v1532 = vpop.f32.mrb[0].mxu0
      %v1533 = vadd.f32 0.0, %v1532
      %v1534 = vpop.f32.mrb[0].mxu0
      %1535 = vmatprep.mubr.f32.mxu0 0.0
      %1536 = vmatmul.mubr.f32.gmra.mrb[0].mxu0 %v1418
      %v1537 = vpop.f32.mrb[0].mxu0
      %v1538 = vadd.f32 0.0, %v1537
      %v1539 = vpop.f32.mrb[0].mxu0
      %1540 = vmatprep.mubr.f32.mxu0 0.0
      %1541 = vmatmul.mubr.f32.gmra.mrb[0].mxu0 %v1419
      %v1542 = vpop.f32.mrb[0].mxu0
      %v1543 = vadd.f32 0.0, %v1542
      %v1544 = vpop.f32.mrb[0].mxu0
      %1545 = vmatprep.mubr.f32.mxu0 0.0
      %1546 = vmatmul.mubr.f32.gmra.mrb[0].mxu0 %v1420
      %v1547 = vpop.f32.mrb[0].mxu0
      %v1548 = vadd.f32 0.0, %v1547
      %v1549 = vpop.f32.mrb[0].mxu0
      %1550 = vmatprep.mubr.f32.mxu0 0.0
      %1551 = vmatmul.mubr.f32.gmra.mrb[0].mxu0 %v1421
      %v1552 = vpop.f32.mrb[0].mxu0
      %v1553 = vadd.f32 0.0, %v1552
      %v1554 = vpop.f32.mrb[0].mxu0
      %1555 = vmatprep.mubr.f32.mxu0 0.0
      %1556 = vmatmul.mubr.f32.gmra.mrb[0].mxu0 %v1422
      %v1557 = vpop.f32.mrb[0].mxu0
      %v1558 = vadd.f32 0.0, %v1557
      %v1559 = vpop.f32.mrb[0].mxu0
      %1560 = vmatprep.mubr.f32.mxu0 0.0
      %1561 = vmatmul.mubr.f32.gmra.mrb[0].mxu0 %v1423
      %v1562 = vpop.f32.mrb[0].mxu0
      %v1563 = vadd.f32 0.0, %v1562
      %v1564 = vpop.f32.mrb[0].mxu0
      %1565 = vmatprep.mubr.f32.mxu0 0.0
      %1566 = vmatmul.mubr.f32.gmra.mrb[0].mxu0 %v1424
      %v1567 = vpop.f32.mrb[0].mxu0
      %v1568 = vadd.f32 0.0, %v1567
      %v1569 = vpop.f32.mrb[0].mxu0
      %1570 = vmatprep.mubr.f32.mxu0 0.0
      %1571 = vmatmul.mubr.f32.gmra.mrb[0].mxu0 %v1425
      %v1572 = vpop.f32.mrb[0].mxu0
      %v1573 = vadd.f32 0.0, %v1572
      %v1574 = vpop.f32.mrb[0].mxu0
      %1575 = vmatprep.mubr.f32.mxu0 0.0
      %1576 = vmatmul.mubr.f32.gmra.mrb[0].mxu0 %v1426
      %v1577 = vpop.f32.mrb[0].mxu0
      %v1578 = vadd.f32 0.0, %v1577
      %v1579 = vpop.f32.mrb[0].mxu0
      %1580 = vmatprep.mubr.f32.mxu0 0.0
      %1581 = vmatmul.mubr.f32.gmra.mrb[0].mxu0 %v1427
      %v1582 = vpop.f32.mrb[0].mxu0
      %v1583 = vadd.f32 0.0, %v1582
      %v1584 = vpop.f32.mrb[0].mxu0
      %1585 = vmatprep.mubr.f32.mxu0 0.0
      %1586 = vmatmul.mubr.f32.gmra.mrb[0].mxu0 %v1428
      %v1587 = vpop.f32.mrb[0].mxu0
      %v1588 = vadd.f32 0.0, %v1587
      %v1589 = vpop.f32.mrb[0].mxu0
      %1590 = vmatprep.mubr.f32.mxu0 0.0
      %1591 = vmatmul.mubr.f32.gmra.mrb[0].mxu0 %v1429
      %v1592 = vpop.f32.mrb[0].mxu0
      %v1593 = vadd.f32 0.0, %v1592
      %v1594 = vpop.f32.mrb[0].mxu0
      %1595 = vmatprep.mubr.f32.mxu0 0.0
      %1596 = vmatmul.mubr.f32.gmra.mrb[0].mxu0 %v1430
      %v1597 = vpop.f32.mrb[0].mxu0
      %v1598 = vadd.f32 0.0, %v1597
      %v1599 = vpop.f32.mrb[0].mxu0
      %1600 = vmatprep.mubr.f32.mxu0 0.0
      %1601 = vmatmul.mubr.f32.gmra.mrb[0].mxu0 %v1431
      %v1602 = vpop.f32.mrb[0].mxu0
      %v1603 = vadd.f32 0.0, %v1602
      %v1604 = vpop.f32.mrb[0].mxu0
      %1605 = vmatprep.mubr.f32.mxu0 0.0
      %1606 = vmatmul.mubr.f32.gmra.mrb[0].mxu0 %v1432
      %v1607 = vpop.f32.mrb[0].mxu0
      %v1608 = vadd.f32 0.0, %v1607
      %v1609 = vpop.f32.mrb[0].mxu0
      %1610 = vmatprep.mubr.f32.mxu0 0.0
      %1611 = vmatmul.mubr.f32.gmra.mrb[0].mxu0 %v1433
      %v1612 = vpop.f32.mrb[0].mxu0
      %v1613 = vadd.f32 0.0, %v1612
      %v1614 = vpop.f32.mrb[0].mxu0
      %1615 = vmatprep.mubr.f32.mxu0 0.0
      %1616 = vmatmul.mubr.f32.gmra.mrb[0].mxu0 %v1434
      %v1617 = vpop.f32.mrb[0].mxu0
      %v1618 = vadd.f32 0.0, %v1617
      %v1619 = vpop.f32.mrb[0].mxu0
      %1620 = vmatprep.mubr.f32.mxu0 0.0
      %1621 = vmatmul.mubr.f32.gmra.mrb[0].mxu0 %v1435
      %v1622 = vpop.f32.mrb[0].mxu0
      %v1623 = vadd.f32 0.0, %v1622
      %v1624 = vpop.f32.mrb[0].mxu0
      %1625 = vmatprep.mubr.f32.mxu0 0.0
      %1626 = vmatmul.mubr.f32.gmra.mrb[0].mxu0 %v1436
      %v1627 = vpop.f32.mrb[0].mxu0
      %v1628 = vadd.f32 0.0, %v1627
      %v1629 = vpop.f32.mrb[0].mxu0
      %1630 = vmatprep.mubr.f32.mxu0 0.0
      %1631 = vmatmul.mubr.f32.gmra.mrb[0].mxu0 %v1437
      %v1632 = vpop.f32.mrb[0].mxu0
      %v1633 = vadd.f32 0.0, %v1632
      %v1634 = vpop.f32.mrb[0].mxu0
      %1635 = vmatprep.mubr.f32.mxu0 0.0
      %1636 = vmatmul.mubr.f32.gmra.mrb[0].mxu0 %v1438
      %v1637 = vpop.f32.mrb[0].mxu0
      %v1638 = vadd.f32 0.0, %v1637
      %v1639 = vpop.f32.mrb[0].mxu0
      %1640 = vmatprep.mubr.f32.mxu0 0.0
      %1641 = vmatmul.mubr.f32.gmra.mrb[0].mxu0 %v1439
      %v1642 = vpop.f32.mrb[0].mxu0
      %v1643 = vadd.f32 0.0, %v1642
      %v1644 = vpop.f32.mrb[0].mxu0
      %1645 = vmatprep.mubr.f32.mxu0 0.0
      %1646 = vmatmul.mubr.f32.gmra.mrb[0].mxu0 %v1440
      %v1647 = vpop.f32.mrb[0].mxu0
      %v1648 = vadd.f32 0.0, %v1647
      %v1649 = vpop.f32.mrb[0].mxu0
      %1650 = vmatprep.mubr.f32.mxu0 0.0
      %1651 = vmatmul.mubr.f32.gmra.mrb[0].mxu0 %v1441
      %v1652 = vpop.f32.mrb[0].mxu0
      %v1653 = vadd.f32 0.0, %v1652
      %v1654 = vpop.f32.mrb[0].mxu0
      %1655 = vmatprep.mubr.f32.mxu0 0.0
      %1656 = vmatmul.mubr.f32.gmra.mrb[0].mxu0 %v1442
      %v1657 = vpop.f32.mrb[0].mxu0
      %v1658 = vadd.f32 0.0, %v1657
      %v1659 = vpop.f32.mrb[0].mxu0
      %1660 = vmatprep.mubr.f32.mxu0 0.0
      %1661 = vmatmul.mubr.f32.gmra.mrb[0].mxu0 %v1443
      %v1662 = vpop.f32.mrb[0].mxu0
      %v1663 = vadd.f32 0.0, %v1662
      %v1664 = vpop.f32.mrb[0].mxu0
      %1665 = vmatprep.mubr.f32.mxu0 0.0
      %1666 = vmatmul.mubr.f32.gmra.mrb[0].mxu0 %v1444
      %v1667 = vpop.f32.mrb[0].mxu0
      %v1668 = vadd.f32 0.0, %v1667
      %v1669 = vpop.f32.mrb[0].mxu0
      %1670 = vmatprep.mubr.f32.mxu0 0.0
      %1671 = vmatmul.mubr.f32.gmra.mrb[0].mxu0 %v1445
      %v1672 = vpop.f32.mrb[0].mxu0
      %v1673 = vadd.f32 0.0, %v1672
      %v1674 = vpop.f32.mrb[0].mxu0
      %1675 = vmatprep.mubr.f32.mxu0 0.0
      %1676 = vmatmul.mubr.f32.gmra.mrb[0].mxu0 %v1446
      %v1677 = vpop.f32.mrb[0].mxu0
      %v1678 = vadd.f32 0.0, %v1677
      %v1679 = vpop.f32.mrb[0].mxu0
      %1680 = vmatprep.mubr.f32.mxu0 0.0
      %1681 = vmatmul.mubr.f32.gmra.mrb[0].mxu0 %v1447
      %v1682 = vpop.f32.mrb[0].mxu0
      %v1683 = vadd.f32 0.0, %v1682
      %v1684 = vpop.f32.mrb[0].mxu0
      %1685 = vmatprep.mubr.f32.mxu0 0.0
      %1686 = vmatmul.mubr.f32.gmra.mrb[0].mxu0 %v1448
      %v1687 = vpop.f32.mrb[0].mxu0
      %v1688 = vadd.f32 0.0, %v1687
      %v1689 = vpop.f32.mrb[0].mxu0
      %1690 = vdwg.mxu0
      %v1691 = vadd.f32 %v1385, %v1533
      %v1692 = vadd.f32 %v1386, %v1538
      %v1693 = vadd.f32 %v1387, %v1543
      %v1694 = vadd.f32 %v1388, %v1548
      %v1695 = vadd.f32 %v1389, %v1553
      %v1696 = vadd.f32 %v1390, %v1558
      %v1697 = vadd.f32 %v1391, %v1563
      %v1698 = vadd.f32 %v1392, %v1568
      %v1699 = vadd.f32 %v1393, %v1573
      %v1700 = vadd.f32 %v1394, %v1578
      %v1701 = vadd.f32 %v1395, %v1583
      %v1702 = vadd.f32 %v1396, %v1588
      %v1703 = vadd.f32 %v1397, %v1593
      %v1704 = vadd.f32 %v1398, %v1598
      %v1705 = vadd.f32 %v1399, %v1603
      %v1706 = vadd.f32 %v1400, %v1608
      %v1707 = vadd.f32 %v1401, %v1613
      %v1708 = vadd.f32 %v1402, %v1618
      %v1709 = vadd.f32 %v1403, %v1623
      %v1710 = vadd.f32 %v1404, %v1628
      %v1711 = vadd.f32 %v1405, %v1633
      %v1712 = vadd.f32 %v1406, %v1638
      %v1713 = vadd.f32 %v1407, %v1643
      %v1714 = vadd.f32 %v1408, %v1648
      %v1715 = vadd.f32 %v1409, %v1653
      %v1716 = vadd.f32 %v1410, %v1658
      %v1717 = vadd.f32 %v1411, %v1663
      %v1718 = vadd.f32 %v1412, %v1668
      %v1719 = vadd.f32 %v1413, %v1673
      %v1720 = vadd.f32 %v1414, %v1678
      %v1721 = vadd.f32 %v1415, %v1683
      %v1722 = vadd.f32 %v1416, %v1688
      %v1723 = vld [vmem:[%s531 + $0x1] sm:$0xff]
      %v1724 = vld [vmem:[%s531 + $0x9] sm:$0xff]
      %v1725 = vld [vmem:[%s531 + $0x19] sm:$0xff]
      %v1726 = vld [vmem:[%s531 + $0x21] sm:$0xff]
      %v1727 = vld [vmem:[%s531 + $0x31] sm:$0xff]
      %v1728 = vld [vmem:[%s531 + $0x39] sm:$0xff]
      %v1729 = vld [vmem:[%s531 + $0x49] sm:$0xff]
      %v1730 = vld [vmem:[%s531 + $0x51] sm:$0xff]
      %v1731 = vld [vmem:[%s531 + $0x61] sm:$0xff]
      %v1732 = vld [vmem:[%s531 + $0x69] sm:$0xff]
      %v1733 = vld [vmem:[%s531 + $0x79] sm:$0xff]
      %v1734 = vld [vmem:[%s531 + $0x81] sm:$0xff]
      %v1735 = vld [vmem:[%s531 + $0x91] sm:$0xff]
      %v1736 = vld [vmem:[%s531 + $0x99] sm:$0xff]
      %v1737 = vld [vmem:[%s531 + $0xa9] sm:$0xff]
      %v1738 = vld [vmem:[%s531 + $0xb1] sm:$0xff]
      %v1739 = vld [vmem:[%s531 + $0xc1] sm:$0xff]
      %v1740 = vld [vmem:[%s531 + $0xc9] sm:$0xff]
      %v1741 = vld [vmem:[%s531 + $0xd9] sm:$0xff]
      %v1742 = vld [vmem:[%s531 + $0xe1] sm:$0xff]
      %v1743 = vld [vmem:[%s531 + $0xf1] sm:$0xff]
      %v1744 = vld [vmem:[%s531 + $0xf9] sm:$0xff]
      %v1745 = vld [vmem:[%s531 + $0x109] sm:$0xff]
      %v1746 = vld [vmem:[%s531 + $0x111] sm:$0xff]
      %v1747 = vld [vmem:[%s531 + $0x121] sm:$0xff]
      %v1748 = vld [vmem:[%s531 + $0x129] sm:$0xff]
      %v1749 = vld [vmem:[%s531 + $0x139] sm:$0xff]
      %v1750 = vld [vmem:[%s531 + $0x141] sm:$0xff]
      %v1751 = vld [vmem:[%s531 + $0x151] sm:$0xff]
      %v1752 = vld [vmem:[%s531 + $0x159] sm:$0xff]
      %v1753 = vld [vmem:[%s531 + $0x169] sm:$0xff]
      %v1754 = vld [vmem:[%s531 + $0x171] sm:$0xff]
      %s1755 = scalar_lea.vmem %s4, 512
      %v1756 = vld [vmem:[%s1755] sm:$0xff]
      %v1757 = vld [vmem:[%s1755 + $0x8] sm:$0xff]
      %v1758 = vld [vmem:[%s1755 + $0x10] sm:$0xff]
      %v1759 = vld [vmem:[%s1755 + $0x18] sm:$0xff]
      %v1760 = vld [vmem:[%s1755 + $0x20] sm:$0xff]
      %v1761 = vld [vmem:[%s1755 + $0x28] sm:$0xff]
      %v1762 = vld [vmem:[%s1755 + $0x30] sm:$0xff]
      %v1763 = vld [vmem:[%s1755 + $0x38] sm:$0xff]
      %v1764 = vld [vmem:[%s1755 + $0x40] sm:$0xff]
      %v1765 = vld [vmem:[%s1755 + $0x48] sm:$0xff]
      %v1766 = vld [vmem:[%s1755 + $0x50] sm:$0xff]
      %v1767 = vld [vmem:[%s1755 + $0x58] sm:$0xff]
      %v1768 = vld [vmem:[%s1755 + $0x60] sm:$0xff]
      %v1769 = vld [vmem:[%s1755 + $0x68] sm:$0xff]
      %v1770 = vld [vmem:[%s1755 + $0x70] sm:$0xff]
      %v1771 = vld [vmem:[%s1755 + $0x78] sm:$0xff]
      %1772 = vmatprep.subr.mxu0 0.0
      %1773 = vmatpush1.msra.mxu0 %v1756
      %1774 = vmatprep.subr.mxu0 0.0
      %1775 = vmatpush1.msra.mxu0 %v1757
      %1776 = vmatprep.subr.mxu0 0.0
      %1777 = vmatpush1.msra.mxu0 %v1758
      %1778 = vmatprep.subr.mxu0 0.0
      %1779 = vmatpush1.msra.mxu0 %v1759
      %1780 = vmatprep.subr.mxu0 0.0
      %1781 = vmatpush1.msra.mxu0 %v1760
      %1782 = vmatprep.subr.mxu0 0.0
      %1783 = vmatpush1.msra.mxu0 %v1761
      %1784 = vmatprep.subr.mxu0 0.0
      %1785 = vmatpush1.msra.mxu0 %v1762
      %1786 = vmatprep.subr.mxu0 0.0
      %1787 = vmatpush1.msra.mxu0 %v1763
      %1788 = vmatprep.subr.mxu0 0.0
      %1789 = vmatpush1.msra.mxu0 %v1764
      %1790 = vmatprep.subr.mxu0 0.0
      %1791 = vmatpush1.msra.mxu0 %v1765
      %1792 = vmatprep.subr.mxu0 0.0
      %1793 = vmatpush1.msra.mxu0 %v1766
      %1794 = vmatprep.subr.mxu0 0.0
      %1795 = vmatpush1.msra.mxu0 %v1767
      %1796 = vmatprep.subr.mxu0 0.0
      %1797 = vmatpush1.msra.mxu0 %v1768
      %1798 = vmatprep.subr.mxu0 0.0
      %1799 = vmatpush1.msra.mxu0 %v1769
      %1800 = vmatprep.subr.mxu0 0.0
      %1801 = vmatpush1.msra.mxu0 %v1770
      %1802 = vmatprep.subr.mxu0 0.0
      %1803 = vmatpush1.msra.mxu0 %v1771
      %1804 = vmatprep.subr.mxu0 0.0
      %1805 = vmatpush1.msra.mxu0 0.0
      %1806 = vmatprep.subr.mxu0 0.0
      %1807 = vmatpush1.msra.mxu0 0.0
      %1808 = vmatprep.subr.mxu0 0.0
      %1809 = vmatpush1.msra.mxu0 0.0
      %1810 = vmatprep.subr.mxu0 0.0
      %1811 = vmatpush1.msra.mxu0 0.0
      %1812 = vmatprep.subr.mxu0 0.0
      %1813 = vmatpush1.msra.mxu0 0.0
      %1814 = vmatprep.subr.mxu0 0.0
      %1815 = vmatpush1.msra.mxu0 0.0
      %1816 = vmatprep.subr.mxu0 0.0
      %1817 = vmatpush1.msra.mxu0 0.0
      %1818 = vmatprep.subr.mxu0 0.0
      %1819 = vmatpush1.msra.mxu0 0.0
      %1820 = vmatprep.subr.mxu0 0.0
      %1821 = vmatpush1.msra.mxu0 0.0
      %1822 = vmatprep.subr.mxu0 0.0
      %1823 = vmatpush1.msra.mxu0 0.0
      %1824 = vmatprep.subr.mxu0 0.0
      %1825 = vmatpush1.msra.mxu0 0.0
      %1826 = vmatprep.subr.mxu0 0.0
      %1827 = vmatpush1.msra.mxu0 0.0
      %1828 = vmatprep.subr.mxu0 0.0
      %1829 = vmatpush1.msra.mxu0 0.0
      %1830 = vmatprep.subr.mxu0 0.0
      %1831 = vmatpush1.msra.mxu0 0.0
      %1832 = vmatprep.subr.mxu0 0.0
      %1833 = vmatpush1.msra.mxu0 0.0
      %1834 = vmatprep.subr.mxu0 0.0
      %1835 = vmatpush1.msra.mxu0 0.0
      %1836 = vmatprep.mubr.f32.mxu0 0.0
      %1837 = vmatmul.mubr.f32.gmra.mrb[0].mxu0 %v1723
      %v1838 = vpop.f32.mrb[0].mxu0
      %v1839 = vadd.f32 0.0, %v1838
      %v1840 = vpop.f32.mrb[0].mxu0
      %1841 = vmatprep.mubr.f32.mxu0 0.0
      %1842 = vmatmul.mubr.f32.gmra.mrb[0].mxu0 %v1724
      %v1843 = vpop.f32.mrb[0].mxu0
      %v1844 = vadd.f32 0.0, %v1843
      %v1845 = vpop.f32.mrb[0].mxu0
      %1846 = vmatprep.mubr.f32.mxu0 0.0
      %1847 = vmatmul.mubr.f32.gmra.mrb[0].mxu0 %v1725
      %v1848 = vpop.f32.mrb[0].mxu0
      %v1849 = vadd.f32 0.0, %v1848
      %v1850 = vpop.f32.mrb[0].mxu0
      %1851 = vmatprep.mubr.f32.mxu0 0.0
      %1852 = vmatmul.mubr.f32.gmra.mrb[0].mxu0 %v1726
      %v1853 = vpop.f32.mrb[0].mxu0
      %v1854 = vadd.f32 0.0, %v1853
      %v1855 = vpop.f32.mrb[0].mxu0
      %1856 = vmatprep.mubr.f32.mxu0 0.0
      %1857 = vmatmul.mubr.f32.gmra.mrb[0].mxu0 %v1727
      %v1858 = vpop.f32.mrb[0].mxu0
      %v1859 = vadd.f32 0.0, %v1858
      %v1860 = vpop.f32.mrb[0].mxu0
      %1861 = vmatprep.mubr.f32.mxu0 0.0
      %1862 = vmatmul.mubr.f32.gmra.mrb[0].mxu0 %v1728
      %v1863 = vpop.f32.mrb[0].mxu0
      %v1864 = vadd.f32 0.0, %v1863
      %v1865 = vpop.f32.mrb[0].mxu0
      %1866 = vmatprep.mubr.f32.mxu0 0.0
      %1867 = vmatmul.mubr.f32.gmra.mrb[0].mxu0 %v1729
      %v1868 = vpop.f32.mrb[0].mxu0
      %v1869 = vadd.f32 0.0, %v1868
      %v1870 = vpop.f32.mrb[0].mxu0
      %1871 = vmatprep.mubr.f32.mxu0 0.0
      %1872 = vmatmul.mubr.f32.gmra.mrb[0].mxu0 %v1730
      %v1873 = vpop.f32.mrb[0].mxu0
      %v1874 = vadd.f32 0.0, %v1873
      %v1875 = vpop.f32.mrb[0].mxu0
      %1876 = vmatprep.mubr.f32.mxu0 0.0
      %1877 = vmatmul.mubr.f32.gmra.mrb[0].mxu0 %v1731
      %v1878 = vpop.f32.mrb[0].mxu0
      %v1879 = vadd.f32 0.0, %v1878
      %v1880 = vpop.f32.mrb[0].mxu0
      %1881 = vmatprep.mubr.f32.mxu0 0.0
      %1882 = vmatmul.mubr.f32.gmra.mrb[0].mxu0 %v1732
      %v1883 = vpop.f32.mrb[0].mxu0
      %v1884 = vadd.f32 0.0, %v1883
      %v1885 = vpop.f32.mrb[0].mxu0
      %1886 = vmatprep.mubr.f32.mxu0 0.0
      %1887 = vmatmul.mubr.f32.gmra.mrb[0].mxu0 %v1733
      %v1888 = vpop.f32.mrb[0].mxu0
      %v1889 = vadd.f32 0.0, %v1888
      %v1890 = vpop.f32.mrb[0].mxu0
      %1891 = vmatprep.mubr.f32.mxu0 0.0
      %1892 = vmatmul.mubr.f32.gmra.mrb[0].mxu0 %v1734
      %v1893 = vpop.f32.mrb[0].mxu0
      %v1894 = vadd.f32 0.0, %v1893
      %v1895 = vpop.f32.mrb[0].mxu0
      %1896 = vmatprep.mubr.f32.mxu0 0.0
      %1897 = vmatmul.mubr.f32.gmra.mrb[0].mxu0 %v1735
      %v1898 = vpop.f32.mrb[0].mxu0
      %v1899 = vadd.f32 0.0, %v1898
      %v1900 = vpop.f32.mrb[0].mxu0
      %1901 = vmatprep.mubr.f32.mxu0 0.0
      %1902 = vmatmul.mubr.f32.gmra.mrb[0].mxu0 %v1736
      %v1903 = vpop.f32.mrb[0].mxu0
      %v1904 = vadd.f32 0.0, %v1903
      %v1905 = vpop.f32.mrb[0].mxu0
      %1906 = vmatprep.mubr.f32.mxu0 0.0
      %1907 = vmatmul.mubr.f32.gmra.mrb[0].mxu0 %v1737
      %v1908 = vpop.f32.mrb[0].mxu0
      %v1909 = vadd.f32 0.0, %v1908
      %v1910 = vpop.f32.mrb[0].mxu0
      %1911 = vmatprep.mubr.f32.mxu0 0.0
      %1912 = vmatmul.mubr.f32.gmra.mrb[0].mxu0 %v1738
      %v1913 = vpop.f32.mrb[0].mxu0
      %v1914 = vadd.f32 0.0, %v1913
      %v1915 = vpop.f32.mrb[0].mxu0
      %1916 = vmatprep.mubr.f32.mxu0 0.0
      %1917 = vmatmul.mubr.f32.gmra.mrb[0].mxu0 %v1739
      %v1918 = vpop.f32.mrb[0].mxu0
      %v1919 = vadd.f32 0.0, %v1918
      %v1920 = vpop.f32.mrb[0].mxu0
      %1921 = vmatprep.mubr.f32.mxu0 0.0
      %1922 = vmatmul.mubr.f32.gmra.mrb[0].mxu0 %v1740
      %v1923 = vpop.f32.mrb[0].mxu0
      %v1924 = vadd.f32 0.0, %v1923
      %v1925 = vpop.f32.mrb[0].mxu0
      %1926 = vmatprep.mubr.f32.mxu0 0.0
      %1927 = vmatmul.mubr.f32.gmra.mrb[0].mxu0 %v1741
      %v1928 = vpop.f32.mrb[0].mxu0
      %v1929 = vadd.f32 0.0, %v1928
      %v1930 = vpop.f32.mrb[0].mxu0
      %1931 = vmatprep.mubr.f32.mxu0 0.0
      %1932 = vmatmul.mubr.f32.gmra.mrb[0].mxu0 %v1742
      %v1933 = vpop.f32.mrb[0].mxu0
      %v1934 = vadd.f32 0.0, %v1933
      %v1935 = vpop.f32.mrb[0].mxu0
      %1936 = vmatprep.mubr.f32.mxu0 0.0
      %1937 = vmatmul.mubr.f32.gmra.mrb[0].mxu0 %v1743
      %v1938 = vpop.f32.mrb[0].mxu0
      %v1939 = vadd.f32 0.0, %v1938
      %v1940 = vpop.f32.mrb[0].mxu0
      %1941 = vmatprep.mubr.f32.mxu0 0.0
      %1942 = vmatmul.mubr.f32.gmra.mrb[0].mxu0 %v1744
      %v1943 = vpop.f32.mrb[0].mxu0
      %v1944 = vadd.f32 0.0, %v1943
      %v1945 = vpop.f32.mrb[0].mxu0
      %1946 = vmatprep.mubr.f32.mxu0 0.0
      %1947 = vmatmul.mubr.f32.gmra.mrb[0].mxu0 %v1745
      %v1948 = vpop.f32.mrb[0].mxu0
      %v1949 = vadd.f32 0.0, %v1948
      %v1950 = vpop.f32.mrb[0].mxu0
      %1951 = vmatprep.mubr.f32.mxu0 0.0
      %1952 = vmatmul.mubr.f32.gmra.mrb[0].mxu0 %v1746
      %v1953 = vpop.f32.mrb[0].mxu0
      %v1954 = vadd.f32 0.0, %v1953
      %v1955 = vpop.f32.mrb[0].mxu0
      %1956 = vmatprep.mubr.f32.mxu0 0.0
      %1957 = vmatmul.mubr.f32.gmra.mrb[0].mxu0 %v1747
      %v1958 = vpop.f32.mrb[0].mxu0
      %v1959 = vadd.f32 0.0, %v1958
      %v1960 = vpop.f32.mrb[0].mxu0
      %1961 = vmatprep.mubr.f32.mxu0 0.0
      %1962 = vmatmul.mubr.f32.gmra.mrb[0].mxu0 %v1748
      %v1963 = vpop.f32.mrb[0].mxu0
      %v1964 = vadd.f32 0.0, %v1963
      %v1965 = vpop.f32.mrb[0].mxu0
      %1966 = vmatprep.mubr.f32.mxu0 0.0
      %1967 = vmatmul.mubr.f32.gmra.mrb[0].mxu0 %v1749
      %v1968 = vpop.f32.mrb[0].mxu0
      %v1969 = vadd.f32 0.0, %v1968
      %v1970 = vpop.f32.mrb[0].mxu0
      %1971 = vmatprep.mubr.f32.mxu0 0.0
      %1972 = vmatmul.mubr.f32.gmra.mrb[0].mxu0 %v1750
      %v1973 = vpop.f32.mrb[0].mxu0
      %v1974 = vadd.f32 0.0, %v1973
      %v1975 = vpop.f32.mrb[0].mxu0
      %1976 = vmatprep.mubr.f32.mxu0 0.0
      %1977 = vmatmul.mubr.f32.gmra.mrb[0].mxu0 %v1751
      %v1978 = vpop.f32.mrb[0].mxu0
      %v1979 = vadd.f32 0.0, %v1978
      %v1980 = vpop.f32.mrb[0].mxu0
      %1981 = vmatprep.mubr.f32.mxu0 0.0
      %1982 = vmatmul.mubr.f32.gmra.mrb[0].mxu0 %v1752
      %v1983 = vpop.f32.mrb[0].mxu0
      %v1984 = vadd.f32 0.0, %v1983
      %v1985 = vpop.f32.mrb[0].mxu0
      %1986 = vmatprep.mubr.f32.mxu0 0.0
      %1987 = vmatmul.mubr.f32.gmra.mrb[0].mxu0 %v1753
      %v1988 = vpop.f32.mrb[0].mxu0
      %v1989 = vadd.f32 0.0, %v1988
      %v1990 = vpop.f32.mrb[0].mxu0
      %1991 = vmatprep.mubr.f32.mxu0 0.0
      %1992 = vmatmul.mubr.f32.gmra.mrb[0].mxu0 %v1754
      %v1993 = vpop.f32.mrb[0].mxu0
      %v1994 = vadd.f32 0.0, %v1993
      %v1995 = vpop.f32.mrb[0].mxu0
      %1996 = vdwg.mxu0
      %v1997 = vadd.f32 %v1691, %v1839
      %v1998 = vadd.f32 %v1692, %v1844
      %v1999 = vadd.f32 %v1693, %v1849
      %v2000 = vadd.f32 %v1694, %v1854
      %v2001 = vadd.f32 %v1695, %v1859
      %v2002 = vadd.f32 %v1696, %v1864
      %v2003 = vadd.f32 %v1697, %v1869
      %v2004 = vadd.f32 %v1698, %v1874
      %v2005 = vadd.f32 %v1699, %v1879
      %v2006 = vadd.f32 %v1700, %v1884
      %v2007 = vadd.f32 %v1701, %v1889
      %v2008 = vadd.f32 %v1702, %v1894
      %v2009 = vadd.f32 %v1703, %v1899
      %v2010 = vadd.f32 %v1704, %v1904
      %v2011 = vadd.f32 %v1705, %v1909
      %v2012 = vadd.f32 %v1706, %v1914
      %v2013 = vadd.f32 %v1707, %v1919
      %v2014 = vadd.f32 %v1708, %v1924
      %v2015 = vadd.f32 %v1709, %v1929
      %v2016 = vadd.f32 %v1710, %v1934
      %v2017 = vadd.f32 %v1711, %v1939
      %v2018 = vadd.f32 %v1712, %v1944
      %v2019 = vadd.f32 %v1713, %v1949
      %v2020 = vadd.f32 %v1714, %v1954
      %v2021 = vadd.f32 %v1715, %v1959
      %v2022 = vadd.f32 %v1716, %v1964
      %v2023 = vadd.f32 %v1717, %v1969
      %v2024 = vadd.f32 %v1718, %v1974
      %v2025 = vadd.f32 %v1719, %v1979
      %v2026 = vadd.f32 %v1720, %v1984
      %v2027 = vadd.f32 %v1721, %v1989
      %v2028 = vadd.f32 %v1722, %v1994
      %v2029 = vld [vmem:[%s531 + $0x2] sm:$0xff]
      %v2030 = vld [vmem:[%s531 + $0xa] sm:$0xff]
      %v2031 = vld [vmem:[%s531 + $0x1a] sm:$0xff]
      %v2032 = vld [vmem:[%s531 + $0x22] sm:$0xff]
      %v2033 = vld [vmem:[%s531 + $0x32] sm:$0xff]
      %v2034 = vld [vmem:[%s531 + $0x3a] sm:$0xff]
      %v2035 = vld [vmem:[%s531 + $0x4a] sm:$0xff]
      %v2036 = vld [vmem:[%s531 + $0x52] sm:$0xff]
      %v2037 = vld [vmem:[%s531 + $0x62] sm:$0xff]
      %v2038 = vld [vmem:[%s531 + $0x6a] sm:$0xff]
      %v2039 = vld [vmem:[%s531 + $0x7a] sm:$0xff]
      %v2040 = vld [vmem:[%s531 + $0x82] sm:$0xff]
      %v2041 = vld [vmem:[%s531 + $0x92] sm:$0xff]
      %v2042 = vld [vmem:[%s531 + $0x9a] sm:$0xff]
      %v2043 = vld [vmem:[%s531 + $0xaa] sm:$0xff]
      %v2044 = vld [vmem:[%s531 + $0xb2] sm:$0xff]
      %v2045 = vld [vmem:[%s531 + $0xc2] sm:$0xff]
      %v2046 = vld [vmem:[%s531 + $0xca] sm:$0xff]
      %v2047 = vld [vmem:[%s531 + $0xda] sm:$0xff]
      %v2048 = vld [vmem:[%s531 + $0xe2] sm:$0xff]
      %v2049 = vld [vmem:[%s531 + $0xf2] sm:$0xff]
      %v2050 = vld [vmem:[%s531 + $0xfa] sm:$0xff]
      %v2051 = vld [vmem:[%s531 + $0x10a] sm:$0xff]
      %v2052 = vld [vmem:[%s531 + $0x112] sm:$0xff]
      %v2053 = vld [vmem:[%s531 + $0x122] sm:$0xff]
      %v2054 = vld [vmem:[%s531 + $0x12a] sm:$0xff]
      %v2055 = vld [vmem:[%s531 + $0x13a] sm:$0xff]
      %v2056 = vld [vmem:[%s531 + $0x142] sm:$0xff]
      %v2057 = vld [vmem:[%s531 + $0x152] sm:$0xff]
      %v2058 = vld [vmem:[%s531 + $0x15a] sm:$0xff]
      %v2059 = vld [vmem:[%s531 + $0x16a] sm:$0xff]
      %v2060 = vld [vmem:[%s531 + $0x172] sm:$0xff]
      %s2061 = scalar_lea.vmem %s4, 640
      %v2062 = vld [vmem:[%s2061] sm:$0xff]
      %v2063 = vld [vmem:[%s2061 + $0x8] sm:$0xff]
      %v2064 = vld [vmem:[%s2061 + $0x10] sm:$0xff]
      %v2065 = vld [vmem:[%s2061 + $0x18] sm:$0xff]
      %v2066 = vld [vmem:[%s2061 + $0x20] sm:$0xff]
      %v2067 = vld [vmem:[%s2061 + $0x28] sm:$0xff]
      %v2068 = vld [vmem:[%s2061 + $0x30] sm:$0xff]
      %v2069 = vld [vmem:[%s2061 + $0x38] sm:$0xff]
      %v2070 = vld [vmem:[%s2061 + $0x40] sm:$0xff]
      %v2071 = vld [vmem:[%s2061 + $0x48] sm:$0xff]
      %v2072 = vld [vmem:[%s2061 + $0x50] sm:$0xff]
      %v2073 = vld [vmem:[%s2061 + $0x58] sm:$0xff]
      %v2074 = vld [vmem:[%s2061 + $0x60] sm:$0xff]
      %v2075 = vld [vmem:[%s2061 + $0x68] sm:$0xff]
      %v2076 = vld [vmem:[%s2061 + $0x70] sm:$0xff]
      %v2077 = vld [vmem:[%s2061 + $0x78] sm:$0xff]
      %2078 = vmatprep.subr.mxu0 0.0
      %2079 = vmatpush1.msra.mxu0 %v2062
      %2080 = vmatprep.subr.mxu0 0.0
      %2081 = vmatpush1.msra.mxu0 %v2063
      %2082 = vmatprep.subr.mxu0 0.0
      %2083 = vmatpush1.msra.mxu0 %v2064
      %2084 = vmatprep.subr.mxu0 0.0
      %2085 = vmatpush1.msra.mxu0 %v2065
      %2086 = vmatprep.subr.mxu0 0.0
      %2087 = vmatpush1.msra.mxu0 %v2066
      %2088 = vmatprep.subr.mxu0 0.0
      %2089 = vmatpush1.msra.mxu0 %v2067
      %2090 = vmatprep.subr.mxu0 0.0
      %2091 = vmatpush1.msra.mxu0 %v2068
      %2092 = vmatprep.subr.mxu0 0.0
      %2093 = vmatpush1.msra.mxu0 %v2069
      %2094 = vmatprep.subr.mxu0 0.0
      %2095 = vmatpush1.msra.mxu0 %v2070
      %2096 = vmatprep.subr.mxu0 0.0
      %2097 = vmatpush1.msra.mxu0 %v2071
      %2098 = vmatprep.subr.mxu0 0.0
      %2099 = vmatpush1.msra.mxu0 %v2072
      %2100 = vmatprep.subr.mxu0 0.0
      %2101 = vmatpush1.msra.mxu0 %v2073
      %2102 = vmatprep.subr.mxu0 0.0
      %2103 = vmatpush1.msra.mxu0 %v2074
      %2104 = vmatprep.subr.mxu0 0.0
      %2105 = vmatpush1.msra.mxu0 %v2075
      %2106 = vmatprep.subr.mxu0 0.0
      %2107 = vmatpush1.msra.mxu0 %v2076
      %2108 = vmatprep.subr.mxu0 0.0
      %2109 = vmatpush1.msra.mxu0 %v2077
      %2110 = vmatprep.subr.mxu0 0.0
      %2111 = vmatpush1.msra.mxu0 0.0
      %2112 = vmatprep.subr.mxu0 0.0
      %2113 = vmatpush1.msra.mxu0 0.0
      %2114 = vmatprep.subr.mxu0 0.0
      %2115 = vmatpush1.msra.mxu0 0.0
      %2116 = vmatprep.subr.mxu0 0.0
      %2117 = vmatpush1.msra.mxu0 0.0
      %2118 = vmatprep.subr.mxu0 0.0
      %2119 = vmatpush1.msra.mxu0 0.0
      %2120 = vmatprep.subr.mxu0 0.0
      %2121 = vmatpush1.msra.mxu0 0.0
      %2122 = vmatprep.subr.mxu0 0.0
      %2123 = vmatpush1.msra.mxu0 0.0
      %2124 = vmatprep.subr.mxu0 0.0
      %2125 = vmatpush1.msra.mxu0 0.0
      %2126 = vmatprep.subr.mxu0 0.0
      %2127 = vmatpush1.msra.mxu0 0.0
      %2128 = vmatprep.subr.mxu0 0.0
      %2129 = vmatpush1.msra.mxu0 0.0
      %2130 = vmatprep.subr.mxu0 0.0
      %2131 = vmatpush1.msra.mxu0 0.0
      %2132 = vmatprep.subr.mxu0 0.0
      %2133 = vmatpush1.msra.mxu0 0.0
      %2134 = vmatprep.subr.mxu0 0.0
      %2135 = vmatpush1.msra.mxu0 0.0
      %2136 = vmatprep.subr.mxu0 0.0
      %2137 = vmatpush1.msra.mxu0 0.0
      %2138 = vmatprep.subr.mxu0 0.0
      %2139 = vmatpush1.msra.mxu0 0.0
      %2140 = vmatprep.subr.mxu0 0.0
      %2141 = vmatpush1.msra.mxu0 0.0
      %2142 = vmatprep.mubr.f32.mxu0 0.0
      %2143 = vmatmul.mubr.f32.gmra.mrb[0].mxu0 %v2029
      %v2144 = vpop.f32.mrb[0].mxu0
      %v2145 = vadd.f32 0.0, %v2144
      %v2146 = vpop.f32.mrb[0].mxu0
      %2147 = vmatprep.mubr.f32.mxu0 0.0
      %2148 = vmatmul.mubr.f32.gmra.mrb[0].mxu0 %v2030
      %v2149 = vpop.f32.mrb[0].mxu0
      %v2150 = vadd.f32 0.0, %v2149
      %v2151 = vpop.f32.mrb[0].mxu0
      %2152 = vmatprep.mubr.f32.mxu0 0.0
      %2153 = vmatmul.mubr.f32.gmra.mrb[0].mxu0 %v2031
      %v2154 = vpop.f32.mrb[0].mxu0
      %v2155 = vadd.f32 0.0, %v2154
      %v2156 = vpop.f32.mrb[0].mxu0
      %2157 = vmatprep.mubr.f32.mxu0 0.0
      %2158 = vmatmul.mubr.f32.gmra.mrb[0].mxu0 %v2032
      %v2159 = vpop.f32.mrb[0].mxu0
      %v2160 = vadd.f32 0.0, %v2159
      %v2161 = vpop.f32.mrb[0].mxu0
      %2162 = vmatprep.mubr.f32.mxu0 0.0
      %2163 = vmatmul.mubr.f32.gmra.mrb[0].mxu0 %v2033
      %v2164 = vpop.f32.mrb[0].mxu0
      %v2165 = vadd.f32 0.0, %v2164
      %v2166 = vpop.f32.mrb[0].mxu0
      %2167 = vmatprep.mubr.f32.mxu0 0.0
      %2168 = vmatmul.mubr.f32.gmra.mrb[0].mxu0 %v2034
      %v2169 = vpop.f32.mrb[0].mxu0
      %v2170 = vadd.f32 0.0, %v2169
      %v2171 = vpop.f32.mrb[0].mxu0
      %2172 = vmatprep.mubr.f32.mxu0 0.0
      %2173 = vmatmul.mubr.f32.gmra.mrb[0].mxu0 %v2035
      %v2174 = vpop.f32.mrb[0].mxu0
      %v2175 = vadd.f32 0.0, %v2174
      %v2176 = vpop.f32.mrb[0].mxu0
      %2177 = vmatprep.mubr.f32.mxu0 0.0
      %2178 = vmatmul.mubr.f32.gmra.mrb[0].mxu0 %v2036
      %v2179 = vpop.f32.mrb[0].mxu0
      %v2180 = vadd.f32 0.0, %v2179
      %v2181 = vpop.f32.mrb[0].mxu0
      %2182 = vmatprep.mubr.f32.mxu0 0.0
      %2183 = vmatmul.mubr.f32.gmra.mrb[0].mxu0 %v2037
      %v2184 = vpop.f32.mrb[0].mxu0
      %v2185 = vadd.f32 0.0, %v2184
      %v2186 = vpop.f32.mrb[0].mxu0
      %2187 = vmatprep.mubr.f32.mxu0 0.0
      %2188 = vmatmul.mubr.f32.gmra.mrb[0].mxu0 %v2038
      %v2189 = vpop.f32.mrb[0].mxu0
      %v2190 = vadd.f32 0.0, %v2189
      %v2191 = vpop.f32.mrb[0].mxu0
      %2192 = vmatprep.mubr.f32.mxu0 0.0
      %2193 = vmatmul.mubr.f32.gmra.mrb[0].mxu0 %v2039
      %v2194 = vpop.f32.mrb[0].mxu0
      %v2195 = vadd.f32 0.0, %v2194
      %v2196 = vpop.f32.mrb[0].mxu0
      %2197 = vmatprep.mubr.f32.mxu0 0.0
      %2198 = vmatmul.mubr.f32.gmra.mrb[0].mxu0 %v2040
      %v2199 = vpop.f32.mrb[0].mxu0
      %v2200 = vadd.f32 0.0, %v2199
      %v2201 = vpop.f32.mrb[0].mxu0
      %2202 = vmatprep.mubr.f32.mxu0 0.0
      %2203 = vmatmul.mubr.f32.gmra.mrb[0].mxu0 %v2041
      %v2204 = vpop.f32.mrb[0].mxu0
      %v2205 = vadd.f32 0.0, %v2204
      %v2206 = vpop.f32.mrb[0].mxu0
      %2207 = vmatprep.mubr.f32.mxu0 0.0
      %2208 = vmatmul.mubr.f32.gmra.mrb[0].mxu0 %v2042
      %v2209 = vpop.f32.mrb[0].mxu0
      %v2210 = vadd.f32 0.0, %v2209
      %v2211 = vpop.f32.mrb[0].mxu0
      %2212 = vmatprep.mubr.f32.mxu0 0.0
      %2213 = vmatmul.mubr.f32.gmra.mrb[0].mxu0 %v2043
      %v2214 = vpop.f32.mrb[0].mxu0
      %v2215 = vadd.f32 0.0, %v2214
      %v2216 = vpop.f32.mrb[0].mxu0
      %2217 = vmatprep.mubr.f32.mxu0 0.0
      %2218 = vmatmul.mubr.f32.gmra.mrb[0].mxu0 %v2044
      %v2219 = vpop.f32.mrb[0].mxu0
      %v2220 = vadd.f32 0.0, %v2219
      %v2221 = vpop.f32.mrb[0].mxu0
      %2222 = vmatprep.mubr.f32.mxu0 0.0
      %2223 = vmatmul.mubr.f32.gmra.mrb[0].mxu0 %v2045
      %v2224 = vpop.f32.mrb[0].mxu0
      %v2225 = vadd.f32 0.0, %v2224
      %v2226 = vpop.f32.mrb[0].mxu0
      %2227 = vmatprep.mubr.f32.mxu0 0.0
      %2228 = vmatmul.mubr.f32.gmra.mrb[0].mxu0 %v2046
      %v2229 = vpop.f32.mrb[0].mxu0
      %v2230 = vadd.f32 0.0, %v2229
      %v2231 = vpop.f32.mrb[0].mxu0
      %2232 = vmatprep.mubr.f32.mxu0 0.0
      %2233 = vmatmul.mubr.f32.gmra.mrb[0].mxu0 %v2047
      %v2234 = vpop.f32.mrb[0].mxu0
      %v2235 = vadd.f32 0.0, %v2234
      %v2236 = vpop.f32.mrb[0].mxu0
      %2237 = vmatprep.mubr.f32.mxu0 0.0
      %2238 = vmatmul.mubr.f32.gmra.mrb[0].mxu0 %v2048
      %v2239 = vpop.f32.mrb[0].mxu0
      %v2240 = vadd.f32 0.0, %v2239
      %v2241 = vpop.f32.mrb[0].mxu0
      %2242 = vmatprep.mubr.f32.mxu0 0.0
      %2243 = vmatmul.mubr.f32.gmra.mrb[0].mxu0 %v2049
      %v2244 = vpop.f32.mrb[0].mxu0
      %v2245 = vadd.f32 0.0, %v2244
      %v2246 = vpop.f32.mrb[0].mxu0
      %2247 = vmatprep.mubr.f32.mxu0 0.0
      %2248 = vmatmul.mubr.f32.gmra.mrb[0].mxu0 %v2050
      %v2249 = vpop.f32.mrb[0].mxu0
      %v2250 = vadd.f32 0.0, %v2249
      %v2251 = vpop.f32.mrb[0].mxu0
      %2252 = vmatprep.mubr.f32.mxu0 0.0
      %2253 = vmatmul.mubr.f32.gmra.mrb[0].mxu0 %v2051
      %v2254 = vpop.f32.mrb[0].mxu0
      %v2255 = vadd.f32 0.0, %v2254
      %v2256 = vpop.f32.mrb[0].mxu0
      %2257 = vmatprep.mubr.f32.mxu0 0.0
      %2258 = vmatmul.mubr.f32.gmra.mrb[0].mxu0 %v2052
      %v2259 = vpop.f32.mrb[0].mxu0
      %v2260 = vadd.f32 0.0, %v2259
      %v2261 = vpop.f32.mrb[0].mxu0
      %2262 = vmatprep.mubr.f32.mxu0 0.0
      %2263 = vmatmul.mubr.f32.gmra.mrb[0].mxu0 %v2053
      %v2264 = vpop.f32.mrb[0].mxu0
      %v2265 = vadd.f32 0.0, %v2264
      %v2266 = vpop.f32.mrb[0].mxu0
      %2267 = vmatprep.mubr.f32.mxu0 0.0
      %2268 = vmatmul.mubr.f32.gmra.mrb[0].mxu0 %v2054
      %v2269 = vpop.f32.mrb[0].mxu0
      %v2270 = vadd.f32 0.0, %v2269
      %v2271 = vpop.f32.mrb[0].mxu0
      %2272 = vmatprep.mubr.f32.mxu0 0.0
      %2273 = vmatmul.mubr.f32.gmra.mrb[0].mxu0 %v2055
      %v2274 = vpop.f32.mrb[0].mxu0
      %v2275 = vadd.f32 0.0, %v2274
      %v2276 = vpop.f32.mrb[0].mxu0
      %2277 = vmatprep.mubr.f32.mxu0 0.0
      %2278 = vmatmul.mubr.f32.gmra.mrb[0].mxu0 %v2056
      %v2279 = vpop.f32.mrb[0].mxu0
      %v2280 = vadd.f32 0.0, %v2279
      %v2281 = vpop.f32.mrb[0].mxu0
      %2282 = vmatprep.mubr.f32.mxu0 0.0
      %2283 = vmatmul.mubr.f32.gmra.mrb[0].mxu0 %v2057
      %v2284 = vpop.f32.mrb[0].mxu0
      %v2285 = vadd.f32 0.0, %v2284
      %v2286 = vpop.f32.mrb[0].mxu0
      %2287 = vmatprep.mubr.f32.mxu0 0.0
      %2288 = vmatmul.mubr.f32.gmra.mrb[0].mxu0 %v2058
      %v2289 = vpop.f32.mrb[0].mxu0
      %v2290 = vadd.f32 0.0, %v2289
      %v2291 = vpop.f32.mrb[0].mxu0
      %2292 = vmatprep.mubr.f32.mxu0 0.0
      %2293 = vmatmul.mubr.f32.gmra.mrb[0].mxu0 %v2059
      %v2294 = vpop.f32.mrb[0].mxu0
      %v2295 = vadd.f32 0.0, %v2294
      %v2296 = vpop.f32.mrb[0].mxu0
      %2297 = vmatprep.mubr.f32.mxu0 0.0
      %2298 = vmatmul.mubr.f32.gmra.mrb[0].mxu0 %v2060
      %v2299 = vpop.f32.mrb[0].mxu0
      %v2300 = vadd.f32 0.0, %v2299
      %v2301 = vpop.f32.mrb[0].mxu0
      %2302 = vdwg.mxu0
      %v2303 = vadd.f32 %v1997, %v2145
      %v2304 = vadd.f32 %v1998, %v2150
      %v2305 = vadd.f32 %v1999, %v2155
      %v2306 = vadd.f32 %v2000, %v2160
      %v2307 = vadd.f32 %v2001, %v2165
      %v2308 = vadd.f32 %v2002, %v2170
      %v2309 = vadd.f32 %v2003, %v2175
      %v2310 = vadd.f32 %v2004, %v2180
      %v2311 = vadd.f32 %v2005, %v2185
      %v2312 = vadd.f32 %v2006, %v2190
      %v2313 = vadd.f32 %v2007, %v2195
      %v2314 = vadd.f32 %v2008, %v2200
      %v2315 = vadd.f32 %v2009, %v2205
      %v2316 = vadd.f32 %v2010, %v2210
      %v2317 = vadd.f32 %v2011, %v2215
      %v2318 = vadd.f32 %v2012, %v2220
      %v2319 = vadd.f32 %v2013, %v2225
      %v2320 = vadd.f32 %v2014, %v2230
      %v2321 = vadd.f32 %v2015, %v2235
      %v2322 = vadd.f32 %v2016, %v2240
      %v2323 = vadd.f32 %v2017, %v2245
      %v2324 = vadd.f32 %v2018, %v2250
      %v2325 = vadd.f32 %v2019, %v2255
      %v2326 = vadd.f32 %v2020, %v2260
      %v2327 = vadd.f32 %v2021, %v2265
      %v2328 = vadd.f32 %v2022, %v2270
      %v2329 = vadd.f32 %v2023, %v2275
      %v2330 = vadd.f32 %v2024, %v2280
      %v2331 = vadd.f32 %v2025, %v2285
      %v2332 = vadd.f32 %v2026, %v2290
      %v2333 = vadd.f32 %v2027, %v2295
      %v2334 = vadd.f32 %v2028, %v2300
      %s2335 = scalar_lea.vmem [#allocation2], 48
      %v2336 = vld [vmem:[%s2335] sm:$0xff]
      %v2337 = vld [vmem:[%s2335 + $0x8] sm:$0xff]
      %v2338 = vld [vmem:[%s2335 + $0x18] sm:$0xff]
      %v2339 = vld [vmem:[%s2335 + $0x20] sm:$0xff]
      %v2340 = vld [vmem:[%s2335 + $0x30] sm:$0xff]
      %v2341 = vld [vmem:[%s2335 + $0x38] sm:$0xff]
      %v2342 = vld [vmem:[%s2335 + $0x48] sm:$0xff]
      %v2343 = vld [vmem:[%s2335 + $0x50] sm:$0xff]
      %v2344 = vld [vmem:[%s2335 + $0x60] sm:$0xff]
      %v2345 = vld [vmem:[%s2335 + $0x68] sm:$0xff]
      %v2346 = vld [vmem:[%s2335 + $0x78] sm:$0xff]
      %v2347 = vld [vmem:[%s2335 + $0x80] sm:$0xff]
      %v2348 = vld [vmem:[%s2335 + $0x90] sm:$0xff]
      %v2349 = vld [vmem:[%s2335 + $0x98] sm:$0xff]
      %v2350 = vld [vmem:[%s2335 + $0xa8] sm:$0xff]
      %v2351 = vld [vmem:[%s2335 + $0xb0] sm:$0xff]
      %v2352 = vld [vmem:[%s2335 + $0xc0] sm:$0xff]
      %v2353 = vld [vmem:[%s2335 + $0xc8] sm:$0xff]
      %v2354 = vld [vmem:[%s2335 + $0xd8] sm:$0xff]
      %v2355 = vld [vmem:[%s2335 + $0xe0] sm:$0xff]
      %v2356 = vld [vmem:[%s2335 + $0xf0] sm:$0xff]
      %v2357 = vld [vmem:[%s2335 + $0xf8] sm:$0xff]
      %v2358 = vld [vmem:[%s2335 + $0x108] sm:$0xff]
      %v2359 = vld [vmem:[%s2335 + $0x110] sm:$0xff]
      %v2360 = vld [vmem:[%s2335 + $0x120] sm:$0xff]
      %v2361 = vld [vmem:[%s2335 + $0x128] sm:$0xff]
      %v2362 = vld [vmem:[%s2335 + $0x138] sm:$0xff]
      %v2363 = vld [vmem:[%s2335 + $0x140] sm:$0xff]
      %v2364 = vld [vmem:[%s2335 + $0x150] sm:$0xff]
      %v2365 = vld [vmem:[%s2335 + $0x158] sm:$0xff]
      %v2366 = vld [vmem:[%s2335 + $0x168] sm:$0xff]
      %v2367 = vld [vmem:[%s2335 + $0x170] sm:$0xff]
      %s2368 = scalar_lea.vmem %s4, 768
      %v2369 = vld [vmem:[%s2368] sm:$0xff]
      %v2370 = vld [vmem:[%s2368 + $0x8] sm:$0xff]
      %v2371 = vld [vmem:[%s2368 + $0x10] sm:$0xff]
      %v2372 = vld [vmem:[%s2368 + $0x18] sm:$0xff]
      %v2373 = vld [vmem:[%s2368 + $0x20] sm:$0xff]
      %v2374 = vld [vmem:[%s2368 + $0x28] sm:$0xff]
      %v2375 = vld [vmem:[%s2368 + $0x30] sm:$0xff]
      %v2376 = vld [vmem:[%s2368 + $0x38] sm:$0xff]
      %v2377 = vld [vmem:[%s2368 + $0x40] sm:$0xff]
      %v2378 = vld [vmem:[%s2368 + $0x48] sm:$0xff]
      %v2379 = vld [vmem:[%s2368 + $0x50] sm:$0xff]
      %v2380 = vld [vmem:[%s2368 + $0x58] sm:$0xff]
      %v2381 = vld [vmem:[%s2368 + $0x60] sm:$0xff]
      %v2382 = vld [vmem:[%s2368 + $0x68] sm:$0xff]
      %v2383 = vld [vmem:[%s2368 + $0x70] sm:$0xff]
      %v2384 = vld [vmem:[%s2368 + $0x78] sm:$0xff]
      %2385 = vmatprep.subr.mxu0 0.0
      %2386 = vmatpush1.msra.mxu0 %v2369
      %2387 = vmatprep.subr.mxu0 0.0
      %2388 = vmatpush1.msra.mxu0 %v2370
      %2389 = vmatprep.subr.mxu0 0.0
      %2390 = vmatpush1.msra.mxu0 %v2371
      %2391 = vmatprep.subr.mxu0 0.0
      %2392 = vmatpush1.msra.mxu0 %v2372
      %2393 = vmatprep.subr.mxu0 0.0
      %2394 = vmatpush1.msra.mxu0 %v2373
      %2395 = vmatprep.subr.mxu0 0.0
      %2396 = vmatpush1.msra.mxu0 %v2374
      %2397 = vmatprep.subr.mxu0 0.0
      %2398 = vmatpush1.msra.mxu0 %v2375
      %2399 = vmatprep.subr.mxu0 0.0
      %2400 = vmatpush1.msra.mxu0 %v2376
      %2401 = vmatprep.subr.mxu0 0.0
      %2402 = vmatpush1.msra.mxu0 %v2377
      %2403 = vmatprep.subr.mxu0 0.0
      %2404 = vmatpush1.msra.mxu0 %v2378
      %2405 = vmatprep.subr.mxu0 0.0
      %2406 = vmatpush1.msra.mxu0 %v2379
      %2407 = vmatprep.subr.mxu0 0.0
      %2408 = vmatpush1.msra.mxu0 %v2380
      %2409 = vmatprep.subr.mxu0 0.0
      %2410 = vmatpush1.msra.mxu0 %v2381
      %2411 = vmatprep.subr.mxu0 0.0
      %2412 = vmatpush1.msra.mxu0 %v2382
      %2413 = vmatprep.subr.mxu0 0.0
      %2414 = vmatpush1.msra.mxu0 %v2383
      %2415 = vmatprep.subr.mxu0 0.0
      %2416 = vmatpush1.msra.mxu0 %v2384
      %2417 = vmatprep.subr.mxu0 0.0
      %2418 = vmatpush1.msra.mxu0 0.0
      %2419 = vmatprep.subr.mxu0 0.0
      %2420 = vmatpush1.msra.mxu0 0.0
      %2421 = vmatprep.subr.mxu0 0.0
      %2422 = vmatpush1.msra.mxu0 0.0
      %2423 = vmatprep.subr.mxu0 0.0
      %2424 = vmatpush1.msra.mxu0 0.0
      %2425 = vmatprep.subr.mxu0 0.0
      %2426 = vmatpush1.msra.mxu0 0.0
      %2427 = vmatprep.subr.mxu0 0.0
      %2428 = vmatpush1.msra.mxu0 0.0
      %2429 = vmatprep.subr.mxu0 0.0
      %2430 = vmatpush1.msra.mxu0 0.0
      %2431 = vmatprep.subr.mxu0 0.0
      %2432 = vmatpush1.msra.mxu0 0.0
      %2433 = vmatprep.subr.mxu0 0.0
      %2434 = vmatpush1.msra.mxu0 0.0
      %2435 = vmatprep.subr.mxu0 0.0
      %2436 = vmatpush1.msra.mxu0 0.0
      %2437 = vmatprep.subr.mxu0 0.0
      %2438 = vmatpush1.msra.mxu0 0.0
      %2439 = vmatprep.subr.mxu0 0.0
      %2440 = vmatpush1.msra.mxu0 0.0
      %2441 = vmatprep.subr.mxu0 0.0
      %2442 = vmatpush1.msra.mxu0 0.0
      %2443 = vmatprep.subr.mxu0 0.0
      %2444 = vmatpush1.msra.mxu0 0.0
      %2445 = vmatprep.subr.mxu0 0.0
      %2446 = vmatpush1.msra.mxu0 0.0
      %2447 = vmatprep.subr.mxu0 0.0
      %2448 = vmatpush1.msra.mxu0 0.0
      %2449 = vmatprep.mubr.f32.mxu0 0.0
      %2450 = vmatmul.mubr.f32.gmra.mrb[0].mxu0 %v2336
      %v2451 = vpop.f32.mrb[0].mxu0
      %v2452 = vadd.f32 0.0, %v2451
      %v2453 = vpop.f32.mrb[0].mxu0
      %2454 = vmatprep.mubr.f32.mxu0 0.0
      %2455 = vmatmul.mubr.f32.gmra.mrb[0].mxu0 %v2337
      %v2456 = vpop.f32.mrb[0].mxu0
      %v2457 = vadd.f32 0.0, %v2456
      %v2458 = vpop.f32.mrb[0].mxu0
      %2459 = vmatprep.mubr.f32.mxu0 0.0
      %2460 = vmatmul.mubr.f32.gmra.mrb[0].mxu0 %v2338
      %v2461 = vpop.f32.mrb[0].mxu0
      %v2462 = vadd.f32 0.0, %v2461
      %v2463 = vpop.f32.mrb[0].mxu0
      %2464 = vmatprep.mubr.f32.mxu0 0.0
      %2465 = vmatmul.mubr.f32.gmra.mrb[0].mxu0 %v2339
      %v2466 = vpop.f32.mrb[0].mxu0
      %v2467 = vadd.f32 0.0, %v2466
      %v2468 = vpop.f32.mrb[0].mxu0
      %2469 = vmatprep.mubr.f32.mxu0 0.0
      %2470 = vmatmul.mubr.f32.gmra.mrb[0].mxu0 %v2340
      %v2471 = vpop.f32.mrb[0].mxu0
      %v2472 = vadd.f32 0.0, %v2471
      %v2473 = vpop.f32.mrb[0].mxu0
      %2474 = vmatprep.mubr.f32.mxu0 0.0
      %2475 = vmatmul.mubr.f32.gmra.mrb[0].mxu0 %v2341
      %v2476 = vpop.f32.mrb[0].mxu0
      %v2477 = vadd.f32 0.0, %v2476
      %v2478 = vpop.f32.mrb[0].mxu0
      %2479 = vmatprep.mubr.f32.mxu0 0.0
      %2480 = vmatmul.mubr.f32.gmra.mrb[0].mxu0 %v2342
      %v2481 = vpop.f32.mrb[0].mxu0
      %v2482 = vadd.f32 0.0, %v2481
      %v2483 = vpop.f32.mrb[0].mxu0
      %2484 = vmatprep.mubr.f32.mxu0 0.0
      %2485 = vmatmul.mubr.f32.gmra.mrb[0].mxu0 %v2343
      %v2486 = vpop.f32.mrb[0].mxu0
      %v2487 = vadd.f32 0.0, %v2486
      %v2488 = vpop.f32.mrb[0].mxu0
      %2489 = vmatprep.mubr.f32.mxu0 0.0
      %2490 = vmatmul.mubr.f32.gmra.mrb[0].mxu0 %v2344
      %v2491 = vpop.f32.mrb[0].mxu0
      %v2492 = vadd.f32 0.0, %v2491
      %v2493 = vpop.f32.mrb[0].mxu0
      %2494 = vmatprep.mubr.f32.mxu0 0.0
      %2495 = vmatmul.mubr.f32.gmra.mrb[0].mxu0 %v2345
      %v2496 = vpop.f32.mrb[0].mxu0
      %v2497 = vadd.f32 0.0, %v2496
      %v2498 = vpop.f32.mrb[0].mxu0
      %2499 = vmatprep.mubr.f32.mxu0 0.0
      %2500 = vmatmul.mubr.f32.gmra.mrb[0].mxu0 %v2346
      %v2501 = vpop.f32.mrb[0].mxu0
      %v2502 = vadd.f32 0.0, %v2501
      %v2503 = vpop.f32.mrb[0].mxu0
      %2504 = vmatprep.mubr.f32.mxu0 0.0
      %2505 = vmatmul.mubr.f32.gmra.mrb[0].mxu0 %v2347
      %v2506 = vpop.f32.mrb[0].mxu0
      %v2507 = vadd.f32 0.0, %v2506
      %v2508 = vpop.f32.mrb[0].mxu0
      %2509 = vmatprep.mubr.f32.mxu0 0.0
      %2510 = vmatmul.mubr.f32.gmra.mrb[0].mxu0 %v2348
      %v2511 = vpop.f32.mrb[0].mxu0
      %v2512 = vadd.f32 0.0, %v2511
      %v2513 = vpop.f32.mrb[0].mxu0
      %2514 = vmatprep.mubr.f32.mxu0 0.0
      %2515 = vmatmul.mubr.f32.gmra.mrb[0].mxu0 %v2349
      %v2516 = vpop.f32.mrb[0].mxu0
      %v2517 = vadd.f32 0.0, %v2516
      %v2518 = vpop.f32.mrb[0].mxu0
      %2519 = vmatprep.mubr.f32.mxu0 0.0
      %2520 = vmatmul.mubr.f32.gmra.mrb[0].mxu0 %v2350
      %v2521 = vpop.f32.mrb[0].mxu0
      %v2522 = vadd.f32 0.0, %v2521
      %v2523 = vpop.f32.mrb[0].mxu0
      %2524 = vmatprep.mubr.f32.mxu0 0.0
      %2525 = vmatmul.mubr.f32.gmra.mrb[0].mxu0 %v2351
      %v2526 = vpop.f32.mrb[0].mxu0
      %v2527 = vadd.f32 0.0, %v2526
      %v2528 = vpop.f32.mrb[0].mxu0
      %2529 = vmatprep.mubr.f32.mxu0 0.0
      %2530 = vmatmul.mubr.f32.gmra.mrb[0].mxu0 %v2352
      %v2531 = vpop.f32.mrb[0].mxu0
      %v2532 = vadd.f32 0.0, %v2531
      %v2533 = vpop.f32.mrb[0].mxu0
      %2534 = vmatprep.mubr.f32.mxu0 0.0
      %2535 = vmatmul.mubr.f32.gmra.mrb[0].mxu0 %v2353
      %v2536 = vpop.f32.mrb[0].mxu0
      %v2537 = vadd.f32 0.0, %v2536
      %v2538 = vpop.f32.mrb[0].mxu0
      %2539 = vmatprep.mubr.f32.mxu0 0.0
      %2540 = vmatmul.mubr.f32.gmra.mrb[0].mxu0 %v2354
      %v2541 = vpop.f32.mrb[0].mxu0
      %v2542 = vadd.f32 0.0, %v2541
      %v2543 = vpop.f32.mrb[0].mxu0
      %2544 = vmatprep.mubr.f32.mxu0 0.0
      %2545 = vmatmul.mubr.f32.gmra.mrb[0].mxu0 %v2355
      %v2546 = vpop.f32.mrb[0].mxu0
      %v2547 = vadd.f32 0.0, %v2546
      %v2548 = vpop.f32.mrb[0].mxu0
      %2549 = vmatprep.mubr.f32.mxu0 0.0
      %2550 = vmatmul.mubr.f32.gmra.mrb[0].mxu0 %v2356
      %v2551 = vpop.f32.mrb[0].mxu0
      %v2552 = vadd.f32 0.0, %v2551
      %v2553 = vpop.f32.mrb[0].mxu0
      %2554 = vmatprep.mubr.f32.mxu0 0.0
      %2555 = vmatmul.mubr.f32.gmra.mrb[0].mxu0 %v2357
      %v2556 = vpop.f32.mrb[0].mxu0
      %v2557 = vadd.f32 0.0, %v2556
      %v2558 = vpop.f32.mrb[0].mxu0
      %2559 = vmatprep.mubr.f32.mxu0 0.0
      %2560 = vmatmul.mubr.f32.gmra.mrb[0].mxu0 %v2358
      %v2561 = vpop.f32.mrb[0].mxu0
      %v2562 = vadd.f32 0.0, %v2561
      %v2563 = vpop.f32.mrb[0].mxu0
      %2564 = vmatprep.mubr.f32.mxu0 0.0
      %2565 = vmatmul.mubr.f32.gmra.mrb[0].mxu0 %v2359
      %v2566 = vpop.f32.mrb[0].mxu0
      %v2567 = vadd.f32 0.0, %v2566
      %v2568 = vpop.f32.mrb[0].mxu0
      %2569 = vmatprep.mubr.f32.mxu0 0.0
      %2570 = vmatmul.mubr.f32.gmra.mrb[0].mxu0 %v2360
      %v2571 = vpop.f32.mrb[0].mxu0
      %v2572 = vadd.f32 0.0, %v2571
      %v2573 = vpop.f32.mrb[0].mxu0
      %2574 = vmatprep.mubr.f32.mxu0 0.0
      %2575 = vmatmul.mubr.f32.gmra.mrb[0].mxu0 %v2361
      %v2576 = vpop.f32.mrb[0].mxu0
      %v2577 = vadd.f32 0.0, %v2576
      %v2578 = vpop.f32.mrb[0].mxu0
      %2579 = vmatprep.mubr.f32.mxu0 0.0
      %2580 = vmatmul.mubr.f32.gmra.mrb[0].mxu0 %v2362
      %v2581 = vpop.f32.mrb[0].mxu0
      %v2582 = vadd.f32 0.0, %v2581
      %v2583 = vpop.f32.mrb[0].mxu0
      %2584 = vmatprep.mubr.f32.mxu0 0.0
      %2585 = vmatmul.mubr.f32.gmra.mrb[0].mxu0 %v2363
      %v2586 = vpop.f32.mrb[0].mxu0
      %v2587 = vadd.f32 0.0, %v2586
      %v2588 = vpop.f32.mrb[0].mxu0
      %2589 = vmatprep.mubr.f32.mxu0 0.0
      %2590 = vmatmul.mubr.f32.gmra.mrb[0].mxu0 %v2364
      %v2591 = vpop.f32.mrb[0].mxu0
      %v2592 = vadd.f32 0.0, %v2591
      %v2593 = vpop.f32.mrb[0].mxu0
      %2594 = vmatprep.mubr.f32.mxu0 0.0
      %2595 = vmatmul.mubr.f32.gmra.mrb[0].mxu0 %v2365
      %v2596 = vpop.f32.mrb[0].mxu0
      %v2597 = vadd.f32 0.0, %v2596
      %v2598 = vpop.f32.mrb[0].mxu0
      %2599 = vmatprep.mubr.f32.mxu0 0.0
      %2600 = vmatmul.mubr.f32.gmra.mrb[0].mxu0 %v2366
      %v2601 = vpop.f32.mrb[0].mxu0
      %v2602 = vadd.f32 0.0, %v2601
      %v2603 = vpop.f32.mrb[0].mxu0
      %2604 = vmatprep.mubr.f32.mxu0 0.0
      %2605 = vmatmul.mubr.f32.gmra.mrb[0].mxu0 %v2367
      %v2606 = vpop.f32.mrb[0].mxu0
      %v2607 = vadd.f32 0.0, %v2606
      %v2608 = vpop.f32.mrb[0].mxu0
      %2609 = vdwg.mxu0
      %v2610 = vadd.f32 %v2303, %v2452
      %v2611 = vadd.f32 %v2304, %v2457
      %v2612 = vadd.f32 %v2305, %v2462
      %v2613 = vadd.f32 %v2306, %v2467
      %v2614 = vadd.f32 %v2307, %v2472
      %v2615 = vadd.f32 %v2308, %v2477
      %v2616 = vadd.f32 %v2309, %v2482
      %v2617 = vadd.f32 %v2310, %v2487
      %v2618 = vadd.f32 %v2311, %v2492
      %v2619 = vadd.f32 %v2312, %v2497
      %v2620 = vadd.f32 %v2313, %v2502
      %v2621 = vadd.f32 %v2314, %v2507
      %v2622 = vadd.f32 %v2315, %v2512
      %v2623 = vadd.f32 %v2316, %v2517
      %v2624 = vadd.f32 %v2317, %v2522
      %v2625 = vadd.f32 %v2318, %v2527
      %v2626 = vadd.f32 %v2319, %v2532
      %v2627 = vadd.f32 %v2320, %v2537
      %v2628 = vadd.f32 %v2321, %v2542
      %v2629 = vadd.f32 %v2322, %v2547
      %v2630 = vadd.f32 %v2323, %v2552
      %v2631 = vadd.f32 %v2324, %v2557
      %v2632 = vadd.f32 %v2325, %v2562
      %v2633 = vadd.f32 %v2326, %v2567
      %v2634 = vadd.f32 %v2327, %v2572
      %v2635 = vadd.f32 %v2328, %v2577
      %v2636 = vadd.f32 %v2329, %v2582
      %v2637 = vadd.f32 %v2330, %v2587
      %v2638 = vadd.f32 %v2331, %v2592
      %v2639 = vadd.f32 %v2332, %v2597
      %v2640 = vadd.f32 %v2333, %v2602
      %v2641 = vadd.f32 %v2334, %v2607
      %v2642 = vld [vmem:[%s2335 + $0x1] sm:$0xff]
      %v2643 = vld [vmem:[%s2335 + $0x9] sm:$0xff]
      %v2644 = vld [vmem:[%s2335 + $0x19] sm:$0xff]
      %v2645 = vld [vmem:[%s2335 + $0x21] sm:$0xff]
      %v2646 = vld [vmem:[%s2335 + $0x31] sm:$0xff]
      %v2647 = vld [vmem:[%s2335 + $0x39] sm:$0xff]
      %v2648 = vld [vmem:[%s2335 + $0x49] sm:$0xff]
      %v2649 = vld [vmem:[%s2335 + $0x51] sm:$0xff]
      %v2650 = vld [vmem:[%s2335 + $0x61] sm:$0xff]
      %v2651 = vld [vmem:[%s2335 + $0x69] sm:$0xff]
      %v2652 = vld [vmem:[%s2335 + $0x79] sm:$0xff]
      %v2653 = vld [vmem:[%s2335 + $0x81] sm:$0xff]
      %v2654 = vld [vmem:[%s2335 + $0x91] sm:$0xff]
      %v2655 = vld [vmem:[%s2335 + $0x99] sm:$0xff]
      %v2656 = vld [vmem:[%s2335 + $0xa9] sm:$0xff]
      %v2657 = vld [vmem:[%s2335 + $0xb1] sm:$0xff]
      %v2658 = vld [vmem:[%s2335 + $0xc1] sm:$0xff]
      %v2659 = vld [vmem:[%s2335 + $0xc9] sm:$0xff]
      %v2660 = vld [vmem:[%s2335 + $0xd9] sm:$0xff]
      %v2661 = vld [vmem:[%s2335 + $0xe1] sm:$0xff]
      %v2662 = vld [vmem:[%s2335 + $0xf1] sm:$0xff]
      %v2663 = vld [vmem:[%s2335 + $0xf9] sm:$0xff]
      %v2664 = vld [vmem:[%s2335 + $0x109] sm:$0xff]
      %v2665 = vld [vmem:[%s2335 + $0x111] sm:$0xff]
      %v2666 = vld [vmem:[%s2335 + $0x121] sm:$0xff]
      %v2667 = vld [vmem:[%s2335 + $0x129] sm:$0xff]
      %v2668 = vld [vmem:[%s2335 + $0x139] sm:$0xff]
      %v2669 = vld [vmem:[%s2335 + $0x141] sm:$0xff]
      %v2670 = vld [vmem:[%s2335 + $0x151] sm:$0xff]
      %v2671 = vld [vmem:[%s2335 + $0x159] sm:$0xff]
      %v2672 = vld [vmem:[%s2335 + $0x169] sm:$0xff]
      %v2673 = vld [vmem:[%s2335 + $0x171] sm:$0xff]
      %s2674 = scalar_lea.vmem %s4, 896
      %v2675 = vld [vmem:[%s2674] sm:$0xff]
      %v2676 = vld [vmem:[%s2674 + $0x8] sm:$0xff]
      %v2677 = vld [vmem:[%s2674 + $0x10] sm:$0xff]
      %v2678 = vld [vmem:[%s2674 + $0x18] sm:$0xff]
      %v2679 = vld [vmem:[%s2674 + $0x20] sm:$0xff]
      %v2680 = vld [vmem:[%s2674 + $0x28] sm:$0xff]
      %v2681 = vld [vmem:[%s2674 + $0x30] sm:$0xff]
      %v2682 = vld [vmem:[%s2674 + $0x38] sm:$0xff]
      %v2683 = vld [vmem:[%s2674 + $0x40] sm:$0xff]
      %v2684 = vld [vmem:[%s2674 + $0x48] sm:$0xff]
      %v2685 = vld [vmem:[%s2674 + $0x50] sm:$0xff]
      %v2686 = vld [vmem:[%s2674 + $0x58] sm:$0xff]
      %v2687 = vld [vmem:[%s2674 + $0x60] sm:$0xff]
      %v2688 = vld [vmem:[%s2674 + $0x68] sm:$0xff]
      %v2689 = vld [vmem:[%s2674 + $0x70] sm:$0xff]
      %v2690 = vld [vmem:[%s2674 + $0x78] sm:$0xff]
      %2691 = vmatprep.subr.mxu0 0.0
      %2692 = vmatpush1.msra.mxu0 %v2675
      %2693 = vmatprep.subr.mxu0 0.0
      %2694 = vmatpush1.msra.mxu0 %v2676
      %2695 = vmatprep.subr.mxu0 0.0
      %2696 = vmatpush1.msra.mxu0 %v2677
      %2697 = vmatprep.subr.mxu0 0.0
      %2698 = vmatpush1.msra.mxu0 %v2678
      %2699 = vmatprep.subr.mxu0 0.0
      %2700 = vmatpush1.msra.mxu0 %v2679
      %2701 = vmatprep.subr.mxu0 0.0
      %2702 = vmatpush1.msra.mxu0 %v2680
      %2703 = vmatprep.subr.mxu0 0.0
      %2704 = vmatpush1.msra.mxu0 %v2681
      %2705 = vmatprep.subr.mxu0 0.0
      %2706 = vmatpush1.msra.mxu0 %v2682
      %2707 = vmatprep.subr.mxu0 0.0
      %2708 = vmatpush1.msra.mxu0 %v2683
      %2709 = vmatprep.subr.mxu0 0.0
      %2710 = vmatpush1.msra.mxu0 %v2684
      %2711 = vmatprep.subr.mxu0 0.0
      %2712 = vmatpush1.msra.mxu0 %v2685
      %2713 = vmatprep.subr.mxu0 0.0
      %2714 = vmatpush1.msra.mxu0 %v2686
      %2715 = vmatprep.subr.mxu0 0.0
      %2716 = vmatpush1.msra.mxu0 %v2687
      %2717 = vmatprep.subr.mxu0 0.0
      %2718 = vmatpush1.msra.mxu0 %v2688
      %2719 = vmatprep.subr.mxu0 0.0
      %2720 = vmatpush1.msra.mxu0 %v2689
      %2721 = vmatprep.subr.mxu0 0.0
      %2722 = vmatpush1.msra.mxu0 %v2690
      %2723 = vmatprep.subr.mxu0 0.0
      %2724 = vmatpush1.msra.mxu0 0.0
      %2725 = vmatprep.subr.mxu0 0.0
      %2726 = vmatpush1.msra.mxu0 0.0
      %2727 = vmatprep.subr.mxu0 0.0
      %2728 = vmatpush1.msra.mxu0 0.0
      %2729 = vmatprep.subr.mxu0 0.0
      %2730 = vmatpush1.msra.mxu0 0.0
      %2731 = vmatprep.subr.mxu0 0.0
      %2732 = vmatpush1.msra.mxu0 0.0
      %2733 = vmatprep.subr.mxu0 0.0
      %2734 = vmatpush1.msra.mxu0 0.0
      %2735 = vmatprep.subr.mxu0 0.0
      %2736 = vmatpush1.msra.mxu0 0.0
      %2737 = vmatprep.subr.mxu0 0.0
      %2738 = vmatpush1.msra.mxu0 0.0
      %2739 = vmatprep.subr.mxu0 0.0
      %2740 = vmatpush1.msra.mxu0 0.0
      %2741 = vmatprep.subr.mxu0 0.0
      %2742 = vmatpush1.msra.mxu0 0.0
      %2743 = vmatprep.subr.mxu0 0.0
      %2744 = vmatpush1.msra.mxu0 0.0
      %2745 = vmatprep.subr.mxu0 0.0
      %2746 = vmatpush1.msra.mxu0 0.0
      %2747 = vmatprep.subr.mxu0 0.0
      %2748 = vmatpush1.msra.mxu0 0.0
      %2749 = vmatprep.subr.mxu0 0.0
      %2750 = vmatpush1.msra.mxu0 0.0
      %2751 = vmatprep.subr.mxu0 0.0
      %2752 = vmatpush1.msra.mxu0 0.0
      %2753 = vmatprep.subr.mxu0 0.0
      %2754 = vmatpush1.msra.mxu0 0.0
      %2755 = vmatprep.mubr.f32.mxu0 0.0
      %2756 = vmatmul.mubr.f32.gmra.mrb[0].mxu0 %v2642
      %v2757 = vpop.f32.mrb[0].mxu0
      %v2758 = vadd.f32 0.0, %v2757
      %v2759 = vpop.f32.mrb[0].mxu0
      %2760 = vmatprep.mubr.f32.mxu0 0.0
      %2761 = vmatmul.mubr.f32.gmra.mrb[0].mxu0 %v2643
      %v2762 = vpop.f32.mrb[0].mxu0
      %v2763 = vadd.f32 0.0, %v2762
      %v2764 = vpop.f32.mrb[0].mxu0
      %2765 = vmatprep.mubr.f32.mxu0 0.0
      %2766 = vmatmul.mubr.f32.gmra.mrb[0].mxu0 %v2644
      %v2767 = vpop.f32.mrb[0].mxu0
      %v2768 = vadd.f32 0.0, %v2767
      %v2769 = vpop.f32.mrb[0].mxu0
      %2770 = vmatprep.mubr.f32.mxu0 0.0
      %2771 = vmatmul.mubr.f32.gmra.mrb[0].mxu0 %v2645
      %v2772 = vpop.f32.mrb[0].mxu0
      %v2773 = vadd.f32 0.0, %v2772
      %v2774 = vpop.f32.mrb[0].mxu0
      %2775 = vmatprep.mubr.f32.mxu0 0.0
      %2776 = vmatmul.mubr.f32.gmra.mrb[0].mxu0 %v2646
      %v2777 = vpop.f32.mrb[0].mxu0
      %v2778 = vadd.f32 0.0, %v2777
      %v2779 = vpop.f32.mrb[0].mxu0
      %2780 = vmatprep.mubr.f32.mxu0 0.0
      %2781 = vmatmul.mubr.f32.gmra.mrb[0].mxu0 %v2647
      %v2782 = vpop.f32.mrb[0].mxu0
      %v2783 = vadd.f32 0.0, %v2782
      %v2784 = vpop.f32.mrb[0].mxu0
      %2785 = vmatprep.mubr.f32.mxu0 0.0
      %2786 = vmatmul.mubr.f32.gmra.mrb[0].mxu0 %v2648
      %v2787 = vpop.f32.mrb[0].mxu0
      %v2788 = vadd.f32 0.0, %v2787
      %v2789 = vpop.f32.mrb[0].mxu0
      %2790 = vmatprep.mubr.f32.mxu0 0.0
      %2791 = vmatmul.mubr.f32.gmra.mrb[0].mxu0 %v2649
      %v2792 = vpop.f32.mrb[0].mxu0
      %v2793 = vadd.f32 0.0, %v2792
      %v2794 = vpop.f32.mrb[0].mxu0
      %2795 = vmatprep.mubr.f32.mxu0 0.0
      %2796 = vmatmul.mubr.f32.gmra.mrb[0].mxu0 %v2650
      %v2797 = vpop.f32.mrb[0].mxu0
      %v2798 = vadd.f32 0.0, %v2797
      %v2799 = vpop.f32.mrb[0].mxu0
      %2800 = vmatprep.mubr.f32.mxu0 0.0
      %2801 = vmatmul.mubr.f32.gmra.mrb[0].mxu0 %v2651
      %v2802 = vpop.f32.mrb[0].mxu0
      %v2803 = vadd.f32 0.0, %v2802
      %v2804 = vpop.f32.mrb[0].mxu0
      %2805 = vmatprep.mubr.f32.mxu0 0.0
      %2806 = vmatmul.mubr.f32.gmra.mrb[0].mxu0 %v2652
      %v2807 = vpop.f32.mrb[0].mxu0
      %v2808 = vadd.f32 0.0, %v2807
      %v2809 = vpop.f32.mrb[0].mxu0
      %2810 = vmatprep.mubr.f32.mxu0 0.0
      %2811 = vmatmul.mubr.f32.gmra.mrb[0].mxu0 %v2653
      %v2812 = vpop.f32.mrb[0].mxu0
      %v2813 = vadd.f32 0.0, %v2812
      %v2814 = vpop.f32.mrb[0].mxu0
      %2815 = vmatprep.mubr.f32.mxu0 0.0
      %2816 = vmatmul.mubr.f32.gmra.mrb[0].mxu0 %v2654
      %v2817 = vpop.f32.mrb[0].mxu0
      %v2818 = vadd.f32 0.0, %v2817
      %v2819 = vpop.f32.mrb[0].mxu0
      %2820 = vmatprep.mubr.f32.mxu0 0.0
      %2821 = vmatmul.mubr.f32.gmra.mrb[0].mxu0 %v2655
      %v2822 = vpop.f32.mrb[0].mxu0
      %v2823 = vadd.f32 0.0, %v2822
      %v2824 = vpop.f32.mrb[0].mxu0
      %2825 = vmatprep.mubr.f32.mxu0 0.0
      %2826 = vmatmul.mubr.f32.gmra.mrb[0].mxu0 %v2656
      %v2827 = vpop.f32.mrb[0].mxu0
      %v2828 = vadd.f32 0.0, %v2827
      %v2829 = vpop.f32.mrb[0].mxu0
      %2830 = vmatprep.mubr.f32.mxu0 0.0
      %2831 = vmatmul.mubr.f32.gmra.mrb[0].mxu0 %v2657
      %v2832 = vpop.f32.mrb[0].mxu0
      %v2833 = vadd.f32 0.0, %v2832
      %v2834 = vpop.f32.mrb[0].mxu0
      %2835 = vmatprep.mubr.f32.mxu0 0.0
      %2836 = vmatmul.mubr.f32.gmra.mrb[0].mxu0 %v2658
      %v2837 = vpop.f32.mrb[0].mxu0
      %v2838 = vadd.f32 0.0, %v2837
      %v2839 = vpop.f32.mrb[0].mxu0
      %2840 = vmatprep.mubr.f32.mxu0 0.0
      %2841 = vmatmul.mubr.f32.gmra.mrb[0].mxu0 %v2659
      %v2842 = vpop.f32.mrb[0].mxu0
      %v2843 = vadd.f32 0.0, %v2842
      %v2844 = vpop.f32.mrb[0].mxu0
      %2845 = vmatprep.mubr.f32.mxu0 0.0
      %2846 = vmatmul.mubr.f32.gmra.mrb[0].mxu0 %v2660
      %v2847 = vpop.f32.mrb[0].mxu0
      %v2848 = vadd.f32 0.0, %v2847
      %v2849 = vpop.f32.mrb[0].mxu0
      %2850 = vmatprep.mubr.f32.mxu0 0.0
      %2851 = vmatmul.mubr.f32.gmra.mrb[0].mxu0 %v2661
      %v2852 = vpop.f32.mrb[0].mxu0
      %v2853 = vadd.f32 0.0, %v2852
      %v2854 = vpop.f32.mrb[0].mxu0
      %2855 = vmatprep.mubr.f32.mxu0 0.0
      %2856 = vmatmul.mubr.f32.gmra.mrb[0].mxu0 %v2662
      %v2857 = vpop.f32.mrb[0].mxu0
      %v2858 = vadd.f32 0.0, %v2857
      %v2859 = vpop.f32.mrb[0].mxu0
      %2860 = vmatprep.mubr.f32.mxu0 0.0
      %2861 = vmatmul.mubr.f32.gmra.mrb[0].mxu0 %v2663
      %v2862 = vpop.f32.mrb[0].mxu0
      %v2863 = vadd.f32 0.0, %v2862
      %v2864 = vpop.f32.mrb[0].mxu0
      %2865 = vmatprep.mubr.f32.mxu0 0.0
      %2866 = vmatmul.mubr.f32.gmra.mrb[0].mxu0 %v2664
      %v2867 = vpop.f32.mrb[0].mxu0
      %v2868 = vadd.f32 0.0, %v2867
      %v2869 = vpop.f32.mrb[0].mxu0
      %2870 = vmatprep.mubr.f32.mxu0 0.0
      %2871 = vmatmul.mubr.f32.gmra.mrb[0].mxu0 %v2665
      %v2872 = vpop.f32.mrb[0].mxu0
      %v2873 = vadd.f32 0.0, %v2872
      %v2874 = vpop.f32.mrb[0].mxu0
      %2875 = vmatprep.mubr.f32.mxu0 0.0
      %2876 = vmatmul.mubr.f32.gmra.mrb[0].mxu0 %v2666
      %v2877 = vpop.f32.mrb[0].mxu0
      %v2878 = vadd.f32 0.0, %v2877
      %v2879 = vpop.f32.mrb[0].mxu0
      %2880 = vmatprep.mubr.f32.mxu0 0.0
      %2881 = vmatmul.mubr.f32.gmra.mrb[0].mxu0 %v2667
      %v2882 = vpop.f32.mrb[0].mxu0
      %v2883 = vadd.f32 0.0, %v2882
      %v2884 = vpop.f32.mrb[0].mxu0
      %2885 = vmatprep.mubr.f32.mxu0 0.0
      %2886 = vmatmul.mubr.f32.gmra.mrb[0].mxu0 %v2668
      %v2887 = vpop.f32.mrb[0].mxu0
      %v2888 = vadd.f32 0.0, %v2887
      %v2889 = vpop.f32.mrb[0].mxu0
      %2890 = vmatprep.mubr.f32.mxu0 0.0
      %2891 = vmatmul.mubr.f32.gmra.mrb[0].mxu0 %v2669
      %v2892 = vpop.f32.mrb[0].mxu0
      %v2893 = vadd.f32 0.0, %v2892
      %v2894 = vpop.f32.mrb[0].mxu0
      %2895 = vmatprep.mubr.f32.mxu0 0.0
      %2896 = vmatmul.mubr.f32.gmra.mrb[0].mxu0 %v2670
      %v2897 = vpop.f32.mrb[0].mxu0
      %v2898 = vadd.f32 0.0, %v2897
      %v2899 = vpop.f32.mrb[0].mxu0
      %2900 = vmatprep.mubr.f32.mxu0 0.0
      %2901 = vmatmul.mubr.f32.gmra.mrb[0].mxu0 %v2671
      %v2902 = vpop.f32.mrb[0].mxu0
      %v2903 = vadd.f32 0.0, %v2902
      %v2904 = vpop.f32.mrb[0].mxu0
      %2905 = vmatprep.mubr.f32.mxu0 0.0
      %2906 = vmatmul.mubr.f32.gmra.mrb[0].mxu0 %v2672
      %v2907 = vpop.f32.mrb[0].mxu0
      %v2908 = vadd.f32 0.0, %v2907
      %v2909 = vpop.f32.mrb[0].mxu0
      %2910 = vmatprep.mubr.f32.mxu0 0.0
      %2911 = vmatmul.mubr.f32.gmra.mrb[0].mxu0 %v2673
      %v2912 = vpop.f32.mrb[0].mxu0
      %v2913 = vadd.f32 0.0, %v2912
      %v2914 = vpop.f32.mrb[0].mxu0
      %2915 = vdwg.mxu0
      %v2916 = vadd.f32 %v2610, %v2758
      %v2917 = vadd.f32 %v2611, %v2763
      %v2918 = vadd.f32 %v2612, %v2768
      %v2919 = vadd.f32 %v2613, %v2773
      %v2920 = vadd.f32 %v2614, %v2778
      %v2921 = vadd.f32 %v2615, %v2783
      %v2922 = vadd.f32 %v2616, %v2788
      %v2923 = vadd.f32 %v2617, %v2793
      %v2924 = vadd.f32 %v2618, %v2798
      %v2925 = vadd.f32 %v2619, %v2803
      %v2926 = vadd.f32 %v2620, %v2808
      %v2927 = vadd.f32 %v2621, %v2813
      %v2928 = vadd.f32 %v2622, %v2818
      %v2929 = vadd.f32 %v2623, %v2823
      %v2930 = vadd.f32 %v2624, %v2828
      %v2931 = vadd.f32 %v2625, %v2833
      %v2932 = vadd.f32 %v2626, %v2838
      %v2933 = vadd.f32 %v2627, %v2843
      %v2934 = vadd.f32 %v2628, %v2848
      %v2935 = vadd.f32 %v2629, %v2853
      %v2936 = vadd.f32 %v2630, %v2858
      %v2937 = vadd.f32 %v2631, %v2863
      %v2938 = vadd.f32 %v2632, %v2868
      %v2939 = vadd.f32 %v2633, %v2873
      %v2940 = vadd.f32 %v2634, %v2878
      %v2941 = vadd.f32 %v2635, %v2883
      %v2942 = vadd.f32 %v2636, %v2888
      %v2943 = vadd.f32 %v2637, %v2893
      %v2944 = vadd.f32 %v2638, %v2898
      %v2945 = vadd.f32 %v2639, %v2903
      %v2946 = vadd.f32 %v2640, %v2908
      %v2947 = vadd.f32 %v2641, %v2913
      %v2948 = vld [vmem:[%s2335 + $0x2] sm:$0xff]
      %v2949 = vld [vmem:[%s2335 + $0xa] sm:$0xff]
      %v2950 = vld [vmem:[%s2335 + $0x1a] sm:$0xff]
      %v2951 = vld [vmem:[%s2335 + $0x22] sm:$0xff]
      %v2952 = vld [vmem:[%s2335 + $0x32] sm:$0xff]
      %v2953 = vld [vmem:[%s2335 + $0x3a] sm:$0xff]
      %v2954 = vld [vmem:[%s2335 + $0x4a] sm:$0xff]
      %v2955 = vld [vmem:[%s2335 + $0x52] sm:$0xff]
      %v2956 = vld [vmem:[%s2335 + $0x62] sm:$0xff]
      %v2957 = vld [vmem:[%s2335 + $0x6a] sm:$0xff]
      %v2958 = vld [vmem:[%s2335 + $0x7a] sm:$0xff]
      %v2959 = vld [vmem:[%s2335 + $0x82] sm:$0xff]
      %v2960 = vld [vmem:[%s2335 + $0x92] sm:$0xff]
      %v2961 = vld [vmem:[%s2335 + $0x9a] sm:$0xff]
      %v2962 = vld [vmem:[%s2335 + $0xaa] sm:$0xff]
      %v2963 = vld [vmem:[%s2335 + $0xb2] sm:$0xff]
      %v2964 = vld [vmem:[%s2335 + $0xc2] sm:$0xff]
      %v2965 = vld [vmem:[%s2335 + $0xca] sm:$0xff]
      %v2966 = vld [vmem:[%s2335 + $0xda] sm:$0xff]
      %v2967 = vld [vmem:[%s2335 + $0xe2] sm:$0xff]
      %v2968 = vld [vmem:[%s2335 + $0xf2] sm:$0xff]
      %v2969 = vld [vmem:[%s2335 + $0xfa] sm:$0xff]
      %v2970 = vld [vmem:[%s2335 + $0x10a] sm:$0xff]
      %v2971 = vld [vmem:[%s2335 + $0x112] sm:$0xff]
      %v2972 = vld [vmem:[%s2335 + $0x122] sm:$0xff]
      %v2973 = vld [vmem:[%s2335 + $0x12a] sm:$0xff]
      %v2974 = vld [vmem:[%s2335 + $0x13a] sm:$0xff]
      %v2975 = vld [vmem:[%s2335 + $0x142] sm:$0xff]
      %v2976 = vld [vmem:[%s2335 + $0x152] sm:$0xff]
      %v2977 = vld [vmem:[%s2335 + $0x15a] sm:$0xff]
      %v2978 = vld [vmem:[%s2335 + $0x16a] sm:$0xff]
      %v2979 = vld [vmem:[%s2335 + $0x172] sm:$0xff]
      %s2980 = scalar_lea.vmem %s4, 1024
      %v2981 = vld [vmem:[%s2980] sm:$0xff]
      %v2982 = vld [vmem:[%s2980 + $0x8] sm:$0xff]
      %v2983 = vld [vmem:[%s2980 + $0x10] sm:$0xff]
      %v2984 = vld [vmem:[%s2980 + $0x18] sm:$0xff]
      %v2985 = vld [vmem:[%s2980 + $0x20] sm:$0xff]
      %v2986 = vld [vmem:[%s2980 + $0x28] sm:$0xff]
      %v2987 = vld [vmem:[%s2980 + $0x30] sm:$0xff]
      %v2988 = vld [vmem:[%s2980 + $0x38] sm:$0xff]
      %v2989 = vld [vmem:[%s2980 + $0x40] sm:$0xff]
      %v2990 = vld [vmem:[%s2980 + $0x48] sm:$0xff]
      %v2991 = vld [vmem:[%s2980 + $0x50] sm:$0xff]
      %v2992 = vld [vmem:[%s2980 + $0x58] sm:$0xff]
      %v2993 = vld [vmem:[%s2980 + $0x60] sm:$0xff]
      %v2994 = vld [vmem:[%s2980 + $0x68] sm:$0xff]
      %v2995 = vld [vmem:[%s2980 + $0x70] sm:$0xff]
      %v2996 = vld [vmem:[%s2980 + $0x78] sm:$0xff]
      %2997 = vmatprep.subr.mxu0 0.0
      %2998 = vmatpush1.msra.mxu0 %v2981
      %2999 = vmatprep.subr.mxu0 0.0
      %3000 = vmatpush1.msra.mxu0 %v2982
      %3001 = vmatprep.subr.mxu0 0.0
      %3002 = vmatpush1.msra.mxu0 %v2983
      %3003 = vmatprep.subr.mxu0 0.0
      %3004 = vmatpush1.msra.mxu0 %v2984
      %3005 = vmatprep.subr.mxu0 0.0
      %3006 = vmatpush1.msra.mxu0 %v2985
      %3007 = vmatprep.subr.mxu0 0.0
      %3008 = vmatpush1.msra.mxu0 %v2986
      %3009 = vmatprep.subr.mxu0 0.0
      %3010 = vmatpush1.msra.mxu0 %v2987
      %3011 = vmatprep.subr.mxu0 0.0
      %3012 = vmatpush1.msra.mxu0 %v2988
      %3013 = vmatprep.subr.mxu0 0.0
      %3014 = vmatpush1.msra.mxu0 %v2989
      %3015 = vmatprep.subr.mxu0 0.0
      %3016 = vmatpush1.msra.mxu0 %v2990
      %3017 = vmatprep.subr.mxu0 0.0
      %3018 = vmatpush1.msra.mxu0 %v2991
      %3019 = vmatprep.subr.mxu0 0.0
      %3020 = vmatpush1.msra.mxu0 %v2992
      %3021 = vmatprep.subr.mxu0 0.0
      %3022 = vmatpush1.msra.mxu0 %v2993
      %3023 = vmatprep.subr.mxu0 0.0
      %3024 = vmatpush1.msra.mxu0 %v2994
      %3025 = vmatprep.subr.mxu0 0.0
      %3026 = vmatpush1.msra.mxu0 %v2995
      %3027 = vmatprep.subr.mxu0 0.0
      %3028 = vmatpush1.msra.mxu0 %v2996
      %3029 = vmatprep.subr.mxu0 0.0
      %3030 = vmatpush1.msra.mxu0 0.0
      %3031 = vmatprep.subr.mxu0 0.0
      %3032 = vmatpush1.msra.mxu0 0.0
      %3033 = vmatprep.subr.mxu0 0.0
      %3034 = vmatpush1.msra.mxu0 0.0
      %3035 = vmatprep.subr.mxu0 0.0
      %3036 = vmatpush1.msra.mxu0 0.0
      %3037 = vmatprep.subr.mxu0 0.0
      %3038 = vmatpush1.msra.mxu0 0.0
      %3039 = vmatprep.subr.mxu0 0.0
      %3040 = vmatpush1.msra.mxu0 0.0
      %3041 = vmatprep.subr.mxu0 0.0
      %3042 = vmatpush1.msra.mxu0 0.0
      %3043 = vmatprep.subr.mxu0 0.0
      %3044 = vmatpush1.msra.mxu0 0.0
      %3045 = vmatprep.subr.mxu0 0.0
      %3046 = vmatpush1.msra.mxu0 0.0
      %3047 = vmatprep.subr.mxu0 0.0
      %3048 = vmatpush1.msra.mxu0 0.0
      %3049 = vmatprep.subr.mxu0 0.0
      %3050 = vmatpush1.msra.mxu0 0.0
      %3051 = vmatprep.subr.mxu0 0.0
      %3052 = vmatpush1.msra.mxu0 0.0
      %3053 = vmatprep.subr.mxu0 0.0
      %3054 = vmatpush1.msra.mxu0 0.0
      %3055 = vmatprep.subr.mxu0 0.0
      %3056 = vmatpush1.msra.mxu0 0.0
      %3057 = vmatprep.subr.mxu0 0.0
      %3058 = vmatpush1.msra.mxu0 0.0
      %3059 = vmatprep.subr.mxu0 0.0
      %3060 = vmatpush1.msra.mxu0 0.0
      %3061 = vmatprep.mubr.f32.mxu0 0.0
      %3062 = vmatmul.mubr.f32.gmra.mrb[0].mxu0 %v2948
      %v3063 = vpop.f32.mrb[0].mxu0
      %v3064 = vadd.f32 0.0, %v3063
      %v3065 = vpop.f32.mrb[0].mxu0
      %3066 = vmatprep.mubr.f32.mxu0 0.0
      %3067 = vmatmul.mubr.f32.gmra.mrb[0].mxu0 %v2949
      %v3068 = vpop.f32.mrb[0].mxu0
      %v3069 = vadd.f32 0.0, %v3068
      %v3070 = vpop.f32.mrb[0].mxu0
      %3071 = vmatprep.mubr.f32.mxu0 0.0
      %3072 = vmatmul.mubr.f32.gmra.mrb[0].mxu0 %v2950
      %v3073 = vpop.f32.mrb[0].mxu0
      %v3074 = vadd.f32 0.0, %v3073
      %v3075 = vpop.f32.mrb[0].mxu0
      %3076 = vmatprep.mubr.f32.mxu0 0.0
      %3077 = vmatmul.mubr.f32.gmra.mrb[0].mxu0 %v2951
      %v3078 = vpop.f32.mrb[0].mxu0
      %v3079 = vadd.f32 0.0, %v3078
      %v3080 = vpop.f32.mrb[0].mxu0
      %3081 = vmatprep.mubr.f32.mxu0 0.0
      %3082 = vmatmul.mubr.f32.gmra.mrb[0].mxu0 %v2952
      %v3083 = vpop.f32.mrb[0].mxu0
      %v3084 = vadd.f32 0.0, %v3083
      %v3085 = vpop.f32.mrb[0].mxu0
      %3086 = vmatprep.mubr.f32.mxu0 0.0
      %3087 = vmatmul.mubr.f32.gmra.mrb[0].mxu0 %v2953
      %v3088 = vpop.f32.mrb[0].mxu0
      %v3089 = vadd.f32 0.0, %v3088
      %v3090 = vpop.f32.mrb[0].mxu0
      %3091 = vmatprep.mubr.f32.mxu0 0.0
      %3092 = vmatmul.mubr.f32.gmra.mrb[0].mxu0 %v2954
      %v3093 = vpop.f32.mrb[0].mxu0
      %v3094 = vadd.f32 0.0, %v3093
      %v3095 = vpop.f32.mrb[0].mxu0
      %3096 = vmatprep.mubr.f32.mxu0 0.0
      %3097 = vmatmul.mubr.f32.gmra.mrb[0].mxu0 %v2955
      %v3098 = vpop.f32.mrb[0].mxu0
      %v3099 = vadd.f32 0.0, %v3098
      %v3100 = vpop.f32.mrb[0].mxu0
      %3101 = vmatprep.mubr.f32.mxu0 0.0
      %3102 = vmatmul.mubr.f32.gmra.mrb[0].mxu0 %v2956
      %v3103 = vpop.f32.mrb[0].mxu0
      %v3104 = vadd.f32 0.0, %v3103
      %v3105 = vpop.f32.mrb[0].mxu0
      %3106 = vmatprep.mubr.f32.mxu0 0.0
      %3107 = vmatmul.mubr.f32.gmra.mrb[0].mxu0 %v2957
      %v3108 = vpop.f32.mrb[0].mxu0
      %v3109 = vadd.f32 0.0, %v3108
      %v3110 = vpop.f32.mrb[0].mxu0
      %3111 = vmatprep.mubr.f32.mxu0 0.0
      %3112 = vmatmul.mubr.f32.gmra.mrb[0].mxu0 %v2958
      %v3113 = vpop.f32.mrb[0].mxu0
      %v3114 = vadd.f32 0.0, %v3113
      %v3115 = vpop.f32.mrb[0].mxu0
      %3116 = vmatprep.mubr.f32.mxu0 0.0
      %3117 = vmatmul.mubr.f32.gmra.mrb[0].mxu0 %v2959
      %v3118 = vpop.f32.mrb[0].mxu0
      %v3119 = vadd.f32 0.0, %v3118
      %v3120 = vpop.f32.mrb[0].mxu0
      %3121 = vmatprep.mubr.f32.mxu0 0.0
      %3122 = vmatmul.mubr.f32.gmra.mrb[0].mxu0 %v2960
      %v3123 = vpop.f32.mrb[0].mxu0
      %v3124 = vadd.f32 0.0, %v3123
      %v3125 = vpop.f32.mrb[0].mxu0
      %3126 = vmatprep.mubr.f32.mxu0 0.0
      %3127 = vmatmul.mubr.f32.gmra.mrb[0].mxu0 %v2961
      %v3128 = vpop.f32.mrb[0].mxu0
      %v3129 = vadd.f32 0.0, %v3128
      %v3130 = vpop.f32.mrb[0].mxu0
      %3131 = vmatprep.mubr.f32.mxu0 0.0
      %3132 = vmatmul.mubr.f32.gmra.mrb[0].mxu0 %v2962
      %v3133 = vpop.f32.mrb[0].mxu0
      %v3134 = vadd.f32 0.0, %v3133
      %v3135 = vpop.f32.mrb[0].mxu0
      %3136 = vmatprep.mubr.f32.mxu0 0.0
      %3137 = vmatmul.mubr.f32.gmra.mrb[0].mxu0 %v2963
      %v3138 = vpop.f32.mrb[0].mxu0
      %v3139 = vadd.f32 0.0, %v3138
      %v3140 = vpop.f32.mrb[0].mxu0
      %3141 = vmatprep.mubr.f32.mxu0 0.0
      %3142 = vmatmul.mubr.f32.gmra.mrb[0].mxu0 %v2964
      %v3143 = vpop.f32.mrb[0].mxu0
      %v3144 = vadd.f32 0.0, %v3143
      %v3145 = vpop.f32.mrb[0].mxu0
      %3146 = vmatprep.mubr.f32.mxu0 0.0
      %3147 = vmatmul.mubr.f32.gmra.mrb[0].mxu0 %v2965
      %v3148 = vpop.f32.mrb[0].mxu0
      %v3149 = vadd.f32 0.0, %v3148
      %v3150 = vpop.f32.mrb[0].mxu0
      %3151 = vmatprep.mubr.f32.mxu0 0.0
      %3152 = vmatmul.mubr.f32.gmra.mrb[0].mxu0 %v2966
      %v3153 = vpop.f32.mrb[0].mxu0
      %v3154 = vadd.f32 0.0, %v3153
      %v3155 = vpop.f32.mrb[0].mxu0
      %3156 = vmatprep.mubr.f32.mxu0 0.0
      %3157 = vmatmul.mubr.f32.gmra.mrb[0].mxu0 %v2967
      %v3158 = vpop.f32.mrb[0].mxu0
      %v3159 = vadd.f32 0.0, %v3158
      %v3160 = vpop.f32.mrb[0].mxu0
      %3161 = vmatprep.mubr.f32.mxu0 0.0
      %3162 = vmatmul.mubr.f32.gmra.mrb[0].mxu0 %v2968
      %v3163 = vpop.f32.mrb[0].mxu0
      %v3164 = vadd.f32 0.0, %v3163
      %v3165 = vpop.f32.mrb[0].mxu0
      %3166 = vmatprep.mubr.f32.mxu0 0.0
      %3167 = vmatmul.mubr.f32.gmra.mrb[0].mxu0 %v2969
      %v3168 = vpop.f32.mrb[0].mxu0
      %v3169 = vadd.f32 0.0, %v3168
      %v3170 = vpop.f32.mrb[0].mxu0
      %3171 = vmatprep.mubr.f32.mxu0 0.0
      %3172 = vmatmul.mubr.f32.gmra.mrb[0].mxu0 %v2970
      %v3173 = vpop.f32.mrb[0].mxu0
      %v3174 = vadd.f32 0.0, %v3173
      %v3175 = vpop.f32.mrb[0].mxu0
      %3176 = vmatprep.mubr.f32.mxu0 0.0
      %3177 = vmatmul.mubr.f32.gmra.mrb[0].mxu0 %v2971
      %v3178 = vpop.f32.mrb[0].mxu0
      %v3179 = vadd.f32 0.0, %v3178
      %v3180 = vpop.f32.mrb[0].mxu0
      %3181 = vmatprep.mubr.f32.mxu0 0.0
      %3182 = vmatmul.mubr.f32.gmra.mrb[0].mxu0 %v2972
      %v3183 = vpop.f32.mrb[0].mxu0
      %v3184 = vadd.f32 0.0, %v3183
      %v3185 = vpop.f32.mrb[0].mxu0
      %3186 = vmatprep.mubr.f32.mxu0 0.0
      %3187 = vmatmul.mubr.f32.gmra.mrb[0].mxu0 %v2973
      %v3188 = vpop.f32.mrb[0].mxu0
      %v3189 = vadd.f32 0.0, %v3188
      %v3190 = vpop.f32.mrb[0].mxu0
      %3191 = vmatprep.mubr.f32.mxu0 0.0
      %3192 = vmatmul.mubr.f32.gmra.mrb[0].mxu0 %v2974
      %v3193 = vpop.f32.mrb[0].mxu0
      %v3194 = vadd.f32 0.0, %v3193
      %v3195 = vpop.f32.mrb[0].mxu0
      %3196 = vmatprep.mubr.f32.mxu0 0.0
      %3197 = vmatmul.mubr.f32.gmra.mrb[0].mxu0 %v2975
      %v3198 = vpop.f32.mrb[0].mxu0
      %v3199 = vadd.f32 0.0, %v3198
      %v3200 = vpop.f32.mrb[0].mxu0
      %3201 = vmatprep.mubr.f32.mxu0 0.0
      %3202 = vmatmul.mubr.f32.gmra.mrb[0].mxu0 %v2976
      %v3203 = vpop.f32.mrb[0].mxu0
      %v3204 = vadd.f32 0.0, %v3203
      %v3205 = vpop.f32.mrb[0].mxu0
      %3206 = vmatprep.mubr.f32.mxu0 0.0
      %3207 = vmatmul.mubr.f32.gmra.mrb[0].mxu0 %v2977
      %v3208 = vpop.f32.mrb[0].mxu0
      %v3209 = vadd.f32 0.0, %v3208
      %v3210 = vpop.f32.mrb[0].mxu0
      %3211 = vmatprep.mubr.f32.mxu0 0.0
      %3212 = vmatmul.mubr.f32.gmra.mrb[0].mxu0 %v2978
      %v3213 = vpop.f32.mrb[0].mxu0
      %v3214 = vadd.f32 0.0, %v3213
      %v3215 = vpop.f32.mrb[0].mxu0
      %3216 = vmatprep.mubr.f32.mxu0 0.0
      %3217 = vmatmul.mubr.f32.gmra.mrb[0].mxu0 %v2979
      %v3218 = vpop.f32.mrb[0].mxu0
      %v3219 = vadd.f32 0.0, %v3218
      %v3220 = vpop.f32.mrb[0].mxu0
      %3221 = vdwg.mxu0
      %v3222 = vadd.f32 %v2916, %v3064
      %v3223 = vadd.f32 %v2917, %v3069
      %v3224 = vadd.f32 %v2918, %v3074
      %v3225 = vadd.f32 %v2919, %v3079
      %v3226 = vadd.f32 %v2920, %v3084
      %v3227 = vadd.f32 %v2921, %v3089
      %v3228 = vadd.f32 %v2922, %v3094
      %v3229 = vadd.f32 %v2923, %v3099
      %v3230 = vadd.f32 %v2924, %v3104
      %v3231 = vadd.f32 %v2925, %v3109
      %v3232 = vadd.f32 %v2926, %v3114
      %v3233 = vadd.f32 %v2927, %v3119
      %v3234 = vadd.f32 %v2928, %v3124
      %v3235 = vadd.f32 %v2929, %v3129
      %v3236 = vadd.f32 %v2930, %v3134
      %v3237 = vadd.f32 %v2931, %v3139
      %v3238 = vadd.f32 %v2932, %v3144
      %v3239 = vadd.f32 %v2933, %v3149
      %v3240 = vadd.f32 %v2934, %v3154
      %v3241 = vadd.f32 %v2935, %v3159
      %v3242 = vadd.f32 %v2936, %v3164
      %v3243 = vadd.f32 %v2937, %v3169
      %v3244 = vadd.f32 %v2938, %v3174
      %v3245 = vadd.f32 %v2939, %v3179
      %v3246 = vadd.f32 %v2940, %v3184
      %v3247 = vadd.f32 %v2941, %v3189
      %v3248 = vadd.f32 %v2942, %v3194
      %v3249 = vadd.f32 %v2943, %v3199
      %v3250 = vadd.f32 %v2944, %v3204
      %v3251 = vadd.f32 %v2945, %v3209
      %v3252 = vadd.f32 %v2946, %v3214
      %v3253 = vadd.f32 %v2947, %v3219
      %3254 = vst [vmem:[%s249] sm:$0xff] %v3222
      %3255 = vst [vmem:[%s249 + $0x8] sm:$0xff] %v3223
      %3256 = vst [vmem:[%s249 + $0x10] sm:$0xff] %v3224
      %3257 = vst [vmem:[%s249 + $0x18] sm:$0xff] %v3225
      %3258 = vst [vmem:[%s249 + $0x20] sm:$0xff] %v3226
      %3259 = vst [vmem:[%s249 + $0x28] sm:$0xff] %v3227
      %3260 = vst [vmem:[%s249 + $0x30] sm:$0xff] %v3228
      %3261 = vst [vmem:[%s249 + $0x38] sm:$0xff] %v3229
      %3262 = vst [vmem:[%s249 + $0x40] sm:$0xff] %v3230
      %3263 = vst [vmem:[%s249 + $0x48] sm:$0xff] %v3231
      %3264 = vst [vmem:[%s249 + $0x50] sm:$0xff] %v3232
      %3265 = vst [vmem:[%s249 + $0x58] sm:$0xff] %v3233
      %3266 = vst [vmem:[%s249 + $0x60] sm:$0xff] %v3234
      %3267 = vst [vmem:[%s249 + $0x68] sm:$0xff] %v3235
      %3268 = vst [vmem:[%s249 + $0x70] sm:$0xff] %v3236
      %3269 = vst [vmem:[%s249 + $0x78] sm:$0xff] %v3237
      %3270 = vst [vmem:[%s249 + $0x80] sm:$0xff] %v3238
      %3271 = vst [vmem:[%s249 + $0x88] sm:$0xff] %v3239
      %3272 = vst [vmem:[%s249 + $0x90] sm:$0xff] %v3240
      %3273 = vst [vmem:[%s249 + $0x98] sm:$0xff] %v3241
      %3274 = vst [vmem:[%s249 + $0xa0] sm:$0xff] %v3242
      %3275 = vst [vmem:[%s249 + $0xa8] sm:$0xff] %v3243
      %3276 = vst [vmem:[%s249 + $0xb0] sm:$0xff] %v3244
      %3277 = vst [vmem:[%s249 + $0xb8] sm:$0xff] %v3245
      %3278 = vst [vmem:[%s249 + $0xc0] sm:$0xff] %v3246
      %3279 = vst [vmem:[%s249 + $0xc8] sm:$0xff] %v3247
      %3280 = vst [vmem:[%s249 + $0xd0] sm:$0xff] %v3248
      %3281 = vst [vmem:[%s249 + $0xd8] sm:$0xff] %v3249
      %3282 = vst [vmem:[%s249 + $0xe0] sm:$0xff] %v3250
      %3283 = vst [vmem:[%s249 + $0xe8] sm:$0xff] %v3251
      %3284 = vst [vmem:[%s249 + $0xf0] sm:$0xff] %v3252
      %3285 = vst [vmem:[%s249 + $0xf8] sm:$0xff] %v3253
      %v3286 = vld [vmem:[%s6] sm:$0x1]
      %v3287 = vadd.f32 %v3222, %v3223
      %v3288 = vadd.f32 %v3287, %v3224
      %v3289 = vadd.f32 %v3288, %v3225
      %v3290 = vadd.f32 %v3289, %v3226
      %v3291 = vadd.f32 %v3290, %v3227
      %v3292 = vadd.f32 %v3291, %v3228
      %v3293 = vadd.f32 %v3292, %v3229
      %v3294 = vadd.f32 %v3293, %v3230
      %v3295 = vadd.f32 %v3294, %v3231
      %v3296 = vadd.f32 %v3295, %v3232
      %v3297 = vadd.f32 %v3296, %v3233
      %v3298 = vadd.f32 %v3297, %v3234
      %v3299 = vadd.f32 %v3298, %v3235
      %v3300 = vadd.f32 %v3299, %v3236
      %v3301 = vadd.f32 %v3300, %v3237
      %v3302 = vadd.f32 %v3301, %v3238
      %v3303 = vadd.f32 %v3302, %v3239
      %v3304 = vadd.f32 %v3303, %v3240
      %v3305 = vadd.f32 %v3304, %v3241
      %v3306 = vadd.f32 %v3305, %v3242
      %v3307 = vadd.f32 %v3306, %v3243
      %v3308 = vadd.f32 %v3307, %v3244
      %v3309 = vadd.f32 %v3308, %v3245
      %v3310 = vadd.f32 %v3309, %v3246
      %v3311 = vadd.f32 %v3310, %v3247
      %v3312 = vadd.f32 %v3311, %v3248
      %v3313 = vadd.f32 %v3312, %v3249
      %v3314 = vadd.f32 %v3313, %v3250
      %v3315 = vadd.f32 %v3314, %v3251
      %v3316 = vadd.f32 %v3315, %v3252
      %v3317 = vadd.f32 %v3316, %v3253
      %v3318 = vrot.slane %v3317, 4
      %v3319 = vadd.f32 %v3317, %v3318
      %v3320 = vrot.slane %v3319, 2
      %v3321 = vadd.f32 %v3319, %v3320
      %v3322 = vrot.slane %v3321, 1
      %v3323 = vadd.f32 %v3321, %v3322
      %v3324 = vadd.f32 %v3286, %v3323
      %3325 = vst [vmem:[%s6] sm:$0x1] %v3324
      %v3326 = vld [vmem:[%s6 + $0x1] sm:$0x1]
      %v3327 = vmul.f32 %v3222, %v3222
      %v3328 = vmul.f32 %v3223, %v3223
      %v3329 = vmul.f32 %v3224, %v3224
      %v3330 = vmul.f32 %v3225, %v3225
      %v3331 = vmul.f32 %v3226, %v3226
      %v3332 = vmul.f32 %v3227, %v3227
      %v3333 = vmul.f32 %v3228, %v3228
      %v3334 = vmul.f32 %v3229, %v3229
      %v3335 = vmul.f32 %v3230, %v3230
      %v3336 = vmul.f32 %v3231, %v3231
      %v3337 = vmul.f32 %v3232, %v3232
      %v3338 = vmul.f32 %v3233, %v3233
      %v3339 = vmul.f32 %v3234, %v3234
      %v3340 = vmul.f32 %v3235, %v3235
      %v3341 = vmul.f32 %v3236, %v3236
      %v3342 = vmul.f32 %v3237, %v3237
      %v3343 = vmul.f32 %v3238, %v3238
      %v3344 = vmul.f32 %v3239, %v3239
      %v3345 = vmul.f32 %v3240, %v3240
      %v3346 = vmul.f32 %v3241, %v3241
      %v3347 = vmul.f32 %v3242, %v3242
      %v3348 = vmul.f32 %v3243, %v3243
      %v3349 = vmul.f32 %v3244, %v3244
      %v3350 = vmul.f32 %v3245, %v3245
      %v3351 = vmul.f32 %v3246, %v3246
      %v3352 = vmul.f32 %v3247, %v3247
      %v3353 = vmul.f32 %v3248, %v3248
      %v3354 = vmul.f32 %v3249, %v3249
      %v3355 = vmul.f32 %v3250, %v3250
      %v3356 = vmul.f32 %v3251, %v3251
      %v3357 = vmul.f32 %v3252, %v3252
      %v3358 = vmul.f32 %v3253, %v3253
      %v3359 = vadd.f32 %v3327, %v3328
      %v3360 = vadd.f32 %v3359, %v3329
      %v3361 = vadd.f32 %v3360, %v3330
      %v3362 = vadd.f32 %v3361, %v3331
      %v3363 = vadd.f32 %v3362, %v3332
      %v3364 = vadd.f32 %v3363, %v3333
      %v3365 = vadd.f32 %v3364, %v3334
      %v3366 = vadd.f32 %v3365, %v3335
      %v3367 = vadd.f32 %v3366, %v3336
      %v3368 = vadd.f32 %v3367, %v3337
      %v3369 = vadd.f32 %v3368, %v3338
      %v3370 = vadd.f32 %v3369, %v3339
      %v3371 = vadd.f32 %v3370, %v3340
      %v3372 = vadd.f32 %v3371, %v3341
      %v3373 = vadd.f32 %v3372, %v3342
      %v3374 = vadd.f32 %v3373, %v3343
      %v3375 = vadd.f32 %v3374, %v3344
      %v3376 = vadd.f32 %v3375, %v3345
      %v3377 = vadd.f32 %v3376, %v3346
      %v3378 = vadd.f32 %v3377, %v3347
      %v3379 = vadd.f32 %v3378, %v3348
      %v3380 = vadd.f32 %v3379, %v3349
      %v3381 = vadd.f32 %v3380, %v3350
      %v3382 = vadd.f32 %v3381, %v3351
      %v3383 = vadd.f32 %v3382, %v3352
      %v3384 = vadd.f32 %v3383, %v3353
      %v3385 = vadd.f32 %v3384, %v3354
      %v3386 = vadd.f32 %v3385, %v3355
      %v3387 = vadd.f32 %v3386, %v3356
      %v3388 = vadd.f32 %v3387, %v3357
      %v3389 = vadd.f32 %v3388, %v3358
      %v3390 = vrot.slane %v3389, 4
      %v3391 = vadd.f32 %v3389, %v3390
      %v3392 = vrot.slane %v3391, 2
      %v3393 = vadd.f32 %v3391, %v3392
      %v3394 = vrot.slane %v3393, 1
      %v3395 = vadd.f32 %v3393, %v3394
      %v3396 = vadd.f32 %v3326, %v3395
      %3397 = vst [vmem:[%s6 + $0x1] sm:$0x1] %v3396
      %p3398 = scmp.lt.s32.totalorder %s18, 1
      %s3399 = scalar_select %p3398, %s18, 1
      %s3400 = smul.addr %s3399, 32
      %s3401 = smul.addr %s3400, 8
      %s3402 = scalar_lea.vmem %s5, %s3401
      // Predicated region
      $region45: #{residual_block_forward.4} parent=39 // pred_check
        %p3403 = pneg %p146
      $region46: #{residual_block_forward.4} parent=39 // pred_check_branch
        %3405 = sbr.rel (%p3403) target = $region48
      $region47: #{residual_block_forward.4} parent=39 // pred_region
        _
      $region48: #{residual_block_forward.4} parent=39 // pred_fallthru
        _
      // Predicated region
      $region49: #{residual_block_forward.4} parent=39 // pred_check
        %p3406 = pneg %p167
      $region50: #{residual_block_forward.4} parent=39 // pred_check_branch
        %3408 = sbr.rel (%p3406) target = $region52
      $region51: #{residual_block_forward.4} parent=39 // pred_region
        _
      $region52: #{residual_block_forward.4} parent=39 // pred_fallthru
        _
      // Predicated region
      $region53: #{residual_block_forward.4} parent=39 // pred_check
        %p3409 = pneg %p167
      $region54: #{residual_block_forward.4} parent=39 // pred_check_branch
        %3411 = sbr.rel (%p3409) target = $region56
      $region55: #{residual_block_forward.4} parent=39 // pred_region
        _
      $region56: #{residual_block_forward.4} parent=39 // pred_fallthru
        _
    $region40: #{residual_block_forward.4} parent=5 // pred_fallthru
      _
    %p3412 = scmp.le.s32.totalorder 2, %s13
    // Predicated region
    $region57: #{residual_block_forward.4} parent=5 // pred_check
      %p3413 = pneg %p3412
    $region58: #{residual_block_forward.4} parent=5 // pred_check_branch
      %3415 = sbr.rel (%p3413) target = $region60
    $region59: #{residual_block_forward.4} parent=5 // pred_region
      %s3416 = ssub.s32 %s13, 2
      // Predicated region
      $region61: #{residual_block_forward.4} parent=59 // pred_check
        %p3417 = pneg %p152
      $region62: #{residual_block_forward.4} parent=59 // pred_check_branch
        %3419 = sbr.rel (%p3417) target = $region64
      $region63: #{residual_block_forward.4} parent=59 // pred_region
        %p3420 = scmp.lt.s32.totalorder %s19, 1
        %s3421 = scalar_select %p3420, %s19, 1
        %s3422 = smul.addr %s3421, 32
        %s3423 = smul.addr %s3422, 8
        %s3424 = scalar_lea.vmem %s5, %s3423
      $region64: #{residual_block_forward.4} parent=59 // pred_fallthru
        _
    $region60: #{residual_block_forward.4} parent=5 // pred_fallthru
      _
  $region6: #{residual_block_forward.4} parent=0 // loop_footer
    %s17 = sadd.s32 1, %s13
  $region7: #{residual_block_forward.4} parent=0 // loop_footer_branch
    %12 = sbr.rel target = $region3
  $region8: #{residual_block_forward.4} parent=0 // loop_exit
    _

// kernel: residual_block_forward.3
$region0: #{residual_block_forward.3}
  #allocation0 [shape = 'u32[]', space=smem, size = 0x4, offset = 0x4, fixed_abs, tag = 'smem constant byte address 0x4 - core index']
  #allocation1 [shape = 'u32[144,128]{1,0:T(1,128)}', space=vmem, size = 0x12000, scoped, tag = 'internal scratch']
  %s0 = inlined_call_operand.vmem [shape: f32[2,18,18,4], index: 0, kind: input, shape index: {}]
  %s1 = inlined_call_operand.vmem [shape: f32[9,4,128], index: 1, kind: input, shape index: {}]
  %s2 = inlined_call_operand.vmem [shape: f32[4,128], index: 2, kind: input, shape index: {}]
  %s3 = inlined_call_operand.vmem [shape: f32[2,256,128], index: 3, kind: output, shape index: {0}]
  %s4 = inlined_call_operand.vmem [shape: f32[2,256,128], index: 4, kind: output, shape index: {1}]
  %s5 = inlined_call_operand.vmem [shape: f32[8,128], index: 5, kind: output, shape index: {2}]
  %6 = xla_tuple %s3, %s4, %s5
  %s7 = sld [smem:[#allocation0]]
  $region65: #{residual_block_forward.3} parent=0
    _
  %s9 = ssub.s32 1, %s7
  %s10 = scalar_select 0, %s9, %s7
  loop: start=0, step=1, limit=4
  $region2: #{residual_block_forward.3} parent=0 // loop_pre_header
    _
  $region3: #{residual_block_forward.3} parent=0 // loop_header
    %s12 = sphi 0, %s16
    %p13 = scmp.ge.s32.totalorder %s12, 4
    %s22 = sphi 0, %s24
    %s25 = sphi 0, %s22
    %s26 = sphi 0, %s25
    %s42 = sphi 0, %s26
    %s46 = sphi 0, %s46
    %s48 = sphi 0, %s46
    %s49 = sphi 0, %s48
    %s63 = sphi 0, %s49
    %s67 = sphi 0, %s67
    %s69 = sphi 0, %s67
    %s70 = sphi 0, %s69
    %s84 = sphi 0, %s70
    %s90 = sphi 0, %s92
    %s93 = sphi 0, %s90
    %s94 = sphi 0, %s93
    %s110 = sphi 0, %s94
    %s116 = sphi 0, %s118
    %s119 = sphi 0, %s116
    %s120 = sphi 0, %s119
    %s136 = sphi 0, %s120
    %s140 = sphi 0, %s140
    %s142 = sphi 0, %s140
    %s143 = sphi 0, %s142
    %s157 = sphi 0, %s143
  $region4: #{residual_block_forward.3} parent=0 // loop_header_branch
    %15 = sbr.rel (%p13) target = $region8
  $region5: #{residual_block_forward.3} parent=0 // loop_body
    %s17 = ssub.s32 %s12, 1
    %s18 = ssub.s32 %s12, 2
    %s19 = sadd.s32 %s12, 1
    %s20 = ssub.s32 %s12, %s19
    %p21 = scmp.eq.s32.totalorder %s20, 0
    %s23 = sadd.s32 %s22, 1
    %s24 = scalar_select %p21, %s22, %s23
    %p27 = pneg %p21
    %p28 = scmp.eq.s32.totalorder %s12, 1
    %p29 = por %p27, %p28
    %p30 = scmp.ne.s32.totalorder %s22, %s25
    %p31 = scmp.eq.s32.totalorder %s12, 0
    %p32 = por %p30, %p31
    %p33 = scmp.ne.s32.totalorder %s22, %s25
    %p34 = scmp.eq.s32.totalorder %s17, 1
    %p35 = por %p33, %p34
    %p36 = scmp.ne.s32.totalorder %s25, %s26
    %p37 = scmp.eq.s32.totalorder %s17, 0
    %p38 = por %p36, %p37
    %p39 = scmp.ne.s32.totalorder %s25, %s26
    %p40 = scmp.eq.s32.totalorder %s18, 1
    %p41 = por %p39, %p40
    %p43 = scmp.ne.s32.totalorder %s26, %s42
    %p44 = scmp.eq.s32.totalorder %s18, 0
    %p45 = por %p43, %p44
    %s47 = sadd.s32 %s46, 1
    %p50 = scmp.eq.s32.totalorder %s12, 1
    %p51 = scmp.ne.s32.totalorder %s46, %s48
    %p52 = scmp.eq.s32.totalorder %s12, 0
    %p53 = por %p51, %p52
    %p54 = scmp.ne.s32.totalorder %s46, %s48
    %p55 = scmp.eq.s32.totalorder %s17, 1
    %p56 = por %p54, %p55
    %p57 = scmp.ne.s32.totalorder %s48, %s49
    %p58 = scmp.eq.s32.totalorder %s17, 0
    %p59 = por %p57, %p58
    %p60 = scmp.ne.s32.totalorder %s48, %s49
    %p61 = scmp.eq.s32.totalorder %s18, 1
    %p62 = por %p60, %p61
    %p64 = scmp.ne.s32.totalorder %s49, %s63
    %p65 = scmp.eq.s32.totalorder %s18, 0
    %p66 = por %p64, %p65
    %s68 = sadd.s32 %s67, 1
    %p71 = scmp.eq.s32.totalorder %s12, 1
    %p72 = scmp.ne.s32.totalorder %s67, %s69
    %p73 = scmp.eq.s32.totalorder %s12, 0
    %p74 = por %p72, %p73
    %p75 = scmp.ne.s32.totalorder %s67, %s69
    %p76 = scmp.eq.s32.totalorder %s17, 1
    %p77 = por %p75, %p76
    %p78 = scmp.ne.s32.totalorder %s69, %s70
    %p79 = scmp.eq.s32.totalorder %s17, 0
    %p80 = por %p78, %p79
    %p81 = scmp.ne.s32.totalorder %s69, %s70
    %p82 = scmp.eq.s32.totalorder %s18, 1
    %p83 = por %p81, %p82
    %p85 = scmp.ne.s32.totalorder %s70, %s84
    %p86 = scmp.eq.s32.totalorder %s18, 0
    %p87 = por %p85, %p86
    %s88 = ssub.s32 %s12, %s19
    %p89 = scmp.eq.s32.totalorder %s88, 0
    %s91 = sadd.s32 %s90, 1
    %s92 = scalar_select %p89, %s90, %s91
    %p95 = pneg %p89
    %p96 = scmp.eq.s32.totalorder %s12, 1
    %p97 = por %p95, %p96
    %p98 = scmp.ne.s32.totalorder %s90, %s93
    %p99 = scmp.eq.s32.totalorder %s12, 0
    %p100 = por %p98, %p99
    %p101 = scmp.ne.s32.totalorder %s90, %s93
    %p102 = scmp.eq.s32.totalorder %s17, 1
    %p103 = por %p101, %p102
    %p104 = scmp.ne.s32.totalorder %s93, %s94
    %p105 = scmp.eq.s32.totalorder %s17, 0
    %p106 = por %p104, %p105
    %p107 = scmp.ne.s32.totalorder %s93, %s94
    %p108 = scmp.eq.s32.totalorder %s18, 1
    %p109 = por %p107, %p108
    %p111 = scmp.ne.s32.totalorder %s94, %s110
    %p112 = scmp.eq.s32.totalorder %s18, 0
    %p113 = por %p111, %p112
    %s114 = ssub.s32 %s12, %s19
    %p115 = scmp.eq.s32.totalorder %s114, 0
    %s117 = sadd.s32 %s116, 1
    %s118 = scalar_select %p115, %s116, %s117
    %p121 = pneg %p115
    %p122 = scmp.eq.s32.totalorder %s12, 1
    %p123 = por %p121, %p122
    %p124 = scmp.ne.s32.totalorder %s116, %s119
    %p125 = scmp.eq.s32.totalorder %s12, 0
    %p126 = por %p124, %p125
    %p127 = scmp.ne.s32.totalorder %s116, %s119
    %p128 = scmp.eq.s32.totalorder %s17, 1
    %p129 = por %p127, %p128
    %p130 = scmp.ne.s32.totalorder %s119, %s120
    %p131 = scmp.eq.s32.totalorder %s17, 0
    %p132 = por %p130, %p131
    %p133 = scmp.ne.s32.totalorder %s119, %s120
    %p134 = scmp.eq.s32.totalorder %s18, 1
    %p135 = por %p133, %p134
    %p137 = scmp.ne.s32.totalorder %s120, %s136
    %p138 = scmp.eq.s32.totalorder %s18, 0
    %p139 = por %p137, %p138
    %s141 = sadd.s32 %s140, 1
    %p144 = scmp.eq.s32.totalorder %s12, 1
    %p145 = scmp.ne.s32.totalorder %s140, %s142
    %p146 = scmp.eq.s32.totalorder %s12, 0
    %p147 = por %p145, %p146
    %p148 = scmp.ne.s32.totalorder %s140, %s142
    %p149 = scmp.eq.s32.totalorder %s17, 1
    %p150 = por %p148, %p149
    %p151 = scmp.ne.s32.totalorder %s142, %s143
    %p152 = scmp.eq.s32.totalorder %s17, 0
    %p153 = por %p151, %p152
    %p154 = scmp.ne.s32.totalorder %s142, %s143
    %p155 = scmp.eq.s32.totalorder %s18, 1
    %p156 = por %p154, %p155
    %p158 = scmp.ne.s32.totalorder %s143, %s157
    %p159 = scmp.eq.s32.totalorder %s18, 0
    %p160 = por %p158, %p159
    %p161 = scmp.le.s32.totalorder 1, %s12
    %p162 = scmp.lt.s32.totalorder %s12, 3
    %p163 = pnand %p161, %p162
    %p164 = pneg %p163
    // Predicated region
    $region9: #{residual_block_forward.3} parent=5 // pred_check
      _
    $region10: #{residual_block_forward.3} parent=5 // pred_check_branch
      %166 = sbr.rel (%p163) target = $region12
    $region11: #{residual_block_forward.3} parent=5 // pred_region
      %s167 = ssub.s32 %s12, 1
      // Predicated region
      $region13: #{residual_block_forward.3} parent=11 // pred_check
        %p168 = pneg %p59
      $region14: #{residual_block_forward.3} parent=11 // pred_check_branch
        %170 = sbr.rel (%p168) target = $region16
      $region15: #{residual_block_forward.3} parent=11 // pred_region
        _
      $region16: #{residual_block_forward.3} parent=11 // pred_fallthru
        _
      // Predicated region
      $region17: #{residual_block_forward.3} parent=11 // pred_check
        %p171 = pneg %p80
      $region18: #{residual_block_forward.3} parent=11 // pred_check_branch
        %173 = sbr.rel (%p171) target = $region20
      $region19: #{residual_block_forward.3} parent=11 // pred_region
        _
      $region20: #{residual_block_forward.3} parent=11 // pred_fallthru
        _
    $region12: #{residual_block_forward.3} parent=5 // pred_fallthru
      _
    %p174 = scmp.lt.s32.totalorder %s12, 2
    // Predicated region
    $region21: #{residual_block_forward.3} parent=5 // pred_check
      %p175 = pneg %p174
    $region22: #{residual_block_forward.3} parent=5 // pred_check_branch
      %177 = sbr.rel (%p175) target = $region24
    $region23: #{residual_block_forward.3} parent=5 // pred_region
      // Predicated region
      $region25: #{residual_block_forward.3} parent=23 // pred_check
        %p178 = pneg %p32
      $region26: #{residual_block_forward.3} parent=23 // pred_check_branch
        %180 = sbr.rel (%p178) target = $region28
      $region27: #{residual_block_forward.3} parent=23 // pred_region
        %p181 = scmp.lt.s32.totalorder %s12, 1
        %s182 = scalar_select %p181, %s12, 1
        %s183 = smul.addr %s182, 54
        %s184 = smul.addr %s183, 8
        %s185 = scalar_lea.vmem %s0, %s184
      $region28: #{residual_block_forward.3} parent=23 // pred_fallthru
        _
    $region24: #{residual_block_forward.3} parent=5 // pred_fallthru
      _
    %p186 = scmp.le.s32.totalorder 1, %s12
    %p187 = scmp.lt.s32.totalorder %s12, 3
    %p188 = pnand %p186, %p187
    %p189 = pneg %p188
    // Predicated region
    $region29: #{residual_block_forward.3} parent=5 // pred_check
      _
    $region30: #{residual_block_forward.3} parent=5 // pred_check_branch
      %191 = sbr.rel (%p188) target = $region32
    $region31: #{residual_block_forward.3} parent=5 // pred_region
      %s192 = ssub.s32 %s12, 1
      %p193 = scmp.lt.s32.totalorder %s17, 1
      %s194 = scalar_select %p193, %s17, 1
      %s195 = smul.addr %s194, 54
      %s196 = smul.addr %s195, 8
      %s197 = scalar_lea.vmem %s0, %s196
      %p198 = pneg %p38
      %p199 = pneg %p35
      %p200 = pneg %p59
      %p201 = pneg %p56
      %p202 = pneg %p80
      %p203 = pneg %p77
      %p204 = pneg %p106
      %p205 = pneg %p103
      %p206 = scmp.lt.s32.totalorder %s17, 1
      %s207 = scalar_select %p206, %s17, 1
      %s208 = smul.addr %s207, 32
      %s209 = smul.addr %s208, 8
      %s210 = scalar_lea.vmem %s3, %s209
      %p211 = pneg %p132
      %p212 = pneg %p129
      %p213 = scmp.lt.s32.totalorder %s17, 1
      %s214 = scalar_select %p213, %s17, 1
      %s215 = smul.addr %s214, 32
      %s216 = smul.addr %s215, 8
      %s217 = scalar_lea.vmem %s4, %s216
      %p218 = pneg %p153
      %p219 = pneg %p150
      %p220 = scmp.lt.s32.totalorder %s17, 1
      %s221 = scalar_select %p220, %s17, 1
      %s222 = smul.addr %s221, 54
      %s223 = smul.addr %s222, 8
      %s224 = scalar_lea.vmem %s0, %s223
      %p225 = scmp.lt.s32.totalorder %s17, 1
      %s226 = scalar_select %p225, %s17, 1
      %s227 = smul.addr %s226, 32
      %s228 = smul.addr %s227, 8
      %s229 = scalar_lea.vmem %s3, %s228
      %p230 = scmp.lt.s32.totalorder %s17, 1
      %s231 = scalar_select %p230, %s17, 1
      %s232 = smul.addr %s231, 32
      %s233 = smul.addr %s232, 8
      %s234 = scalar_lea.vmem %s4, %s233
      %p235 = scmp.eq.s32.totalorder %s17, 0
      // Predicated region
      $region33: #{residual_block_forward.3} parent=31 // pred_check
        %p236 = pneg %p235
      $region34: #{residual_block_forward.3} parent=31 // pred_check_branch
        %238 = sbr.rel (%p236) target = $region36
      $region35: #{residual_block_forward.3} parent=31 // pred_region
        %239 = vst [vmem:[%s5] sm:$0xff] 0.0
      $region36: #{residual_block_forward.3} parent=31 // pred_fallthru
        _
      %v240 = vld [vmem:[%s224] sm:$0xff]
      %v241 = vld [vmem:[%s224 + $0x8] sm:$0xff]
      %v242 = vld [vmem:[%s224 + $0x18] sm:$0xff]
      %v243 = vld [vmem:[%s224 + $0x20] sm:$0xff]
      %v244 = vld [vmem:[%s224 + $0x30] sm:$0xff]
      %v245 = vld [vmem:[%s224 + $0x38] sm:$0xff]
      %v246 = vld [vmem:[%s224 + $0x48] sm:$0xff]
      %v247 = vld [vmem:[%s224 + $0x50] sm:$0xff]
      %v248 = vld [vmem:[%s224 + $0x60] sm:$0xff]
      %v249 = vld [vmem:[%s224 + $0x68] sm:$0xff]
      %v250 = vld [vmem:[%s224 + $0x78] sm:$0xff]
      %v251 = vld [vmem:[%s224 + $0x80] sm:$0xff]
      %v252 = vld [vmem:[%s224 + $0x90] sm:$0xff]
      %v253 = vld [vmem:[%s224 + $0x98] sm:$0xff]
      %v254 = vld [vmem:[%s224 + $0xa8] sm:$0xff]
      %v255 = vld [vmem:[%s224 + $0xb0] sm:$0xff]
      %v256 = vld [vmem:[%s224 + $0xc0] sm:$0xff]
      %v257 = vld [vmem:[%s224 + $0xc8] sm:$0xff]
      %v258 = vld [vmem:[%s224 + $0xd8] sm:$0xff]
      %v259 = vld [vmem:[%s224 + $0xe0] sm:$0xff]
      %v260 = vld [vmem:[%s224 + $0xf0] sm:$0xff]
      %v261 = vld [vmem:[%s224 + $0xf8] sm:$0xff]
      %v262 = vld [vmem:[%s224 + $0x108] sm:$0xff]
      %v263 = vld [vmem:[%s224 + $0x110] sm:$0xff]
      %v264 = vld [vmem:[%s224 + $0x120] sm:$0xff]
      %v265 = vld [vmem:[%s224 + $0x128] sm:$0xff]
      %v266 = vld [vmem:[%s224 + $0x138] sm:$0xff]
      %v267 = vld [vmem:[%s224 + $0x140] sm:$0xff]
      %v268 = vld [vmem:[%s224 + $0x150] sm:$0xff]
      %v269 = vld [vmem:[%s224 + $0x158] sm:$0xff]
      %v270 = vld [vmem:[%s224 + $0x168] sm:$0xff]
      %v271 = vld [vmem:[%s224 + $0x170] sm:$0xff]
      %v272 = vld [vmem:[%s1] sm:$0xf]
      %v273 = vld [vmem:[%s224 + $0x1] sm:$0xff]
      %v274 = vld [vmem:[%s224 + $0x9] sm:$0xff]
      %v275 = vld [vmem:[%s224 + $0x19] sm:$0xff]
      %v276 = vld [vmem:[%s224 + $0x21] sm:$0xff]
      %v277 = vld [vmem:[%s224 + $0x31] sm:$0xff]
      %v278 = vld [vmem:[%s224 + $0x39] sm:$0xff]
      %v279 = vld [vmem:[%s224 + $0x49] sm:$0xff]
      %v280 = vld [vmem:[%s224 + $0x51] sm:$0xff]
      %v281 = vld [vmem:[%s224 + $0x61] sm:$0xff]
      %v282 = vld [vmem:[%s224 + $0x69] sm:$0xff]
      %v283 = vld [vmem:[%s224 + $0x79] sm:$0xff]
      %v284 = vld [vmem:[%s224 + $0x81] sm:$0xff]
      %v285 = vld [vmem:[%s224 + $0x91] sm:$0xff]
      %v286 = vld [vmem:[%s224 + $0x99] sm:$0xff]
      %v287 = vld [vmem:[%s224 + $0xa9] sm:$0xff]
      %v288 = vld [vmem:[%s224 + $0xb1] sm:$0xff]
      %v289 = vld [vmem:[%s224 + $0xc1] sm:$0xff]
      %v290 = vld [vmem:[%s224 + $0xc9] sm:$0xff]
      %v291 = vld [vmem:[%s224 + $0xd9] sm:$0xff]
      %v292 = vld [vmem:[%s224 + $0xe1] sm:$0xff]
      %v293 = vld [vmem:[%s224 + $0xf1] sm:$0xff]
      %v294 = vld [vmem:[%s224 + $0xf9] sm:$0xff]
      %v295 = vld [vmem:[%s224 + $0x109] sm:$0xff]
      %v296 = vld [vmem:[%s224 + $0x111] sm:$0xff]
      %v297 = vld [vmem:[%s224 + $0x121] sm:$0xff]
      %v298 = vld [vmem:[%s224 + $0x129] sm:$0xff]
      %v299 = vld [vmem:[%s224 + $0x139] sm:$0xff]
      %v300 = vld [vmem:[%s224 + $0x141] sm:$0xff]
      %v301 = vld [vmem:[%s224 + $0x151] sm:$0xff]
      %v302 = vld [vmem:[%s224 + $0x159] sm:$0xff]
      %v303 = vld [vmem:[%s224 + $0x169] sm:$0xff]
      %v304 = vld [vmem:[%s224 + $0x171] sm:$0xff]
      %s305 = scalar_lea.vmem %s1, 4
      %v306 = vld [vmem:[%s305] sm:$0xf]
      %vm307 = vcmask 31744
      %v309 = vsel %vm307, %v273, 0
      %v312 = vsel %vm307, %v274, 0
      %v315 = vsel %vm307, %v275, 0
      %v318 = vsel %vm307, %v276, 0
      %v321 = vsel %vm307, %v277, 0
      %v324 = vsel %vm307, %v278, 0
      %v327 = vsel %vm307, %v279, 0
      %v330 = vsel %vm307, %v280, 0
      %v333 = vsel %vm307, %v281, 0
      %v336 = vsel %vm307, %v282, 0
      %v339 = vsel %vm307, %v283, 0
      %v342 = vsel %vm307, %v284, 0
      %v345 = vsel %vm307, %v285, 0
      %v348 = vsel %vm307, %v286, 0
      %v351 = vsel %vm307, %v287, 0
      %v354 = vsel %vm307, %v288, 0
      %v357 = vsel %vm307, %v289, 0
      %v360 = vsel %vm307, %v290, 0
      %v363 = vsel %vm307, %v291, 0
      %v366 = vsel %vm307, %v292, 0
      %v369 = vsel %vm307, %v293, 0
      %v372 = vsel %vm307, %v294, 0
      %v375 = vsel %vm307, %v295, 0
      %v378 = vsel %vm307, %v296, 0
      %v381 = vsel %vm307, %v297, 0
      %v384 = vsel %vm307, %v298, 0
      %v387 = vsel %vm307, %v299, 0
      %v390 = vsel %vm307, %v300, 0
      %v393 = vsel %vm307, %v301, 0
      %v396 = vsel %vm307, %v302, 0
      %v399 = vsel %vm307, %v303, 0
      %v402 = vsel %vm307, %v304, 0
      %vm404 = vcmask 1043456
      %v406 = vsel %vm404, %v306, 0
      %408 = vmatprep.subr.mxu0 0.0
      %409 = vmatpush1.msra.mxu0 %v406
      %410 = vmatprep.subr.mxu0 0.0
      %411 = vmatpush1.msra.mxu0 0.0
      %412 = vmatprep.subr.mxu0 0.0
      %413 = vmatpush1.msra.mxu0 0.0
      %414 = vmatprep.subr.mxu0 0.0
      %415 = vmatpush1.msra.mxu0 0.0
      %416 = vmatprep.subr.mxu0 0.0
      %417 = vmatpush1.msra.mxu0 0.0
      %418 = vmatprep.subr.mxu0 0.0
      %419 = vmatpush1.msra.mxu0 0.0
      %420 = vmatprep.subr.mxu0 0.0
      %421 = vmatpush1.msra.mxu0 0.0
      %422 = vmatprep.subr.mxu0 0.0
      %423 = vmatpush1.msra.mxu0 0.0
      %424 = vmatprep.subr.mxu0 0.0
      %425 = vmatpush1.msra.mxu0 0.0
      %426 = vmatprep.subr.mxu0 0.0
      %427 = vmatpush1.msra.mxu0 0.0
      %428 = vmatprep.subr.mxu0 0.0
      %429 = vmatpush1.msra.mxu0 0.0
      %430 = vmatprep.subr.mxu0 0.0
      %431 = vmatpush1.msra.mxu0 0.0
      %432 = vmatprep.subr.mxu0 0.0
      %433 = vmatpush1.msra.mxu0 0.0
      %434 = vmatprep.subr.mxu0 0.0
      %435 = vmatpush1.msra.mxu0 0.0
      %436 = vmatprep.subr.mxu0 0.0
      %437 = vmatpush1.msra.mxu0 0.0
      %438 = vmatprep.subr.mxu0 0.0
      %439 = vmatpush1.msra.mxu0 0.0
      %440 = vmatprep.subr.mxu0 0.0
      %441 = vmatpush1.msra.mxu0 0.0
      %442 = vmatprep.subr.mxu0 0.0
      %443 = vmatpush1.msra.mxu0 0.0
      %444 = vmatprep.subr.mxu0 0.0
      %445 = vmatpush1.msra.mxu0 0.0
      %446 = vmatprep.subr.mxu0 0.0
      %447 = vmatpush1.msra.mxu0 0.0
      %448 = vmatprep.subr.mxu0 0.0
      %449 = vmatpush1.msra.mxu0 0.0
      %450 = vmatprep.subr.mxu0 0.0
      %451 = vmatpush1.msra.mxu0 0.0
      %452 = vmatprep.subr.mxu0 0.0
      %453 = vmatpush1.msra.mxu0 0.0
      %454 = vmatprep.subr.mxu0 0.0
      %455 = vmatpush1.msra.mxu0 0.0
      %456 = vmatprep.subr.mxu0 0.0
      %457 = vmatpush1.msra.mxu0 0.0
      %458 = vmatprep.subr.mxu0 0.0
      %459 = vmatpush1.msra.mxu0 0.0
      %460 = vmatprep.subr.mxu0 0.0
      %461 = vmatpush1.msra.mxu0 0.0
      %462 = vmatprep.subr.mxu0 0.0
      %463 = vmatpush1.msra.mxu0 0.0
      %464 = vmatprep.subr.mxu0 0.0
      %465 = vmatpush1.msra.mxu0 0.0
      %466 = vmatprep.subr.mxu0 0.0
      %467 = vmatpush1.msra.mxu0 0.0
      %468 = vmatprep.subr.mxu0 0.0
      %469 = vmatpush1.msra.mxu0 0.0
      %470 = vmatprep.subr.mxu0 0.0
      %471 = vmatpush1.msra.mxu0 0.0
      %472 = vmatprep.mubr.f32.mxu0 0.0
      %473 = vmatmul.mubr.f32.gmra.mrb[0].mxu0 %v309
      %v474 = vpop.f32.mrb[0].mxu0
      %v475 = vadd.f32 0.0, %v474
      %v476 = vpop.f32.mrb[0].mxu0
      %477 = vmatprep.mubr.f32.mxu0 0.0
      %478 = vmatmul.mubr.f32.gmra.mrb[0].mxu0 %v312
      %v479 = vpop.f32.mrb[0].mxu0
      %v480 = vadd.f32 0.0, %v479
      %v481 = vpop.f32.mrb[0].mxu0
      %482 = vmatprep.mubr.f32.mxu0 0.0
      %483 = vmatmul.mubr.f32.gmra.mrb[0].mxu0 %v315
      %v484 = vpop.f32.mrb[0].mxu0
      %v485 = vadd.f32 0.0, %v484
      %v486 = vpop.f32.mrb[0].mxu0
      %487 = vmatprep.mubr.f32.mxu0 0.0
      %488 = vmatmul.mubr.f32.gmra.mrb[0].mxu0 %v318
      %v489 = vpop.f32.mrb[0].mxu0
      %v490 = vadd.f32 0.0, %v489
      %v491 = vpop.f32.mrb[0].mxu0
      %492 = vmatprep.mubr.f32.mxu0 0.0
      %493 = vmatmul.mubr.f32.gmra.mrb[0].mxu0 %v321
      %v494 = vpop.f32.mrb[0].mxu0
      %v495 = vadd.f32 0.0, %v494
      %v496 = vpop.f32.mrb[0].mxu0
      %497 = vmatprep.mubr.f32.mxu0 0.0
      %498 = vmatmul.mubr.f32.gmra.mrb[0].mxu0 %v324
      %v499 = vpop.f32.mrb[0].mxu0
      %v500 = vadd.f32 0.0, %v499
      %v501 = vpop.f32.mrb[0].mxu0
      %502 = vmatprep.mubr.f32.mxu0 0.0
      %503 = vmatmul.mubr.f32.gmra.mrb[0].mxu0 %v327
      %v504 = vpop.f32.mrb[0].mxu0
      %v505 = vadd.f32 0.0, %v504
      %v506 = vpop.f32.mrb[0].mxu0
      %507 = vmatprep.mubr.f32.mxu0 0.0
      %508 = vmatmul.mubr.f32.gmra.mrb[0].mxu0 %v330
      %v509 = vpop.f32.mrb[0].mxu0
      %v510 = vadd.f32 0.0, %v509
      %v511 = vpop.f32.mrb[0].mxu0
      %512 = vmatprep.mubr.f32.mxu0 0.0
      %513 = vmatmul.mubr.f32.gmra.mrb[0].mxu0 %v333
      %v514 = vpop.f32.mrb[0].mxu0
      %v515 = vadd.f32 0.0, %v514
      %v516 = vpop.f32.mrb[0].mxu0
      %517 = vmatprep.mubr.f32.mxu0 0.0
      %518 = vmatmul.mubr.f32.gmra.mrb[0].mxu0 %v336
      %v519 = vpop.f32.mrb[0].mxu0
      %v520 = vadd.f32 0.0, %v519
      %v521 = vpop.f32.mrb[0].mxu0
      %522 = vmatprep.mubr.f32.mxu0 0.0
      %523 = vmatmul.mubr.f32.gmra.mrb[0].mxu0 %v339
      %v524 = vpop.f32.mrb[0].mxu0
      %v525 = vadd.f32 0.0, %v524
      %v526 = vpop.f32.mrb[0].mxu0
      %527 = vmatprep.mubr.f32.mxu0 0.0
      %528 = vmatmul.mubr.f32.gmra.mrb[0].mxu0 %v342
      %v529 = vpop.f32.mrb[0].mxu0
      %v530 = vadd.f32 0.0, %v529
      %v531 = vpop.f32.mrb[0].mxu0
      %532 = vmatprep.mubr.f32.mxu0 0.0
      %533 = vmatmul.mubr.f32.gmra.mrb[0].mxu0 %v345
      %v534 = vpop.f32.mrb[0].mxu0
      %v535 = vadd.f32 0.0, %v534
      %v536 = vpop.f32.mrb[0].mxu0
      %537 = vmatprep.mubr.f32.mxu0 0.0
      %538 = vmatmul.mubr.f32.gmra.mrb[0].mxu0 %v348
      %v539 = vpop.f32.mrb[0].mxu0
      %v540 = vadd.f32 0.0, %v539
      %v541 = vpop.f32.mrb[0].mxu0
      %542 = vmatprep.mubr.f32.mxu0 0.0
      %543 = vmatmul.mubr.f32.gmra.mrb[0].mxu0 %v351
      %v544 = vpop.f32.mrb[0].mxu0
      %v545 = vadd.f32 0.0, %v544
      %v546 = vpop.f32.mrb[0].mxu0
      %547 = vmatprep.mubr.f32.mxu0 0.0
      %548 = vmatmul.mubr.f32.gmra.mrb[0].mxu0 %v354
      %v549 = vpop.f32.mrb[0].mxu0
      %v550 = vadd.f32 0.0, %v549
      %v551 = vpop.f32.mrb[0].mxu0
      %552 = vmatprep.mubr.f32.mxu0 0.0
      %553 = vmatmul.mubr.f32.gmra.mrb[0].mxu0 %v357
      %v554 = vpop.f32.mrb[0].mxu0
      %v555 = vadd.f32 0.0, %v554
      %v556 = vpop.f32.mrb[0].mxu0
      %557 = vmatprep.mubr.f32.mxu0 0.0
      %558 = vmatmul.mubr.f32.gmra.mrb[0].mxu0 %v360
      %v559 = vpop.f32.mrb[0].mxu0
      %v560 = vadd.f32 0.0, %v559
      %v561 = vpop.f32.mrb[0].mxu0
      %562 = vmatprep.mubr.f32.mxu0 0.0
      %563 = vmatmul.mubr.f32.gmra.mrb[0].mxu0 %v363
      %v564 = vpop.f32.mrb[0].mxu0
      %v565 = vadd.f32 0.0, %v564
      %v566 = vpop.f32.mrb[0].mxu0
      %567 = vmatprep.mubr.f32.mxu0 0.0
      %568 = vmatmul.mubr.f32.gmra.mrb[0].mxu0 %v366
      %v569 = vpop.f32.mrb[0].mxu0
      %v570 = vadd.f32 0.0, %v569
      %v571 = vpop.f32.mrb[0].mxu0
      %572 = vmatprep.mubr.f32.mxu0 0.0
      %573 = vmatmul.mubr.f32.gmra.mrb[0].mxu0 %v369
      %v574 = vpop.f32.mrb[0].mxu0
      %v575 = vadd.f32 0.0, %v574
      %v576 = vpop.f32.mrb[0].mxu0
      %577 = vmatprep.mubr.f32.mxu0 0.0
      %578 = vmatmul.mubr.f32.gmra.mrb[0].mxu0 %v372
      %v579 = vpop.f32.mrb[0].mxu0
      %v580 = vadd.f32 0.0, %v579
      %v581 = vpop.f32.mrb[0].mxu0
      %582 = vmatprep.mubr.f32.mxu0 0.0
      %583 = vmatmul.mubr.f32.gmra.mrb[0].mxu0 %v375
      %v584 = vpop.f32.mrb[0].mxu0
      %v585 = vadd.f32 0.0, %v584
      %v586 = vpop.f32.mrb[0].mxu0
      %587 = vmatprep.mubr.f32.mxu0 0.0
      %588 = vmatmul.mubr.f32.gmra.mrb[0].mxu0 %v378
      %v589 = vpop.f32.mrb[0].mxu0
      %v590 = vadd.f32 0.0, %v589
      %v591 = vpop.f32.mrb[0].mxu0
      %592 = vmatprep.mubr.f32.mxu0 0.0
      %593 = vmatmul.mubr.f32.gmra.mrb[0].mxu0 %v381
      %v594 = vpop.f32.mrb[0].mxu0
      %v595 = vadd.f32 0.0, %v594
      %v596 = vpop.f32.mrb[0].mxu0
      %597 = vmatprep.mubr.f32.mxu0 0.0
      %598 = vmatmul.mubr.f32.gmra.mrb[0].mxu0 %v384
      %v599 = vpop.f32.mrb[0].mxu0
      %v600 = vadd.f32 0.0, %v599
      %v601 = vpop.f32.mrb[0].mxu0
      %602 = vmatprep.mubr.f32.mxu0 0.0
      %603 = vmatmul.mubr.f32.gmra.mrb[0].mxu0 %v387
      %v604 = vpop.f32.mrb[0].mxu0
      %v605 = vadd.f32 0.0, %v604
      %v606 = vpop.f32.mrb[0].mxu0
      %607 = vmatprep.mubr.f32.mxu0 0.0
      %608 = vmatmul.mubr.f32.gmra.mrb[0].mxu0 %v390
      %v609 = vpop.f32.mrb[0].mxu0
      %v610 = vadd.f32 0.0, %v609
      %v611 = vpop.f32.mrb[0].mxu0
      %612 = vmatprep.mubr.f32.mxu0 0.0
      %613 = vmatmul.mubr.f32.gmra.mrb[0].mxu0 %v393
      %v614 = vpop.f32.mrb[0].mxu0
      %v615 = vadd.f32 0.0, %v614
      %v616 = vpop.f32.mrb[0].mxu0
      %617 = vmatprep.mubr.f32.mxu0 0.0
      %618 = vmatmul.mubr.f32.gmra.mrb[0].mxu0 %v396
      %v619 = vpop.f32.mrb[0].mxu0
      %v620 = vadd.f32 0.0, %v619
      %v621 = vpop.f32.mrb[0].mxu0
      %622 = vmatprep.mubr.f32.mxu0 0.0
      %623 = vmatmul.mubr.f32.gmra.mrb[0].mxu0 %v399
      %v624 = vpop.f32.mrb[0].mxu0
      %v625 = vadd.f32 0.0, %v624
      %v626 = vpop.f32.mrb[0].mxu0
      %627 = vmatprep.mubr.f32.mxu0 0.0
      %628 = vmatmul.mubr.f32.gmra.mrb[0].mxu0 %v402
      %v629 = vpop.f32.mrb[0].mxu0
      %v630 = vadd.f32 0.0, %v629
      %v631 = vpop.f32.mrb[0].mxu0
      %632 = vdwg.mxu0
      %v634 = vsel %vm307, %v240, 0
      %v637 = vsel %vm307, %v241, 0
      %v640 = vsel %vm307, %v242, 0
      %v643 = vsel %vm307, %v243, 0
      %v646 = vsel %vm307, %v244, 0
      %v649 = vsel %vm307, %v245, 0
      %v652 = vsel %vm307, %v246, 0
      %v655 = vsel %vm307, %v247, 0
      %v658 = vsel %vm307, %v248, 0
      %v661 = vsel %vm307, %v249, 0
      %v664 = vsel %vm307, %v250, 0
      %v667 = vsel %vm307, %v251, 0
      %v670 = vsel %vm307, %v252, 0
      %v673 = vsel %vm307, %v253, 0
      %v676 = vsel %vm307, %v254, 0
      %v679 = vsel %vm307, %v255, 0
      %v682 = vsel %vm307, %v256, 0
      %v685 = vsel %vm307, %v257, 0
      %v688 = vsel %vm307, %v258, 0
      %v691 = vsel %vm307, %v259, 0
      %v694 = vsel %vm307, %v260, 0
      %v697 = vsel %vm307, %v261, 0
      %v700 = vsel %vm307, %v262, 0
      %v703 = vsel %vm307, %v263, 0
      %v706 = vsel %vm307, %v264, 0
      %v709 = vsel %vm307, %v265, 0
      %v712 = vsel %vm307, %v266, 0
      %v715 = vsel %vm307, %v267, 0
      %v718 = vsel %vm307, %v268, 0
      %v721 = vsel %vm307, %v269, 0
      %v724 = vsel %vm307, %v270, 0
      %v727 = vsel %vm307, %v271, 0
      %v730 = vsel %vm404, %v272, 0
      %732 = vmatprep.subr.mxu0 0.0
      %733 = vmatpush1.msra.mxu0 %v730
      %734 = vmatprep.subr.mxu0 0.0
      %735 = vmatpush1.msra.mxu0 0.0
      %736 = vmatprep.subr.mxu0 0.0
      %737 = vmatpush1.msra.mxu0 0.0
      %738 = vmatprep.subr.mxu0 0.0
      %739 = vmatpush1.msra.mxu0 0.0
      %740 = vmatprep.subr.mxu0 0.0
      %741 = vmatpush1.msra.mxu0 0.0
      %742 = vmatprep.subr.mxu0 0.0
      %743 = vmatpush1.msra.mxu0 0.0
      %744 = vmatprep.subr.mxu0 0.0
      %745 = vmatpush1.msra.mxu0 0.0
      %746 = vmatprep.subr.mxu0 0.0
      %747 = vmatpush1.msra.mxu0 0.0
      %748 = vmatprep.subr.mxu0 0.0
      %749 = vmatpush1.msra.mxu0 0.0
      %750 = vmatprep.subr.mxu0 0.0
      %751 = vmatpush1.msra.mxu0 0.0
      %752 = vmatprep.subr.mxu0 0.0
      %753 = vmatpush1.msra.mxu0 0.0
      %754 = vmatprep.subr.mxu0 0.0
      %755 = vmatpush1.msra.mxu0 0.0
      %756 = vmatprep.subr.mxu0 0.0
      %757 = vmatpush1.msra.mxu0 0.0
      %758 = vmatprep.subr.mxu0 0.0
      %759 = vmatpush1.msra.mxu0 0.0
      %760 = vmatprep.subr.mxu0 0.0
      %761 = vmatpush1.msra.mxu0 0.0
      %762 = vmatprep.subr.mxu0 0.0
      %763 = vmatpush1.msra.mxu0 0.0
      %764 = vmatprep.subr.mxu0 0.0
      %765 = vmatpush1.msra.mxu0 0.0
      %766 = vmatprep.subr.mxu0 0.0
      %767 = vmatpush1.msra.mxu0 0.0
      %768 = vmatprep.subr.mxu0 0.0
      %769 = vmatpush1.msra.mxu0 0.0
      %770 = vmatprep.subr.mxu0 0.0
      %771 = vmatpush1.msra.mxu0 0.0
      %772 = vmatprep.subr.mxu0 0.0
      %773 = vmatpush1.msra.mxu0 0.0
      %774 = vmatprep.subr.mxu0 0.0
      %775 = vmatpush1.msra.mxu0 0.0
      %776 = vmatprep.subr.mxu0 0.0
      %777 = vmatpush1.msra.mxu0 0.0
      %778 = vmatprep.subr.mxu0 0.0
      %779 = vmatpush1.msra.mxu0 0.0
      %780 = vmatprep.subr.mxu0 0.0
      %781 = vmatpush1.msra.mxu0 0.0
      %782 = vmatprep.subr.mxu0 0.0
      %783 = vmatpush1.msra.mxu0 0.0
      %784 = vmatprep.subr.mxu0 0.0
      %785 = vmatpush1.msra.mxu0 0.0
      %786 = vmatprep.subr.mxu0 0.0
      %787 = vmatpush1.msra.mxu0 0.0
      %788 = vmatprep.subr.mxu0 0.0
      %789 = vmatpush1.msra.mxu0 0.0
      %790 = vmatprep.subr.mxu0 0.0
      %791 = vmatpush1.msra.mxu0 0.0
      %792 = vmatprep.subr.mxu0 0.0
      %793 = vmatpush1.msra.mxu0 0.0
      %794 = vmatprep.subr.mxu0 0.0
      %795 = vmatpush1.msra.mxu0 0.0
      %796 = vmatprep.mubr.f32.mxu0 0.0
      %797 = vmatmul.mubr.f32.gmra.mrb[0].mxu0 %v634
      %v798 = vpop.f32.mrb[0].mxu0
      %v799 = vadd.f32 %v475, %v798
      %v800 = vpop.f32.mrb[0].mxu0
      %801 = vmatprep.mubr.f32.mxu0 0.0
      %802 = vmatmul.mubr.f32.gmra.mrb[0].mxu0 %v637
      %v803 = vpop.f32.mrb[0].mxu0
      %v804 = vadd.f32 %v480, %v803
      %v805 = vpop.f32.mrb[0].mxu0
      %806 = vmatprep.mubr.f32.mxu0 0.0
      %807 = vmatmul.mubr.f32.gmra.mrb[0].mxu0 %v640
      %v808 = vpop.f32.mrb[0].mxu0
      %v809 = vadd.f32 %v485, %v808
      %v810 = vpop.f32.mrb[0].mxu0
      %811 = vmatprep.mubr.f32.mxu0 0.0
      %812 = vmatmul.mubr.f32.gmra.mrb[0].mxu0 %v643
      %v813 = vpop.f32.mrb[0].mxu0
      %v814 = vadd.f32 %v490, %v813
      %v815 = vpop.f32.mrb[0].mxu0
      %816 = vmatprep.mubr.f32.mxu0 0.0
      %817 = vmatmul.mubr.f32.gmra.mrb[0].mxu0 %v646
      %v818 = vpop.f32.mrb[0].mxu0
      %v819 = vadd.f32 %v495, %v818
      %v820 = vpop.f32.mrb[0].mxu0
      %821 = vmatprep.mubr.f32.mxu0 0.0
      %822 = vmatmul.mubr.f32.gmra.mrb[0].mxu0 %v649
      %v823 = vpop.f32.mrb[0].mxu0
      %v824 = vadd.f32 %v500, %v823
      %v825 = vpop.f32.mrb[0].mxu0
      %826 = vmatprep.mubr.f32.mxu0 0.0
      %827 = vmatmul.mubr.f32.gmra.mrb[0].mxu0 %v652
      %v828 = vpop.f32.mrb[0].mxu0
      %v829 = vadd.f32 %v505, %v828
      %v830 = vpop.f32.mrb[0].mxu0
      %831 = vmatprep.mubr.f32.mxu0 0.0
      %832 = vmatmul.mubr.f32.gmra.mrb[0].mxu0 %v655
      %v833 = vpop.f32.mrb[0].mxu0
      %v834 = vadd.f32 %v510, %v833
      %v835 = vpop.f32.mrb[0].mxu0
      %836 = vmatprep.mubr.f32.mxu0 0.0
      %837 = vmatmul.mubr.f32.gmra.mrb[0].mxu0 %v658
      %v838 = vpop.f32.mrb[0].mxu0
      %v839 = vadd.f32 %v515, %v838
      %v840 = vpop.f32.mrb[0].mxu0
      %841 = vmatprep.mubr.f32.mxu0 0.0
      %842 = vmatmul.mubr.f32.gmra.mrb[0].mxu0 %v661
      %v843 = vpop.f32.mrb[0].mxu0
      %v844 = vadd.f32 %v520, %v843
      %v845 = vpop.f32.mrb[0].mxu0
      %846 = vmatprep.mubr.f32.mxu0 0.0
      %847 = vmatmul.mubr.f32.gmra.mrb[0].mxu0 %v664
      %v848 = vpop.f32.mrb[0].mxu0
      %v849 = vadd.f32 %v525, %v848
      %v850 = vpop.f32.mrb[0].mxu0
      %851 = vmatprep.mubr.f32.mxu0 0.0
      %852 = vmatmul.mubr.f32.gmra.mrb[0].mxu0 %v667
      %v853 = vpop.f32.mrb[0].mxu0
      %v854 = vadd.f32 %v530, %v853
      %v855 = vpop.f32.mrb[0].mxu0
      %856 = vmatprep.mubr.f32.mxu0 0.0
      %857 = vmatmul.mubr.f32.gmra.mrb[0].mxu0 %v670
      %v858 = vpop.f32.mrb[0].mxu0
      %v859 = vadd.f32 %v535, %v858
      %v860 = vpop.f32.mrb[0].mxu0
      %861 = vmatprep.mubr.f32.mxu0 0.0
      %862 = vmatmul.mubr.f32.gmra.mrb[0].mxu0 %v673
      %v863 = vpop.f32.mrb[0].mxu0
      %v864 = vadd.f32 %v540, %v863
      %v865 = vpop.f32.mrb[0].mxu0
      %866 = vmatprep.mubr.f32.mxu0 0.0
      %867 = vmatmul.mubr.f32.gmra.mrb[0].mxu0 %v676
      %v868 = vpop.f32.mrb[0].mxu0
      %v869 = vadd.f32 %v545, %v868
      %v870 = vpop.f32.mrb[0].mxu0
      %871 = vmatprep.mubr.f32.mxu0 0.0
      %872 = vmatmul.mubr.f32.gmra.mrb[0].mxu0 %v679
      %v873 = vpop.f32.mrb[0].mxu0
      %v874 = vadd.f32 %v550, %v873
      %v875 = vpop.f32.mrb[0].mxu0
      %876 = vmatprep.mubr.f32.mxu0 0.0
      %877 = vmatmul.mubr.f32.gmra.mrb[0].mxu0 %v682
      %v878 = vpop.f32.mrb[0].mxu0
      %v879 = vadd.f32 %v555, %v878
      %v880 = vpop.f32.mrb[0].mxu0
      %881 = vmatprep.mubr.f32.mxu0 0.0
      %882 = vmatmul.mubr.f32.gmra.mrb[0].mxu0 %v685
      %v883 = vpop.f32.mrb[0].mxu0
      %v884 = vadd.f32 %v560, %v883
      %v885 = vpop.f32.mrb[0].mxu0
      %886 = vmatprep.mubr.f32.mxu0 0.0
      %887 = vmatmul.mubr.f32.gmra.mrb[0].mxu0 %v688
      %v888 = vpop.f32.mrb[0].mxu0
      %v889 = vadd.f32 %v565, %v888
      %v890 = vpop.f32.mrb[0].mxu0
      %891 = vmatprep.mubr.f32.mxu0 0.0
      %892 = vmatmul.mubr.f32.gmra.mrb[0].mxu0 %v691
      %v893 = vpop.f32.mrb[0].mxu0
      %v894 = vadd.f32 %v570, %v893
      %v895 = vpop.f32.mrb[0].mxu0
      %896 = vmatprep.mubr.f32.mxu0 0.0
      %897 = vmatmul.mubr.f32.gmra.mrb[0].mxu0 %v694
      %v898 = vpop.f32.mrb[0].mxu0
      %v899 = vadd.f32 %v575, %v898
      %v900 = vpop.f32.mrb[0].mxu0
      %901 = vmatprep.mubr.f32.mxu0 0.0
      %902 = vmatmul.mubr.f32.gmra.mrb[0].mxu0 %v697
      %v903 = vpop.f32.mrb[0].mxu0
      %v904 = vadd.f32 %v580, %v903
      %v905 = vpop.f32.mrb[0].mxu0
      %906 = vmatprep.mubr.f32.mxu0 0.0
      %907 = vmatmul.mubr.f32.gmra.mrb[0].mxu0 %v700
      %v908 = vpop.f32.mrb[0].mxu0
      %v909 = vadd.f32 %v585, %v908
      %v910 = vpop.f32.mrb[0].mxu0
      %911 = vmatprep.mubr.f32.mxu0 0.0
      %912 = vmatmul.mubr.f32.gmra.mrb[0].mxu0 %v703
      %v913 = vpop.f32.mrb[0].mxu0
      %v914 = vadd.f32 %v590, %v913
      %v915 = vpop.f32.mrb[0].mxu0
      %916 = vmatprep.mubr.f32.mxu0 0.0
      %917 = vmatmul.mubr.f32.gmra.mrb[0].mxu0 %v706
      %v918 = vpop.f32.mrb[0].mxu0
      %v919 = vadd.f32 %v595, %v918
      %v920 = vpop.f32.mrb[0].mxu0
      %921 = vmatprep.mubr.f32.mxu0 0.0
      %922 = vmatmul.mubr.f32.gmra.mrb[0].mxu0 %v709
      %v923 = vpop.f32.mrb[0].mxu0
      %v924 = vadd.f32 %v600, %v923
      %v925 = vpop.f32.mrb[0].mxu0
      %926 = vmatprep.mubr.f32.mxu0 0.0
      %927 = vmatmul.mubr.f32.gmra.mrb[0].mxu0 %v712
      %v928 = vpop.f32.mrb[0].mxu0
      %v929 = vadd.f32 %v605, %v928
      %v930 = vpop.f32.mrb[0].mxu0
      %931 = vmatprep.mubr.f32.mxu0 0.0
      %932 = vmatmul.mubr.f32.gmra.mrb[0].mxu0 %v715
      %v933 = vpop.f32.mrb[0].mxu0
      %v934 = vadd.f32 %v610, %v933
      %v935 = vpop.f32.mrb[0].mxu0
      %936 = vmatprep.mubr.f32.mxu0 0.0
      %937 = vmatmul.mubr.f32.gmra.mrb[0].mxu0 %v718
      %v938 = vpop.f32.mrb[0].mxu0
      %v939 = vadd.f32 %v615, %v938
      %v940 = vpop.f32.mrb[0].mxu0
      %941 = vmatprep.mubr.f32.mxu0 0.0
      %942 = vmatmul.mubr.f32.gmra.mrb[0].mxu0 %v721
      %v943 = vpop.f32.mrb[0].mxu0
      %v944 = vadd.f32 %v620, %v943
      %v945 = vpop.f32.mrb[0].mxu0
      %946 = vmatprep.mubr.f32.mxu0 0.0
      %947 = vmatmul.mubr.f32.gmra.mrb[0].mxu0 %v724
      %v948 = vpop.f32.mrb[0].mxu0
      %v949 = vadd.f32 %v625, %v948
      %v950 = vpop.f32.mrb[0].mxu0
      %951 = vmatprep.mubr.f32.mxu0 0.0
      %952 = vmatmul.mubr.f32.gmra.mrb[0].mxu0 %v727
      %v953 = vpop.f32.mrb[0].mxu0
      %v954 = vadd.f32 %v630, %v953
      %v955 = vpop.f32.mrb[0].mxu0
      %956 = vdwg.mxu0
      %v957 = vld [vmem:[%s224 + $0x2] sm:$0xff]
      %v958 = vld [vmem:[%s224 + $0xa] sm:$0xff]
      %v959 = vld [vmem:[%s224 + $0x1a] sm:$0xff]
      %v960 = vld [vmem:[%s224 + $0x22] sm:$0xff]
      %v961 = vld [vmem:[%s224 + $0x32] sm:$0xff]
      %v962 = vld [vmem:[%s224 + $0x3a] sm:$0xff]
      %v963 = vld [vmem:[%s224 + $0x4a] sm:$0xff]
      %v964 = vld [vmem:[%s224 + $0x52] sm:$0xff]
      %v965 = vld [vmem:[%s224 + $0x62] sm:$0xff]
      %v966 = vld [vmem:[%s224 + $0x6a] sm:$0xff]
      %v967 = vld [vmem:[%s224 + $0x7a] sm:$0xff]
      %v968 = vld [vmem:[%s224 + $0x82] sm:$0xff]
      %v969 = vld [vmem:[%s224 + $0x92] sm:$0xff]
      %v970 = vld [vmem:[%s224 + $0x9a] sm:$0xff]
      %v971 = vld [vmem:[%s224 + $0xaa] sm:$0xff]
      %v972 = vld [vmem:[%s224 + $0xb2] sm:$0xff]
      %v973 = vld [vmem:[%s224 + $0xc2] sm:$0xff]
      %v974 = vld [vmem:[%s224 + $0xca] sm:$0xff]
      %v975 = vld [vmem:[%s224 + $0xda] sm:$0xff]
      %v976 = vld [vmem:[%s224 + $0xe2] sm:$0xff]
      %v977 = vld [vmem:[%s224 + $0xf2] sm:$0xff]
      %v978 = vld [vmem:[%s224 + $0xfa] sm:$0xff]
      %v979 = vld [vmem:[%s224 + $0x10a] sm:$0xff]
      %v980 = vld [vmem:[%s224 + $0x112] sm:$0xff]
      %v981 = vld [vmem:[%s224 + $0x122] sm:$0xff]
      %v982 = vld [vmem:[%s224 + $0x12a] sm:$0xff]
      %v983 = vld [vmem:[%s224 + $0x13a] sm:$0xff]
      %v984 = vld [vmem:[%s224 + $0x142] sm:$0xff]
      %v985 = vld [vmem:[%s224 + $0x152] sm:$0xff]
      %v986 = vld [vmem:[%s224 + $0x15a] sm:$0xff]
      %v987 = vld [vmem:[%s224 + $0x16a] sm:$0xff]
      %v988 = vld [vmem:[%s224 + $0x172] sm:$0xff]
      %s989 = scalar_lea.vmem %s1, 8
      %v990 = vld [vmem:[%s989] sm:$0xf]
      %v992 = vsel %vm307, %v957, 0
      %v995 = vsel %vm307, %v958, 0
      %v998 = vsel %vm307, %v959, 0
      %v1001 = vsel %vm307, %v960, 0
      %v1004 = vsel %vm307, %v961, 0
      %v1007 = vsel %vm307, %v962, 0
      %v1010 = vsel %vm307, %v963, 0
      %v1013 = vsel %vm307, %v964, 0
      %v1016 = vsel %vm307, %v965, 0
      %v1019 = vsel %vm307, %v966, 0
      %v1022 = vsel %vm307, %v967, 0
      %v1025 = vsel %vm307, %v968, 0
      %v1028 = vsel %vm307, %v969, 0
      %v1031 = vsel %vm307, %v970, 0
      %v1034 = vsel %vm307, %v971, 0
      %v1037 = vsel %vm307, %v972, 0
      %v1040 = vsel %vm307, %v973, 0
      %v1043 = vsel %vm307, %v974, 0
      %v1046 = vsel %vm307, %v975, 0
      %v1049 = vsel %vm307, %v976, 0
      %v1052 = vsel %vm307, %v977, 0
      %v1055 = vsel %vm307, %v978, 0
      %v1058 = vsel %vm307, %v979, 0
      %v1061 = vsel %vm307, %v980, 0
      %v1064 = vsel %vm307, %v981, 0
      %v1067 = vsel %vm307, %v982, 0
      %v1070 = vsel %vm307, %v983, 0
      %v1073 = vsel %vm307, %v984, 0
      %v1076 = vsel %vm307, %v985, 0
      %v1079 = vsel %vm307, %v986, 0
      %v1082 = vsel %vm307, %v987, 0
      %v1085 = vsel %vm307, %v988, 0
      %v1088 = vsel %vm404, %v990, 0
      %1090 = vmatprep.subr.mxu0 0.0
      %1091 = vmatpush1.msra.mxu0 %v1088
      %1092 = vmatprep.subr.mxu0 0.0
      %1093 = vmatpush1.msra.mxu0 0.0
      %1094 = vmatprep.subr.mxu0 0.0
      %1095 = vmatpush1.msra.mxu0 0.0
      %1096 = vmatprep.subr.mxu0 0.0
      %1097 = vmatpush1.msra.mxu0 0.0
      %1098 = vmatprep.subr.mxu0 0.0
      %1099 = vmatpush1.msra.mxu0 0.0
      %1100 = vmatprep.subr.mxu0 0.0
      %1101 = vmatpush1.msra.mxu0 0.0
      %1102 = vmatprep.subr.mxu0 0.0
      %1103 = vmatpush1.msra.mxu0 0.0
      %1104 = vmatprep.subr.mxu0 0.0
      %1105 = vmatpush1.msra.mxu0 0.0
      %1106 = vmatprep.subr.mxu0 0.0
      %1107 = vmatpush1.msra.mxu0 0.0
      %1108 = vmatprep.subr.mxu0 0.0
      %1109 = vmatpush1.msra.mxu0 0.0
      %1110 = vmatprep.subr.mxu0 0.0
      %1111 = vmatpush1.msra.mxu0 0.0
      %1112 = vmatprep.subr.mxu0 0.0
      %1113 = vmatpush1.msra.mxu0 0.0
      %1114 = vmatprep.subr.mxu0 0.0
      %1115 = vmatpush1.msra.mxu0 0.0
      %1116 = vmatprep.subr.mxu0 0.0
      %1117 = vmatpush1.msra.mxu0 0.0
      %1118 = vmatprep.subr.mxu0 0.0
      %1119 = vmatpush1.msra.mxu0 0.0
      %1120 = vmatprep.subr.mxu0 0.0
      %1121 = vmatpush1.msra.mxu0 0.0
      %1122 = vmatprep.subr.mxu0 0.0
      %1123 = vmatpush1.msra.mxu0 0.0
      %1124 = vmatprep.subr.mxu0 0.0
      %1125 = vmatpush1.msra.mxu0 0.0
      %1126 = vmatprep.subr.mxu0 0.0
      %1127 = vmatpush1.msra.mxu0 0.0
      %1128 = vmatprep.subr.mxu0 0.0
      %1129 = vmatpush1.msra.mxu0 0.0
      %1130 = vmatprep.subr.mxu0 0.0
      %1131 = vmatpush1.msra.mxu0 0.0
      %1132 = vmatprep.subr.mxu0 0.0
      %1133 = vmatpush1.msra.mxu0 0.0
      %1134 = vmatprep.subr.mxu0 0.0
      %1135 = vmatpush1.msra.mxu0 0.0
      %1136 = vmatprep.subr.mxu0 0.0
      %1137 = vmatpush1.msra.mxu0 0.0
      %1138 = vmatprep.subr.mxu0 0.0
      %1139 = vmatpush1.msra.mxu0 0.0
      %1140 = vmatprep.subr.mxu0 0.0
      %1141 = vmatpush1.msra.mxu0 0.0
      %1142 = vmatprep.subr.mxu0 0.0
      %1143 = vmatpush1.msra.mxu0 0.0
      %1144 = vmatprep.subr.mxu0 0.0
      %1145 = vmatpush1.msra.mxu0 0.0
      %1146 = vmatprep.subr.mxu0 0.0
      %1147 = vmatpush1.msra.mxu0 0.0
      %1148 = vmatprep.subr.mxu0 0.0
      %1149 = vmatpush1.msra.mxu0 0.0
      %1150 = vmatprep.subr.mxu0 0.0
      %1151 = vmatpush1.msra.mxu0 0.0
      %1152 = vmatprep.subr.mxu0 0.0
      %1153 = vmatpush1.msra.mxu0 0.0
      %1154 = vmatprep.mubr.f32.mxu0 0.0
      %1155 = vmatmul.mubr.f32.gmra.mrb[0].mxu0 %v992
      %v1156 = vpop.f32.mrb[0].mxu0
      %v1157 = vadd.f32 0.0, %v1156
      %v1158 = vpop.f32.mrb[0].mxu0
      %1159 = vmatprep.mubr.f32.mxu0 0.0
      %1160 = vmatmul.mubr.f32.gmra.mrb[0].mxu0 %v995
      %v1161 = vpop.f32.mrb[0].mxu0
      %v1162 = vadd.f32 0.0, %v1161
      %v1163 = vpop.f32.mrb[0].mxu0
      %1164 = vmatprep.mubr.f32.mxu0 0.0
      %1165 = vmatmul.mubr.f32.gmra.mrb[0].mxu0 %v998
      %v1166 = vpop.f32.mrb[0].mxu0
      %v1167 = vadd.f32 0.0, %v1166
      %v1168 = vpop.f32.mrb[0].mxu0
      %1169 = vmatprep.mubr.f32.mxu0 0.0
      %1170 = vmatmul.mubr.f32.gmra.mrb[0].mxu0 %v1001
      %v1171 = vpop.f32.mrb[0].mxu0
      %v1172 = vadd.f32 0.0, %v1171
      %v1173 = vpop.f32.mrb[0].mxu0
      %1174 = vmatprep.mubr.f32.mxu0 0.0
      %1175 = vmatmul.mubr.f32.gmra.mrb[0].mxu0 %v1004
      %v1176 = vpop.f32.mrb[0].mxu0
      %v1177 = vadd.f32 0.0, %v1176
      %v1178 = vpop.f32.mrb[0].mxu0
      %1179 = vmatprep.mubr.f32.mxu0 0.0
      %1180 = vmatmul.mubr.f32.gmra.mrb[0].mxu0 %v1007
      %v1181 = vpop.f32.mrb[0].mxu0
      %v1182 = vadd.f32 0.0, %v1181
      %v1183 = vpop.f32.mrb[0].mxu0
      %1184 = vmatprep.mubr.f32.mxu0 0.0
      %1185 = vmatmul.mubr.f32.gmra.mrb[0].mxu0 %v1010
      %v1186 = vpop.f32.mrb[0].mxu0
      %v1187 = vadd.f32 0.0, %v1186
      %v1188 = vpop.f32.mrb[0].mxu0
      %1189 = vmatprep.mubr.f32.mxu0 0.0
      %1190 = vmatmul.mubr.f32.gmra.mrb[0].mxu0 %v1013
      %v1191 = vpop.f32.mrb[0].mxu0
      %v1192 = vadd.f32 0.0, %v1191
      %v1193 = vpop.f32.mrb[0].mxu0
      %1194 = vmatprep.mubr.f32.mxu0 0.0
      %1195 = vmatmul.mubr.f32.gmra.mrb[0].mxu0 %v1016
      %v1196 = vpop.f32.mrb[0].mxu0
      %v1197 = vadd.f32 0.0, %v1196
      %v1198 = vpop.f32.mrb[0].mxu0
      %1199 = vmatprep.mubr.f32.mxu0 0.0
      %1200 = vmatmul.mubr.f32.gmra.mrb[0].mxu0 %v1019
      %v1201 = vpop.f32.mrb[0].mxu0
      %v1202 = vadd.f32 0.0, %v1201
      %v1203 = vpop.f32.mrb[0].mxu0
      %1204 = vmatprep.mubr.f32.mxu0 0.0
      %1205 = vmatmul.mubr.f32.gmra.mrb[0].mxu0 %v1022
      %v1206 = vpop.f32.mrb[0].mxu0
      %v1207 = vadd.f32 0.0, %v1206
      %v1208 = vpop.f32.mrb[0].mxu0
      %1209 = vmatprep.mubr.f32.mxu0 0.0
      %1210 = vmatmul.mubr.f32.gmra.mrb[0].mxu0 %v1025
      %v1211 = vpop.f32.mrb[0].mxu0
      %v1212 = vadd.f32 0.0, %v1211
      %v1213 = vpop.f32.mrb[0].mxu0
      %1214 = vmatprep.mubr.f32.mxu0 0.0
      %1215 = vmatmul.mubr.f32.gmra.mrb[0].mxu0 %v1028
      %v1216 = vpop.f32.mrb[0].mxu0
      %v1217 = vadd.f32 0.0, %v1216
      %v1218 = vpop.f32.mrb[0].mxu0
      %1219 = vmatprep.mubr.f32.mxu0 0.0
      %1220 = vmatmul.mubr.f32.gmra.mrb[0].mxu0 %v1031
      %v1221 = vpop.f32.mrb[0].mxu0
      %v1222 = vadd.f32 0.0, %v1221
      %v1223 = vpop.f32.mrb[0].mxu0
      %1224 = vmatprep.mubr.f32.mxu0 0.0
      %1225 = vmatmul.mubr.f32.gmra.mrb[0].mxu0 %v1034
      %v1226 = vpop.f32.mrb[0].mxu0
      %v1227 = vadd.f32 0.0, %v1226
      %v1228 = vpop.f32.mrb[0].mxu0
      %1229 = vmatprep.mubr.f32.mxu0 0.0
      %1230 = vmatmul.mubr.f32.gmra.mrb[0].mxu0 %v1037
      %v1231 = vpop.f32.mrb[0].mxu0
      %v1232 = vadd.f32 0.0, %v1231
      %v1233 = vpop.f32.mrb[0].mxu0
      %1234 = vmatprep.mubr.f32.mxu0 0.0
      %1235 = vmatmul.mubr.f32.gmra.mrb[0].mxu0 %v1040
      %v1236 = vpop.f32.mrb[0].mxu0
      %v1237 = vadd.f32 0.0, %v1236
      %v1238 = vpop.f32.mrb[0].mxu0
      %1239 = vmatprep.mubr.f32.mxu0 0.0
      %1240 = vmatmul.mubr.f32.gmra.mrb[0].mxu0 %v1043
      %v1241 = vpop.f32.mrb[0].mxu0
      %v1242 = vadd.f32 0.0, %v1241
      %v1243 = vpop.f32.mrb[0].mxu0
      %1244 = vmatprep.mubr.f32.mxu0 0.0
      %1245 = vmatmul.mubr.f32.gmra.mrb[0].mxu0 %v1046
      %v1246 = vpop.f32.mrb[0].mxu0
      %v1247 = vadd.f32 0.0, %v1246
      %v1248 = vpop.f32.mrb[0].mxu0
      %1249 = vmatprep.mubr.f32.mxu0 0.0
      %1250 = vmatmul.mubr.f32.gmra.mrb[0].mxu0 %v1049
      %v1251 = vpop.f32.mrb[0].mxu0
      %v1252 = vadd.f32 0.0, %v1251
      %v1253 = vpop.f32.mrb[0].mxu0
      %1254 = vmatprep.mubr.f32.mxu0 0.0
      %1255 = vmatmul.mubr.f32.gmra.mrb[0].mxu0 %v1052
      %v1256 = vpop.f32.mrb[0].mxu0
      %v1257 = vadd.f32 0.0, %v1256
      %v1258 = vpop.f32.mrb[0].mxu0
      %1259 = vmatprep.mubr.f32.mxu0 0.0
      %1260 = vmatmul.mubr.f32.gmra.mrb[0].mxu0 %v1055
      %v1261 = vpop.f32.mrb[0].mxu0
      %v1262 = vadd.f32 0.0, %v1261
      %v1263 = vpop.f32.mrb[0].mxu0
      %1264 = vmatprep.mubr.f32.mxu0 0.0
      %1265 = vmatmul.mubr.f32.gmra.mrb[0].mxu0 %v1058
      %v1266 = vpop.f32.mrb[0].mxu0
      %v1267 = vadd.f32 0.0, %v1266
      %v1268 = vpop.f32.mrb[0].mxu0
      %1269 = vmatprep.mubr.f32.mxu0 0.0
      %1270 = vmatmul.mubr.f32.gmra.mrb[0].mxu0 %v1061
      %v1271 = vpop.f32.mrb[0].mxu0
      %v1272 = vadd.f32 0.0, %v1271
      %v1273 = vpop.f32.mrb[0].mxu0
      %1274 = vmatprep.mubr.f32.mxu0 0.0
      %1275 = vmatmul.mubr.f32.gmra.mrb[0].mxu0 %v1064
      %v1276 = vpop.f32.mrb[0].mxu0
      %v1277 = vadd.f32 0.0, %v1276
      %v1278 = vpop.f32.mrb[0].mxu0
      %1279 = vmatprep.mubr.f32.mxu0 0.0
      %1280 = vmatmul.mubr.f32.gmra.mrb[0].mxu0 %v1067
      %v1281 = vpop.f32.mrb[0].mxu0
      %v1282 = vadd.f32 0.0, %v1281
      %v1283 = vpop.f32.mrb[0].mxu0
      %1284 = vmatprep.mubr.f32.mxu0 0.0
      %1285 = vmatmul.mubr.f32.gmra.mrb[0].mxu0 %v1070
      %v1286 = vpop.f32.mrb[0].mxu0
      %v1287 = vadd.f32 0.0, %v1286
      %v1288 = vpop.f32.mrb[0].mxu0
      %1289 = vmatprep.mubr.f32.mxu0 0.0
      %1290 = vmatmul.mubr.f32.gmra.mrb[0].mxu0 %v1073
      %v1291 = vpop.f32.mrb[0].mxu0
      %v1292 = vadd.f32 0.0, %v1291
      %v1293 = vpop.f32.mrb[0].mxu0
      %1294 = vmatprep.mubr.f32.mxu0 0.0
      %1295 = vmatmul.mubr.f32.gmra.mrb[0].mxu0 %v1076
      %v1296 = vpop.f32.mrb[0].mxu0
      %v1297 = vadd.f32 0.0, %v1296
      %v1298 = vpop.f32.mrb[0].mxu0
      %1299 = vmatprep.mubr.f32.mxu0 0.0
      %1300 = vmatmul.mubr.f32.gmra.mrb[0].mxu0 %v1079
      %v1301 = vpop.f32.mrb[0].mxu0
      %v1302 = vadd.f32 0.0, %v1301
      %v1303 = vpop.f32.mrb[0].mxu0
      %1304 = vmatprep.mubr.f32.mxu0 0.0
      %1305 = vmatmul.mubr.f32.gmra.mrb[0].mxu0 %v1082
      %v1306 = vpop.f32.mrb[0].mxu0
      %v1307 = vadd.f32 0.0, %v1306
      %v1308 = vpop.f32.mrb[0].mxu0
      %1309 = vmatprep.mubr.f32.mxu0 0.0
      %1310 = vmatmul.mubr.f32.gmra.mrb[0].mxu0 %v1085
      %v1311 = vpop.f32.mrb[0].mxu0
      %v1312 = vadd.f32 0.0, %v1311
      %v1313 = vpop.f32.mrb[0].mxu0
      %1314 = vdwg.mxu0
      %v1315 = vadd.f32 %v799, %v1157
      %v1316 = vadd.f32 %v804, %v1162
      %v1317 = vadd.f32 %v809, %v1167
      %v1318 = vadd.f32 %v814, %v1172
      %v1319 = vadd.f32 %v819, %v1177
      %v1320 = vadd.f32 %v824, %v1182
      %v1321 = vadd.f32 %v829, %v1187
      %v1322 = vadd.f32 %v834, %v1192
      %v1323 = vadd.f32 %v839, %v1197
      %v1324 = vadd.f32 %v844, %v1202
      %v1325 = vadd.f32 %v849, %v1207
      %v1326 = vadd.f32 %v854, %v1212
      %v1327 = vadd.f32 %v859, %v1217
      %v1328 = vadd.f32 %v864, %v1222
      %v1329 = vadd.f32 %v869, %v1227
      %v1330 = vadd.f32 %v874, %v1232
      %v1331 = vadd.f32 %v879, %v1237
      %v1332 = vadd.f32 %v884, %v1242
      %v1333 = vadd.f32 %v889, %v1247
      %v1334 = vadd.f32 %v894, %v1252
      %v1335 = vadd.f32 %v899, %v1257
      %v1336 = vadd.f32 %v904, %v1262
      %v1337 = vadd.f32 %v909, %v1267
      %v1338 = vadd.f32 %v914, %v1272
      %v1339 = vadd.f32 %v919, %v1277
      %v1340 = vadd.f32 %v924, %v1282
      %v1341 = vadd.f32 %v929, %v1287
      %v1342 = vadd.f32 %v934, %v1292
      %v1343 = vadd.f32 %v939, %v1297
      %v1344 = vadd.f32 %v944, %v1302
      %v1345 = vadd.f32 %v949, %v1307
      %v1346 = vadd.f32 %v954, %v1312
      %s1347 = scalar_lea.vmem %s224, 24
      %v1348 = vld [vmem:[%s1347] sm:$0xff]
      %v1349 = vld [vmem:[%s1347 + $0x8] sm:$0xff]
      %v1350 = vld [vmem:[%s1347 + $0x18] sm:$0xff]
      %v1351 = vld [vmem:[%s1347 + $0x20] sm:$0xff]
      %v1352 = vld [vmem:[%s1347 + $0x30] sm:$0xff]
      %v1353 = vld [vmem:[%s1347 + $0x38] sm:$0xff]
      %v1354 = vld [vmem:[%s1347 + $0x48] sm:$0xff]
      %v1355 = vld [vmem:[%s1347 + $0x50] sm:$0xff]
      %v1356 = vld [vmem:[%s1347 + $0x60] sm:$0xff]
      %v1357 = vld [vmem:[%s1347 + $0x68] sm:$0xff]
      %v1358 = vld [vmem:[%s1347 + $0x78] sm:$0xff]
      %v1359 = vld [vmem:[%s1347 + $0x80] sm:$0xff]
      %v1360 = vld [vmem:[%s1347 + $0x90] sm:$0xff]
      %v1361 = vld [vmem:[%s1347 + $0x98] sm:$0xff]
      %v1362 = vld [vmem:[%s1347 + $0xa8] sm:$0xff]
      %v1363 = vld [vmem:[%s1347 + $0xb0] sm:$0xff]
      %v1364 = vld [vmem:[%s1347 + $0xc0] sm:$0xff]
      %v1365 = vld [vmem:[%s1347 + $0xc8] sm:$0xff]
      %v1366 = vld [vmem:[%s1347 + $0xd8] sm:$0xff]
      %v1367 = vld [vmem:[%s1347 + $0xe0] sm:$0xff]
      %v1368 = vld [vmem:[%s1347 + $0xf0] sm:$0xff]
      %v1369 = vld [vmem:[%s1347 + $0xf8] sm:$0xff]
      %v1370 = vld [vmem:[%s1347 + $0x108] sm:$0xff]
      %v1371 = vld [vmem:[%s1347 + $0x110] sm:$0xff]
      %v1372 = vld [vmem:[%s1347 + $0x120] sm:$0xff]
      %v1373 = vld [vmem:[%s1347 + $0x128] sm:$0xff]
      %v1374 = vld [vmem:[%s1347 + $0x138] sm:$0xff]
      %v1375 = vld [vmem:[%s1347 + $0x140] sm:$0xff]
      %v1376 = vld [vmem:[%s1347 + $0x150] sm:$0xff]
      %v1377 = vld [vmem:[%s1347 + $0x158] sm:$0xff]
      %v1378 = vld [vmem:[%s1347 + $0x168] sm:$0xff]
      %v1379 = vld [vmem:[%s1347 + $0x170] sm:$0xff]
      %s1380 = scalar_lea.vmem %s1, 12
      %v1381 = vld [vmem:[%s1380] sm:$0xf]
      %v1383 = vsel %vm307, %v1348, 0
      %v1386 = vsel %vm307, %v1349, 0
      %v1389 = vsel %vm307, %v1350, 0
      %v1392 = vsel %vm307, %v1351, 0
      %v1395 = vsel %vm307, %v1352, 0
      %v1398 = vsel %vm307, %v1353, 0
      %v1401 = vsel %vm307, %v1354, 0
      %v1404 = vsel %vm307, %v1355, 0
      %v1407 = vsel %vm307, %v1356, 0
      %v1410 = vsel %vm307, %v1357, 0
      %v1413 = vsel %vm307, %v1358, 0
      %v1416 = vsel %vm307, %v1359, 0
      %v1419 = vsel %vm307, %v1360, 0
      %v1422 = vsel %vm307, %v1361, 0
      %v1425 = vsel %vm307, %v1362, 0
      %v1428 = vsel %vm307, %v1363, 0
      %v1431 = vsel %vm307, %v1364, 0
      %v1434 = vsel %vm307, %v1365, 0
      %v1437 = vsel %vm307, %v1366, 0
      %v1440 = vsel %vm307, %v1367, 0
      %v1443 = vsel %vm307, %v1368, 0
      %v1446 = vsel %vm307, %v1369, 0
      %v1449 = vsel %vm307, %v1370, 0
      %v1452 = vsel %vm307, %v1371, 0
      %v1455 = vsel %vm307, %v1372, 0
      %v1458 = vsel %vm307, %v1373, 0
      %v1461 = vsel %vm307, %v1374, 0
      %v1464 = vsel %vm307, %v1375, 0
      %v1467 = vsel %vm307, %v1376, 0
      %v1470 = vsel %vm307, %v1377, 0
      %v1473 = vsel %vm307, %v1378, 0
      %v1476 = vsel %vm307, %v1379, 0
      %v1479 = vsel %vm404, %v1381, 0
      %1481 = vmatprep.subr.mxu0 0.0
      %1482 = vmatpush1.msra.mxu0 %v1479
      %1483 = vmatprep.subr.mxu0 0.0
      %1484 = vmatpush1.msra.mxu0 0.0
      %1485 = vmatprep.subr.mxu0 0.0
      %1486 = vmatpush1.msra.mxu0 0.0
      %1487 = vmatprep.subr.mxu0 0.0
      %1488 = vmatpush1.msra.mxu0 0.0
      %1489 = vmatprep.subr.mxu0 0.0
      %1490 = vmatpush1.msra.mxu0 0.0
      %1491 = vmatprep.subr.mxu0 0.0
      %1492 = vmatpush1.msra.mxu0 0.0
      %1493 = vmatprep.subr.mxu0 0.0
      %1494 = vmatpush1.msra.mxu0 0.0
      %1495 = vmatprep.subr.mxu0 0.0
      %1496 = vmatpush1.msra.mxu0 0.0
      %1497 = vmatprep.subr.mxu0 0.0
      %1498 = vmatpush1.msra.mxu0 0.0
      %1499 = vmatprep.subr.mxu0 0.0
      %1500 = vmatpush1.msra.mxu0 0.0
      %1501 = vmatprep.subr.mxu0 0.0
      %1502 = vmatpush1.msra.mxu0 0.0
      %1503 = vmatprep.subr.mxu0 0.0
      %1504 = vmatpush1.msra.mxu0 0.0
      %1505 = vmatprep.subr.mxu0 0.0
      %1506 = vmatpush1.msra.mxu0 0.0
      %1507 = vmatprep.subr.mxu0 0.0
      %1508 = vmatpush1.msra.mxu0 0.0
      %1509 = vmatprep.subr.mxu0 0.0
      %1510 = vmatpush1.msra.mxu0 0.0
      %1511 = vmatprep.subr.mxu0 0.0
      %1512 = vmatpush1.msra.mxu0 0.0
      %1513 = vmatprep.subr.mxu0 0.0
      %1514 = vmatpush1.msra.mxu0 0.0
      %1515 = vmatprep.subr.mxu0 0.0
      %1516 = vmatpush1.msra.mxu0 0.0
      %1517 = vmatprep.subr.mxu0 0.0
      %1518 = vmatpush1.msra.mxu0 0.0
      %1519 = vmatprep.subr.mxu0 0.0
      %1520 = vmatpush1.msra.mxu0 0.0
      %1521 = vmatprep.subr.mxu0 0.0
      %1522 = vmatpush1.msra.mxu0 0.0
      %1523 = vmatprep.subr.mxu0 0.0
      %1524 = vmatpush1.msra.mxu0 0.0
      %1525 = vmatprep.subr.mxu0 0.0
      %1526 = vmatpush1.msra.mxu0 0.0
      %1527 = vmatprep.subr.mxu0 0.0
      %1528 = vmatpush1.msra.mxu0 0.0
      %1529 = vmatprep.subr.mxu0 0.0
      %1530 = vmatpush1.msra.mxu0 0.0
      %1531 = vmatprep.subr.mxu0 0.0
      %1532 = vmatpush1.msra.mxu0 0.0
      %1533 = vmatprep.subr.mxu0 0.0
      %1534 = vmatpush1.msra.mxu0 0.0
      %1535 = vmatprep.subr.mxu0 0.0
      %1536 = vmatpush1.msra.mxu0 0.0
      %1537 = vmatprep.subr.mxu0 0.0
      %1538 = vmatpush1.msra.mxu0 0.0
      %1539 = vmatprep.subr.mxu0 0.0
      %1540 = vmatpush1.msra.mxu0 0.0
      %1541 = vmatprep.subr.mxu0 0.0
      %1542 = vmatpush1.msra.mxu0 0.0
      %1543 = vmatprep.subr.mxu0 0.0
      %1544 = vmatpush1.msra.mxu0 0.0
      %1545 = vmatprep.mubr.f32.mxu0 0.0
      %1546 = vmatmul.mubr.f32.gmra.mrb[0].mxu0 %v1383
      %v1547 = vpop.f32.mrb[0].mxu0
      %v1548 = vadd.f32 0.0, %v1547
      %v1549 = vpop.f32.mrb[0].mxu0
      %1550 = vmatprep.mubr.f32.mxu0 0.0
      %1551 = vmatmul.mubr.f32.gmra.mrb[0].mxu0 %v1386
      %v1552 = vpop.f32.mrb[0].mxu0
      %v1553 = vadd.f32 0.0, %v1552
      %v1554 = vpop.f32.mrb[0].mxu0
      %1555 = vmatprep.mubr.f32.mxu0 0.0
      %1556 = vmatmul.mubr.f32.gmra.mrb[0].mxu0 %v1389
      %v1557 = vpop.f32.mrb[0].mxu0
      %v1558 = vadd.f32 0.0, %v1557
      %v1559 = vpop.f32.mrb[0].mxu0
      %1560 = vmatprep.mubr.f32.mxu0 0.0
      %1561 = vmatmul.mubr.f32.gmra.mrb[0].mxu0 %v1392
      %v1562 = vpop.f32.mrb[0].mxu0
      %v1563 = vadd.f32 0.0, %v1562
      %v1564 = vpop.f32.mrb[0].mxu0
      %1565 = vmatprep.mubr.f32.mxu0 0.0
      %1566 = vmatmul.mubr.f32.gmra.mrb[0].mxu0 %v1395
      %v1567 = vpop.f32.mrb[0].mxu0
      %v1568 = vadd.f32 0.0, %v1567
      %v1569 = vpop.f32.mrb[0].mxu0
      %1570 = vmatprep.mubr.f32.mxu0 0.0
      %1571 = vmatmul.mubr.f32.gmra.mrb[0].mxu0 %v1398
      %v1572 = vpop.f32.mrb[0].mxu0
      %v1573 = vadd.f32 0.0, %v1572
      %v1574 = vpop.f32.mrb[0].mxu0
      %1575 = vmatprep.mubr.f32.mxu0 0.0
      %1576 = vmatmul.mubr.f32.gmra.mrb[0].mxu0 %v1401
      %v1577 = vpop.f32.mrb[0].mxu0
      %v1578 = vadd.f32 0.0, %v1577
      %v1579 = vpop.f32.mrb[0].mxu0
      %1580 = vmatprep.mubr.f32.mxu0 0.0
      %1581 = vmatmul.mubr.f32.gmra.mrb[0].mxu0 %v1404
      %v1582 = vpop.f32.mrb[0].mxu0
      %v1583 = vadd.f32 0.0, %v1582
      %v1584 = vpop.f32.mrb[0].mxu0
      %1585 = vmatprep.mubr.f32.mxu0 0.0
      %1586 = vmatmul.mubr.f32.gmra.mrb[0].mxu0 %v1407
      %v1587 = vpop.f32.mrb[0].mxu0
      %v1588 = vadd.f32 0.0, %v1587
      %v1589 = vpop.f32.mrb[0].mxu0
      %1590 = vmatprep.mubr.f32.mxu0 0.0
      %1591 = vmatmul.mubr.f32.gmra.mrb[0].mxu0 %v1410
      %v1592 = vpop.f32.mrb[0].mxu0
      %v1593 = vadd.f32 0.0, %v1592
      %v1594 = vpop.f32.mrb[0].mxu0
      %1595 = vmatprep.mubr.f32.mxu0 0.0
      %1596 = vmatmul.mubr.f32.gmra.mrb[0].mxu0 %v1413
      %v1597 = vpop.f32.mrb[0].mxu0
      %v1598 = vadd.f32 0.0, %v1597
      %v1599 = vpop.f32.mrb[0].mxu0
      %1600 = vmatprep.mubr.f32.mxu0 0.0
      %1601 = vmatmul.mubr.f32.gmra.mrb[0].mxu0 %v1416
      %v1602 = vpop.f32.mrb[0].mxu0
      %v1603 = vadd.f32 0.0, %v1602
      %v1604 = vpop.f32.mrb[0].mxu0
      %1605 = vmatprep.mubr.f32.mxu0 0.0
      %1606 = vmatmul.mubr.f32.gmra.mrb[0].mxu0 %v1419
      %v1607 = vpop.f32.mrb[0].mxu0
      %v1608 = vadd.f32 0.0, %v1607
      %v1609 = vpop.f32.mrb[0].mxu0
      %1610 = vmatprep.mubr.f32.mxu0 0.0
      %1611 = vmatmul.mubr.f32.gmra.mrb[0].mxu0 %v1422
      %v1612 = vpop.f32.mrb[0].mxu0
      %v1613 = vadd.f32 0.0, %v1612
      %v1614 = vpop.f32.mrb[0].mxu0
      %1615 = vmatprep.mubr.f32.mxu0 0.0
      %1616 = vmatmul.mubr.f32.gmra.mrb[0].mxu0 %v1425
      %v1617 = vpop.f32.mrb[0].mxu0
      %v1618 = vadd.f32 0.0, %v1617
      %v1619 = vpop.f32.mrb[0].mxu0
      %1620 = vmatprep.mubr.f32.mxu0 0.0
      %1621 = vmatmul.mubr.f32.gmra.mrb[0].mxu0 %v1428
      %v1622 = vpop.f32.mrb[0].mxu0
      %v1623 = vadd.f32 0.0, %v1622
      %v1624 = vpop.f32.mrb[0].mxu0
      %1625 = vmatprep.mubr.f32.mxu0 0.0
      %1626 = vmatmul.mubr.f32.gmra.mrb[0].mxu0 %v1431
      %v1627 = vpop.f32.mrb[0].mxu0
      %v1628 = vadd.f32 0.0, %v1627
      %v1629 = vpop.f32.mrb[0].mxu0
      %1630 = vmatprep.mubr.f32.mxu0 0.0
      %1631 = vmatmul.mubr.f32.gmra.mrb[0].mxu0 %v1434
      %v1632 = vpop.f32.mrb[0].mxu0
      %v1633 = vadd.f32 0.0, %v1632
      %v1634 = vpop.f32.mrb[0].mxu0
      %1635 = vmatprep.mubr.f32.mxu0 0.0
      %1636 = vmatmul.mubr.f32.gmra.mrb[0].mxu0 %v1437
      %v1637 = vpop.f32.mrb[0].mxu0
      %v1638 = vadd.f32 0.0, %v1637
      %v1639 = vpop.f32.mrb[0].mxu0
      %1640 = vmatprep.mubr.f32.mxu0 0.0
      %1641 = vmatmul.mubr.f32.gmra.mrb[0].mxu0 %v1440
      %v1642 = vpop.f32.mrb[0].mxu0
      %v1643 = vadd.f32 0.0, %v1642
      %v1644 = vpop.f32.mrb[0].mxu0
      %1645 = vmatprep.mubr.f32.mxu0 0.0
      %1646 = vmatmul.mubr.f32.gmra.mrb[0].mxu0 %v1443
      %v1647 = vpop.f32.mrb[0].mxu0
      %v1648 = vadd.f32 0.0, %v1647
      %v1649 = vpop.f32.mrb[0].mxu0
      %1650 = vmatprep.mubr.f32.mxu0 0.0
      %1651 = vmatmul.mubr.f32.gmra.mrb[0].mxu0 %v1446
      %v1652 = vpop.f32.mrb[0].mxu0
      %v1653 = vadd.f32 0.0, %v1652
      %v1654 = vpop.f32.mrb[0].mxu0
      %1655 = vmatprep.mubr.f32.mxu0 0.0
      %1656 = vmatmul.mubr.f32.gmra.mrb[0].mxu0 %v1449
      %v1657 = vpop.f32.mrb[0].mxu0
      %v1658 = vadd.f32 0.0, %v1657
      %v1659 = vpop.f32.mrb[0].mxu0
      %1660 = vmatprep.mubr.f32.mxu0 0.0
      %1661 = vmatmul.mubr.f32.gmra.mrb[0].mxu0 %v1452
      %v1662 = vpop.f32.mrb[0].mxu0
      %v1663 = vadd.f32 0.0, %v1662
      %v1664 = vpop.f32.mrb[0].mxu0
      %1665 = vmatprep.mubr.f32.mxu0 0.0
      %1666 = vmatmul.mubr.f32.gmra.mrb[0].mxu0 %v1455
      %v1667 = vpop.f32.mrb[0].mxu0
      %v1668 = vadd.f32 0.0, %v1667
      %v1669 = vpop.f32.mrb[0].mxu0
      %1670 = vmatprep.mubr.f32.mxu0 0.0
      %1671 = vmatmul.mubr.f32.gmra.mrb[0].mxu0 %v1458
      %v1672 = vpop.f32.mrb[0].mxu0
      %v1673 = vadd.f32 0.0, %v1672
      %v1674 = vpop.f32.mrb[0].mxu0
      %1675 = vmatprep.mubr.f32.mxu0 0.0
      %1676 = vmatmul.mubr.f32.gmra.mrb[0].mxu0 %v1461
      %v1677 = vpop.f32.mrb[0].mxu0
      %v1678 = vadd.f32 0.0, %v1677
      %v1679 = vpop.f32.mrb[0].mxu0
      %1680 = vmatprep.mubr.f32.mxu0 0.0
      %1681 = vmatmul.mubr.f32.gmra.mrb[0].mxu0 %v1464
      %v1682 = vpop.f32.mrb[0].mxu0
      %v1683 = vadd.f32 0.0, %v1682
      %v1684 = vpop.f32.mrb[0].mxu0
      %1685 = vmatprep.mubr.f32.mxu0 0.0
      %1686 = vmatmul.mubr.f32.gmra.mrb[0].mxu0 %v1467
      %v1687 = vpop.f32.mrb[0].mxu0
      %v1688 = vadd.f32 0.0, %v1687
      %v1689 = vpop.f32.mrb[0].mxu0
      %1690 = vmatprep.mubr.f32.mxu0 0.0
      %1691 = vmatmul.mubr.f32.gmra.mrb[0].mxu0 %v1470
      %v1692 = vpop.f32.mrb[0].mxu0
      %v1693 = vadd.f32 0.0, %v1692
      %v1694 = vpop.f32.mrb[0].mxu0
      %1695 = vmatprep.mubr.f32.mxu0 0.0
      %1696 = vmatmul.mubr.f32.gmra.mrb[0].mxu0 %v1473
      %v1697 = vpop.f32.mrb[0].mxu0
      %v1698 = vadd.f32 0.0, %v1697
      %v1699 = vpop.f32.mrb[0].mxu0
      %1700 = vmatprep.mubr.f32.mxu0 0.0
      %1701 = vmatmul.mubr.f32.gmra.mrb[0].mxu0 %v1476
      %v1702 = vpop.f32.mrb[0].mxu0
      %v1703 = vadd.f32 0.0, %v1702
      %v1704 = vpop.f32.mrb[0].mxu0
      %1705 = vdwg.mxu0
      %v1706 = vadd.f32 %v1315, %v1548
      %v1707 = vadd.f32 %v1316, %v1553
      %v1708 = vadd.f32 %v1317, %v1558
      %v1709 = vadd.f32 %v1318, %v1563
      %v1710 = vadd.f32 %v1319, %v1568
      %v1711 = vadd.f32 %v1320, %v1573
      %v1712 = vadd.f32 %v1321, %v1578
      %v1713 = vadd.f32 %v1322, %v1583
      %v1714 = vadd.f32 %v1323, %v1588
      %v1715 = vadd.f32 %v1324, %v1593
      %v1716 = vadd.f32 %v1325, %v1598
      %v1717 = vadd.f32 %v1326, %v1603
      %v1718 = vadd.f32 %v1327, %v1608
      %v1719 = vadd.f32 %v1328, %v1613
      %v1720 = vadd.f32 %v1329, %v1618
      %v1721 = vadd.f32 %v1330, %v1623
      %v1722 = vadd.f32 %v1331, %v1628
      %v1723 = vadd.f32 %v1332, %v1633
      %v1724 = vadd.f32 %v1333, %v1638
      %v1725 = vadd.f32 %v1334, %v1643
      %v1726 = vadd.f32 %v1335, %v1648
      %v1727 = vadd.f32 %v1336, %v1653
      %v1728 = vadd.f32 %v1337, %v1658
      %v1729 = vadd.f32 %v1338, %v1663
      %v1730 = vadd.f32 %v1339, %v1668
      %v1731 = vadd.f32 %v1340, %v1673
      %v1732 = vadd.f32 %v1341, %v1678
      %v1733 = vadd.f32 %v1342, %v1683
      %v1734 = vadd.f32 %v1343, %v1688
      %v1735 = vadd.f32 %v1344, %v1693
      %v1736 = vadd.f32 %v1345, %v1698
      %v1737 = vadd.f32 %v1346, %v1703
      %v1738 = vld [vmem:[%s1347 + $0x1] sm:$0xff]
      %v1739 = vld [vmem:[%s1347 + $0x9] sm:$0xff]
      %v1740 = vld [vmem:[%s1347 + $0x19] sm:$0xff]
      %v1741 = vld [vmem:[%s1347 + $0x21] sm:$0xff]
      %v1742 = vld [vmem:[%s1347 + $0x31] sm:$0xff]
      %v1743 = vld [vmem:[%s1347 + $0x39] sm:$0xff]
      %v1744 = vld [vmem:[%s1347 + $0x49] sm:$0xff]
      %v1745 = vld [vmem:[%s1347 + $0x51] sm:$0xff]
      %v1746 = vld [vmem:[%s1347 + $0x61] sm:$0xff]
      %v1747 = vld [vmem:[%s1347 + $0x69] sm:$0xff]
      %v1748 = vld [vmem:[%s1347 + $0x79] sm:$0xff]
      %v1749 = vld [vmem:[%s1347 + $0x81] sm:$0xff]
      %v1750 = vld [vmem:[%s1347 + $0x91] sm:$0xff]
      %v1751 = vld [vmem:[%s1347 + $0x99] sm:$0xff]
      %v1752 = vld [vmem:[%s1347 + $0xa9] sm:$0xff]
      %v1753 = vld [vmem:[%s1347 + $0xb1] sm:$0xff]
      %v1754 = vld [vmem:[%s1347 + $0xc1] sm:$0xff]
      %v1755 = vld [vmem:[%s1347 + $0xc9] sm:$0xff]
      %v1756 = vld [vmem:[%s1347 + $0xd9] sm:$0xff]
      %v1757 = vld [vmem:[%s1347 + $0xe1] sm:$0xff]
      %v1758 = vld [vmem:[%s1347 + $0xf1] sm:$0xff]
      %v1759 = vld [vmem:[%s1347 + $0xf9] sm:$0xff]
      %v1760 = vld [vmem:[%s1347 + $0x109] sm:$0xff]
      %v1761 = vld [vmem:[%s1347 + $0x111] sm:$0xff]
      %v1762 = vld [vmem:[%s1347 + $0x121] sm:$0xff]
      %v1763 = vld [vmem:[%s1347 + $0x129] sm:$0xff]
      %v1764 = vld [vmem:[%s1347 + $0x139] sm:$0xff]
      %v1765 = vld [vmem:[%s1347 + $0x141] sm:$0xff]
      %v1766 = vld [vmem:[%s1347 + $0x151] sm:$0xff]
      %v1767 = vld [vmem:[%s1347 + $0x159] sm:$0xff]
      %v1768 = vld [vmem:[%s1347 + $0x169] sm:$0xff]
      %v1769 = vld [vmem:[%s1347 + $0x171] sm:$0xff]
      %s1770 = scalar_lea.vmem %s1, 16
      %v1771 = vld [vmem:[%s1770] sm:$0xf]
      %v1773 = vsel %vm307, %v1738, 0
      %v1776 = vsel %vm307, %v1739, 0
      %v1779 = vsel %vm307, %v1740, 0
      %v1782 = vsel %vm307, %v1741, 0
      %v1785 = vsel %vm307, %v1742, 0
      %v1788 = vsel %vm307, %v1743, 0
      %v1791 = vsel %vm307, %v1744, 0
      %v1794 = vsel %vm307, %v1745, 0
      %v1797 = vsel %vm307, %v1746, 0
      %v1800 = vsel %vm307, %v1747, 0
      %v1803 = vsel %vm307, %v1748, 0
      %v1806 = vsel %vm307, %v1749, 0
      %v1809 = vsel %vm307, %v1750, 0
      %v1812 = vsel %vm307, %v1751, 0
      %v1815 = vsel %vm307, %v1752, 0
      %v1818 = vsel %vm307, %v1753, 0
      %v1821 = vsel %vm307, %v1754, 0
      %v1824 = vsel %vm307, %v1755, 0
      %v1827 = vsel %vm307, %v1756, 0
      %v1830 = vsel %vm307, %v1757, 0
      %v1833 = vsel %vm307, %v1758, 0
      %v1836 = vsel %vm307, %v1759, 0
      %v1839 = vsel %vm307, %v1760, 0
      %v1842 = vsel %vm307, %v1761, 0
      %v1845 = vsel %vm307, %v1762, 0
      %v1848 = vsel %vm307, %v1763, 0
      %v1851 = vsel %vm307, %v1764, 0
      %v1854 = vsel %vm307, %v1765, 0
      %v1857 = vsel %vm307, %v1766, 0
      %v1860 = vsel %vm307, %v1767, 0
      %v1863 = vsel %vm307, %v1768, 0
      %v1866 = vsel %vm307, %v1769, 0
      %v1869 = vsel %vm404, %v1771, 0
      %1871 = vmatprep.subr.mxu0 0.0
      %1872 = vmatpush1.msra.mxu0 %v1869
      %1873 = vmatprep.subr.mxu0 0.0
      %1874 = vmatpush1.msra.mxu0 0.0
      %1875 = vmatprep.subr.mxu0 0.0
      %1876 = vmatpush1.msra.mxu0 0.0
      %1877 = vmatprep.subr.mxu0 0.0
      %1878 = vmatpush1.msra.mxu0 0.0
      %1879 = vmatprep.subr.mxu0 0.0
      %1880 = vmatpush1.msra.mxu0 0.0
      %1881 = vmatprep.subr.mxu0 0.0
      %1882 = vmatpush1.msra.mxu0 0.0
      %1883 = vmatprep.subr.mxu0 0.0
      %1884 = vmatpush1.msra.mxu0 0.0
      %1885 = vmatprep.subr.mxu0 0.0
      %1886 = vmatpush1.msra.mxu0 0.0
      %1887 = vmatprep.subr.mxu0 0.0
      %1888 = vmatpush1.msra.mxu0 0.0
      %1889 = vmatprep.subr.mxu0 0.0
      %1890 = vmatpush1.msra.mxu0 0.0
      %1891 = vmatprep.subr.mxu0 0.0
      %1892 = vmatpush1.msra.mxu0 0.0
      %1893 = vmatprep.subr.mxu0 0.0
      %1894 = vmatpush1.msra.mxu0 0.0
      %1895 = vmatprep.subr.mxu0 0.0
      %1896 = vmatpush1.msra.mxu0 0.0
      %1897 = vmatprep.subr.mxu0 0.0
      %1898 = vmatpush1.msra.mxu0 0.0
      %1899 = vmatprep.subr.mxu0 0.0
      %1900 = vmatpush1.msra.mxu0 0.0
      %1901 = vmatprep.subr.mxu0 0.0
      %1902 = vmatpush1.msra.mxu0 0.0
      %1903 = vmatprep.subr.mxu0 0.0
      %1904 = vmatpush1.msra.mxu0 0.0
      %1905 = vmatprep.subr.mxu0 0.0
      %1906 = vmatpush1.msra.mxu0 0.0
      %1907 = vmatprep.subr.mxu0 0.0
      %1908 = vmatpush1.msra.mxu0 0.0
      %1909 = vmatprep.subr.mxu0 0.0
      %1910 = vmatpush1.msra.mxu0 0.0
      %1911 = vmatprep.subr.mxu0 0.0
      %1912 = vmatpush1.msra.mxu0 0.0
      %1913 = vmatprep.subr.mxu0 0.0
      %1914 = vmatpush1.msra.mxu0 0.0
      %1915 = vmatprep.subr.mxu0 0.0
      %1916 = vmatpush1.msra.mxu0 0.0
      %1917 = vmatprep.subr.mxu0 0.0
      %1918 = vmatpush1.msra.mxu0 0.0
      %1919 = vmatprep.subr.mxu0 0.0
      %1920 = vmatpush1.msra.mxu0 0.0
      %1921 = vmatprep.subr.mxu0 0.0
      %1922 = vmatpush1.msra.mxu0 0.0
      %1923 = vmatprep.subr.mxu0 0.0
      %1924 = vmatpush1.msra.mxu0 0.0
      %1925 = vmatprep.subr.mxu0 0.0
      %1926 = vmatpush1.msra.mxu0 0.0
      %1927 = vmatprep.subr.mxu0 0.0
      %1928 = vmatpush1.msra.mxu0 0.0
      %1929 = vmatprep.subr.mxu0 0.0
      %1930 = vmatpush1.msra.mxu0 0.0
      %1931 = vmatprep.subr.mxu0 0.0
      %1932 = vmatpush1.msra.mxu0 0.0
      %1933 = vmatprep.subr.mxu0 0.0
      %1934 = vmatpush1.msra.mxu0 0.0
      %1935 = vmatprep.mubr.f32.mxu0 0.0
      %1936 = vmatmul.mubr.f32.gmra.mrb[0].mxu0 %v1773
      %v1937 = vpop.f32.mrb[0].mxu0
      %v1938 = vadd.f32 0.0, %v1937
      %v1939 = vpop.f32.mrb[0].mxu0
      %1940 = vmatprep.mubr.f32.mxu0 0.0
      %1941 = vmatmul.mubr.f32.gmra.mrb[0].mxu0 %v1776
      %v1942 = vpop.f32.mrb[0].mxu0
      %v1943 = vadd.f32 0.0, %v1942
      %v1944 = vpop.f32.mrb[0].mxu0
      %1945 = vmatprep.mubr.f32.mxu0 0.0
      %1946 = vmatmul.mubr.f32.gmra.mrb[0].mxu0 %v1779
      %v1947 = vpop.f32.mrb[0].mxu0
      %v1948 = vadd.f32 0.0, %v1947
      %v1949 = vpop.f32.mrb[0].mxu0
      %1950 = vmatprep.mubr.f32.mxu0 0.0
      %1951 = vmatmul.mubr.f32.gmra.mrb[0].mxu0 %v1782
      %v1952 = vpop.f32.mrb[0].mxu0
      %v1953 = vadd.f32 0.0, %v1952
      %v1954 = vpop.f32.mrb[0].mxu0
      %1955 = vmatprep.mubr.f32.mxu0 0.0
      %1956 = vmatmul.mubr.f32.gmra.mrb[0].mxu0 %v1785
      %v1957 = vpop.f32.mrb[0].mxu0
      %v1958 = vadd.f32 0.0, %v1957
      %v1959 = vpop.f32.mrb[0].mxu0
      %1960 = vmatprep.mubr.f32.mxu0 0.0
      %1961 = vmatmul.mubr.f32.gmra.mrb[0].mxu0 %v1788
      %v1962 = vpop.f32.mrb[0].mxu0
      %v1963 = vadd.f32 0.0, %v1962
      %v1964 = vpop.f32.mrb[0].mxu0
      %1965 = vmatprep.mubr.f32.mxu0 0.0
      %1966 = vmatmul.mubr.f32.gmra.mrb[0].mxu0 %v1791
      %v1967 = vpop.f32.mrb[0].mxu0
      %v1968 = vadd.f32 0.0, %v1967
      %v1969 = vpop.f32.mrb[0].mxu0
      %1970 = vmatprep.mubr.f32.mxu0 0.0
      %1971 = vmatmul.mubr.f32.gmra.mrb[0].mxu0 %v1794
      %v1972 = vpop.f32.mrb[0].mxu0
      %v1973 = vadd.f32 0.0, %v1972
      %v1974 = vpop.f32.mrb[0].mxu0
      %1975 = vmatprep.mubr.f32.mxu0 0.0
      %1976 = vmatmul.mubr.f32.gmra.mrb[0].mxu0 %v1797
      %v1977 = vpop.f32.mrb[0].mxu0
      %v1978 = vadd.f32 0.0, %v1977
      %v1979 = vpop.f32.mrb[0].mxu0
      %1980 = vmatprep.mubr.f32.mxu0 0.0
      %1981 = vmatmul.mubr.f32.gmra.mrb[0].mxu0 %v1800
      %v1982 = vpop.f32.mrb[0].mxu0
      %v1983 = vadd.f32 0.0, %v1982
      %v1984 = vpop.f32.mrb[0].mxu0
      %1985 = vmatprep.mubr.f32.mxu0 0.0
      %1986 = vmatmul.mubr.f32.gmra.mrb[0].mxu0 %v1803
      %v1987 = vpop.f32.mrb[0].mxu0
      %v1988 = vadd.f32 0.0, %v1987
      %v1989 = vpop.f32.mrb[0].mxu0
      %1990 = vmatprep.mubr.f32.mxu0 0.0
      %1991 = vmatmul.mubr.f32.gmra.mrb[0].mxu0 %v1806
      %v1992 = vpop.f32.mrb[0].mxu0
      %v1993 = vadd.f32 0.0, %v1992
      %v1994 = vpop.f32.mrb[0].mxu0
      %1995 = vmatprep.mubr.f32.mxu0 0.0
      %1996 = vmatmul.mubr.f32.gmra.mrb[0].mxu0 %v1809
      %v1997 = vpop.f32.mrb[0].mxu0
      %v1998 = vadd.f32 0.0, %v1997
      %v1999 = vpop.f32.mrb[0].mxu0
      %2000 = vmatprep.mubr.f32.mxu0 0.0
      %2001 = vmatmul.mubr.f32.gmra.mrb[0].mxu0 %v1812
      %v2002 = vpop.f32.mrb[0].mxu0
      %v2003 = vadd.f32 0.0, %v2002
      %v2004 = vpop.f32.mrb[0].mxu0
      %2005 = vmatprep.mubr.f32.mxu0 0.0
      %2006 = vmatmul.mubr.f32.gmra.mrb[0].mxu0 %v1815
      %v2007 = vpop.f32.mrb[0].mxu0
      %v2008 = vadd.f32 0.0, %v2007
      %v2009 = vpop.f32.mrb[0].mxu0
      %2010 = vmatprep.mubr.f32.mxu0 0.0
      %2011 = vmatmul.mubr.f32.gmra.mrb[0].mxu0 %v1818
      %v2012 = vpop.f32.mrb[0].mxu0
      %v2013 = vadd.f32 0.0, %v2012
      %v2014 = vpop.f32.mrb[0].mxu0
      %2015 = vmatprep.mubr.f32.mxu0 0.0
      %2016 = vmatmul.mubr.f32.gmra.mrb[0].mxu0 %v1821
      %v2017 = vpop.f32.mrb[0].mxu0
      %v2018 = vadd.f32 0.0, %v2017
      %v2019 = vpop.f32.mrb[0].mxu0
      %2020 = vmatprep.mubr.f32.mxu0 0.0
      %2021 = vmatmul.mubr.f32.gmra.mrb[0].mxu0 %v1824
      %v2022 = vpop.f32.mrb[0].mxu0
      %v2023 = vadd.f32 0.0, %v2022
      %v2024 = vpop.f32.mrb[0].mxu0
      %2025 = vmatprep.mubr.f32.mxu0 0.0
      %2026 = vmatmul.mubr.f32.gmra.mrb[0].mxu0 %v1827
      %v2027 = vpop.f32.mrb[0].mxu0
      %v2028 = vadd.f32 0.0, %v2027
      %v2029 = vpop.f32.mrb[0].mxu0
      %2030 = vmatprep.mubr.f32.mxu0 0.0
      %2031 = vmatmul.mubr.f32.gmra.mrb[0].mxu0 %v1830
      %v2032 = vpop.f32.mrb[0].mxu0
      %v2033 = vadd.f32 0.0, %v2032
      %v2034 = vpop.f32.mrb[0].mxu0
      %2035 = vmatprep.mubr.f32.mxu0 0.0
      %2036 = vmatmul.mubr.f32.gmra.mrb[0].mxu0 %v1833
      %v2037 = vpop.f32.mrb[0].mxu0
      %v2038 = vadd.f32 0.0, %v2037
      %v2039 = vpop.f32.mrb[0].mxu0
      %2040 = vmatprep.mubr.f32.mxu0 0.0
      %2041 = vmatmul.mubr.f32.gmra.mrb[0].mxu0 %v1836
      %v2042 = vpop.f32.mrb[0].mxu0
      %v2043 = vadd.f32 0.0, %v2042
      %v2044 = vpop.f32.mrb[0].mxu0
      %2045 = vmatprep.mubr.f32.mxu0 0.0
      %2046 = vmatmul.mubr.f32.gmra.mrb[0].mxu0 %v1839
      %v2047 = vpop.f32.mrb[0].mxu0
      %v2048 = vadd.f32 0.0, %v2047
      %v2049 = vpop.f32.mrb[0].mxu0
      %2050 = vmatprep.mubr.f32.mxu0 0.0
      %2051 = vmatmul.mubr.f32.gmra.mrb[0].mxu0 %v1842
      %v2052 = vpop.f32.mrb[0].mxu0
      %v2053 = vadd.f32 0.0, %v2052
      %v2054 = vpop.f32.mrb[0].mxu0
      %2055 = vmatprep.mubr.f32.mxu0 0.0
      %2056 = vmatmul.mubr.f32.gmra.mrb[0].mxu0 %v1845
      %v2057 = vpop.f32.mrb[0].mxu0
      %v2058 = vadd.f32 0.0, %v2057
      %v2059 = vpop.f32.mrb[0].mxu0
      %2060 = vmatprep.mubr.f32.mxu0 0.0
      %2061 = vmatmul.mubr.f32.gmra.mrb[0].mxu0 %v1848
      %v2062 = vpop.f32.mrb[0].mxu0
      %v2063 = vadd.f32 0.0, %v2062
      %v2064 = vpop.f32.mrb[0].mxu0
      %2065 = vmatprep.mubr.f32.mxu0 0.0
      %2066 = vmatmul.mubr.f32.gmra.mrb[0].mxu0 %v1851
      %v2067 = vpop.f32.mrb[0].mxu0
      %v2068 = vadd.f32 0.0, %v2067
      %v2069 = vpop.f32.mrb[0].mxu0
      %2070 = vmatprep.mubr.f32.mxu0 0.0
      %2071 = vmatmul.mubr.f32.gmra.mrb[0].mxu0 %v1854
      %v2072 = vpop.f32.mrb[0].mxu0
      %v2073 = vadd.f32 0.0, %v2072
      %v2074 = vpop.f32.mrb[0].mxu0
      %2075 = vmatprep.mubr.f32.mxu0 0.0
      %2076 = vmatmul.mubr.f32.gmra.mrb[0].mxu0 %v1857
      %v2077 = vpop.f32.mrb[0].mxu0
      %v2078 = vadd.f32 0.0, %v2077
      %v2079 = vpop.f32.mrb[0].mxu0
      %2080 = vmatprep.mubr.f32.mxu0 0.0
      %2081 = vmatmul.mubr.f32.gmra.mrb[0].mxu0 %v1860
      %v2082 = vpop.f32.mrb[0].mxu0
      %v2083 = vadd.f32 0.0, %v2082
      %v2084 = vpop.f32.mrb[0].mxu0
      %2085 = vmatprep.mubr.f32.mxu0 0.0
      %2086 = vmatmul.mubr.f32.gmra.mrb[0].mxu0 %v1863
      %v2087 = vpop.f32.mrb[0].mxu0
      %v2088 = vadd.f32 0.0, %v2087
      %v2089 = vpop.f32.mrb[0].mxu0
      %2090 = vmatprep.mubr.f32.mxu0 0.0
      %2091 = vmatmul.mubr.f32.gmra.mrb[0].mxu0 %v1866
      %v2092 = vpop.f32.mrb[0].mxu0
      %v2093 = vadd.f32 0.0, %v2092
      %v2094 = vpop.f32.mrb[0].mxu0
      %2095 = vdwg.mxu0
      %v2096 = vadd.f32 %v1706, %v1938
      %v2097 = vadd.f32 %v1707, %v1943
      %v2098 = vadd.f32 %v1708, %v1948
      %v2099 = vadd.f32 %v1709, %v1953
      %v2100 = vadd.f32 %v1710, %v1958
      %v2101 = vadd.f32 %v1711, %v1963
      %v2102 = vadd.f32 %v1712, %v1968
      %v2103 = vadd.f32 %v1713, %v1973
      %v2104 = vadd.f32 %v1714, %v1978
      %v2105 = vadd.f32 %v1715, %v1983
      %v2106 = vadd.f32 %v1716, %v1988
      %v2107 = vadd.f32 %v1717, %v1993
      %v2108 = vadd.f32 %v1718, %v1998
      %v2109 = vadd.f32 %v1719, %v2003
      %v2110 = vadd.f32 %v1720, %v2008
      %v2111 = vadd.f32 %v1721, %v2013
      %v2112 = vadd.f32 %v1722, %v2018
      %v2113 = vadd.f32 %v1723, %v2023
      %v2114 = vadd.f32 %v1724, %v2028
      %v2115 = vadd.f32 %v1725, %v2033
      %v2116 = vadd.f32 %v1726, %v2038
      %v2117 = vadd.f32 %v1727, %v2043
      %v2118 = vadd.f32 %v1728, %v2048
      %v2119 = vadd.f32 %v1729, %v2053
      %v2120 = vadd.f32 %v1730, %v2058
      %v2121 = vadd.f32 %v1731, %v2063
      %v2122 = vadd.f32 %v1732, %v2068
      %v2123 = vadd.f32 %v1733, %v2073
      %v2124 = vadd.f32 %v1734, %v2078
      %v2125 = vadd.f32 %v1735, %v2083
      %v2126 = vadd.f32 %v1736, %v2088
      %v2127 = vadd.f32 %v1737, %v2093
      %v2128 = vld [vmem:[%s1347 + $0x2] sm:$0xff]
      %v2129 = vld [vmem:[%s1347 + $0xa] sm:$0xff]
      %v2130 = vld [vmem:[%s1347 + $0x1a] sm:$0xff]
      %v2131 = vld [vmem:[%s1347 + $0x22] sm:$0xff]
      %v2132 = vld [vmem:[%s1347 + $0x32] sm:$0xff]
      %v2133 = vld [vmem:[%s1347 + $0x3a] sm:$0xff]
      %v2134 = vld [vmem:[%s1347 + $0x4a] sm:$0xff]
      %v2135 = vld [vmem:[%s1347 + $0x52] sm:$0xff]
      %v2136 = vld [vmem:[%s1347 + $0x62] sm:$0xff]
      %v2137 = vld [vmem:[%s1347 + $0x6a] sm:$0xff]
      %v2138 = vld [vmem:[%s1347 + $0x7a] sm:$0xff]
      %v2139 = vld [vmem:[%s1347 + $0x82] sm:$0xff]
      %v2140 = vld [vmem:[%s1347 + $0x92] sm:$0xff]
      %v2141 = vld [vmem:[%s1347 + $0x9a] sm:$0xff]
      %v2142 = vld [vmem:[%s1347 + $0xaa] sm:$0xff]
      %v2143 = vld [vmem:[%s1347 + $0xb2] sm:$0xff]
      %v2144 = vld [vmem:[%s1347 + $0xc2] sm:$0xff]
      %v2145 = vld [vmem:[%s1347 + $0xca] sm:$0xff]
      %v2146 = vld [vmem:[%s1347 + $0xda] sm:$0xff]
      %v2147 = vld [vmem:[%s1347 + $0xe2] sm:$0xff]
      %v2148 = vld [vmem:[%s1347 + $0xf2] sm:$0xff]
      %v2149 = vld [vmem:[%s1347 + $0xfa] sm:$0xff]
      %v2150 = vld [vmem:[%s1347 + $0x10a] sm:$0xff]
      %v2151 = vld [vmem:[%s1347 + $0x112] sm:$0xff]
      %v2152 = vld [vmem:[%s1347 + $0x122] sm:$0xff]
      %v2153 = vld [vmem:[%s1347 + $0x12a] sm:$0xff]
      %v2154 = vld [vmem:[%s1347 + $0x13a] sm:$0xff]
      %v2155 = vld [vmem:[%s1347 + $0x142] sm:$0xff]
      %v2156 = vld [vmem:[%s1347 + $0x152] sm:$0xff]
      %v2157 = vld [vmem:[%s1347 + $0x15a] sm:$0xff]
      %v2158 = vld [vmem:[%s1347 + $0x16a] sm:$0xff]
      %v2159 = vld [vmem:[%s1347 + $0x172] sm:$0xff]
      %s2160 = scalar_lea.vmem %s1, 20
      %v2161 = vld [vmem:[%s2160] sm:$0xf]
      %v2163 = vsel %vm307, %v2128, 0
      %v2166 = vsel %vm307, %v2129, 0
      %v2169 = vsel %vm307, %v2130, 0
      %v2172 = vsel %vm307, %v2131, 0
      %v2175 = vsel %vm307, %v2132, 0
      %v2178 = vsel %vm307, %v2133, 0
      %v2181 = vsel %vm307, %v2134, 0
      %v2184 = vsel %vm307, %v2135, 0
      %v2187 = vsel %vm307, %v2136, 0
      %v2190 = vsel %vm307, %v2137, 0
      %v2193 = vsel %vm307, %v2138, 0
      %v2196 = vsel %vm307, %v2139, 0
      %v2199 = vsel %vm307, %v2140, 0
      %v2202 = vsel %vm307, %v2141, 0
      %v2205 = vsel %vm307, %v2142, 0
      %v2208 = vsel %vm307, %v2143, 0
      %v2211 = vsel %vm307, %v2144, 0
      %v2214 = vsel %vm307, %v2145, 0
      %v2217 = vsel %vm307, %v2146, 0
      %v2220 = vsel %vm307, %v2147, 0
      %v2223 = vsel %vm307, %v2148, 0
      %v2226 = vsel %vm307, %v2149, 0
      %v2229 = vsel %vm307, %v2150, 0
      %v2232 = vsel %vm307, %v2151, 0
      %v2235 = vsel %vm307, %v2152, 0
      %v2238 = vsel %vm307, %v2153, 0
      %v2241 = vsel %vm307, %v2154, 0
      %v2244 = vsel %vm307, %v2155, 0
      %v2247 = vsel %vm307, %v2156, 0
      %v2250 = vsel %vm307, %v2157, 0
      %v2253 = vsel %vm307, %v2158, 0
      %v2256 = vsel %vm307, %v2159, 0
      %v2259 = vsel %vm404, %v2161, 0
      %2261 = vmatprep.subr.mxu0 0.0
      %2262 = vmatpush1.msra.mxu0 %v2259
      %2263 = vmatprep.subr.mxu0 0.0
      %2264 = vmatpush1.msra.mxu0 0.0
      %2265 = vmatprep.subr.mxu0 0.0
      %2266 = vmatpush1.msra.mxu0 0.0
      %2267 = vmatprep.subr.mxu0 0.0
      %2268 = vmatpush1.msra.mxu0 0.0
      %2269 = vmatprep.subr.mxu0 0.0
      %2270 = vmatpush1.msra.mxu0 0.0
      %2271 = vmatprep.subr.mxu0 0.0
      %2272 = vmatpush1.msra.mxu0 0.0
      %2273 = vmatprep.subr.mxu0 0.0
      %2274 = vmatpush1.msra.mxu0 0.0
      %2275 = vmatprep.subr.mxu0 0.0
      %2276 = vmatpush1.msra.mxu0 0.0
      %2277 = vmatprep.subr.mxu0 0.0
      %2278 = vmatpush1.msra.mxu0 0.0
      %2279 = vmatprep.subr.mxu0 0.0
      %2280 = vmatpush1.msra.mxu0 0.0
      %2281 = vmatprep.subr.mxu0 0.0
      %2282 = vmatpush1.msra.mxu0 0.0
      %2283 = vmatprep.subr.mxu0 0.0
      %2284 = vmatpush1.msra.mxu0 0.0
      %2285 = vmatprep.subr.mxu0 0.0
      %2286 = vmatpush1.msra.mxu0 0.0
      %2287 = vmatprep.subr.mxu0 0.0
      %2288 = vmatpush1.msra.mxu0 0.0
      %2289 = vmatprep.subr.mxu0 0.0
      %2290 = vmatpush1.msra.mxu0 0.0
      %2291 = vmatprep.subr.mxu0 0.0
      %2292 = vmatpush1.msra.mxu0 0.0
      %2293 = vmatprep.subr.mxu0 0.0
      %2294 = vmatpush1.msra.mxu0 0.0
      %2295 = vmatprep.subr.mxu0 0.0
      %2296 = vmatpush1.msra.mxu0 0.0
      %2297 = vmatprep.subr.mxu0 0.0
      %2298 = vmatpush1.msra.mxu0 0.0
      %2299 = vmatprep.subr.mxu0 0.0
      %2300 = vmatpush1.msra.mxu0 0.0
      %2301 = vmatprep.subr.mxu0 0.0
      %2302 = vmatpush1.msra.mxu0 0.0
      %2303 = vmatprep.subr.mxu0 0.0
      %2304 = vmatpush1.msra.mxu0 0.0
      %2305 = vmatprep.subr.mxu0 0.0
      %2306 = vmatpush1.msra.mxu0 0.0
      %2307 = vmatprep.subr.mxu0 0.0
      %2308 = vmatpush1.msra.mxu0 0.0
      %2309 = vmatprep.subr.mxu0 0.0
      %2310 = vmatpush1.msra.mxu0 0.0
      %2311 = vmatprep.subr.mxu0 0.0
      %2312 = vmatpush1.msra.mxu0 0.0
      %2313 = vmatprep.subr.mxu0 0.0
      %2314 = vmatpush1.msra.mxu0 0.0
      %2315 = vmatprep.subr.mxu0 0.0
      %2316 = vmatpush1.msra.mxu0 0.0
      %2317 = vmatprep.subr.mxu0 0.0
      %2318 = vmatpush1.msra.mxu0 0.0
      %2319 = vmatprep.subr.mxu0 0.0
      %2320 = vmatpush1.msra.mxu0 0.0
      %2321 = vmatprep.subr.mxu0 0.0
      %2322 = vmatpush1.msra.mxu0 0.0
      %2323 = vmatprep.subr.mxu0 0.0
      %2324 = vmatpush1.msra.mxu0 0.0
      %2325 = vmatprep.mubr.f32.mxu0 0.0
      %2326 = vmatmul.mubr.f32.gmra.mrb[0].mxu0 %v2163
      %v2327 = vpop.f32.mrb[0].mxu0
      %v2328 = vadd.f32 0.0, %v2327
      %v2329 = vpop.f32.mrb[0].mxu0
      %2330 = vmatprep.mubr.f32.mxu0 0.0
      %2331 = vmatmul.mubr.f32.gmra.mrb[0].mxu0 %v2166
      %v2332 = vpop.f32.mrb[0].mxu0
      %v2333 = vadd.f32 0.0, %v2332
      %v2334 = vpop.f32.mrb[0].mxu0
      %2335 = vmatprep.mubr.f32.mxu0 0.0
      %2336 = vmatmul.mubr.f32.gmra.mrb[0].mxu0 %v2169
      %v2337 = vpop.f32.mrb[0].mxu0
      %v2338 = vadd.f32 0.0, %v2337
      %v2339 = vpop.f32.mrb[0].mxu0
      %2340 = vmatprep.mubr.f32.mxu0 0.0
      %2341 = vmatmul.mubr.f32.gmra.mrb[0].mxu0 %v2172
      %v2342 = vpop.f32.mrb[0].mxu0
      %v2343 = vadd.f32 0.0, %v2342
      %v2344 = vpop.f32.mrb[0].mxu0
      %2345 = vmatprep.mubr.f32.mxu0 0.0
      %2346 = vmatmul.mubr.f32.gmra.mrb[0].mxu0 %v2175
      %v2347 = vpop.f32.mrb[0].mxu0
      %v2348 = vadd.f32 0.0, %v2347
      %v2349 = vpop.f32.mrb[0].mxu0
      %2350 = vmatprep.mubr.f32.mxu0 0.0
      %2351 = vmatmul.mubr.f32.gmra.mrb[0].mxu0 %v2178
      %v2352 = vpop.f32.mrb[0].mxu0
      %v2353 = vadd.f32 0.0, %v2352
      %v2354 = vpop.f32.mrb[0].mxu0
      %2355 = vmatprep.mubr.f32.mxu0 0.0
      %2356 = vmatmul.mubr.f32.gmra.mrb[0].mxu0 %v2181
      %v2357 = vpop.f32.mrb[0].mxu0
      %v2358 = vadd.f32 0.0, %v2357
      %v2359 = vpop.f32.mrb[0].mxu0
      %2360 = vmatprep.mubr.f32.mxu0 0.0
      %2361 = vmatmul.mubr.f32.gmra.mrb[0].mxu0 %v2184
      %v2362 = vpop.f32.mrb[0].mxu0
      %v2363 = vadd.f32 0.0, %v2362
      %v2364 = vpop.f32.mrb[0].mxu0
      %2365 = vmatprep.mubr.f32.mxu0 0.0
      %2366 = vmatmul.mubr.f32.gmra.mrb[0].mxu0 %v2187
      %v2367 = vpop.f32.mrb[0].mxu0
      %v2368 = vadd.f32 0.0, %v2367
      %v2369 = vpop.f32.mrb[0].mxu0
      %2370 = vmatprep.mubr.f32.mxu0 0.0
      %2371 = vmatmul.mubr.f32.gmra.mrb[0].mxu0 %v2190
      %v2372 = vpop.f32.mrb[0].mxu0
      %v2373 = vadd.f32 0.0, %v2372
      %v2374 = vpop.f32.mrb[0].mxu0
      %2375 = vmatprep.mubr.f32.mxu0 0.0
      %2376 = vmatmul.mubr.f32.gmra.mrb[0].mxu0 %v2193
      %v2377 = vpop.f32.mrb[0].mxu0
      %v2378 = vadd.f32 0.0, %v2377
      %v2379 = vpop.f32.mrb[0].mxu0
      %2380 = vmatprep.mubr.f32.mxu0 0.0
      %2381 = vmatmul.mubr.f32.gmra.mrb[0].mxu0 %v2196
      %v2382 = vpop.f32.mrb[0].mxu0
      %v2383 = vadd.f32 0.0, %v2382
      %v2384 = vpop.f32.mrb[0].mxu0
      %2385 = vmatprep.mubr.f32.mxu0 0.0
      %2386 = vmatmul.mubr.f32.gmra.mrb[0].mxu0 %v2199
      %v2387 = vpop.f32.mrb[0].mxu0
      %v2388 = vadd.f32 0.0, %v2387
      %v2389 = vpop.f32.mrb[0].mxu0
      %2390 = vmatprep.mubr.f32.mxu0 0.0
      %2391 = vmatmul.mubr.f32.gmra.mrb[0].mxu0 %v2202
      %v2392 = vpop.f32.mrb[0].mxu0
      %v2393 = vadd.f32 0.0, %v2392
      %v2394 = vpop.f32.mrb[0].mxu0
      %2395 = vmatprep.mubr.f32.mxu0 0.0
      %2396 = vmatmul.mubr.f32.gmra.mrb[0].mxu0 %v2205
      %v2397 = vpop.f32.mrb[0].mxu0
      %v2398 = vadd.f32 0.0, %v2397
      %v2399 = vpop.f32.mrb[0].mxu0
      %2400 = vmatprep.mubr.f32.mxu0 0.0
      %2401 = vmatmul.mubr.f32.gmra.mrb[0].mxu0 %v2208
      %v2402 = vpop.f32.mrb[0].mxu0
      %v2403 = vadd.f32 0.0, %v2402
      %v2404 = vpop.f32.mrb[0].mxu0
      %2405 = vmatprep.mubr.f32.mxu0 0.0
      %2406 = vmatmul.mubr.f32.gmra.mrb[0].mxu0 %v2211
      %v2407 = vpop.f32.mrb[0].mxu0
      %v2408 = vadd.f32 0.0, %v2407
      %v2409 = vpop.f32.mrb[0].mxu0
      %2410 = vmatprep.mubr.f32.mxu0 0.0
      %2411 = vmatmul.mubr.f32.gmra.mrb[0].mxu0 %v2214
      %v2412 = vpop.f32.mrb[0].mxu0
      %v2413 = vadd.f32 0.0, %v2412
      %v2414 = vpop.f32.mrb[0].mxu0
      %2415 = vmatprep.mubr.f32.mxu0 0.0
      %2416 = vmatmul.mubr.f32.gmra.mrb[0].mxu0 %v2217
      %v2417 = vpop.f32.mrb[0].mxu0
      %v2418 = vadd.f32 0.0, %v2417
      %v2419 = vpop.f32.mrb[0].mxu0
      %2420 = vmatprep.mubr.f32.mxu0 0.0
      %2421 = vmatmul.mubr.f32.gmra.mrb[0].mxu0 %v2220
      %v2422 = vpop.f32.mrb[0].mxu0
      %v2423 = vadd.f32 0.0, %v2422
      %v2424 = vpop.f32.mrb[0].mxu0
      %2425 = vmatprep.mubr.f32.mxu0 0.0
      %2426 = vmatmul.mubr.f32.gmra.mrb[0].mxu0 %v2223
      %v2427 = vpop.f32.mrb[0].mxu0
      %v2428 = vadd.f32 0.0, %v2427
      %v2429 = vpop.f32.mrb[0].mxu0
      %2430 = vmatprep.mubr.f32.mxu0 0.0
      %2431 = vmatmul.mubr.f32.gmra.mrb[0].mxu0 %v2226
      %v2432 = vpop.f32.mrb[0].mxu0
      %v2433 = vadd.f32 0.0, %v2432
      %v2434 = vpop.f32.mrb[0].mxu0
      %2435 = vmatprep.mubr.f32.mxu0 0.0
      %2436 = vmatmul.mubr.f32.gmra.mrb[0].mxu0 %v2229
      %v2437 = vpop.f32.mrb[0].mxu0
      %v2438 = vadd.f32 0.0, %v2437
      %v2439 = vpop.f32.mrb[0].mxu0
      %2440 = vmatprep.mubr.f32.mxu0 0.0
      %2441 = vmatmul.mubr.f32.gmra.mrb[0].mxu0 %v2232
      %v2442 = vpop.f32.mrb[0].mxu0
      %v2443 = vadd.f32 0.0, %v2442
      %v2444 = vpop.f32.mrb[0].mxu0
      %2445 = vmatprep.mubr.f32.mxu0 0.0
      %2446 = vmatmul.mubr.f32.gmra.mrb[0].mxu0 %v2235
      %v2447 = vpop.f32.mrb[0].mxu0
      %v2448 = vadd.f32 0.0, %v2447
      %v2449 = vpop.f32.mrb[0].mxu0
      %2450 = vmatprep.mubr.f32.mxu0 0.0
      %2451 = vmatmul.mubr.f32.gmra.mrb[0].mxu0 %v2238
      %v2452 = vpop.f32.mrb[0].mxu0
      %v2453 = vadd.f32 0.0, %v2452
      %v2454 = vpop.f32.mrb[0].mxu0
      %2455 = vmatprep.mubr.f32.mxu0 0.0
      %2456 = vmatmul.mubr.f32.gmra.mrb[0].mxu0 %v2241
      %v2457 = vpop.f32.mrb[0].mxu0
      %v2458 = vadd.f32 0.0, %v2457
      %v2459 = vpop.f32.mrb[0].mxu0
      %2460 = vmatprep.mubr.f32.mxu0 0.0
      %2461 = vmatmul.mubr.f32.gmra.mrb[0].mxu0 %v2244
      %v2462 = vpop.f32.mrb[0].mxu0
      %v2463 = vadd.f32 0.0, %v2462
      %v2464 = vpop.f32.mrb[0].mxu0
      %2465 = vmatprep.mubr.f32.mxu0 0.0
      %2466 = vmatmul.mubr.f32.gmra.mrb[0].mxu0 %v2247
      %v2467 = vpop.f32.mrb[0].mxu0
      %v2468 = vadd.f32 0.0, %v2467
      %v2469 = vpop.f32.mrb[0].mxu0
      %2470 = vmatprep.mubr.f32.mxu0 0.0
      %2471 = vmatmul.mubr.f32.gmra.mrb[0].mxu0 %v2250
      %v2472 = vpop.f32.mrb[0].mxu0
      %v2473 = vadd.f32 0.0, %v2472
      %v2474 = vpop.f32.mrb[0].mxu0
      %2475 = vmatprep.mubr.f32.mxu0 0.0
      %2476 = vmatmul.mubr.f32.gmra.mrb[0].mxu0 %v2253
      %v2477 = vpop.f32.mrb[0].mxu0
      %v2478 = vadd.f32 0.0, %v2477
      %v2479 = vpop.f32.mrb[0].mxu0
      %2480 = vmatprep.mubr.f32.mxu0 0.0
      %2481 = vmatmul.mubr.f32.gmra.mrb[0].mxu0 %v2256
      %v2482 = vpop.f32.mrb[0].mxu0
      %v2483 = vadd.f32 0.0, %v2482
      %v2484 = vpop.f32.mrb[0].mxu0
      %2485 = vdwg.mxu0
      %v2486 = vadd.f32 %v2096, %v2328
      %v2487 = vadd.f32 %v2097, %v2333
      %v2488 = vadd.f32 %v2098, %v2338
      %v2489 = vadd.f32 %v2099, %v2343
      %v2490 = vadd.f32 %v2100, %v2348
      %v2491 = vadd.f32 %v2101, %v2353
      %v2492 = vadd.f32 %v2102, %v2358
      %v2493 = vadd.f32 %v2103, %v2363
      %v2494 = vadd.f32 %v2104, %v2368
      %v2495 = vadd.f32 %v2105, %v2373
      %v2496 = vadd.f32 %v2106, %v2378
      %v2497 = vadd.f32 %v2107, %v2383
      %v2498 = vadd.f32 %v2108, %v2388
      %v2499 = vadd.f32 %v2109, %v2393
      %v2500 = vadd.f32 %v2110, %v2398
      %v2501 = vadd.f32 %v2111, %v2403
      %v2502 = vadd.f32 %v2112, %v2408
      %v2503 = vadd.f32 %v2113, %v2413
      %v2504 = vadd.f32 %v2114, %v2418
      %v2505 = vadd.f32 %v2115, %v2423
      %v2506 = vadd.f32 %v2116, %v2428
      %v2507 = vadd.f32 %v2117, %v2433
      %v2508 = vadd.f32 %v2118, %v2438
      %v2509 = vadd.f32 %v2119, %v2443
      %v2510 = vadd.f32 %v2120, %v2448
      %v2511 = vadd.f32 %v2121, %v2453
      %v2512 = vadd.f32 %v2122, %v2458
      %v2513 = vadd.f32 %v2123, %v2463
      %v2514 = vadd.f32 %v2124, %v2468
      %v2515 = vadd.f32 %v2125, %v2473
      %v2516 = vadd.f32 %v2126, %v2478
      %v2517 = vadd.f32 %v2127, %v2483
      %s2518 = scalar_lea.vmem %s224, 48
      %v2519 = vld [vmem:[%s2518] sm:$0xff]
      %v2520 = vld [vmem:[%s2518 + $0x8] sm:$0xff]
      %v2521 = vld [vmem:[%s2518 + $0x18] sm:$0xff]
      %v2522 = vld [vmem:[%s2518 + $0x20] sm:$0xff]
      %v2523 = vld [vmem:[%s2518 + $0x30] sm:$0xff]
      %v2524 = vld [vmem:[%s2518 + $0x38] sm:$0xff]
      %v2525 = vld [vmem:[%s2518 + $0x48] sm:$0xff]
      %v2526 = vld [vmem:[%s2518 + $0x50] sm:$0xff]
      %v2527 = vld [vmem:[%s2518 + $0x60] sm:$0xff]
      %v2528 = vld [vmem:[%s2518 + $0x68] sm:$0xff]
      %v2529 = vld [vmem:[%s2518 + $0x78] sm:$0xff]
      %v2530 = vld [vmem:[%s2518 + $0x80] sm:$0xff]
      %v2531 = vld [vmem:[%s2518 + $0x90] sm:$0xff]
      %v2532 = vld [vmem:[%s2518 + $0x98] sm:$0xff]
      %v2533 = vld [vmem:[%s2518 + $0xa8] sm:$0xff]
      %v2534 = vld [vmem:[%s2518 + $0xb0] sm:$0xff]
      %v2535 = vld [vmem:[%s2518 + $0xc0] sm:$0xff]
      %v2536 = vld [vmem:[%s2518 + $0xc8] sm:$0xff]
      %v2537 = vld [vmem:[%s2518 + $0xd8] sm:$0xff]
      %v2538 = vld [vmem:[%s2518 + $0xe0] sm:$0xff]
      %v2539 = vld [vmem:[%s2518 + $0xf0] sm:$0xff]
      %v2540 = vld [vmem:[%s2518 + $0xf8] sm:$0xff]
      %v2541 = vld [vmem:[%s2518 + $0x108] sm:$0xff]
      %v2542 = vld [vmem:[%s2518 + $0x110] sm:$0xff]
      %v2543 = vld [vmem:[%s2518 + $0x120] sm:$0xff]
      %v2544 = vld [vmem:[%s2518 + $0x128] sm:$0xff]
      %v2545 = vld [vmem:[%s2518 + $0x138] sm:$0xff]
      %v2546 = vld [vmem:[%s2518 + $0x140] sm:$0xff]
      %v2547 = vld [vmem:[%s2518 + $0x150] sm:$0xff]
      %v2548 = vld [vmem:[%s2518 + $0x158] sm:$0xff]
      %v2549 = vld [vmem:[%s2518 + $0x168] sm:$0xff]
      %v2550 = vld [vmem:[%s2518 + $0x170] sm:$0xff]
      %s2551 = scalar_lea.vmem %s1, 24
      %v2552 = vld [vmem:[%s2551] sm:$0xf]
      %v2554 = vsel %vm307, %v2519, 0
      %v2557 = vsel %vm307, %v2520, 0
      %v2560 = vsel %vm307, %v2521, 0
      %v2563 = vsel %vm307, %v2522, 0
      %v2566 = vsel %vm307, %v2523, 0
      %v2569 = vsel %vm307, %v2524, 0
      %v2572 = vsel %vm307, %v2525, 0
      %v2575 = vsel %vm307, %v2526, 0
      %v2578 = vsel %vm307, %v2527, 0
      %v2581 = vsel %vm307, %v2528, 0
      %v2584 = vsel %vm307, %v2529, 0
      %v2587 = vsel %vm307, %v2530, 0
      %v2590 = vsel %vm307, %v2531, 0
      %v2593 = vsel %vm307, %v2532, 0
      %v2596 = vsel %vm307, %v2533, 0
      %v2599 = vsel %vm307, %v2534, 0
      %v2602 = vsel %vm307, %v2535, 0
      %v2605 = vsel %vm307, %v2536, 0
      %v2608 = vsel %vm307, %v2537, 0
      %v2611 = vsel %vm307, %v2538, 0
      %v2614 = vsel %vm307, %v2539, 0
      %v2617 = vsel %vm307, %v2540, 0
      %v2620 = vsel %vm307, %v2541, 0
      %v2623 = vsel %vm307, %v2542, 0
      %v2626 = vsel %vm307, %v2543, 0
      %v2629 = vsel %vm307, %v2544, 0
      %v2632 = vsel %vm307, %v2545, 0
      %v2635 = vsel %vm307, %v2546, 0
      %v2638 = vsel %vm307, %v2547, 0
      %v2641 = vsel %vm307, %v2548, 0
      %v2644 = vsel %vm307, %v2549, 0
      %v2647 = vsel %vm307, %v2550, 0
      %v2650 = vsel %vm404, %v2552, 0
      %2652 = vmatprep.subr.mxu0 0.0
      %2653 = vmatpush1.msra.mxu0 %v2650
      %2654 = vmatprep.subr.mxu0 0.0
      %2655 = vmatpush1.msra.mxu0 0.0
      %2656 = vmatprep.subr.mxu0 0.0
      %2657 = vmatpush1.msra.mxu0 0.0
      %2658 = vmatprep.subr.mxu0 0.0
      %2659 = vmatpush1.msra.mxu0 0.0
      %2660 = vmatprep.subr.mxu0 0.0
      %2661 = vmatpush1.msra.mxu0 0.0
      %2662 = vmatprep.subr.mxu0 0.0
      %2663 = vmatpush1.msra.mxu0 0.0
      %2664 = vmatprep.subr.mxu0 0.0
      %2665 = vmatpush1.msra.mxu0 0.0
      %2666 = vmatprep.subr.mxu0 0.0
      %2667 = vmatpush1.msra.mxu0 0.0
      %2668 = vmatprep.subr.mxu0 0.0
      %2669 = vmatpush1.msra.mxu0 0.0
      %2670 = vmatprep.subr.mxu0 0.0
      %2671 = vmatpush1.msra.mxu0 0.0
      %2672 = vmatprep.subr.mxu0 0.0
      %2673 = vmatpush1.msra.mxu0 0.0
      %2674 = vmatprep.subr.mxu0 0.0
      %2675 = vmatpush1.msra.mxu0 0.0
      %2676 = vmatprep.subr.mxu0 0.0
      %2677 = vmatpush1.msra.mxu0 0.0
      %2678 = vmatprep.subr.mxu0 0.0
      %2679 = vmatpush1.msra.mxu0 0.0
      %2680 = vmatprep.subr.mxu0 0.0
      %2681 = vmatpush1.msra.mxu0 0.0
      %2682 = vmatprep.subr.mxu0 0.0
      %2683 = vmatpush1.msra.mxu0 0.0
      %2684 = vmatprep.subr.mxu0 0.0
      %2685 = vmatpush1.msra.mxu0 0.0
      %2686 = vmatprep.subr.mxu0 0.0
      %2687 = vmatpush1.msra.mxu0 0.0
      %2688 = vmatprep.subr.mxu0 0.0
      %2689 = vmatpush1.msra.mxu0 0.0
      %2690 = vmatprep.subr.mxu0 0.0
      %2691 = vmatpush1.msra.mxu0 0.0
      %2692 = vmatprep.subr.mxu0 0.0
      %2693 = vmatpush1.msra.mxu0 0.0
      %2694 = vmatprep.subr.mxu0 0.0
      %2695 = vmatpush1.msra.mxu0 0.0
      %2696 = vmatprep.subr.mxu0 0.0
      %2697 = vmatpush1.msra.mxu0 0.0
      %2698 = vmatprep.subr.mxu0 0.0
      %2699 = vmatpush1.msra.mxu0 0.0
      %2700 = vmatprep.subr.mxu0 0.0
      %2701 = vmatpush1.msra.mxu0 0.0
      %2702 = vmatprep.subr.mxu0 0.0
      %2703 = vmatpush1.msra.mxu0 0.0
      %2704 = vmatprep.subr.mxu0 0.0
      %2705 = vmatpush1.msra.mxu0 0.0
      %2706 = vmatprep.subr.mxu0 0.0
      %2707 = vmatpush1.msra.mxu0 0.0
      %2708 = vmatprep.subr.mxu0 0.0
      %2709 = vmatpush1.msra.mxu0 0.0
      %2710 = vmatprep.subr.mxu0 0.0
      %2711 = vmatpush1.msra.mxu0 0.0
      %2712 = vmatprep.subr.mxu0 0.0
      %2713 = vmatpush1.msra.mxu0 0.0
      %2714 = vmatprep.subr.mxu0 0.0
      %2715 = vmatpush1.msra.mxu0 0.0
      %2716 = vmatprep.mubr.f32.mxu0 0.0
      %2717 = vmatmul.mubr.f32.gmra.mrb[0].mxu0 %v2554
      %v2718 = vpop.f32.mrb[0].mxu0
      %v2719 = vadd.f32 0.0, %v2718
      %v2720 = vpop.f32.mrb[0].mxu0
      %2721 = vmatprep.mubr.f32.mxu0 0.0
      %2722 = vmatmul.mubr.f32.gmra.mrb[0].mxu0 %v2557
      %v2723 = vpop.f32.mrb[0].mxu0
      %v2724 = vadd.f32 0.0, %v2723
      %v2725 = vpop.f32.mrb[0].mxu0
      %2726 = vmatprep.mubr.f32.mxu0 0.0
      %2727 = vmatmul.mubr.f32.gmra.mrb[0].mxu0 %v2560
      %v2728 = vpop.f32.mrb[0].mxu0
      %v2729 = vadd.f32 0.0, %v2728
      %v2730 = vpop.f32.mrb[0].mxu0
      %2731 = vmatprep.mubr.f32.mxu0 0.0
      %2732 = vmatmul.mubr.f32.gmra.mrb[0].mxu0 %v2563
      %v2733 = vpop.f32.mrb[0].mxu0
      %v2734 = vadd.f32 0.0, %v2733
      %v2735 = vpop.f32.mrb[0].mxu0
      %2736 = vmatprep.mubr.f32.mxu0 0.0
      %2737 = vmatmul.mubr.f32.gmra.mrb[0].mxu0 %v2566
      %v2738 = vpop.f32.mrb[0].mxu0
      %v2739 = vadd.f32 0.0, %v2738
      %v2740 = vpop.f32.mrb[0].mxu0
      %2741 = vmatprep.mubr.f32.mxu0 0.0
      %2742 = vmatmul.mubr.f32.gmra.mrb[0].mxu0 %v2569
      %v2743 = vpop.f32.mrb[0].mxu0
      %v2744 = vadd.f32 0.0, %v2743
      %v2745 = vpop.f32.mrb[0].mxu0
      %2746 = vmatprep.mubr.f32.mxu0 0.0
      %2747 = vmatmul.mubr.f32.gmra.mrb[0].mxu0 %v2572
      %v2748 = vpop.f32.mrb[0].mxu0
      %v2749 = vadd.f32 0.0, %v2748
      %v2750 = vpop.f32.mrb[0].mxu0
      %2751 = vmatprep.mubr.f32.mxu0 0.0
      %2752 = vmatmul.mubr.f32.gmra.mrb[0].mxu0 %v2575
      %v2753 = vpop.f32.mrb[0].mxu0
      %v2754 = vadd.f32 0.0, %v2753
      %v2755 = vpop.f32.mrb[0].mxu0
      %2756 = vmatprep.mubr.f32.mxu0 0.0
      %2757 = vmatmul.mubr.f32.gmra.mrb[0].mxu0 %v2578
      %v2758 = vpop.f32.mrb[0].mxu0
      %v2759 = vadd.f32 0.0, %v2758
      %v2760 = vpop.f32.mrb[0].mxu0
      %2761 = vmatprep.mubr.f32.mxu0 0.0
      %2762 = vmatmul.mubr.f32.gmra.mrb[0].mxu0 %v2581
      %v2763 = vpop.f32.mrb[0].mxu0
      %v2764 = vadd.f32 0.0, %v2763
      %v2765 = vpop.f32.mrb[0].mxu0
      %2766 = vmatprep.mubr.f32.mxu0 0.0
      %2767 = vmatmul.mubr.f32.gmra.mrb[0].mxu0 %v2584
      %v2768 = vpop.f32.mrb[0].mxu0
      %v2769 = vadd.f32 0.0, %v2768
      %v2770 = vpop.f32.mrb[0].mxu0
      %2771 = vmatprep.mubr.f32.mxu0 0.0
      %2772 = vmatmul.mubr.f32.gmra.mrb[0].mxu0 %v2587
      %v2773 = vpop.f32.mrb[0].mxu0
      %v2774 = vadd.f32 0.0, %v2773
      %v2775 = vpop.f32.mrb[0].mxu0
      %2776 = vmatprep.mubr.f32.mxu0 0.0
      %2777 = vmatmul.mubr.f32.gmra.mrb[0].mxu0 %v2590
      %v2778 = vpop.f32.mrb[0].mxu0
      %v2779 = vadd.f32 0.0, %v2778
      %v2780 = vpop.f32.mrb[0].mxu0
      %2781 = vmatprep.mubr.f32.mxu0 0.0
      %2782 = vmatmul.mubr.f32.gmra.mrb[0].mxu0 %v2593
      %v2783 = vpop.f32.mrb[0].mxu0
      %v2784 = vadd.f32 0.0, %v2783
      %v2785 = vpop.f32.mrb[0].mxu0
      %2786 = vmatprep.mubr.f32.mxu0 0.0
      %2787 = vmatmul.mubr.f32.gmra.mrb[0].mxu0 %v2596
      %v2788 = vpop.f32.mrb[0].mxu0
      %v2789 = vadd.f32 0.0, %v2788
      %v2790 = vpop.f32.mrb[0].mxu0
      %2791 = vmatprep.mubr.f32.mxu0 0.0
      %2792 = vmatmul.mubr.f32.gmra.mrb[0].mxu0 %v2599
      %v2793 = vpop.f32.mrb[0].mxu0
      %v2794 = vadd.f32 0.0, %v2793
      %v2795 = vpop.f32.mrb[0].mxu0
      %2796 = vmatprep.mubr.f32.mxu0 0.0
      %2797 = vmatmul.mubr.f32.gmra.mrb[0].mxu0 %v2602
      %v2798 = vpop.f32.mrb[0].mxu0
      %v2799 = vadd.f32 0.0, %v2798
      %v2800 = vpop.f32.mrb[0].mxu0
      %2801 = vmatprep.mubr.f32.mxu0 0.0
      %2802 = vmatmul.mubr.f32.gmra.mrb[0].mxu0 %v2605
      %v2803 = vpop.f32.mrb[0].mxu0
      %v2804 = vadd.f32 0.0, %v2803
      %v2805 = vpop.f32.mrb[0].mxu0
      %2806 = vmatprep.mubr.f32.mxu0 0.0
      %2807 = vmatmul.mubr.f32.gmra.mrb[0].mxu0 %v2608
      %v2808 = vpop.f32.mrb[0].mxu0
      %v2809 = vadd.f32 0.0, %v2808
      %v2810 = vpop.f32.mrb[0].mxu0
      %2811 = vmatprep.mubr.f32.mxu0 0.0
      %2812 = vmatmul.mubr.f32.gmra.mrb[0].mxu0 %v2611
      %v2813 = vpop.f32.mrb[0].mxu0
      %v2814 = vadd.f32 0.0, %v2813
      %v2815 = vpop.f32.mrb[0].mxu0
      %2816 = vmatprep.mubr.f32.mxu0 0.0
      %2817 = vmatmul.mubr.f32.gmra.mrb[0].mxu0 %v2614
      %v2818 = vpop.f32.mrb[0].mxu0
      %v2819 = vadd.f32 0.0, %v2818
      %v2820 = vpop.f32.mrb[0].mxu0
      %2821 = vmatprep.mubr.f32.mxu0 0.0
      %2822 = vmatmul.mubr.f32.gmra.mrb[0].mxu0 %v2617
      %v2823 = vpop.f32.mrb[0].mxu0
      %v2824 = vadd.f32 0.0, %v2823
      %v2825 = vpop.f32.mrb[0].mxu0
      %2826 = vmatprep.mubr.f32.mxu0 0.0
      %2827 = vmatmul.mubr.f32.gmra.mrb[0].mxu0 %v2620
      %v2828 = vpop.f32.mrb[0].mxu0
      %v2829 = vadd.f32 0.0, %v2828
      %v2830 = vpop.f32.mrb[0].mxu0
      %2831 = vmatprep.mubr.f32.mxu0 0.0
      %2832 = vmatmul.mubr.f32.gmra.mrb[0].mxu0 %v2623
      %v2833 = vpop.f32.mrb[0].mxu0
      %v2834 = vadd.f32 0.0, %v2833
      %v2835 = vpop.f32.mrb[0].mxu0
      %2836 = vmatprep.mubr.f32.mxu0 0.0
      %2837 = vmatmul.mubr.f32.gmra.mrb[0].mxu0 %v2626
      %v2838 = vpop.f32.mrb[0].mxu0
      %v2839 = vadd.f32 0.0, %v2838
      %v2840 = vpop.f32.mrb[0].mxu0
      %2841 = vmatprep.mubr.f32.mxu0 0.0
      %2842 = vmatmul.mubr.f32.gmra.mrb[0].mxu0 %v2629
      %v2843 = vpop.f32.mrb[0].mxu0
      %v2844 = vadd.f32 0.0, %v2843
      %v2845 = vpop.f32.mrb[0].mxu0
      %2846 = vmatprep.mubr.f32.mxu0 0.0
      %2847 = vmatmul.mubr.f32.gmra.mrb[0].mxu0 %v2632
      %v2848 = vpop.f32.mrb[0].mxu0
      %v2849 = vadd.f32 0.0, %v2848
      %v2850 = vpop.f32.mrb[0].mxu0
      %2851 = vmatprep.mubr.f32.mxu0 0.0
      %2852 = vmatmul.mubr.f32.gmra.mrb[0].mxu0 %v2635
      %v2853 = vpop.f32.mrb[0].mxu0
      %v2854 = vadd.f32 0.0, %v2853
      %v2855 = vpop.f32.mrb[0].mxu0
      %2856 = vmatprep.mubr.f32.mxu0 0.0
      %2857 = vmatmul.mubr.f32.gmra.mrb[0].mxu0 %v2638
      %v2858 = vpop.f32.mrb[0].mxu0
      %v2859 = vadd.f32 0.0, %v2858
      %v2860 = vpop.f32.mrb[0].mxu0
      %2861 = vmatprep.mubr.f32.mxu0 0.0
      %2862 = vmatmul.mubr.f32.gmra.mrb[0].mxu0 %v2641
      %v2863 = vpop.f32.mrb[0].mxu0
      %v2864 = vadd.f32 0.0, %v2863
      %v2865 = vpop.f32.mrb[0].mxu0
      %2866 = vmatprep.mubr.f32.mxu0 0.0
      %2867 = vmatmul.mubr.f32.gmra.mrb[0].mxu0 %v2644
      %v2868 = vpop.f32.mrb[0].mxu0
      %v2869 = vadd.f32 0.0, %v2868
      %v2870 = vpop.f32.mrb[0].mxu0
      %2871 = vmatprep.mubr.f32.mxu0 0.0
      %2872 = vmatmul.mubr.f32.gmra.mrb[0].mxu0 %v2647
      %v2873 = vpop.f32.mrb[0].mxu0
      %v2874 = vadd.f32 0.0, %v2873
      %v2875 = vpop.f32.mrb[0].mxu0
      %2876 = vdwg.mxu0
      %v2877 = vadd.f32 %v2486, %v2719
      %v2878 = vadd.f32 %v2487, %v2724
      %v2879 = vadd.f32 %v2488, %v2729
      %v2880 = vadd.f32 %v2489, %v2734
      %v2881 = vadd.f32 %v2490, %v2739
      %v2882 = vadd.f32 %v2491, %v2744
      %v2883 = vadd.f32 %v2492, %v2749
      %v2884 = vadd.f32 %v2493, %v2754
      %v2885 = vadd.f32 %v2494, %v2759
      %v2886 = vadd.f32 %v2495, %v2764
      %v2887 = vadd.f32 %v2496, %v2769
      %v2888 = vadd.f32 %v2497, %v2774
      %v2889 = vadd.f32 %v2498, %v2779
      %v2890 = vadd.f32 %v2499, %v2784
      %v2891 = vadd.f32 %v2500, %v2789
      %v2892 = vadd.f32 %v2501, %v2794
      %v2893 = vadd.f32 %v2502, %v2799
      %v2894 = vadd.f32 %v2503, %v2804
      %v2895 = vadd.f32 %v2504, %v2809
      %v2896 = vadd.f32 %v2505, %v2814
      %v2897 = vadd.f32 %v2506, %v2819
      %v2898 = vadd.f32 %v2507, %v2824
      %v2899 = vadd.f32 %v2508, %v2829
      %v2900 = vadd.f32 %v2509, %v2834
      %v2901 = vadd.f32 %v2510, %v2839
      %v2902 = vadd.f32 %v2511, %v2844
      %v2903 = vadd.f32 %v2512, %v2849
      %v2904 = vadd.f32 %v2513, %v2854
      %v2905 = vadd.f32 %v2514, %v2859
      %v2906 = vadd.f32 %v2515, %v2864
      %v2907 = vadd.f32 %v2516, %v2869
      %v2908 = vadd.f32 %v2517, %v2874
      %v2909 = vld [vmem:[%s2518 + $0x1] sm:$0xff]
      %v2910 = vld [vmem:[%s2518 + $0x9] sm:$0xff]
      %v2911 = vld [vmem:[%s2518 + $0x19] sm:$0xff]
      %v2912 = vld [vmem:[%s2518 + $0x21] sm:$0xff]
      %v2913 = vld [vmem:[%s2518 + $0x31] sm:$0xff]
      %v2914 = vld [vmem:[%s2518 + $0x39] sm:$0xff]
      %v2915 = vld [vmem:[%s2518 + $0x49] sm:$0xff]
      %v2916 = vld [vmem:[%s2518 + $0x51] sm:$0xff]
      %v2917 = vld [vmem:[%s2518 + $0x61] sm:$0xff]
      %v2918 = vld [vmem:[%s2518 + $0x69] sm:$0xff]
      %v2919 = vld [vmem:[%s2518 + $0x79] sm:$0xff]
      %v2920 = vld [vmem:[%s2518 + $0x81] sm:$0xff]
      %v2921 = vld [vmem:[%s2518 + $0x91] sm:$0xff]
      %v2922 = vld [vmem:[%s2518 + $0x99] sm:$0xff]
      %v2923 = vld [vmem:[%s2518 + $0xa9] sm:$0xff]
      %v2924 = vld [vmem:[%s2518 + $0xb1] sm:$0xff]
      %v2925 = vld [vmem:[%s2518 + $0xc1] sm:$0xff]
      %v2926 = vld [vmem:[%s2518 + $0xc9] sm:$0xff]
      %v2927 = vld [vmem:[%s2518 + $0xd9] sm:$0xff]
      %v2928 = vld [vmem:[%s2518 + $0xe1] sm:$0xff]
      %v2929 = vld [vmem:[%s2518 + $0xf1] sm:$0xff]
      %v2930 = vld [vmem:[%s2518 + $0xf9] sm:$0xff]
      %v2931 = vld [vmem:[%s2518 + $0x109] sm:$0xff]
      %v2932 = vld [vmem:[%s2518 + $0x111] sm:$0xff]
      %v2933 = vld [vmem:[%s2518 + $0x121] sm:$0xff]
      %v2934 = vld [vmem:[%s2518 + $0x129] sm:$0xff]
      %v2935 = vld [vmem:[%s2518 + $0x139] sm:$0xff]
      %v2936 = vld [vmem:[%s2518 + $0x141] sm:$0xff]
      %v2937 = vld [vmem:[%s2518 + $0x151] sm:$0xff]
      %v2938 = vld [vmem:[%s2518 + $0x159] sm:$0xff]
      %v2939 = vld [vmem:[%s2518 + $0x169] sm:$0xff]
      %v2940 = vld [vmem:[%s2518 + $0x171] sm:$0xff]
      %s2941 = scalar_lea.vmem %s1, 28
      %v2942 = vld [vmem:[%s2941] sm:$0xf]
      %v2944 = vsel %vm307, %v2909, 0
      %v2947 = vsel %vm307, %v2910, 0
      %v2950 = vsel %vm307, %v2911, 0
      %v2953 = vsel %vm307, %v2912, 0
      %v2956 = vsel %vm307, %v2913, 0
      %v2959 = vsel %vm307, %v2914, 0
      %v2962 = vsel %vm307, %v2915, 0
      %v2965 = vsel %vm307, %v2916, 0
      %v2968 = vsel %vm307, %v2917, 0
      %v2971 = vsel %vm307, %v2918, 0
      %v2974 = vsel %vm307, %v2919, 0
      %v2977 = vsel %vm307, %v2920, 0
      %v2980 = vsel %vm307, %v2921, 0
      %v2983 = vsel %vm307, %v2922, 0
      %v2986 = vsel %vm307, %v2923, 0
      %v2989 = vsel %vm307, %v2924, 0
      %v2992 = vsel %vm307, %v2925, 0
      %v2995 = vsel %vm307, %v2926, 0
      %v2998 = vsel %vm307, %v2927, 0
      %v3001 = vsel %vm307, %v2928, 0
      %v3004 = vsel %vm307, %v2929, 0
      %v3007 = vsel %vm307, %v2930, 0
      %v3010 = vsel %vm307, %v2931, 0
      %v3013 = vsel %vm307, %v2932, 0
      %v3016 = vsel %vm307, %v2933, 0
      %v3019 = vsel %vm307, %v2934, 0
      %v3022 = vsel %vm307, %v2935, 0
      %v3025 = vsel %vm307, %v2936, 0
      %v3028 = vsel %vm307, %v2937, 0
      %v3031 = vsel %vm307, %v2938, 0
      %v3034 = vsel %vm307, %v2939, 0
      %v3037 = vsel %vm307, %v2940, 0
      %v3040 = vsel %vm404, %v2942, 0
      %3042 = vmatprep.subr.mxu0 0.0
      %3043 = vmatpush1.msra.mxu0 %v3040
      %3044 = vmatprep.subr.mxu0 0.0
      %3045 = vmatpush1.msra.mxu0 0.0
      %3046 = vmatprep.subr.mxu0 0.0
      %3047 = vmatpush1.msra.mxu0 0.0
      %3048 = vmatprep.subr.mxu0 0.0
      %3049 = vmatpush1.msra.mxu0 0.0
      %3050 = vmatprep.subr.mxu0 0.0
      %3051 = vmatpush1.msra.mxu0 0.0
      %3052 = vmatprep.subr.mxu0 0.0
      %3053 = vmatpush1.msra.mxu0 0.0
      %3054 = vmatprep.subr.mxu0 0.0
      %3055 = vmatpush1.msra.mxu0 0.0
      %3056 = vmatprep.subr.mxu0 0.0
      %3057 = vmatpush1.msra.mxu0 0.0
      %3058 = vmatprep.subr.mxu0 0.0
      %3059 = vmatpush1.msra.mxu0 0.0
      %3060 = vmatprep.subr.mxu0 0.0
      %3061 = vmatpush1.msra.mxu0 0.0
      %3062 = vmatprep.subr.mxu0 0.0
      %3063 = vmatpush1.msra.mxu0 0.0
      %3064 = vmatprep.subr.mxu0 0.0
      %3065 = vmatpush1.msra.mxu0 0.0
      %3066 = vmatprep.subr.mxu0 0.0
      %3067 = vmatpush1.msra.mxu0 0.0
      %3068 = vmatprep.subr.mxu0 0.0
      %3069 = vmatpush1.msra.mxu0 0.0
      %3070 = vmatprep.subr.mxu0 0.0
      %3071 = vmatpush1.msra.mxu0 0.0
      %3072 = vmatprep.subr.mxu0 0.0
      %3073 = vmatpush1.msra.mxu0 0.0
      %3074 = vmatprep.subr.mxu0 0.0
      %3075 = vmatpush1.msra.mxu0 0.0
      %3076 = vmatprep.subr.mxu0 0.0
      %3077 = vmatpush1.msra.mxu0 0.0
      %3078 = vmatprep.subr.mxu0 0.0
      %3079 = vmatpush1.msra.mxu0 0.0
      %3080 = vmatprep.subr.mxu0 0.0
      %3081 = vmatpush1.msra.mxu0 0.0
      %3082 = vmatprep.subr.mxu0 0.0
      %3083 = vmatpush1.msra.mxu0 0.0
      %3084 = vmatprep.subr.mxu0 0.0
      %3085 = vmatpush1.msra.mxu0 0.0
      %3086 = vmatprep.subr.mxu0 0.0
      %3087 = vmatpush1.msra.mxu0 0.0
      %3088 = vmatprep.subr.mxu0 0.0
      %3089 = vmatpush1.msra.mxu0 0.0
      %3090 = vmatprep.subr.mxu0 0.0
      %3091 = vmatpush1.msra.mxu0 0.0
      %3092 = vmatprep.subr.mxu0 0.0
      %3093 = vmatpush1.msra.mxu0 0.0
      %3094 = vmatprep.subr.mxu0 0.0
      %3095 = vmatpush1.msra.mxu0 0.0
      %3096 = vmatprep.subr.mxu0 0.0
      %3097 = vmatpush1.msra.mxu0 0.0
      %3098 = vmatprep.subr.mxu0 0.0
      %3099 = vmatpush1.msra.mxu0 0.0
      %3100 = vmatprep.subr.mxu0 0.0
      %3101 = vmatpush1.msra.mxu0 0.0
      %3102 = vmatprep.subr.mxu0 0.0
      %3103 = vmatpush1.msra.mxu0 0.0
      %3104 = vmatprep.subr.mxu0 0.0
      %3105 = vmatpush1.msra.mxu0 0.0
      %3106 = vmatprep.mubr.f32.mxu0 0.0
      %3107 = vmatmul.mubr.f32.gmra.mrb[0].mxu0 %v2944
      %v3108 = vpop.f32.mrb[0].mxu0
      %v3109 = vadd.f32 0.0, %v3108
      %v3110 = vpop.f32.mrb[0].mxu0
      %3111 = vmatprep.mubr.f32.mxu0 0.0
      %3112 = vmatmul.mubr.f32.gmra.mrb[0].mxu0 %v2947
      %v3113 = vpop.f32.mrb[0].mxu0
      %v3114 = vadd.f32 0.0, %v3113
      %v3115 = vpop.f32.mrb[0].mxu0
      %3116 = vmatprep.mubr.f32.mxu0 0.0
      %3117 = vmatmul.mubr.f32.gmra.mrb[0].mxu0 %v2950
      %v3118 = vpop.f32.mrb[0].mxu0
      %v3119 = vadd.f32 0.0, %v3118
      %v3120 = vpop.f32.mrb[0].mxu0
      %3121 = vmatprep.mubr.f32.mxu0 0.0
      %3122 = vmatmul.mubr.f32.gmra.mrb[0].mxu0 %v2953
      %v3123 = vpop.f32.mrb[0].mxu0
      %v3124 = vadd.f32 0.0, %v3123
      %v3125 = vpop.f32.mrb[0].mxu0
      %3126 = vmatprep.mubr.f32.mxu0 0.0
      %3127 = vmatmul.mubr.f32.gmra.mrb[0].mxu0 %v2956
      %v3128 = vpop.f32.mrb[0].mxu0
      %v3129 = vadd.f32 0.0, %v3128
      %v3130 = vpop.f32.mrb[0].mxu0
      %3131 = vmatprep.mubr.f32.mxu0 0.0
      %3132 = vmatmul.mubr.f32.gmra.mrb[0].mxu0 %v2959
      %v3133 = vpop.f32.mrb[0].mxu0
      %v3134 = vadd.f32 0.0, %v3133
      %v3135 = vpop.f32.mrb[0].mxu0
      %3136 = vmatprep.mubr.f32.mxu0 0.0
      %3137 = vmatmul.mubr.f32.gmra.mrb[0].mxu0 %v2962
      %v3138 = vpop.f32.mrb[0].mxu0
      %v3139 = vadd.f32 0.0, %v3138
      %v3140 = vpop.f32.mrb[0].mxu0
      %3141 = vmatprep.mubr.f32.mxu0 0.0
      %3142 = vmatmul.mubr.f32.gmra.mrb[0].mxu0 %v2965
      %v3143 = vpop.f32.mrb[0].mxu0
      %v3144 = vadd.f32 0.0, %v3143
      %v3145 = vpop.f32.mrb[0].mxu0
      %3146 = vmatprep.mubr.f32.mxu0 0.0
      %3147 = vmatmul.mubr.f32.gmra.mrb[0].mxu0 %v2968
      %v3148 = vpop.f32.mrb[0].mxu0
      %v3149 = vadd.f32 0.0, %v3148
      %v3150 = vpop.f32.mrb[0].mxu0
      %3151 = vmatprep.mubr.f32.mxu0 0.0
      %3152 = vmatmul.mubr.f32.gmra.mrb[0].mxu0 %v2971
      %v3153 = vpop.f32.mrb[0].mxu0
      %v3154 = vadd.f32 0.0, %v3153
      %v3155 = vpop.f32.mrb[0].mxu0
      %3156 = vmatprep.mubr.f32.mxu0 0.0
      %3157 = vmatmul.mubr.f32.gmra.mrb[0].mxu0 %v2974
      %v3158 = vpop.f32.mrb[0].mxu0
      %v3159 = vadd.f32 0.0, %v3158
      %v3160 = vpop.f32.mrb[0].mxu0
      %3161 = vmatprep.mubr.f32.mxu0 0.0
      %3162 = vmatmul.mubr.f32.gmra.mrb[0].mxu0 %v2977
      %v3163 = vpop.f32.mrb[0].mxu0
      %v3164 = vadd.f32 0.0, %v3163
      %v3165 = vpop.f32.mrb[0].mxu0
      %3166 = vmatprep.mubr.f32.mxu0 0.0
      %3167 = vmatmul.mubr.f32.gmra.mrb[0].mxu0 %v2980
      %v3168 = vpop.f32.mrb[0].mxu0
      %v3169 = vadd.f32 0.0, %v3168
      %v3170 = vpop.f32.mrb[0].mxu0
      %3171 = vmatprep.mubr.f32.mxu0 0.0
      %3172 = vmatmul.mubr.f32.gmra.mrb[0].mxu0 %v2983
      %v3173 = vpop.f32.mrb[0].mxu0
      %v3174 = vadd.f32 0.0, %v3173
      %v3175 = vpop.f32.mrb[0].mxu0
      %3176 = vmatprep.mubr.f32.mxu0 0.0
      %3177 = vmatmul.mubr.f32.gmra.mrb[0].mxu0 %v2986
      %v3178 = vpop.f32.mrb[0].mxu0
      %v3179 = vadd.f32 0.0, %v3178
      %v3180 = vpop.f32.mrb[0].mxu0
      %3181 = vmatprep.mubr.f32.mxu0 0.0
      %3182 = vmatmul.mubr.f32.gmra.mrb[0].mxu0 %v2989
      %v3183 = vpop.f32.mrb[0].mxu0
      %v3184 = vadd.f32 0.0, %v3183
      %v3185 = vpop.f32.mrb[0].mxu0
      %3186 = vmatprep.mubr.f32.mxu0 0.0
      %3187 = vmatmul.mubr.f32.gmra.mrb[0].mxu0 %v2992
      %v3188 = vpop.f32.mrb[0].mxu0
      %v3189 = vadd.f32 0.0, %v3188
      %v3190 = vpop.f32.mrb[0].mxu0
      %3191 = vmatprep.mubr.f32.mxu0 0.0
      %3192 = vmatmul.mubr.f32.gmra.mrb[0].mxu0 %v2995
      %v3193 = vpop.f32.mrb[0].mxu0
      %v3194 = vadd.f32 0.0, %v3193
      %v3195 = vpop.f32.mrb[0].mxu0
      %3196 = vmatprep.mubr.f32.mxu0 0.0
      %3197 = vmatmul.mubr.f32.gmra.mrb[0].mxu0 %v2998
      %v3198 = vpop.f32.mrb[0].mxu0
      %v3199 = vadd.f32 0.0, %v3198
      %v3200 = vpop.f32.mrb[0].mxu0
      %3201 = vmatprep.mubr.f32.mxu0 0.0
      %3202 = vmatmul.mubr.f32.gmra.mrb[0].mxu0 %v3001
      %v3203 = vpop.f32.mrb[0].mxu0
      %v3204 = vadd.f32 0.0, %v3203
      %v3205 = vpop.f32.mrb[0].mxu0
      %3206 = vmatprep.mubr.f32.mxu0 0.0
      %3207 = vmatmul.mubr.f32.gmra.mrb[0].mxu0 %v3004
      %v3208 = vpop.f32.mrb[0].mxu0
      %v3209 = vadd.f32 0.0, %v3208
      %v3210 = vpop.f32.mrb[0].mxu0
      %3211 = vmatprep.mubr.f32.mxu0 0.0
      %3212 = vmatmul.mubr.f32.gmra.mrb[0].mxu0 %v3007
      %v3213 = vpop.f32.mrb[0].mxu0
      %v3214 = vadd.f32 0.0, %v3213
      %v3215 = vpop.f32.mrb[0].mxu0
      %3216 = vmatprep.mubr.f32.mxu0 0.0
      %3217 = vmatmul.mubr.f32.gmra.mrb[0].mxu0 %v3010
      %v3218 = vpop.f32.mrb[0].mxu0
      %v3219 = vadd.f32 0.0, %v3218
      %v3220 = vpop.f32.mrb[0].mxu0
      %3221 = vmatprep.mubr.f32.mxu0 0.0
      %3222 = vmatmul.mubr.f32.gmra.mrb[0].mxu0 %v3013
      %v3223 = vpop.f32.mrb[0].mxu0
      %v3224 = vadd.f32 0.0, %v3223
      %v3225 = vpop.f32.mrb[0].mxu0
      %3226 = vmatprep.mubr.f32.mxu0 0.0
      %3227 = vmatmul.mubr.f32.gmra.mrb[0].mxu0 %v3016
      %v3228 = vpop.f32.mrb[0].mxu0
      %v3229 = vadd.f32 0.0, %v3228
      %v3230 = vpop.f32.mrb[0].mxu0
      %3231 = vmatprep.mubr.f32.mxu0 0.0
      %3232 = vmatmul.mubr.f32.gmra.mrb[0].mxu0 %v3019
      %v3233 = vpop.f32.mrb[0].mxu0
      %v3234 = vadd.f32 0.0, %v3233
      %v3235 = vpop.f32.mrb[0].mxu0
      %3236 = vmatprep.mubr.f32.mxu0 0.0
      %3237 = vmatmul.mubr.f32.gmra.mrb[0].mxu0 %v3022
      %v3238 = vpop.f32.mrb[0].mxu0
      %v3239 = vadd.f32 0.0, %v3238
      %v3240 = vpop.f32.mrb[0].mxu0
      %3241 = vmatprep.mubr.f32.mxu0 0.0
      %3242 = vmatmul.mubr.f32.gmra.mrb[0].mxu0 %v3025
      %v3243 = vpop.f32.mrb[0].mxu0
      %v3244 = vadd.f32 0.0, %v3243
      %v3245 = vpop.f32.mrb[0].mxu0
      %3246 = vmatprep.mubr.f32.mxu0 0.0
      %3247 = vmatmul.mubr.f32.gmra.mrb[0].mxu0 %v3028
      %v3248 = vpop.f32.mrb[0].mxu0
      %v3249 = vadd.f32 0.0, %v3248
      %v3250 = vpop.f32.mrb[0].mxu0
      %3251 = vmatprep.mubr.f32.mxu0 0.0
      %3252 = vmatmul.mubr.f32.gmra.mrb[0].mxu0 %v3031
      %v3253 = vpop.f32.mrb[0].mxu0
      %v3254 = vadd.f32 0.0, %v3253
      %v3255 = vpop.f32.mrb[0].mxu0
      %3256 = vmatprep.mubr.f32.mxu0 0.0
      %3257 = vmatmul.mubr.f32.gmra.mrb[0].mxu0 %v3034
      %v3258 = vpop.f32.mrb[0].mxu0
      %v3259 = vadd.f32 0.0, %v3258
      %v3260 = vpop.f32.mrb[0].mxu0
      %3261 = vmatprep.mubr.f32.mxu0 0.0
      %3262 = vmatmul.mubr.f32.gmra.mrb[0].mxu0 %v3037
      %v3263 = vpop.f32.mrb[0].mxu0
      %v3264 = vadd.f32 0.0, %v3263
      %v3265 = vpop.f32.mrb[0].mxu0
      %3266 = vdwg.mxu0
      %v3267 = vadd.f32 %v2877, %v3109
      %v3268 = vadd.f32 %v2878, %v3114
      %v3269 = vadd.f32 %v2879, %v3119
      %v3270 = vadd.f32 %v2880, %v3124
      %v3271 = vadd.f32 %v2881, %v3129
      %v3272 = vadd.f32 %v2882, %v3134
      %v3273 = vadd.f32 %v2883, %v3139
      %v3274 = vadd.f32 %v2884, %v3144
      %v3275 = vadd.f32 %v2885, %v3149
      %v3276 = vadd.f32 %v2886, %v3154
      %v3277 = vadd.f32 %v2887, %v3159
      %v3278 = vadd.f32 %v2888, %v3164
      %v3279 = vadd.f32 %v2889, %v3169
      %v3280 = vadd.f32 %v2890, %v3174
      %v3281 = vadd.f32 %v2891, %v3179
      %v3282 = vadd.f32 %v2892, %v3184
      %v3283 = vadd.f32 %v2893, %v3189
      %v3284 = vadd.f32 %v2894, %v3194
      %v3285 = vadd.f32 %v2895, %v3199
      %v3286 = vadd.f32 %v2896, %v3204
      %v3287 = vadd.f32 %v2897, %v3209
      %v3288 = vadd.f32 %v2898, %v3214
      %v3289 = vadd.f32 %v2899, %v3219
      %v3290 = vadd.f32 %v2900, %v3224
      %v3291 = vadd.f32 %v2901, %v3229
      %v3292 = vadd.f32 %v2902, %v3234
      %v3293 = vadd.f32 %v2903, %v3239
      %v3294 = vadd.f32 %v2904, %v3244
      %v3295 = vadd.f32 %v2905, %v3249
      %v3296 = vadd.f32 %v2906, %v3254
      %v3297 = vadd.f32 %v2907, %v3259
      %v3298 = vadd.f32 %v2908, %v3264
      %v3299 = vld [vmem:[%s2518 + $0x2] sm:$0xff]
      %v3300 = vld [vmem:[%s2518 + $0xa] sm:$0xff]
      %v3301 = vld [vmem:[%s2518 + $0x1a] sm:$0xff]
      %v3302 = vld [vmem:[%s2518 + $0x22] sm:$0xff]
      %v3303 = vld [vmem:[%s2518 + $0x32] sm:$0xff]
      %v3304 = vld [vmem:[%s2518 + $0x3a] sm:$0xff]
      %v3305 = vld [vmem:[%s2518 + $0x4a] sm:$0xff]
      %v3306 = vld [vmem:[%s2518 + $0x52] sm:$0xff]
      %v3307 = vld [vmem:[%s2518 + $0x62] sm:$0xff]
      %v3308 = vld [vmem:[%s2518 + $0x6a] sm:$0xff]
      %v3309 = vld [vmem:[%s2518 + $0x7a] sm:$0xff]
      %v3310 = vld [vmem:[%s2518 + $0x82] sm:$0xff]
      %v3311 = vld [vmem:[%s2518 + $0x92] sm:$0xff]
      %v3312 = vld [vmem:[%s2518 + $0x9a] sm:$0xff]
      %v3313 = vld [vmem:[%s2518 + $0xaa] sm:$0xff]
      %v3314 = vld [vmem:[%s2518 + $0xb2] sm:$0xff]
      %v3315 = vld [vmem:[%s2518 + $0xc2] sm:$0xff]
      %v3316 = vld [vmem:[%s2518 + $0xca] sm:$0xff]
      %v3317 = vld [vmem:[%s2518 + $0xda] sm:$0xff]
      %v3318 = vld [vmem:[%s2518 + $0xe2] sm:$0xff]
      %v3319 = vld [vmem:[%s2518 + $0xf2] sm:$0xff]
      %v3320 = vld [vmem:[%s2518 + $0xfa] sm:$0xff]
      %v3321 = vld [vmem:[%s2518 + $0x10a] sm:$0xff]
      %v3322 = vld [vmem:[%s2518 + $0x112] sm:$0xff]
      %v3323 = vld [vmem:[%s2518 + $0x122] sm:$0xff]
      %v3324 = vld [vmem:[%s2518 + $0x12a] sm:$0xff]
      %v3325 = vld [vmem:[%s2518 + $0x13a] sm:$0xff]
      %v3326 = vld [vmem:[%s2518 + $0x142] sm:$0xff]
      %v3327 = vld [vmem:[%s2518 + $0x152] sm:$0xff]
      %v3328 = vld [vmem:[%s2518 + $0x15a] sm:$0xff]
      %v3329 = vld [vmem:[%s2518 + $0x16a] sm:$0xff]
      %v3330 = vld [vmem:[%s2518 + $0x172] sm:$0xff]
      %s3331 = scalar_lea.vmem %s1, 32
      %v3332 = vld [vmem:[%s3331] sm:$0xf]
      %v3334 = vsel %vm307, %v3299, 0
      %v3337 = vsel %vm307, %v3300, 0
      %v3340 = vsel %vm307, %v3301, 0
      %v3343 = vsel %vm307, %v3302, 0
      %v3346 = vsel %vm307, %v3303, 0
      %v3349 = vsel %vm307, %v3304, 0
      %v3352 = vsel %vm307, %v3305, 0
      %v3355 = vsel %vm307, %v3306, 0
      %v3358 = vsel %vm307, %v3307, 0
      %v3361 = vsel %vm307, %v3308, 0
      %v3364 = vsel %vm307, %v3309, 0
      %v3367 = vsel %vm307, %v3310, 0
      %v3370 = vsel %vm307, %v3311, 0
      %v3373 = vsel %vm307, %v3312, 0
      %v3376 = vsel %vm307, %v3313, 0
      %v3379 = vsel %vm307, %v3314, 0
      %v3382 = vsel %vm307, %v3315, 0
      %v3385 = vsel %vm307, %v3316, 0
      %v3388 = vsel %vm307, %v3317, 0
      %v3391 = vsel %vm307, %v3318, 0
      %v3394 = vsel %vm307, %v3319, 0
      %v3397 = vsel %vm307, %v3320, 0
      %v3400 = vsel %vm307, %v3321, 0
      %v3403 = vsel %vm307, %v3322, 0
      %v3406 = vsel %vm307, %v3323, 0
      %v3409 = vsel %vm307, %v3324, 0
      %v3412 = vsel %vm307, %v3325, 0
      %v3415 = vsel %vm307, %v3326, 0
      %v3418 = vsel %vm307, %v3327, 0
      %v3421 = vsel %vm307, %v3328, 0
      %v3424 = vsel %vm307, %v3329, 0
      %v3427 = vsel %vm307, %v3330, 0
      %v3430 = vsel %vm404, %v3332, 0
      %3432 = vmatprep.subr.mxu0 0.0
      %3433 = vmatpush1.msra.mxu0 %v3430
      %3434 = vmatprep.subr.mxu0 0.0
      %3435 = vmatpush1.msra.mxu0 0.0
      %3436 = vmatprep.subr.mxu0 0.0
      %3437 = vmatpush1.msra.mxu0 0.0
      %3438 = vmatprep.subr.mxu0 0.0
      %3439 = vmatpush1.msra.mxu0 0.0
      %3440 = vmatprep.subr.mxu0 0.0
      %3441 = vmatpush1.msra.mxu0 0.0
      %3442 = vmatprep.subr.mxu0 0.0
      %3443 = vmatpush1.msra.mxu0 0.0
      %3444 = vmatprep.subr.mxu0 0.0
      %3445 = vmatpush1.msra.mxu0 0.0
      %3446 = vmatprep.subr.mxu0 0.0
      %3447 = vmatpush1.msra.mxu0 0.0
      %3448 = vmatprep.subr.mxu0 0.0
      %3449 = vmatpush1.msra.mxu0 0.0
      %3450 = vmatprep.subr.mxu0 0.0
      %3451 = vmatpush1.msra.mxu0 0.0
      %3452 = vmatprep.subr.mxu0 0.0
      %3453 = vmatpush1.msra.mxu0 0.0
      %3454 = vmatprep.subr.mxu0 0.0
      %3455 = vmatpush1.msra.mxu0 0.0
      %3456 = vmatprep.subr.mxu0 0.0
      %3457 = vmatpush1.msra.mxu0 0.0
      %3458 = vmatprep.subr.mxu0 0.0
      %3459 = vmatpush1.msra.mxu0 0.0
      %3460 = vmatprep.subr.mxu0 0.0
      %3461 = vmatpush1.msra.mxu0 0.0
      %3462 = vmatprep.subr.mxu0 0.0
      %3463 = vmatpush1.msra.mxu0 0.0
      %3464 = vmatprep.subr.mxu0 0.0
      %3465 = vmatpush1.msra.mxu0 0.0
      %3466 = vmatprep.subr.mxu0 0.0
      %3467 = vmatpush1.msra.mxu0 0.0
      %3468 = vmatprep.subr.mxu0 0.0
      %3469 = vmatpush1.msra.mxu0 0.0
      %3470 = vmatprep.subr.mxu0 0.0
      %3471 = vmatpush1.msra.mxu0 0.0
      %3472 = vmatprep.subr.mxu0 0.0
      %3473 = vmatpush1.msra.mxu0 0.0
      %3474 = vmatprep.subr.mxu0 0.0
      %3475 = vmatpush1.msra.mxu0 0.0
      %3476 = vmatprep.subr.mxu0 0.0
      %3477 = vmatpush1.msra.mxu0 0.0
      %3478 = vmatprep.subr.mxu0 0.0
      %3479 = vmatpush1.msra.mxu0 0.0
      %3480 = vmatprep.subr.mxu0 0.0
      %3481 = vmatpush1.msra.mxu0 0.0
      %3482 = vmatprep.subr.mxu0 0.0
      %3483 = vmatpush1.msra.mxu0 0.0
      %3484 = vmatprep.subr.mxu0 0.0
      %3485 = vmatpush1.msra.mxu0 0.0
      %3486 = vmatprep.subr.mxu0 0.0
      %3487 = vmatpush1.msra.mxu0 0.0
      %3488 = vmatprep.subr.mxu0 0.0
      %3489 = vmatpush1.msra.mxu0 0.0
      %3490 = vmatprep.subr.mxu0 0.0
      %3491 = vmatpush1.msra.mxu0 0.0
      %3492 = vmatprep.subr.mxu0 0.0
      %3493 = vmatpush1.msra.mxu0 0.0
      %3494 = vmatprep.subr.mxu0 0.0
      %3495 = vmatpush1.msra.mxu0 0.0
      %3496 = vmatprep.mubr.f32.mxu0 0.0
      %3497 = vmatmul.mubr.f32.gmra.mrb[0].mxu0 %v3334
      %v3498 = vpop.f32.mrb[0].mxu0
      %v3499 = vadd.f32 0.0, %v3498
      %v3500 = vpop.f32.mrb[0].mxu0
      %3501 = vmatprep.mubr.f32.mxu0 0.0
      %3502 = vmatmul.mubr.f32.gmra.mrb[0].mxu0 %v3337
      %v3503 = vpop.f32.mrb[0].mxu0
      %v3504 = vadd.f32 0.0, %v3503
      %v3505 = vpop.f32.mrb[0].mxu0
      %3506 = vmatprep.mubr.f32.mxu0 0.0
      %3507 = vmatmul.mubr.f32.gmra.mrb[0].mxu0 %v3340
      %v3508 = vpop.f32.mrb[0].mxu0
      %v3509 = vadd.f32 0.0, %v3508
      %v3510 = vpop.f32.mrb[0].mxu0
      %3511 = vmatprep.mubr.f32.mxu0 0.0
      %3512 = vmatmul.mubr.f32.gmra.mrb[0].mxu0 %v3343
      %v3513 = vpop.f32.mrb[0].mxu0
      %v3514 = vadd.f32 0.0, %v3513
      %v3515 = vpop.f32.mrb[0].mxu0
      %3516 = vmatprep.mubr.f32.mxu0 0.0
      %3517 = vmatmul.mubr.f32.gmra.mrb[0].mxu0 %v3346
      %v3518 = vpop.f32.mrb[0].mxu0
      %v3519 = vadd.f32 0.0, %v3518
      %v3520 = vpop.f32.mrb[0].mxu0
      %3521 = vmatprep.mubr.f32.mxu0 0.0
      %3522 = vmatmul.mubr.f32.gmra.mrb[0].mxu0 %v3349
      %v3523 = vpop.f32.mrb[0].mxu0
      %v3524 = vadd.f32 0.0, %v3523
      %v3525 = vpop.f32.mrb[0].mxu0
      %3526 = vmatprep.mubr.f32.mxu0 0.0
      %3527 = vmatmul.mubr.f32.gmra.mrb[0].mxu0 %v3352
      %v3528 = vpop.f32.mrb[0].mxu0
      %v3529 = vadd.f32 0.0, %v3528
      %v3530 = vpop.f32.mrb[0].mxu0
      %3531 = vmatprep.mubr.f32.mxu0 0.0
      %3532 = vmatmul.mubr.f32.gmra.mrb[0].mxu0 %v3355
      %v3533 = vpop.f32.mrb[0].mxu0
      %v3534 = vadd.f32 0.0, %v3533
      %v3535 = vpop.f32.mrb[0].mxu0
      %3536 = vmatprep.mubr.f32.mxu0 0.0
      %3537 = vmatmul.mubr.f32.gmra.mrb[0].mxu0 %v3358
      %v3538 = vpop.f32.mrb[0].mxu0
      %v3539 = vadd.f32 0.0, %v3538
      %v3540 = vpop.f32.mrb[0].mxu0
      %3541 = vmatprep.mubr.f32.mxu0 0.0
      %3542 = vmatmul.mubr.f32.gmra.mrb[0].mxu0 %v3361
      %v3543 = vpop.f32.mrb[0].mxu0
      %v3544 = vadd.f32 0.0, %v3543
      %v3545 = vpop.f32.mrb[0].mxu0
      %3546 = vmatprep.mubr.f32.mxu0 0.0
      %3547 = vmatmul.mubr.f32.gmra.mrb[0].mxu0 %v3364
      %v3548 = vpop.f32.mrb[0].mxu0
      %v3549 = vadd.f32 0.0, %v3548
      %v3550 = vpop.f32.mrb[0].mxu0
      %3551 = vmatprep.mubr.f32.mxu0 0.0
      %3552 = vmatmul.mubr.f32.gmra.mrb[0].mxu0 %v3367
      %v3553 = vpop.f32.mrb[0].mxu0
      %v3554 = vadd.f32 0.0, %v3553
      %v3555 = vpop.f32.mrb[0].mxu0
      %3556 = vmatprep.mubr.f32.mxu0 0.0
      %3557 = vmatmul.mubr.f32.gmra.mrb[0].mxu0 %v3370
      %v3558 = vpop.f32.mrb[0].mxu0
      %v3559 = vadd.f32 0.0, %v3558
      %v3560 = vpop.f32.mrb[0].mxu0
      %3561 = vmatprep.mubr.f32.mxu0 0.0
      %3562 = vmatmul.mubr.f32.gmra.mrb[0].mxu0 %v3373
      %v3563 = vpop.f32.mrb[0].mxu0
      %v3564 = vadd.f32 0.0, %v3563
      %v3565 = vpop.f32.mrb[0].mxu0
      %3566 = vmatprep.mubr.f32.mxu0 0.0
      %3567 = vmatmul.mubr.f32.gmra.mrb[0].mxu0 %v3376
      %v3568 = vpop.f32.mrb[0].mxu0
      %v3569 = vadd.f32 0.0, %v3568
      %v3570 = vpop.f32.mrb[0].mxu0
      %3571 = vmatprep.mubr.f32.mxu0 0.0
      %3572 = vmatmul.mubr.f32.gmra.mrb[0].mxu0 %v3379
      %v3573 = vpop.f32.mrb[0].mxu0
      %v3574 = vadd.f32 0.0, %v3573
      %v3575 = vpop.f32.mrb[0].mxu0
      %3576 = vmatprep.mubr.f32.mxu0 0.0
      %3577 = vmatmul.mubr.f32.gmra.mrb[0].mxu0 %v3382
      %v3578 = vpop.f32.mrb[0].mxu0
      %v3579 = vadd.f32 0.0, %v3578
      %v3580 = vpop.f32.mrb[0].mxu0
      %3581 = vmatprep.mubr.f32.mxu0 0.0
      %3582 = vmatmul.mubr.f32.gmra.mrb[0].mxu0 %v3385
      %v3583 = vpop.f32.mrb[0].mxu0
      %v3584 = vadd.f32 0.0, %v3583
      %v3585 = vpop.f32.mrb[0].mxu0
      %3586 = vmatprep.mubr.f32.mxu0 0.0
      %3587 = vmatmul.mubr.f32.gmra.mrb[0].mxu0 %v3388
      %v3588 = vpop.f32.mrb[0].mxu0
      %v3589 = vadd.f32 0.0, %v3588
      %v3590 = vpop.f32.mrb[0].mxu0
      %3591 = vmatprep.mubr.f32.mxu0 0.0
      %3592 = vmatmul.mubr.f32.gmra.mrb[0].mxu0 %v3391
      %v3593 = vpop.f32.mrb[0].mxu0
      %v3594 = vadd.f32 0.0, %v3593
      %v3595 = vpop.f32.mrb[0].mxu0
      %3596 = vmatprep.mubr.f32.mxu0 0.0
      %3597 = vmatmul.mubr.f32.gmra.mrb[0].mxu0 %v3394
      %v3598 = vpop.f32.mrb[0].mxu0
      %v3599 = vadd.f32 0.0, %v3598
      %v3600 = vpop.f32.mrb[0].mxu0
      %3601 = vmatprep.mubr.f32.mxu0 0.0
      %3602 = vmatmul.mubr.f32.gmra.mrb[0].mxu0 %v3397
      %v3603 = vpop.f32.mrb[0].mxu0
      %v3604 = vadd.f32 0.0, %v3603
      %v3605 = vpop.f32.mrb[0].mxu0
      %3606 = vmatprep.mubr.f32.mxu0 0.0
      %3607 = vmatmul.mubr.f32.gmra.mrb[0].mxu0 %v3400
      %v3608 = vpop.f32.mrb[0].mxu0
      %v3609 = vadd.f32 0.0, %v3608
      %v3610 = vpop.f32.mrb[0].mxu0
      %3611 = vmatprep.mubr.f32.mxu0 0.0
      %3612 = vmatmul.mubr.f32.gmra.mrb[0].mxu0 %v3403
      %v3613 = vpop.f32.mrb[0].mxu0
      %v3614 = vadd.f32 0.0, %v3613
      %v3615 = vpop.f32.mrb[0].mxu0
      %3616 = vmatprep.mubr.f32.mxu0 0.0
      %3617 = vmatmul.mubr.f32.gmra.mrb[0].mxu0 %v3406
      %v3618 = vpop.f32.mrb[0].mxu0
      %v3619 = vadd.f32 0.0, %v3618
      %v3620 = vpop.f32.mrb[0].mxu0
      %3621 = vmatprep.mubr.f32.mxu0 0.0
      %3622 = vmatmul.mubr.f32.gmra.mrb[0].mxu0 %v3409
      %v3623 = vpop.f32.mrb[0].mxu0
      %v3624 = vadd.f32 0.0, %v3623
      %v3625 = vpop.f32.mrb[0].mxu0
      %3626 = vmatprep.mubr.f32.mxu0 0.0
      %3627 = vmatmul.mubr.f32.gmra.mrb[0].mxu0 %v3412
      %v3628 = vpop.f32.mrb[0].mxu0
      %v3629 = vadd.f32 0.0, %v3628
      %v3630 = vpop.f32.mrb[0].mxu0
      %3631 = vmatprep.mubr.f32.mxu0 0.0
      %3632 = vmatmul.mubr.f32.gmra.mrb[0].mxu0 %v3415
      %v3633 = vpop.f32.mrb[0].mxu0
      %v3634 = vadd.f32 0.0, %v3633
      %v3635 = vpop.f32.mrb[0].mxu0
      %3636 = vmatprep.mubr.f32.mxu0 0.0
      %3637 = vmatmul.mubr.f32.gmra.mrb[0].mxu0 %v3418
      %v3638 = vpop.f32.mrb[0].mxu0
      %v3639 = vadd.f32 0.0, %v3638
      %v3640 = vpop.f32.mrb[0].mxu0
      %3641 = vmatprep.mubr.f32.mxu0 0.0
      %3642 = vmatmul.mubr.f32.gmra.mrb[0].mxu0 %v3421
      %v3643 = vpop.f32.mrb[0].mxu0
      %v3644 = vadd.f32 0.0, %v3643
      %v3645 = vpop.f32.mrb[0].mxu0
      %3646 = vmatprep.mubr.f32.mxu0 0.0
      %3647 = vmatmul.mubr.f32.gmra.mrb[0].mxu0 %v3424
      %v3648 = vpop.f32.mrb[0].mxu0
      %v3649 = vadd.f32 0.0, %v3648
      %v3650 = vpop.f32.mrb[0].mxu0
      %3651 = vmatprep.mubr.f32.mxu0 0.0
      %3652 = vmatmul.mubr.f32.gmra.mrb[0].mxu0 %v3427
      %v3653 = vpop.f32.mrb[0].mxu0
      %v3654 = vadd.f32 0.0, %v3653
      %v3655 = vpop.f32.mrb[0].mxu0
      %3656 = vdwg.mxu0
      %v3657 = vadd.f32 %v3267, %v3499
      %v3658 = vadd.f32 %v3268, %v3504
      %v3659 = vadd.f32 %v3269, %v3509
      %v3660 = vadd.f32 %v3270, %v3514
      %v3661 = vadd.f32 %v3271, %v3519
      %v3662 = vadd.f32 %v3272, %v3524
      %v3663 = vadd.f32 %v3273, %v3529
      %v3664 = vadd.f32 %v3274, %v3534
      %v3665 = vadd.f32 %v3275, %v3539
      %v3666 = vadd.f32 %v3276, %v3544
      %v3667 = vadd.f32 %v3277, %v3549
      %v3668 = vadd.f32 %v3278, %v3554
      %v3669 = vadd.f32 %v3279, %v3559
      %v3670 = vadd.f32 %v3280, %v3564
      %v3671 = vadd.f32 %v3281, %v3569
      %v3672 = vadd.f32 %v3282, %v3574
      %v3673 = vadd.f32 %v3283, %v3579
      %v3674 = vadd.f32 %v3284, %v3584
      %v3675 = vadd.f32 %v3285, %v3589
      %v3676 = vadd.f32 %v3286, %v3594
      %v3677 = vadd.f32 %v3287, %v3599
      %v3678 = vadd.f32 %v3288, %v3604
      %v3679 = vadd.f32 %v3289, %v3609
      %v3680 = vadd.f32 %v3290, %v3614
      %v3681 = vadd.f32 %v3291, %v3619
      %v3682 = vadd.f32 %v3292, %v3624
      %v3683 = vadd.f32 %v3293, %v3629
      %v3684 = vadd.f32 %v3294, %v3634
      %v3685 = vadd.f32 %v3295, %v3639
      %v3686 = vadd.f32 %v3296, %v3644
      %v3687 = vadd.f32 %v3297, %v3649
      %v3688 = vadd.f32 %v3298, %v3654
      %3689 = vst [vmem:[%s229] sm:$0xff] %v3657
      %3690 = vst [vmem:[%s229 + $0x8] sm:$0xff] %v3658
      %3691 = vst [vmem:[%s229 + $0x10] sm:$0xff] %v3659
      %3692 = vst [vmem:[%s229 + $0x18] sm:$0xff] %v3660
      %3693 = vst [vmem:[%s229 + $0x20] sm:$0xff] %v3661
      %3694 = vst [vmem:[%s229 + $0x28] sm:$0xff] %v3662
      %3695 = vst [vmem:[%s229 + $0x30] sm:$0xff] %v3663
      %3696 = vst [vmem:[%s229 + $0x38] sm:$0xff] %v3664
      %3697 = vst [vmem:[%s229 + $0x40] sm:$0xff] %v3665
      %3698 = vst [vmem:[%s229 + $0x48] sm:$0xff] %v3666
      %3699 = vst [vmem:[%s229 + $0x50] sm:$0xff] %v3667
      %3700 = vst [vmem:[%s229 + $0x58] sm:$0xff] %v3668
      %3701 = vst [vmem:[%s229 + $0x60] sm:$0xff] %v3669
      %3702 = vst [vmem:[%s229 + $0x68] sm:$0xff] %v3670
      %3703 = vst [vmem:[%s229 + $0x70] sm:$0xff] %v3671
      %3704 = vst [vmem:[%s229 + $0x78] sm:$0xff] %v3672
      %3705 = vst [vmem:[%s229 + $0x80] sm:$0xff] %v3673
      %3706 = vst [vmem:[%s229 + $0x88] sm:$0xff] %v3674
      %3707 = vst [vmem:[%s229 + $0x90] sm:$0xff] %v3675
      %3708 = vst [vmem:[%s229 + $0x98] sm:$0xff] %v3676
      %3709 = vst [vmem:[%s229 + $0xa0] sm:$0xff] %v3677
      %3710 = vst [vmem:[%s229 + $0xa8] sm:$0xff] %v3678
      %3711 = vst [vmem:[%s229 + $0xb0] sm:$0xff] %v3679
      %3712 = vst [vmem:[%s229 + $0xb8] sm:$0xff] %v3680
      %3713 = vst [vmem:[%s229 + $0xc0] sm:$0xff] %v3681
      %3714 = vst [vmem:[%s229 + $0xc8] sm:$0xff] %v3682
      %3715 = vst [vmem:[%s229 + $0xd0] sm:$0xff] %v3683
      %3716 = vst [vmem:[%s229 + $0xd8] sm:$0xff] %v3684
      %3717 = vst [vmem:[%s229 + $0xe0] sm:$0xff] %v3685
      %3718 = vst [vmem:[%s229 + $0xe8] sm:$0xff] %v3686
      %3719 = vst [vmem:[%s229 + $0xf0] sm:$0xff] %v3687
      %3720 = vst [vmem:[%s229 + $0xf8] sm:$0xff] %v3688
      %v3721 = vld [vmem:[%s1347 + $0x1] sm:$0xff]
      %v3722 = vld [vmem:[%s1347 + $0x9] sm:$0xff]
      %v3723 = vld [vmem:[%s1347 + $0x19] sm:$0xff]
      %v3724 = vld [vmem:[%s1347 + $0x21] sm:$0xff]
      %v3725 = vld [vmem:[%s1347 + $0x31] sm:$0xff]
      %v3726 = vld [vmem:[%s1347 + $0x39] sm:$0xff]
      %v3727 = vld [vmem:[%s1347 + $0x49] sm:$0xff]
      %v3728 = vld [vmem:[%s1347 + $0x51] sm:$0xff]
      %v3729 = vld [vmem:[%s1347 + $0x61] sm:$0xff]
      %v3730 = vld [vmem:[%s1347 + $0x69] sm:$0xff]
      %v3731 = vld [vmem:[%s1347 + $0x79] sm:$0xff]
      %v3732 = vld [vmem:[%s1347 + $0x81] sm:$0xff]
      %v3733 = vld [vmem:[%s1347 + $0x91] sm:$0xff]
      %v3734 = vld [vmem:[%s1347 + $0x99] sm:$0xff]
      %v3735 = vld [vmem:[%s1347 + $0xa9] sm:$0xff]
      %v3736 = vld [vmem:[%s1347 + $0xb1] sm:$0xff]
      %v3737 = vld [vmem:[%s1347 + $0xc1] sm:$0xff]
      %v3738 = vld [vmem:[%s1347 + $0xc9] sm:$0xff]
      %v3739 = vld [vmem:[%s1347 + $0xd9] sm:$0xff]
      %v3740 = vld [vmem:[%s1347 + $0xe1] sm:$0xff]
      %v3741 = vld [vmem:[%s1347 + $0xf1] sm:$0xff]
      %v3742 = vld [vmem:[%s1347 + $0xf9] sm:$0xff]
      %v3743 = vld [vmem:[%s1347 + $0x109] sm:$0xff]
      %v3744 = vld [vmem:[%s1347 + $0x111] sm:$0xff]
      %v3745 = vld [vmem:[%s1347 + $0x121] sm:$0xff]
      %v3746 = vld [vmem:[%s1347 + $0x129] sm:$0xff]
      %v3747 = vld [vmem:[%s1347 + $0x139] sm:$0xff]
      %v3748 = vld [vmem:[%s1347 + $0x141] sm:$0xff]
      %v3749 = vld [vmem:[%s1347 + $0x151] sm:$0xff]
      %v3750 = vld [vmem:[%s1347 + $0x159] sm:$0xff]
      %v3751 = vld [vmem:[%s1347 + $0x169] sm:$0xff]
      %v3752 = vld [vmem:[%s1347 + $0x171] sm:$0xff]
      %v3753 = vld [vmem:[%s2] sm:$0xf]
      %v3755 = vsel %vm307, %v3721, 0
      %v3758 = vsel %vm307, %v3722, 0
      %v3761 = vsel %vm307, %v3723, 0
      %v3764 = vsel %vm307, %v3724, 0
      %v3767 = vsel %vm307, %v3725, 0
      %v3770 = vsel %vm307, %v3726, 0
      %v3773 = vsel %vm307, %v3727, 0
      %v3776 = vsel %vm307, %v3728, 0
      %v3779 = vsel %vm307, %v3729, 0
      %v3782 = vsel %vm307, %v3730, 0
      %v3785 = vsel %vm307, %v3731, 0
      %v3788 = vsel %vm307, %v3732, 0
      %v3791 = vsel %vm307, %v3733, 0
      %v3794 = vsel %vm307, %v3734, 0
      %v3797 = vsel %vm307, %v3735, 0
      %v3800 = vsel %vm307, %v3736, 0
      %v3803 = vsel %vm307, %v3737, 0
      %v3806 = vsel %vm307, %v3738, 0
      %v3809 = vsel %vm307, %v3739, 0
      %v3812 = vsel %vm307, %v3740, 0
      %v3815 = vsel %vm307, %v3741, 0
      %v3818 = vsel %vm307, %v3742, 0
      %v3821 = vsel %vm307, %v3743, 0
      %v3824 = vsel %vm307, %v3744, 0
      %v3827 = vsel %vm307, %v3745, 0
      %v3830 = vsel %vm307, %v3746, 0
      %v3833 = vsel %vm307, %v3747, 0
      %v3836 = vsel %vm307, %v3748, 0
      %v3839 = vsel %vm307, %v3749, 0
      %v3842 = vsel %vm307, %v3750, 0
      %v3845 = vsel %vm307, %v3751, 0
      %v3848 = vsel %vm307, %v3752, 0
      %v3851 = vsel %vm404, %v3753, 0
      %3853 = vmatprep.subr.mxu0 0.0
      %3854 = vmatpush1.msra.mxu0 %v3851
      %3855 = vmatprep.subr.mxu0 0.0
      %3856 = vmatpush1.msra.mxu0 0.0
      %3857 = vmatprep.subr.mxu0 0.0
      %3858 = vmatpush1.msra.mxu0 0.0
      %3859 = vmatprep.subr.mxu0 0.0
      %3860 = vmatpush1.msra.mxu0 0.0
      %3861 = vmatprep.subr.mxu0 0.0
      %3862 = vmatpush1.msra.mxu0 0.0
      %3863 = vmatprep.subr.mxu0 0.0
      %3864 = vmatpush1.msra.mxu0 0.0
      %3865 = vmatprep.subr.mxu0 0.0
      %3866 = vmatpush1.msra.mxu0 0.0
      %3867 = vmatprep.subr.mxu0 0.0
      %3868 = vmatpush1.msra.mxu0 0.0
      %3869 = vmatprep.subr.mxu0 0.0
      %3870 = vmatpush1.msra.mxu0 0.0
      %3871 = vmatprep.subr.mxu0 0.0
      %3872 = vmatpush1.msra.mxu0 0.0
      %3873 = vmatprep.subr.mxu0 0.0
      %3874 = vmatpush1.msra.mxu0 0.0
      %3875 = vmatprep.subr.mxu0 0.0
      %3876 = vmatpush1.msra.mxu0 0.0
      %3877 = vmatprep.subr.mxu0 0.0
      %3878 = vmatpush1.msra.mxu0 0.0
      %3879 = vmatprep.subr.mxu0 0.0
      %3880 = vmatpush1.msra.mxu0 0.0
      %3881 = vmatprep.subr.mxu0 0.0
      %3882 = vmatpush1.msra.mxu0 0.0
      %3883 = vmatprep.subr.mxu0 0.0
      %3884 = vmatpush1.msra.mxu0 0.0
      %3885 = vmatprep.subr.mxu0 0.0
      %3886 = vmatpush1.msra.mxu0 0.0
      %3887 = vmatprep.subr.mxu0 0.0
      %3888 = vmatpush1.msra.mxu0 0.0
      %3889 = vmatprep.subr.mxu0 0.0
      %3890 = vmatpush1.msra.mxu0 0.0
      %3891 = vmatprep.subr.mxu0 0.0
      %3892 = vmatpush1.msra.mxu0 0.0
      %3893 = vmatprep.subr.mxu0 0.0
      %3894 = vmatpush1.msra.mxu0 0.0
      %3895 = vmatprep.subr.mxu0 0.0
      %3896 = vmatpush1.msra.mxu0 0.0
      %3897 = vmatprep.subr.mxu0 0.0
      %3898 = vmatpush1.msra.mxu0 0.0
      %3899 = vmatprep.subr.mxu0 0.0
      %3900 = vmatpush1.msra.mxu0 0.0
      %3901 = vmatprep.subr.mxu0 0.0
      %3902 = vmatpush1.msra.mxu0 0.0
      %3903 = vmatprep.subr.mxu0 0.0
      %3904 = vmatpush1.msra.mxu0 0.0
      %3905 = vmatprep.subr.mxu0 0.0
      %3906 = vmatpush1.msra.mxu0 0.0
      %3907 = vmatprep.subr.mxu0 0.0
      %3908 = vmatpush1.msra.mxu0 0.0
      %3909 = vmatprep.subr.mxu0 0.0
      %3910 = vmatpush1.msra.mxu0 0.0
      %3911 = vmatprep.subr.mxu0 0.0
      %3912 = vmatpush1.msra.mxu0 0.0
      %3913 = vmatprep.subr.mxu0 0.0
      %3914 = vmatpush1.msra.mxu0 0.0
      %3915 = vmatprep.subr.mxu0 0.0
      %3916 = vmatpush1.msra.mxu0 0.0
      %3917 = vmatprep.mubr.f32.mxu0 0.0
      %3918 = vmatmul.mubr.f32.gmra.mrb[0].mxu0 %v3755
      %v3919 = vpop.f32.mrb[0].mxu0
      %v3920 = vadd.f32 0.0, %v3919
      %v3921 = vpop.f32.mrb[0].mxu0
      %3922 = vmatprep.mubr.f32.mxu0 0.0
      %3923 = vmatmul.mubr.f32.gmra.mrb[0].mxu0 %v3758
      %v3924 = vpop.f32.mrb[0].mxu0
      %v3925 = vadd.f32 0.0, %v3924
      %v3926 = vpop.f32.mrb[0].mxu0
      %3927 = vmatprep.mubr.f32.mxu0 0.0
      %3928 = vmatmul.mubr.f32.gmra.mrb[0].mxu0 %v3761
      %v3929 = vpop.f32.mrb[0].mxu0
      %v3930 = vadd.f32 0.0, %v3929
      %v3931 = vpop.f32.mrb[0].mxu0
      %3932 = vmatprep.mubr.f32.mxu0 0.0
      %3933 = vmatmul.mubr.f32.gmra.mrb[0].mxu0 %v3764
      %v3934 = vpop.f32.mrb[0].mxu0
      %v3935 = vadd.f32 0.0, %v3934
      %v3936 = vpop.f32.mrb[0].mxu0
      %3937 = vmatprep.mubr.f32.mxu0 0.0
      %3938 = vmatmul.mubr.f32.gmra.mrb[0].mxu0 %v3767
      %v3939 = vpop.f32.mrb[0].mxu0
      %v3940 = vadd.f32 0.0, %v3939
      %v3941 = vpop.f32.mrb[0].mxu0
      %3942 = vmatprep.mubr.f32.mxu0 0.0
      %3943 = vmatmul.mubr.f32.gmra.mrb[0].mxu0 %v3770
      %v3944 = vpop.f32.mrb[0].mxu0
      %v3945 = vadd.f32 0.0, %v3944
      %v3946 = vpop.f32.mrb[0].mxu0
      %3947 = vmatprep.mubr.f32.mxu0 0.0
      %3948 = vmatmul.mubr.f32.gmra.mrb[0].mxu0 %v3773
      %v3949 = vpop.f32.mrb[0].mxu0
      %v3950 = vadd.f32 0.0, %v3949
      %v3951 = vpop.f32.mrb[0].mxu0
      %3952 = vmatprep.mubr.f32.mxu0 0.0
      %3953 = vmatmul.mubr.f32.gmra.mrb[0].mxu0 %v3776
      %v3954 = vpop.f32.mrb[0].mxu0
      %v3955 = vadd.f32 0.0, %v3954
      %v3956 = vpop.f32.mrb[0].mxu0
      %3957 = vmatprep.mubr.f32.mxu0 0.0
      %3958 = vmatmul.mubr.f32.gmra.mrb[0].mxu0 %v3779
      %v3959 = vpop.f32.mrb[0].mxu0
      %v3960 = vadd.f32 0.0, %v3959
      %v3961 = vpop.f32.mrb[0].mxu0
      %3962 = vmatprep.mubr.f32.mxu0 0.0
      %3963 = vmatmul.mubr.f32.gmra.mrb[0].mxu0 %v3782
      %v3964 = vpop.f32.mrb[0].mxu0
      %v3965 = vadd.f32 0.0, %v3964
      %v3966 = vpop.f32.mrb[0].mxu0
      %3967 = vmatprep.mubr.f32.mxu0 0.0
      %3968 = vmatmul.mubr.f32.gmra.mrb[0].mxu0 %v3785
      %v3969 = vpop.f32.mrb[0].mxu0
      %v3970 = vadd.f32 0.0, %v3969
      %v3971 = vpop.f32.mrb[0].mxu0
      %3972 = vmatprep.mubr.f32.mxu0 0.0
      %3973 = vmatmul.mubr.f32.gmra.mrb[0].mxu0 %v3788
      %v3974 = vpop.f32.mrb[0].mxu0
      %v3975 = vadd.f32 0.0, %v3974
      %v3976 = vpop.f32.mrb[0].mxu0
      %3977 = vmatprep.mubr.f32.mxu0 0.0
      %3978 = vmatmul.mubr.f32.gmra.mrb[0].mxu0 %v3791
      %v3979 = vpop.f32.mrb[0].mxu0
      %v3980 = vadd.f32 0.0, %v3979
      %v3981 = vpop.f32.mrb[0].mxu0
      %3982 = vmatprep.mubr.f32.mxu0 0.0
      %3983 = vmatmul.mubr.f32.gmra.mrb[0].mxu0 %v3794
      %v3984 = vpop.f32.mrb[0].mxu0
      %v3985 = vadd.f32 0.0, %v3984
      %v3986 = vpop.f32.mrb[0].mxu0
      %3987 = vmatprep.mubr.f32.mxu0 0.0
      %3988 = vmatmul.mubr.f32.gmra.mrb[0].mxu0 %v3797
      %v3989 = vpop.f32.mrb[0].mxu0
      %v3990 = vadd.f32 0.0, %v3989
      %v3991 = vpop.f32.mrb[0].mxu0
      %3992 = vmatprep.mubr.f32.mxu0 0.0
      %3993 = vmatmul.mubr.f32.gmra.mrb[0].mxu0 %v3800
      %v3994 = vpop.f32.mrb[0].mxu0
      %v3995 = vadd.f32 0.0, %v3994
      %v3996 = vpop.f32.mrb[0].mxu0
      %3997 = vmatprep.mubr.f32.mxu0 0.0
      %3998 = vmatmul.mubr.f32.gmra.mrb[0].mxu0 %v3803
      %v3999 = vpop.f32.mrb[0].mxu0
      %v4000 = vadd.f32 0.0, %v3999
      %v4001 = vpop.f32.mrb[0].mxu0
      %4002 = vmatprep.mubr.f32.mxu0 0.0
      %4003 = vmatmul.mubr.f32.gmra.mrb[0].mxu0 %v3806
      %v4004 = vpop.f32.mrb[0].mxu0
      %v4005 = vadd.f32 0.0, %v4004
      %v4006 = vpop.f32.mrb[0].mxu0
      %4007 = vmatprep.mubr.f32.mxu0 0.0
      %4008 = vmatmul.mubr.f32.gmra.mrb[0].mxu0 %v3809
      %v4009 = vpop.f32.mrb[0].mxu0
      %v4010 = vadd.f32 0.0, %v4009
      %v4011 = vpop.f32.mrb[0].mxu0
      %4012 = vmatprep.mubr.f32.mxu0 0.0
      %4013 = vmatmul.mubr.f32.gmra.mrb[0].mxu0 %v3812
      %v4014 = vpop.f32.mrb[0].mxu0
      %v4015 = vadd.f32 0.0, %v4014
      %v4016 = vpop.f32.mrb[0].mxu0
      %4017 = vmatprep.mubr.f32.mxu0 0.0
      %4018 = vmatmul.mubr.f32.gmra.mrb[0].mxu0 %v3815
      %v4019 = vpop.f32.mrb[0].mxu0
      %v4020 = vadd.f32 0.0, %v4019
      %v4021 = vpop.f32.mrb[0].mxu0
      %4022 = vmatprep.mubr.f32.mxu0 0.0
      %4023 = vmatmul.mubr.f32.gmra.mrb[0].mxu0 %v3818
      %v4024 = vpop.f32.mrb[0].mxu0
      %v4025 = vadd.f32 0.0, %v4024
      %v4026 = vpop.f32.mrb[0].mxu0
      %4027 = vmatprep.mubr.f32.mxu0 0.0
      %4028 = vmatmul.mubr.f32.gmra.mrb[0].mxu0 %v3821
      %v4029 = vpop.f32.mrb[0].mxu0
      %v4030 = vadd.f32 0.0, %v4029
      %v4031 = vpop.f32.mrb[0].mxu0
      %4032 = vmatprep.mubr.f32.mxu0 0.0
      %4033 = vmatmul.mubr.f32.gmra.mrb[0].mxu0 %v3824
      %v4034 = vpop.f32.mrb[0].mxu0
      %v4035 = vadd.f32 0.0, %v4034
      %v4036 = vpop.f32.mrb[0].mxu0
      %4037 = vmatprep.mubr.f32.mxu0 0.0
      %4038 = vmatmul.mubr.f32.gmra.mrb[0].mxu0 %v3827
      %v4039 = vpop.f32.mrb[0].mxu0
      %v4040 = vadd.f32 0.0, %v4039
      %v4041 = vpop.f32.mrb[0].mxu0
      %4042 = vmatprep.mubr.f32.mxu0 0.0
      %4043 = vmatmul.mubr.f32.gmra.mrb[0].mxu0 %v3830
      %v4044 = vpop.f32.mrb[0].mxu0
      %v4045 = vadd.f32 0.0, %v4044
      %v4046 = vpop.f32.mrb[0].mxu0
      %4047 = vmatprep.mubr.f32.mxu0 0.0
      %4048 = vmatmul.mubr.f32.gmra.mrb[0].mxu0 %v3833
      %v4049 = vpop.f32.mrb[0].mxu0
      %v4050 = vadd.f32 0.0, %v4049
      %v4051 = vpop.f32.mrb[0].mxu0
      %4052 = vmatprep.mubr.f32.mxu0 0.0
      %4053 = vmatmul.mubr.f32.gmra.mrb[0].mxu0 %v3836
      %v4054 = vpop.f32.mrb[0].mxu0
      %v4055 = vadd.f32 0.0, %v4054
      %v4056 = vpop.f32.mrb[0].mxu0
      %4057 = vmatprep.mubr.f32.mxu0 0.0
      %4058 = vmatmul.mubr.f32.gmra.mrb[0].mxu0 %v3839
      %v4059 = vpop.f32.mrb[0].mxu0
      %v4060 = vadd.f32 0.0, %v4059
      %v4061 = vpop.f32.mrb[0].mxu0
      %4062 = vmatprep.mubr.f32.mxu0 0.0
      %4063 = vmatmul.mubr.f32.gmra.mrb[0].mxu0 %v3842
      %v4064 = vpop.f32.mrb[0].mxu0
      %v4065 = vadd.f32 0.0, %v4064
      %v4066 = vpop.f32.mrb[0].mxu0
      %4067 = vmatprep.mubr.f32.mxu0 0.0
      %4068 = vmatmul.mubr.f32.gmra.mrb[0].mxu0 %v3845
      %v4069 = vpop.f32.mrb[0].mxu0
      %v4070 = vadd.f32 0.0, %v4069
      %v4071 = vpop.f32.mrb[0].mxu0
      %4072 = vmatprep.mubr.f32.mxu0 0.0
      %4073 = vmatmul.mubr.f32.gmra.mrb[0].mxu0 %v3848
      %v4074 = vpop.f32.mrb[0].mxu0
      %v4075 = vadd.f32 0.0, %v4074
      %v4076 = vpop.f32.mrb[0].mxu0
      %4077 = vdwg.mxu0
      %4078 = vst [vmem:[%s234] sm:$0xff] %v3920
      %4079 = vst [vmem:[%s234 + $0x8] sm:$0xff] %v3925
      %4080 = vst [vmem:[%s234 + $0x10] sm:$0xff] %v3930
      %4081 = vst [vmem:[%s234 + $0x18] sm:$0xff] %v3935
      %4082 = vst [vmem:[%s234 + $0x20] sm:$0xff] %v3940
      %4083 = vst [vmem:[%s234 + $0x28] sm:$0xff] %v3945
      %4084 = vst [vmem:[%s234 + $0x30] sm:$0xff] %v3950
      %4085 = vst [vmem:[%s234 + $0x38] sm:$0xff] %v3955
      %4086 = vst [vmem:[%s234 + $0x40] sm:$0xff] %v3960
      %4087 = vst [vmem:[%s234 + $0x48] sm:$0xff] %v3965
      %4088 = vst [vmem:[%s234 + $0x50] sm:$0xff] %v3970
      %4089 = vst [vmem:[%s234 + $0x58] sm:$0xff] %v3975
      %4090 = vst [vmem:[%s234 + $0x60] sm:$0xff] %v3980
      %4091 = vst [vmem:[%s234 + $0x68] sm:$0xff] %v3985
      %4092 = vst [vmem:[%s234 + $0x70] sm:$0xff] %v3990
      %4093 = vst [vmem:[%s234 + $0x78] sm:$0xff] %v3995
      %4094 = vst [vmem:[%s234 + $0x80] sm:$0xff] %v4000
      %4095 = vst [vmem:[%s234 + $0x88] sm:$0xff] %v4005
      %4096 = vst [vmem:[%s234 + $0x90] sm:$0xff] %v4010
      %4097 = vst [vmem:[%s234 + $0x98] sm:$0xff] %v4015
      %4098 = vst [vmem:[%s234 + $0xa0] sm:$0xff] %v4020
      %4099 = vst [vmem:[%s234 + $0xa8] sm:$0xff] %v4025
      %4100 = vst [vmem:[%s234 + $0xb0] sm:$0xff] %v4030
      %4101 = vst [vmem:[%s234 + $0xb8] sm:$0xff] %v4035
      %4102 = vst [vmem:[%s234 + $0xc0] sm:$0xff] %v4040
      %4103 = vst [vmem:[%s234 + $0xc8] sm:$0xff] %v4045
      %4104 = vst [vmem:[%s234 + $0xd0] sm:$0xff] %v4050
      %4105 = vst [vmem:[%s234 + $0xd8] sm:$0xff] %v4055
      %4106 = vst [vmem:[%s234 + $0xe0] sm:$0xff] %v4060
      %4107 = vst [vmem:[%s234 + $0xe8] sm:$0xff] %v4065
      %4108 = vst [vmem:[%s234 + $0xf0] sm:$0xff] %v4070
      %4109 = vst [vmem:[%s234 + $0xf8] sm:$0xff] %v4075
      %v4110 = vld [vmem:[%s5] sm:$0x1]
      %v4111 = vadd.f32 %v3657, %v3658
      %v4112 = vadd.f32 %v4111, %v3659
      %v4113 = vadd.f32 %v4112, %v3660
      %v4114 = vadd.f32 %v4113, %v3661
      %v4115 = vadd.f32 %v4114, %v3662
      %v4116 = vadd.f32 %v4115, %v3663
      %v4117 = vadd.f32 %v4116, %v3664
      %v4118 = vadd.f32 %v4117, %v3665
      %v4119 = vadd.f32 %v4118, %v3666
      %v4120 = vadd.f32 %v4119, %v3667
      %v4121 = vadd.f32 %v4120, %v3668
      %v4122 = vadd.f32 %v4121, %v3669
      %v4123 = vadd.f32 %v4122, %v3670
      %v4124 = vadd.f32 %v4123, %v3671
      %v4125 = vadd.f32 %v4124, %v3672
      %v4126 = vadd.f32 %v4125, %v3673
      %v4127 = vadd.f32 %v4126, %v3674
      %v4128 = vadd.f32 %v4127, %v3675
      %v4129 = vadd.f32 %v4128, %v3676
      %v4130 = vadd.f32 %v4129, %v3677
      %v4131 = vadd.f32 %v4130, %v3678
      %v4132 = vadd.f32 %v4131, %v3679
      %v4133 = vadd.f32 %v4132, %v3680
      %v4134 = vadd.f32 %v4133, %v3681
      %v4135 = vadd.f32 %v4134, %v3682
      %v4136 = vadd.f32 %v4135, %v3683
      %v4137 = vadd.f32 %v4136, %v3684
      %v4138 = vadd.f32 %v4137, %v3685
      %v4139 = vadd.f32 %v4138, %v3686
      %v4140 = vadd.f32 %v4139, %v3687
      %v4141 = vadd.f32 %v4140, %v3688
      %v4142 = vrot.slane %v4141, 4
      %v4143 = vadd.f32 %v4141, %v4142
      %v4144 = vrot.slane %v4143, 2
      %v4145 = vadd.f32 %v4143, %v4144
      %v4146 = vrot.slane %v4145, 1
      %v4147 = vadd.f32 %v4145, %v4146
      %v4148 = vadd.f32 %v4110, %v4147
      %4149 = vst [vmem:[%s5] sm:$0x1] %v4148
      %v4150 = vld [vmem:[%s5 + $0x1] sm:$0x1]
      %v4151 = vmul.f32 %v3657, %v3657
      %v4152 = vmul.f32 %v3658, %v3658
      %v4153 = vmul.f32 %v3659, %v3659
      %v4154 = vmul.f32 %v3660, %v3660
      %v4155 = vmul.f32 %v3661, %v3661
      %v4156 = vmul.f32 %v3662, %v3662
      %v4157 = vmul.f32 %v3663, %v3663
      %v4158 = vmul.f32 %v3664, %v3664
      %v4159 = vmul.f32 %v3665, %v3665
      %v4160 = vmul.f32 %v3666, %v3666
      %v4161 = vmul.f32 %v3667, %v3667
      %v4162 = vmul.f32 %v3668, %v3668
      %v4163 = vmul.f32 %v3669, %v3669
      %v4164 = vmul.f32 %v3670, %v3670
      %v4165 = vmul.f32 %v3671, %v3671
      %v4166 = vmul.f32 %v3672, %v3672
      %v4167 = vmul.f32 %v3673, %v3673
      %v4168 = vmul.f32 %v3674, %v3674
      %v4169 = vmul.f32 %v3675, %v3675
      %v4170 = vmul.f32 %v3676, %v3676
      %v4171 = vmul.f32 %v3677, %v3677
      %v4172 = vmul.f32 %v3678, %v3678
      %v4173 = vmul.f32 %v3679, %v3679
      %v4174 = vmul.f32 %v3680, %v3680
      %v4175 = vmul.f32 %v3681, %v3681
      %v4176 = vmul.f32 %v3682, %v3682
      %v4177 = vmul.f32 %v3683, %v3683
      %v4178 = vmul.f32 %v3684, %v3684
      %v4179 = vmul.f32 %v3685, %v3685
      %v4180 = vmul.f32 %v3686, %v3686
      %v4181 = vmul.f32 %v3687, %v3687
      %v4182 = vmul.f32 %v3688, %v3688
      %v4183 = vadd.f32 %v4151, %v4152
      %v4184 = vadd.f32 %v4183, %v4153
      %v4185 = vadd.f32 %v4184, %v4154
      %v4186 = vadd.f32 %v4185, %v4155
      %v4187 = vadd.f32 %v4186, %v4156
      %v4188 = vadd.f32 %v4187, %v4157
      %v4189 = vadd.f32 %v4188, %v4158
      %v4190 = vadd.f32 %v4189, %v4159
      %v4191 = vadd.f32 %v4190, %v4160
      %v4192 = vadd.f32 %v4191, %v4161
      %v4193 = vadd.f32 %v4192, %v4162
      %v4194 = vadd.f32 %v4193, %v4163
      %v4195 = vadd.f32 %v4194, %v4164
      %v4196 = vadd.f32 %v4195, %v4165
      %v4197 = vadd.f32 %v4196, %v4166
      %v4198 = vadd.f32 %v4197, %v4167
      %v4199 = vadd.f32 %v4198, %v4168
      %v4200 = vadd.f32 %v4199, %v4169
      %v4201 = vadd.f32 %v4200, %v4170
      %v4202 = vadd.f32 %v4201, %v4171
      %v4203 = vadd.f32 %v4202, %v4172
      %v4204 = vadd.f32 %v4203, %v4173
      %v4205 = vadd.f32 %v4204, %v4174
      %v4206 = vadd.f32 %v4205, %v4175
      %v4207 = vadd.f32 %v4206, %v4176
      %v4208 = vadd.f32 %v4207, %v4177
      %v4209 = vadd.f32 %v4208, %v4178
      %v4210 = vadd.f32 %v4209, %v4179
      %v4211 = vadd.f32 %v4210, %v4180
      %v4212 = vadd.f32 %v4211, %v4181
      %v4213 = vadd.f32 %v4212, %v4182
      %v4214 = vrot.slane %v4213, 4
      %v4215 = vadd.f32 %v4213, %v4214
      %v4216 = vrot.slane %v4215, 2
      %v4217 = vadd.f32 %v4215, %v4216
      %v4218 = vrot.slane %v4217, 1
      %v4219 = vadd.f32 %v4217, %v4218
      %v4220 = vadd.f32 %v4150, %v4219
      %4221 = vst [vmem:[%s5 + $0x1] sm:$0x1] %v4220
      %v4222 = vld [vmem:[%s5 + $0x2] sm:$0x1]
      %v4223 = vadd.f32 %v3920, %v3925
      %v4224 = vadd.f32 %v4223, %v3930
      %v4225 = vadd.f32 %v4224, %v3935
      %v4226 = vadd.f32 %v4225, %v3940
      %v4227 = vadd.f32 %v4226, %v3945
      %v4228 = vadd.f32 %v4227, %v3950
      %v4229 = vadd.f32 %v4228, %v3955
      %v4230 = vadd.f32 %v4229, %v3960
      %v4231 = vadd.f32 %v4230, %v3965
      %v4232 = vadd.f32 %v4231, %v3970
      %v4233 = vadd.f32 %v4232, %v3975
      %v4234 = vadd.f32 %v4233, %v3980
      %v4235 = vadd.f32 %v4234, %v3985
      %v4236 = vadd.f32 %v4235, %v3990
      %v4237 = vadd.f32 %v4236, %v3995
      %v4238 = vadd.f32 %v4237, %v4000
      %v4239 = vadd.f32 %v4238, %v4005
      %v4240 = vadd.f32 %v4239, %v4010
      %v4241 = vadd.f32 %v4240, %v4015
      %v4242 = vadd.f32 %v4241, %v4020
      %v4243 = vadd.f32 %v4242, %v4025
      %v4244 = vadd.f32 %v4243, %v4030
      %v4245 = vadd.f32 %v4244, %v4035
      %v4246 = vadd.f32 %v4245, %v4040
      %v4247 = vadd.f32 %v4246, %v4045
      %v4248 = vadd.f32 %v4247, %v4050
      %v4249 = vadd.f32 %v4248, %v4055
      %v4250 = vadd.f32 %v4249, %v4060
      %v4251 = vadd.f32 %v4250, %v4065
      %v4252 = vadd.f32 %v4251, %v4070
      %v4253 = vadd.f32 %v4252, %v4075
      %v4254 = vrot.slane %v4253, 4
      %v4255 = vadd.f32 %v4253, %v4254
      %v4256 = vrot.slane %v4255, 2
      %v4257 = vadd.f32 %v4255, %v4256
      %v4258 = vrot.slane %v4257, 1
      %v4259 = vadd.f32 %v4257, %v4258
      %v4260 = vadd.f32 %v4222, %v4259
      %4261 = vst [vmem:[%s5 + $0x2] sm:$0x1] %v4260
      %v4262 = vld [vmem:[%s5 + $0x3] sm:$0x1]
      %v4263 = vmul.f32 %v3920, %v3920
      %v4264 = vmul.f32 %v3925, %v3925
      %v4265 = vmul.f32 %v3930, %v3930
      %v4266 = vmul.f32 %v3935, %v3935
      %v4267 = vmul.f32 %v3940, %v3940
      %v4268 = vmul.f32 %v3945, %v3945
      %v4269 = vmul.f32 %v3950, %v3950
      %v4270 = vmul.f32 %v3955, %v3955
      %v4271 = vmul.f32 %v3960, %v3960
      %v4272 = vmul.f32 %v3965, %v3965
      %v4273 = vmul.f32 %v3970, %v3970
      %v4274 = vmul.f32 %v3975, %v3975
      %v4275 = vmul.f32 %v3980, %v3980
      %v4276 = vmul.f32 %v3985, %v3985
      %v4277 = vmul.f32 %v3990, %v3990
      %v4278 = vmul.f32 %v3995, %v3995
      %v4279 = vmul.f32 %v4000, %v4000
      %v4280 = vmul.f32 %v4005, %v4005
      %v4281 = vmul.f32 %v4010, %v4010
      %v4282 = vmul.f32 %v4015, %v4015
      %v4283 = vmul.f32 %v4020, %v4020
      %v4284 = vmul.f32 %v4025, %v4025
      %v4285 = vmul.f32 %v4030, %v4030
      %v4286 = vmul.f32 %v4035, %v4035
      %v4287 = vmul.f32 %v4040, %v4040
      %v4288 = vmul.f32 %v4045, %v4045
      %v4289 = vmul.f32 %v4050, %v4050
      %v4290 = vmul.f32 %v4055, %v4055
      %v4291 = vmul.f32 %v4060, %v4060
      %v4292 = vmul.f32 %v4065, %v4065
      %v4293 = vmul.f32 %v4070, %v4070
      %v4294 = vmul.f32 %v4075, %v4075
      %v4295 = vadd.f32 %v4263, %v4264
      %v4296 = vadd.f32 %v4295, %v4265
      %v4297 = vadd.f32 %v4296, %v4266
      %v4298 = vadd.f32 %v4297, %v4267
      %v4299 = vadd.f32 %v4298, %v4268
      %v4300 = vadd.f32 %v4299, %v4269
      %v4301 = vadd.f32 %v4300, %v4270
      %v4302 = vadd.f32 %v4301, %v4271
      %v4303 = vadd.f32 %v4302, %v4272
      %v4304 = vadd.f32 %v4303, %v4273
      %v4305 = vadd.f32 %v4304, %v4274
      %v4306 = vadd.f32 %v4305, %v4275
      %v4307 = vadd.f32 %v4306, %v4276
      %v4308 = vadd.f32 %v4307, %v4277
      %v4309 = vadd.f32 %v4308, %v4278
      %v4310 = vadd.f32 %v4309, %v4279
      %v4311 = vadd.f32 %v4310, %v4280
      %v4312 = vadd.f32 %v4311, %v4281
      %v4313 = vadd.f32 %v4312, %v4282
      %v4314 = vadd.f32 %v4313, %v4283
      %v4315 = vadd.f32 %v4314, %v4284
      %v4316 = vadd.f32 %v4315, %v4285
      %v4317 = vadd.f32 %v4316, %v4286
      %v4318 = vadd.f32 %v4317, %v4287
      %v4319 = vadd.f32 %v4318, %v4288
      %v4320 = vadd.f32 %v4319, %v4289
      %v4321 = vadd.f32 %v4320, %v4290
      %v4322 = vadd.f32 %v4321, %v4291
      %v4323 = vadd.f32 %v4322, %v4292
      %v4324 = vadd.f32 %v4323, %v4293
      %v4325 = vadd.f32 %v4324, %v4294
      %v4326 = vrot.slane %v4325, 4
      %v4327 = vadd.f32 %v4325, %v4326
      %v4328 = vrot.slane %v4327, 2
      %v4329 = vadd.f32 %v4327, %v4328
      %v4330 = vrot.slane %v4329, 1
      %v4331 = vadd.f32 %v4329, %v4330
      %v4332 = vadd.f32 %v4262, %v4331
      %4333 = vst [vmem:[%s5 + $0x3] sm:$0x1] %v4332
      %p4334 = scmp.lt.s32.totalorder %s17, 1
      %s4335 = scalar_select %p4334, %s17, 1
      %s4336 = smul.addr %s4335, 32
      %s4337 = smul.addr %s4336, 8
      %s4338 = scalar_lea.vmem %s3, %s4337
      %p4339 = scmp.lt.s32.totalorder %s17, 1
      %s4340 = scalar_select %p4339, %s17, 1
      %s4341 = smul.addr %s4340, 32
      %s4342 = smul.addr %s4341, 8
      %s4343 = scalar_lea.vmem %s4, %s4342
      // Predicated region
      $region37: #{residual_block_forward.3} parent=31 // pred_check
        %p4344 = pneg %p103
      $region38: #{residual_block_forward.3} parent=31 // pred_check_branch
        %4346 = sbr.rel (%p4344) target = $region40
      $region39: #{residual_block_forward.3} parent=31 // pred_region
        _
      $region40: #{residual_block_forward.3} parent=31 // pred_fallthru
        _
      // Predicated region
      $region41: #{residual_block_forward.3} parent=31 // pred_check
        %p4347 = pneg %p129
      $region42: #{residual_block_forward.3} parent=31 // pred_check_branch
        %4349 = sbr.rel (%p4347) target = $region44
      $region43: #{residual_block_forward.3} parent=31 // pred_region
        _
      $region44: #{residual_block_forward.3} parent=31 // pred_fallthru
        _
      // Predicated region
      $region45: #{residual_block_forward.3} parent=31 // pred_check
        %p4350 = pneg %p150
      $region46: #{residual_block_forward.3} parent=31 // pred_check_branch
        %4352 = sbr.rel (%p4350) target = $region48
      $region47: #{residual_block_forward.3} parent=31 // pred_region
        _
      $region48: #{residual_block_forward.3} parent=31 // pred_fallthru
        _
      // Predicated region
      $region49: #{residual_block_forward.3} parent=31 // pred_check
        %p4353 = pneg %p150
      $region50: #{residual_block_forward.3} parent=31 // pred_check_branch
        %4355 = sbr.rel (%p4353) target = $region52
      $region51: #{residual_block_forward.3} parent=31 // pred_region
        _
      $region52: #{residual_block_forward.3} parent=31 // pred_fallthru
        _
    $region32: #{residual_block_forward.3} parent=5 // pred_fallthru
      _
    %p4356 = scmp.le.s32.totalorder 2, %s12
    // Predicated region
    $region53: #{residual_block_forward.3} parent=5 // pred_check
      %p4357 = pneg %p4356
    $region54: #{residual_block_forward.3} parent=5 // pred_check_branch
      %4359 = sbr.rel (%p4357) target = $region56
    $region55: #{residual_block_forward.3} parent=5 // pred_region
      %s4360 = ssub.s32 %s12, 2
      // Predicated region
      $region57: #{residual_block_forward.3} parent=55 // pred_check
        %p4361 = pneg %p109
      $region58: #{residual_block_forward.3} parent=55 // pred_check_branch
        %4363 = sbr.rel (%p4361) target = $region60
      $region59: #{residual_block_forward.3} parent=55 // pred_region
        %p4364 = scmp.lt.s32.totalorder %s18, 1
        %s4365 = scalar_select %p4364, %s18, 1
        %s4366 = smul.addr %s4365, 32
        %s4367 = smul.addr %s4366, 8
        %s4368 = scalar_lea.vmem %s3, %s4367
      $region60: #{residual_block_forward.3} parent=55 // pred_fallthru
        _
      // Predicated region
      $region61: #{residual_block_forward.3} parent=55 // pred_check
        %p4369 = pneg %p135
      $region62: #{residual_block_forward.3} parent=55 // pred_check_branch
        %4371 = sbr.rel (%p4369) target = $region64
      $region63: #{residual_block_forward.3} parent=55 // pred_region
        %p4372 = scmp.lt.s32.totalorder %s18, 1
        %s4373 = scalar_select %p4372, %s18, 1
        %s4374 = smul.addr %s4373, 32
        %s4375 = smul.addr %s4374, 8
        %s4376 = scalar_lea.vmem %s4, %s4375
      $region64: #{residual_block_forward.3} parent=55 // pred_fallthru
        _
    $region56: #{residual_block_forward.3} parent=5 // pred_fallthru
      _
  $region6: #{residual_block_forward.3} parent=0 // loop_footer
    %s16 = sadd.s32 1, %s12
  $region7: #{residual_block_forward.3} parent=0 // loop_footer_branch
    %11 = sbr.rel target = $region3
  $region8: #{residual_block_forward.3} parent=0 // loop_exit
    _

</llo_original>
